<compile_context>
chip_gen: v7x
topology: tpu7x:2x2x1
jax: 0.10.0
libtpu: 0.0.40
codegen_flags: <defaults>
</compile_context>

<pallas_src>
import functools
import math

import jax
import jax.numpy as jnp
import numpy as np
from jax.experimental import pallas as pl
from jax.experimental.pallas import tpu as pltpu

D_MODEL = 128
MAX_LEN = 128
DFF = 512
NHEAD = 4
NUM_CLASSES = 2
NUM_LAYERS = 2
VOCAB_SIZE = 30522
HEAD_DIM = D_MODEL // NHEAD
LN_EPS = 1e-5
FC_PAD = 128  # classifier out-dim padded to one full lane width; sliced back outside


def _vmem_capacity_bytes():
    try:
        return int(pltpu.get_tpu_info().vmem_capacity_bytes)
    except Exception:
        return 64 * 1024 * 1024  # conservative default (v7x per-core VMEM)


_VMEM_CAP = _vmem_capacity_bytes()
# Generation-specific sizing: bigger resident tiles / scoped-VMEM limit on v5e/v6e
# (128 MiB physical VMEM) than on v7x (64 MiB physical).
_ROW_BUDGET = 4096 if _VMEM_CAP >= 96 * 1024 * 1024 else 2048
_VMEM_LIMIT = (96 * 1024 * 1024) if _VMEM_CAP >= 96 * 1024 * 1024 else (32 * 1024 * 1024)


def _choose_ts(S, B):
    """Largest S-tile whose row count fits the per-generation budget and the (8,128) rule."""
    if S * B <= _ROW_BUDGET:
        return S
    for ts in range(S - 1, 0, -1):
        if S % ts == 0 and ts * B <= _ROW_BUDGET and (ts * B) % 8 == 0:
            return ts
    return S


def _layer_norm(x, gamma, beta):
    # f32 statistics
    mu = jnp.mean(x, axis=-1, keepdims=True)
    var = jnp.mean((x - mu) ** 2, axis=-1, keepdims=True)
    return (x - mu) * jax.lax.rsqrt(var + LN_EPS) * gamma + beta


def fused_transformer_kernel(x_ref,
                             wqkv_ref, bqkv_ref, wo_ref, bo_ref,
                             w1_ref, b1_ref, w2_ref, b2_ref,
                             g1_ref, be1_ref, g2_ref, be2_ref,
                             wf_ref, bf_ref,
                             o_ref,
                             acc_ref, ctx_ref,
                             *, ts, batch, s_total):
    """One S-tile of: 2x post-LN nn.TransformerEncoderLayer (relu FFN) -> mean(S) -> fc."""
    rows = ts * batch
    step = pl.program_id(0)
    scale = 1.0 / math.sqrt(HEAD_DIM)

    @pl.when(step == 0)
    def _():
        acc_ref[...] = jnp.zeros_like(acc_ref)

    def split_heads(x2d):
        # (rows, D) bf16 -> (NHEAD*ts, batch, HEAD_DIM): head becomes the leading batch
        # dim of the attention matmuls (cheap lane slices + leading-axis concat only).
        parts = [x2d[:, h * HEAD_DIM:(h + 1) * HEAD_DIM] for h in range(NHEAD)]
        return jnp.concatenate(parts, axis=0).reshape(NHEAD * ts, batch, HEAD_DIM)

    x_bf = x_ref[...]                              # (rows, D) bf16 activations
    x_f32 = x_bf.astype(jnp.float32)

    for layer in range(NUM_LAYERS):                # static unroll over the 2 layers
        wqkv = wqkv_ref[layer]                     # (D, 3D)  bf16
        wo = wo_ref[layer]                         # (D, D)   bf16
        w1 = w1_ref[layer]                         # (D, DFF) bf16
        w2 = w2_ref[layer]                         # (DFF, D) bf16

        # ---- QKV projection: one (rows,128)@(128,384) MXU matmul (f32 accumulate) ----
        qkv = jnp.dot(x_bf, wqkv, preferred_element_type=jnp.float32) + bqkv_ref[layer]
        qkv_bf = qkv.astype(jnp.bfloat16)
        qh = split_heads(qkv_bf[:, 0 * D_MODEL:1 * D_MODEL])
        kh = split_heads(qkv_bf[:, 1 * D_MODEL:2 * D_MODEL])
        vh = split_heads(qkv_bf[:, 2 * D_MODEL:3 * D_MODEL])

        # ---- attention: one batched op stream over (head x S-tile) ----
        s = jnp.einsum('bqd,bkd->bqk', qh, kh,
                       preferred_element_type=jnp.float32) * scale   # (H*ts, B, B) f32
        m = jnp.max(s, axis=-1, keepdims=True)
        p = jnp.exp(s - m)
        p = p / jnp.sum(p, axis=-1, keepdims=True)        # exact divide (review note)
        ctx = jnp.einsum('bqk,bkd->bqd', p.astype(jnp.bfloat16), vh,
                         preferred_element_type=jnp.float32)          # (H*ts, B, hd)

        # Reassemble heads into their 32-lane offsets of a (rows, D) scratch
        # (4 masked stores), then ONE full-depth K=128 output projection.
        ctx2d = ctx.reshape(NHEAD * rows, HEAD_DIM)
        for h in range(NHEAD):
            ctx_ref[:, h * HEAD_DIM:(h + 1) * HEAD_DIM] = (
                ctx2d[h * rows:(h + 1) * rows, :].astype(jnp.bfloat16))
        attn = jnp.dot(ctx_ref[...], wo,
                       preferred_element_type=jnp.float32) + bo_ref[layer]

        # ---- residual + LayerNorm1 (post-LN), f32 stats ----
        src_f32 = _layer_norm(x_f32 + attn, g1_ref[layer], be1_ref[layer])
        src_bf = src_f32.astype(jnp.bfloat16)

        # ---- feed-forward (relu) + residual + LayerNorm2 ----
        h1 = jnp.maximum(
            jnp.dot(src_bf, w1, preferred_element_type=jnp.float32) + b1_ref[layer], 0.0)
        ffn = jnp.dot(h1.astype(jnp.bfloat16), w2,
                      preferred_element_type=jnp.float32) + b2_ref[layer]
        x_f32 = _layer_norm(src_f32 + ffn, g2_ref[layer], be2_ref[layer])
        x_bf = x_f32.astype(jnp.bfloat16)

    # ---- mean over the original S axis: accumulate this tile's partial sum (f32) ----
    acc_ref[...] += jnp.sum(x_f32.reshape(ts, batch, D_MODEL), axis=0)

    # ---- classifier head on the last grid step (lane-dense padded output) ----
    @pl.when(step == pl.num_programs(0) - 1)
    def _():
        pooled = acc_ref[...] * (1.0 / s_total)
        o_ref[...] = jnp.dot(pooled.astype(jnp.bfloat16), wf_ref[...],
                             preferred_element_type=jnp.float32) + bf_ref[...]


@jax.jit
def transformer_classifier_forward(token_ids, params):
    B, S = token_ids.shape
    # Glue in plain JAX: embedding gather, sqrt(d_model) scale, positional encoding.
    x = jnp.take(params["embedding"], token_ids, axis=0) * math.sqrt(D_MODEL)  # (B, S, D)
    x = x + params["pe"][:S][None, :, :]
    # batch_first=False semantics: transpose so the attention-batch axis S leads, then
    # flatten to layout-clean (S*B, D) bf16 rows (no f32 repacks inside the kernel).
    x2d = jnp.swapaxes(x, 0, 1).reshape(S * B, D_MODEL).astype(jnp.bfloat16)

    ts = _choose_ts(S, B)
    grid = (S // ts,)
    rows_tile = ts * B
    kernel = functools.partial(fused_transformer_kernel, ts=ts, batch=B, s_total=S)

    args = (x2d,
            params["wqkv"], params["bqkv"], params["wo"], params["bo"],
            params["w1"], params["b1"], params["w2"], params["b2"],
            params["g1"], params["be1"], params["g2"], params["be2"],
            params["fc_w"], params["fc_b"])

    # x is tiled over S; all weights stay VMEM-resident for the whole call (<1 MiB bf16).
    vmem_spec = pl.BlockSpec(memory_space=pltpu.MemorySpace.VMEM)
    in_specs = ([pl.BlockSpec((rows_tile, D_MODEL), lambda i: (i, 0))]
                + [vmem_spec] * (len(args) - 1))

    # Advisory cost estimate so XLA schedules the surrounding gather/transpose/slice well.
    R = S * B
    flops_layer = (2 * R * D_MODEL * 3 * D_MODEL            # qkv projection
                   + 2 * 2 * S * NHEAD * B * B * HEAD_DIM   # scores + p@V
                   + 2 * R * D_MODEL * D_MODEL              # output projection
                   + 2 * 2 * R * D_MODEL * DFF)             # ffn
    flops = int(NUM_LAYERS * flops_layer + 2 * B * D_MODEL * FC_PAD)
    transcendentals = int(NUM_LAYERS * (S * NHEAD * B * B + 2 * R))
    bytes_accessed = int(sum(a.size * a.dtype.itemsize for a in args) + B * FC_PAD * 4)

    # TODO(synk): add a second "parallel" grid axis (e.g. over heads with a cross-step
    # recombine) so v7x's 2 TensorCores share work; the S axis must stay "arbitrary"
    # because it carries the mean-pool accumulator.
    logits_padded = pl.pallas_call(
        kernel,
        out_shape=jax.ShapeDtypeStruct((B, FC_PAD), jnp.float32),
        grid_spec=pltpu.PrefetchScalarGridSpec(
            num_scalar_prefetch=0,
            grid=grid,
            in_specs=in_specs,
            out_specs=pl.BlockSpec((B, FC_PAD), lambda i: (0, 0)),
            scratch_shapes=[pltpu.VMEM((B, D_MODEL), jnp.float32),          # mean-pool acc
                            pltpu.VMEM((rows_tile, D_MODEL), jnp.bfloat16)]  # head reassembly
        ),
        compiler_params=pltpu.CompilerParams(
            dimension_semantics=("arbitrary",),
            vmem_limit_bytes=_VMEM_LIMIT),
        cost_estimate=pl.CostEstimate(flops=flops,
                                      transcendentals=transcendentals,
                                      bytes_accessed=bytes_accessed),
    )(*args)
    return logits_padded[:, :NUM_CLASSES]


def positional_encoding():
    pe = np.zeros((MAX_LEN, D_MODEL), dtype=np.float32)
    position = np.arange(0, MAX_LEN, dtype=np.float32)[:, None]
    div_term = np.exp(np.arange(0, D_MODEL, 2, dtype=np.float32)
                      * (-math.log(10000.0) / D_MODEL))
    pe[:, 0::2] = np.sin(position * div_term)
    pe[:, 1::2] = np.cos(position * div_term)
    return jnp.asarray(pe)                           # (max_len, d_model)


def init_params(key):
    keys = jax.random.split(key, NUM_LAYERS + 2)
    layer_keys = [jax.random.split(keys[1 + i], 4) for i in range(NUM_LAYERS)]

    def stack(fn):
        return jnp.stack([fn(i) for i in range(NUM_LAYERS)], axis=0)

    params = {
        "embedding": jax.random.normal(keys[0], (VOCAB_SIZE, D_MODEL), jnp.float32) * 0.02,
        "pe": positional_encoding(),
        # matmul-operand weights in bf16 (f32 accumulation inside the kernel);
        # qkv columns are q|k|v, head-major within each block (matches the kernel split)
        "wqkv": stack(lambda i: (jax.random.normal(layer_keys[i][0], (D_MODEL, 3 * D_MODEL),
                                                   jnp.float32) * 0.02).astype(jnp.bfloat16)),
        "wo": stack(lambda i: (jax.random.normal(layer_keys[i][1], (D_MODEL, D_MODEL),
                                                 jnp.float32) * 0.02).astype(jnp.bfloat16)),
        "w1": stack(lambda i: (jax.random.normal(layer_keys[i][2], (D_MODEL, DFF),
                                                 jnp.float32) * 0.02).astype(jnp.bfloat16)),
        "w2": stack(lambda i: (jax.random.normal(layer_keys[i][3], (DFF, D_MODEL),
                                                 jnp.float32) * 0.02).astype(jnp.bfloat16)),
        # biases / LayerNorm params stay f32
        "bqkv": jnp.zeros((NUM_LAYERS, 1, 3 * D_MODEL), jnp.float32),
        "bo": jnp.zeros((NUM_LAYERS, 1, D_MODEL), jnp.float32),
        "b1": jnp.zeros((NUM_LAYERS, 1, DFF), jnp.float32),
        "b2": jnp.zeros((NUM_LAYERS, 1, D_MODEL), jnp.float32),
        "g1": jnp.ones((NUM_LAYERS, 1, D_MODEL), jnp.float32),
        "be1": jnp.zeros((NUM_LAYERS, 1, D_MODEL), jnp.float32),
        "g2": jnp.ones((NUM_LAYERS, 1, D_MODEL), jnp.float32),
        "be2": jnp.zeros((NUM_LAYERS, 1, D_MODEL), jnp.float32),
    }
    fc_w = jax.random.normal(keys[-1], (D_MODEL, NUM_CLASSES), jnp.float32) * 0.02
    # pad classifier columns to a full 128-lane width (lane-dense store); sliced outside
    params["fc_w"] = jnp.zeros((D_MODEL, FC_PAD), jnp.bfloat16).at[:, :NUM_CLASSES].set(
        fc_w.astype(jnp.bfloat16))
    params["fc_b"] = jnp.zeros((1, FC_PAD), jnp.float32)
    return params


if __name__ == "__main__":
    key = jax.random.PRNGKey(0)
    pkey, dkey = jax.random.split(key)
    params = init_params(pkey)

    B, S = 2, 8
    token_ids = jax.random.randint(dkey, (B, S), 0, VOCAB_SIZE, dtype=jnp.int32)

    logits = transformer_classifier_forward(token_ids, params)
    logits = jax.block_until_ready(logits)
    assert logits.shape == (B, NUM_CLASSES)
    assert logits.dtype == jnp.float32
    print("KERNEL_OK")
</pallas_src>

<mosaic_0001>
module attributes {stable_mosaic.version = 11 : i64} {
  func.func @fused_transformer_kernel(%arg0: i32, %arg1: memref<16x128xbf16, #tpu.memory_space<vmem>>, %arg2: memref<2x128x384xbf16, #tpu.memory_space<vmem>>, %arg3: memref<2x1x384xf32, #tpu.memory_space<vmem>>, %arg4: memref<2x128x128xbf16, #tpu.memory_space<vmem>>, %arg5: memref<2x1x128xf32, #tpu.memory_space<vmem>>, %arg6: memref<2x128x512xbf16, #tpu.memory_space<vmem>>, %arg7: memref<2x1x512xf32, #tpu.memory_space<vmem>>, %arg8: memref<2x512x128xbf16, #tpu.memory_space<vmem>>, %arg9: memref<2x1x128xf32, #tpu.memory_space<vmem>>, %arg10: memref<2x1x128xf32, #tpu.memory_space<vmem>>, %arg11: memref<2x1x128xf32, #tpu.memory_space<vmem>>, %arg12: memref<2x1x128xf32, #tpu.memory_space<vmem>>, %arg13: memref<2x1x128xf32, #tpu.memory_space<vmem>>, %arg14: memref<128x128xbf16, #tpu.memory_space<vmem>>, %arg15: memref<1x128xf32, #tpu.memory_space<vmem>>, %arg16: memref<2x128xf32, #tpu.memory_space<vmem>>, %arg17: memref<2x128xf32, #tpu.memory_space<vmem>>, %arg18: memref<16x128xbf16, #tpu.memory_space<vmem>>) attributes {dimension_semantics = [#tpu.dimension_semantics<arbitrary>], iteration_bounds = array<i64: 1>, scalar_prefetch = 0 : i64, scratch_operands = 2 : i64, tpu.core_type = #tpu.core_type<tc>, window_params = [{transform_indices = @transform_0, window_bounds = array<i64: 16, 128>}, {pipeline_mode = #tpu.pipeline_mode<synchronous>, transform_indices = @transform_1, window_bounds = array<i64: 2, 128, 384>}, {pipeline_mode = #tpu.pipeline_mode<synchronous>, transform_indices = @transform_2, window_bounds = array<i64: 2, 1, 384>}, {pipeline_mode = #tpu.pipeline_mode<synchronous>, transform_indices = @transform_3, window_bounds = array<i64: 2, 128, 128>}, {pipeline_mode = #tpu.pipeline_mode<synchronous>, transform_indices = @transform_4, window_bounds = array<i64: 2, 1, 128>}, {pipeline_mode = #tpu.pipeline_mode<synchronous>, transform_indices = @transform_5, window_bounds = array<i64: 2, 128, 512>}, {pipeline_mode = #tpu.pipeline_mode<synchronous>, transform_indices = @transform_6, window_bounds = array<i64: 2, 1, 512>}, {pipeline_mode = #tpu.pipeline_mode<synchronous>, transform_indices = @transform_7, window_bounds = array<i64: 2, 512, 128>}, {pipeline_mode = #tpu.pipeline_mode<synchronous>, transform_indices = @transform_8, window_bounds = array<i64: 2, 1, 128>}, {pipeline_mode = #tpu.pipeline_mode<synchronous>, transform_indices = @transform_9, window_bounds = array<i64: 2, 1, 128>}, {pipeline_mode = #tpu.pipeline_mode<synchronous>, transform_indices = @transform_10, window_bounds = array<i64: 2, 1, 128>}, {pipeline_mode = #tpu.pipeline_mode<synchronous>, transform_indices = @transform_11, window_bounds = array<i64: 2, 1, 128>}, {pipeline_mode = #tpu.pipeline_mode<synchronous>, transform_indices = @transform_12, window_bounds = array<i64: 2, 1, 128>}, {pipeline_mode = #tpu.pipeline_mode<synchronous>, transform_indices = @transform_13, window_bounds = array<i64: 128, 128>}, {pipeline_mode = #tpu.pipeline_mode<synchronous>, transform_indices = @transform_14, window_bounds = array<i64: 1, 128>}, {pipeline_mode = #tpu.pipeline_mode<synchronous>, transform_indices = @transform_15, window_bounds = array<i64: 2, 128>}]} {
    %c0_i32 = arith.constant 0 : i32
    %0 = arith.cmpi eq, %arg0, %c0_i32 : i32
    %1 = arith.extui %0 : i1 to i32
    %c0_i32_0 = arith.constant 0 : i32
    %2 = arith.cmpi ne, %1, %c0_i32_0 : i32
    scf.if %2 {
      %cst_136 = arith.constant 0.000000e+00 : f32
      %286 = vector.broadcast %cst_136 : f32 to vector<2x128xf32>
      %c0_137 = arith.constant 0 : index
      %c0_138 = arith.constant 0 : index
      %287 = vector.load %arg17[%c0_137, %c0_138] : memref<2x128xf32, #tpu.memory_space<vmem>>, vector<2x128xf32>
      tpu.vector_store %arg17[%c0_137, %c0_138], %286 {strides = array<i32>} : memref<2x128xf32, #tpu.memory_space<vmem>>, vector<2x128xf32>,
    } else {
    }
    %c0 = arith.constant 0 : index
    %c0_1 = arith.constant 0 : index
    %3 = vector.load %arg1[%c0, %c0_1] : memref<16x128xbf16, #tpu.memory_space<vmem>>, vector<16x128xbf16>
    %4 = arith.extf %3 : vector<16x128xbf16> to vector<16x128xf32>
    %c0_2 = arith.constant 0 : index
    %c0_3 = arith.constant 0 : index
    %c0_4 = arith.constant 0 : index
    %5 = vector.load %arg2[%c0_2, %c0_3, %c0_4] : memref<2x128x384xbf16, #tpu.memory_space<vmem>>, vector<1x128x384xbf16>
    %6 = vector.shape_cast %5 : vector<1x128x384xbf16> to vector<128x384xbf16>
    %c0_5 = arith.constant 0 : index
    %c0_6 = arith.constant 0 : index
    %c0_7 = arith.constant 0 : index
    %7 = vector.load %arg4[%c0_5, %c0_6, %c0_7] : memref<2x128x128xbf16, #tpu.memory_space<vmem>>, vector<1x128x128xbf16>
    %8 = vector.shape_cast %7 : vector<1x128x128xbf16> to vector<128x128xbf16>
    %c0_8 = arith.constant 0 : index
    %c0_9 = arith.constant 0 : index
    %c0_10 = arith.constant 0 : index
    %9 = vector.load %arg6[%c0_8, %c0_9, %c0_10] : memref<2x128x512xbf16, #tpu.memory_space<vmem>>, vector<1x128x512xbf16>
    %10 = vector.shape_cast %9 : vector<1x128x512xbf16> to vector<128x512xbf16>
    %c0_11 = arith.constant 0 : index
    %c0_12 = arith.constant 0 : index
    %c0_13 = arith.constant 0 : index
    %11 = vector.load %arg8[%c0_11, %c0_12, %c0_13] : memref<2x512x128xbf16, #tpu.memory_space<vmem>>, vector<1x512x128xbf16>
    %12 = vector.shape_cast %11 : vector<1x512x128xbf16> to vector<512x128xbf16>
    %cst = arith.constant dense<0.000000e+00> : vector<16x384xf32>
    %13 = tpu.matmul %3, %6, %cst {dimension_numbers = #tpu.dot_dimension_numbers<[1], [0], [0], [1], [0, 0, 1, 1], [], []>} : vector<16x128xbf16>, vector<128x384xbf16>, vector<16x384xf32> -> vector<16x384xf32>
    %c0_14 = arith.constant 0 : index
    %c0_15 = arith.constant 0 : index
    %c0_16 = arith.constant 0 : index
    %14 = vector.load %arg3[%c0_14, %c0_15, %c0_16] : memref<2x1x384xf32, #tpu.memory_space<vmem>>, vector<1x1x384xf32>
    %15 = vector.shape_cast %14 : vector<1x1x384xf32> to vector<1x384xf32>
    %16 = vector.broadcast %15 : vector<1x384xf32> to vector<16x384xf32>
    %17 = arith.addf %13, %16 : vector<16x384xf32>
    %18 = arith.truncf %17 : vector<16x384xf32> to vector<16x384xbf16>
    %19 = vector.extract_strided_slice %18 {offsets = [0, 0], sizes = [16, 128], strides = [1, 1]} : vector<16x384xbf16> to vector<16x128xbf16>
    %20 = vector.extract_strided_slice %19 {offsets = [0, 0], sizes = [16, 32], strides = [1, 1]} : vector<16x128xbf16> to vector<16x32xbf16>
    %21 = vector.extract_strided_slice %19 {offsets = [0, 32], sizes = [16, 32], strides = [1, 1]} : vector<16x128xbf16> to vector<16x32xbf16>
    %22 = vector.extract_strided_slice %19 {offsets = [0, 64], sizes = [16, 32], strides = [1, 1]} : vector<16x128xbf16> to vector<16x32xbf16>
    %23 = vector.extract_strided_slice %19 {offsets = [0, 96], sizes = [16, 32], strides = [1, 1]} : vector<16x128xbf16> to vector<16x32xbf16>
    %24 = tpu.concatenate %20, %21, %22, %23 in 0 : vector<16x32xbf16>, vector<16x32xbf16>, vector<16x32xbf16>, vector<16x32xbf16> -> vector<64x32xbf16>
    %25 = vector.shape_cast %24 : vector<64x32xbf16> to vector<32x2x32xbf16>
    %26 = vector.extract_strided_slice %18 {offsets = [0, 128], sizes = [16, 128], strides = [1, 1]} : vector<16x384xbf16> to vector<16x128xbf16>
    %27 = vector.extract_strided_slice %26 {offsets = [0, 0], sizes = [16, 32], strides = [1, 1]} : vector<16x128xbf16> to vector<16x32xbf16>
    %28 = vector.extract_strided_slice %26 {offsets = [0, 32], sizes = [16, 32], strides = [1, 1]} : vector<16x128xbf16> to vector<16x32xbf16>
    %29 = vector.extract_strided_slice %26 {offsets = [0, 64], sizes = [16, 32], strides = [1, 1]} : vector<16x128xbf16> to vector<16x32xbf16>
    %30 = vector.extract_strided_slice %26 {offsets = [0, 96], sizes = [16, 32], strides = [1, 1]} : vector<16x128xbf16> to vector<16x32xbf16>
    %31 = tpu.concatenate %27, %28, %29, %30 in 0 : vector<16x32xbf16>, vector<16x32xbf16>, vector<16x32xbf16>, vector<16x32xbf16> -> vector<64x32xbf16>
    %32 = vector.shape_cast %31 : vector<64x32xbf16> to vector<32x2x32xbf16>
    %33 = vector.extract_strided_slice %18 {offsets = [0, 256], sizes = [16, 128], strides = [1, 1]} : vector<16x384xbf16> to vector<16x128xbf16>
    %34 = vector.extract_strided_slice %33 {offsets = [0, 0], sizes = [16, 32], strides = [1, 1]} : vector<16x128xbf16> to vector<16x32xbf16>
    %35 = vector.extract_strided_slice %33 {offsets = [0, 32], sizes = [16, 32], strides = [1, 1]} : vector<16x128xbf16> to vector<16x32xbf16>
    %36 = vector.extract_strided_slice %33 {offsets = [0, 64], sizes = [16, 32], strides = [1, 1]} : vector<16x128xbf16> to vector<16x32xbf16>
    %37 = vector.extract_strided_slice %33 {offsets = [0, 96], sizes = [16, 32], strides = [1, 1]} : vector<16x128xbf16> to vector<16x32xbf16>
    %38 = tpu.concatenate %34, %35, %36, %37 in 0 : vector<16x32xbf16>, vector<16x32xbf16>, vector<16x32xbf16>, vector<16x32xbf16> -> vector<64x32xbf16>
    %39 = vector.shape_cast %38 : vector<64x32xbf16> to vector<32x2x32xbf16>
    "tpu.trace_start"() <{level = 10 : i32, message = "bqd,bkd->bqk"}> : () -> ()
    %cst_17 = arith.constant dense<0.000000e+00> : vector<32x2x2xf32>
    %40 = tpu.matmul %25, %32, %cst_17 {dimension_numbers = #tpu.dot_dimension_numbers<[2], [2], [1], [1], [0, 0, 0, 1, 1, 1], [0], [0]>} : vector<32x2x32xbf16>, vector<32x2x32xbf16>, vector<32x2x2xf32> -> vector<32x2x2xf32>
    "tpu.trace_stop"() : () -> ()
    %cst_18 = arith.constant 0.176776692 : f32
    %41 = vector.broadcast %cst_18 : f32 to vector<32x2x2xf32>
    %42 = arith.mulf %40, %41 : vector<32x2x2xf32>
    %cst_19 = arith.constant dense<0xFF800000> : vector<32x2xf32>
    %43 = vector.multi_reduction <maximumf>, %42, %cst_19 [2] : vector<32x2x2xf32> to vector<32x2xf32>
    %44 = vector.shape_cast %43 : vector<32x2xf32> to vector<32x2x1xf32>
    %45 = vector.broadcast %44 : vector<32x2x1xf32> to vector<32x2x2xf32>
    %46 = arith.subf %42, %45 : vector<32x2x2xf32>
    %47 = math.exp %46 : vector<32x2x2xf32>
    %cst_20 = arith.constant dense<0.000000e+00> : vector<32x2xf32>
    %48 = vector.multi_reduction <add>, %47, %cst_20 [2] : vector<32x2x2xf32> to vector<32x2xf32>
    %49 = vector.shape_cast %48 : vector<32x2xf32> to vector<32x2x1xf32>
    %50 = vector.broadcast %49 : vector<32x2x1xf32> to vector<32x2x2xf32>
    %51 = arith.divf %47, %50 : vector<32x2x2xf32>
    %52 = arith.truncf %51 : vector<32x2x2xf32> to vector<32x2x2xbf16>
    "tpu.trace_start"() <{level = 10 : i32, message = "bqk,bkd->bqd"}> : () -> ()
    %cst_21 = arith.constant dense<0.000000e+00> : vector<32x2x32xf32>
    %53 = tpu.matmul %52, %39, %cst_21 {dimension_numbers = #tpu.dot_dimension_numbers<[2], [1], [1], [2], [0, 0, 0, 1, 1, 2], [0], [0]>} : vector<32x2x2xbf16>, vector<32x2x32xbf16>, vector<32x2x32xf32> -> vector<32x2x32xf32>
    "tpu.trace_stop"() : () -> ()
    %54 = vector.shape_cast %53 : vector<32x2x32xf32> to vector<64x32xf32>
    %55 = vector.extract_strided_slice %54 {offsets = [0, 0], sizes = [16, 32], strides = [1, 1]} : vector<64x32xf32> to vector<16x32xf32>
    %56 = arith.truncf %55 : vector<16x32xf32> to vector<16x32xbf16>
    %c0_22 = arith.constant 0 : index
    %c0_23 = arith.constant 0 : index
    %57 = vector.load %arg18[%c0_22, %c0_23] : memref<16x128xbf16, #tpu.memory_space<vmem>>, vector<16x32xbf16>
    tpu.vector_store %arg18[%c0_22, %c0_23], %56 {strides = array<i32>} : memref<16x128xbf16, #tpu.memory_space<vmem>>, vector<16x32xbf16>,
    %58 = vector.extract_strided_slice %54 {offsets = [16, 0], sizes = [16, 32], strides = [1, 1]} : vector<64x32xf32> to vector<16x32xf32>
    %59 = arith.truncf %58 : vector<16x32xf32> to vector<16x32xbf16>
    %c0_24 = arith.constant 0 : index
    %c32 = arith.constant 32 : index
    %60 = vector.load %arg18[%c0_24, %c32] : memref<16x128xbf16, #tpu.memory_space<vmem>>, vector<16x32xbf16>
    tpu.vector_store %arg18[%c0_24, %c32], %59 {strides = array<i32>} : memref<16x128xbf16, #tpu.memory_space<vmem>>, vector<16x32xbf16>,
    %61 = vector.extract_strided_slice %54 {offsets = [32, 0], sizes = [16, 32], strides = [1, 1]} : vector<64x32xf32> to vector<16x32xf32>
    %62 = arith.truncf %61 : vector<16x32xf32> to vector<16x32xbf16>
    %c0_25 = arith.constant 0 : index
    %c64 = arith.constant 64 : index
    %63 = vector.load %arg18[%c0_25, %c64] : memref<16x128xbf16, #tpu.memory_space<vmem>>, vector<16x32xbf16>
    tpu.vector_store %arg18[%c0_25, %c64], %62 {strides = array<i32>} : memref<16x128xbf16, #tpu.memory_space<vmem>>, vector<16x32xbf16>,
    %64 = vector.extract_strided_slice %54 {offsets = [48, 0], sizes = [16, 32], strides = [1, 1]} : vector<64x32xf32> to vector<16x32xf32>
    %65 = arith.truncf %64 : vector<16x32xf32> to vector<16x32xbf16>
    %c0_26 = arith.constant 0 : index
    %c96 = arith.constant 96 : index
    %66 = vector.load %arg18[%c0_26, %c96] : memref<16x128xbf16, #tpu.memory_space<vmem>>, vector<16x32xbf16>
    tpu.vector_store %arg18[%c0_26, %c96], %65 {strides = array<i32>} : memref<16x128xbf16, #tpu.memory_space<vmem>>, vector<16x32xbf16>,
    %c0_27 = arith.constant 0 : index
    %c0_28 = arith.constant 0 : index
    %67 = vector.load %arg18[%c0_27, %c0_28] : memref<16x128xbf16, #tpu.memory_space<vmem>>, vector<16x128xbf16>
    %cst_29 = arith.constant dense<0.000000e+00> : vector<16x128xf32>
    %68 = tpu.matmul %67, %8, %cst_29 {dimension_numbers = #tpu.dot_dimension_numbers<[1], [0], [0], [1], [0, 0, 1, 1], [], []>} : vector<16x128xbf16>, vector<128x128xbf16>, vector<16x128xf32> -> vector<16x128xf32>
    %c0_30 = arith.constant 0 : index
    %c0_31 = arith.constant 0 : index
    %c0_32 = arith.constant 0 : index
    %69 = vector.load %arg5[%c0_30, %c0_31, %c0_32] : memref<2x1x128xf32, #tpu.memory_space<vmem>>, vector<1x1x128xf32>
    %70 = vector.shape_cast %69 : vector<1x1x128xf32> to vector<1x128xf32>
    %71 = vector.broadcast %70 : vector<1x128xf32> to vector<16x128xf32>
    %72 = arith.addf %68, %71 : vector<16x128xf32>
    %73 = arith.addf %4, %72 : vector<16x128xf32>
    %c0_33 = arith.constant 0 : index
    %c0_34 = arith.constant 0 : index
    %c0_35 = arith.constant 0 : index
    %74 = vector.load %arg10[%c0_33, %c0_34, %c0_35] : memref<2x1x128xf32, #tpu.memory_space<vmem>>, vector<1x1x128xf32>
    %75 = vector.shape_cast %74 : vector<1x1x128xf32> to vector<1x128xf32>
    %c0_36 = arith.constant 0 : index
    %c0_37 = arith.constant 0 : index
    %c0_38 = arith.constant 0 : index
    %76 = vector.load %arg11[%c0_36, %c0_37, %c0_38] : memref<2x1x128xf32, #tpu.memory_space<vmem>>, vector<1x1x128xf32>
    %77 = vector.shape_cast %76 : vector<1x1x128xf32> to vector<1x128xf32>
    %cst_39 = arith.constant dense<0.000000e+00> : vector<16xf32>
    %78 = vector.multi_reduction <add>, %73, %cst_39 [1] : vector<16x128xf32> to vector<16xf32>
    %79 = vector.shape_cast %78 : vector<16xf32> to vector<16x1xf32>
    %cst_40 = arith.constant 1.280000e+02 : f32
    %80 = vector.broadcast %cst_40 : f32 to vector<16x1xf32>
    %81 = arith.divf %79, %80 : vector<16x1xf32>
    %82 = vector.broadcast %81 : vector<16x1xf32> to vector<16x128xf32>
    %83 = arith.subf %73, %82 : vector<16x128xf32>
    %84 = arith.mulf %83, %83 : vector<16x128xf32>
    %cst_41 = arith.constant dense<0.000000e+00> : vector<16xf32>
    %85 = vector.multi_reduction <add>, %84, %cst_41 [1] : vector<16x128xf32> to vector<16xf32>
    %86 = vector.shape_cast %85 : vector<16xf32> to vector<16x1xf32>
    %cst_42 = arith.constant 1.280000e+02 : f32
    %87 = vector.broadcast %cst_42 : f32 to vector<16x1xf32>
    %88 = arith.divf %86, %87 : vector<16x1xf32>
    %89 = vector.broadcast %81 : vector<16x1xf32> to vector<16x128xf32>
    %90 = arith.subf %73, %89 : vector<16x128xf32>
    %cst_43 = arith.constant 9.99999974E-6 : f32
    %91 = vector.broadcast %cst_43 : f32 to vector<16x1xf32>
    %92 = arith.addf %88, %91 : vector<16x1xf32>
    %93 = math.rsqrt %92 : vector<16x1xf32>
    %94 = vector.broadcast %93 : vector<16x1xf32> to vector<16x128xf32>
    %95 = arith.mulf %90, %94 : vector<16x128xf32>
    %96 = vector.broadcast %75 : vector<1x128xf32> to vector<16x128xf32>
    %97 = arith.mulf %95, %96 : vector<16x128xf32>
    %98 = vector.broadcast %77 : vector<1x128xf32> to vector<16x128xf32>
    %99 = arith.addf %97, %98 : vector<16x128xf32>
    %100 = arith.truncf %99 : vector<16x128xf32> to vector<16x128xbf16>
    %cst_44 = arith.constant dense<0.000000e+00> : vector<16x512xf32>
    %101 = tpu.matmul %100, %10, %cst_44 {dimension_numbers = #tpu.dot_dimension_numbers<[1], [0], [0], [1], [0, 0, 1, 1], [], []>} : vector<16x128xbf16>, vector<128x512xbf16>, vector<16x512xf32> -> vector<16x512xf32>
    %c0_45 = arith.constant 0 : index
    %c0_46 = arith.constant 0 : index
    %c0_47 = arith.constant 0 : index
    %102 = vector.load %arg7[%c0_45, %c0_46, %c0_47] : memref<2x1x512xf32, #tpu.memory_space<vmem>>, vector<1x1x512xf32>
    %103 = vector.shape_cast %102 : vector<1x1x512xf32> to vector<1x512xf32>
    %104 = vector.broadcast %103 : vector<1x512xf32> to vector<16x512xf32>
    %105 = arith.addf %101, %104 : vector<16x512xf32>
    %cst_48 = arith.constant 0.000000e+00 : f32
    %106 = vector.broadcast %cst_48 : f32 to vector<16x512xf32>
    %107 = arith.maximumf %105, %106 : vector<16x512xf32>
    %108 = arith.truncf %107 : vector<16x512xf32> to vector<16x512xbf16>
    %cst_49 = arith.constant dense<0.000000e+00> : vector<16x128xf32>
    %109 = tpu.matmul %108, %12, %cst_49 {dimension_numbers = #tpu.dot_dimension_numbers<[1], [0], [0], [1], [0, 0, 1, 1], [], []>} : vector<16x512xbf16>, vector<512x128xbf16>, vector<16x128xf32> -> vector<16x128xf32>
    %c0_50 = arith.constant 0 : index
    %c0_51 = arith.constant 0 : index
    %c0_52 = arith.constant 0 : index
    %110 = vector.load %arg9[%c0_50, %c0_51, %c0_52] : memref<2x1x128xf32, #tpu.memory_space<vmem>>, vector<1x1x128xf32>
    %111 = vector.shape_cast %110 : vector<1x1x128xf32> to vector<1x128xf32>
    %112 = vector.broadcast %111 : vector<1x128xf32> to vector<16x128xf32>
    %113 = arith.addf %109, %112 : vector<16x128xf32>
    %114 = arith.addf %99, %113 : vector<16x128xf32>
    %c0_53 = arith.constant 0 : index
    %c0_54 = arith.constant 0 : index
    %c0_55 = arith.constant 0 : index
    %115 = vector.load %arg12[%c0_53, %c0_54, %c0_55] : memref<2x1x128xf32, #tpu.memory_space<vmem>>, vector<1x1x128xf32>
    %116 = vector.shape_cast %115 : vector<1x1x128xf32> to vector<1x128xf32>
    %c0_56 = arith.constant 0 : index
    %c0_57 = arith.constant 0 : index
    %c0_58 = arith.constant 0 : index
    %117 = vector.load %arg13[%c0_56, %c0_57, %c0_58] : memref<2x1x128xf32, #tpu.memory_space<vmem>>, vector<1x1x128xf32>
    %118 = vector.shape_cast %117 : vector<1x1x128xf32> to vector<1x128xf32>
    %cst_59 = arith.constant dense<0.000000e+00> : vector<16xf32>
    %119 = vector.multi_reduction <add>, %114, %cst_59 [1] : vector<16x128xf32> to vector<16xf32>
    %120 = vector.shape_cast %119 : vector<16xf32> to vector<16x1xf32>
    %cst_60 = arith.constant 1.280000e+02 : f32
    %121 = vector.broadcast %cst_60 : f32 to vector<16x1xf32>
    %122 = arith.divf %120, %121 : vector<16x1xf32>
    %123 = vector.broadcast %122 : vector<16x1xf32> to vector<16x128xf32>
    %124 = arith.subf %114, %123 : vector<16x128xf32>
    %125 = arith.mulf %124, %124 : vector<16x128xf32>
    %cst_61 = arith.constant dense<0.000000e+00> : vector<16xf32>
    %126 = vector.multi_reduction <add>, %125, %cst_61 [1] : vector<16x128xf32> to vector<16xf32>
    %127 = vector.shape_cast %126 : vector<16xf32> to vector<16x1xf32>
    %cst_62 = arith.constant 1.280000e+02 : f32
    %128 = vector.broadcast %cst_62 : f32 to vector<16x1xf32>
    %129 = arith.divf %127, %128 : vector<16x1xf32>
    %130 = vector.broadcast %122 : vector<16x1xf32> to vector<16x128xf32>
    %131 = arith.subf %114, %130 : vector<16x128xf32>
    %cst_63 = arith.constant 9.99999974E-6 : f32
    %132 = vector.broadcast %cst_63 : f32 to vector<16x1xf32>
    %133 = arith.addf %129, %132 : vector<16x1xf32>
    %134 = math.rsqrt %133 : vector<16x1xf32>
    %135 = vector.broadcast %134 : vector<16x1xf32> to vector<16x128xf32>
    %136 = arith.mulf %131, %135 : vector<16x128xf32>
    %137 = vector.broadcast %116 : vector<1x128xf32> to vector<16x128xf32>
    %138 = arith.mulf %136, %137 : vector<16x128xf32>
    %139 = vector.broadcast %118 : vector<1x128xf32> to vector<16x128xf32>
    %140 = arith.addf %138, %139 : vector<16x128xf32>
    %141 = arith.truncf %140 : vector<16x128xf32> to vector<16x128xbf16>
    %c1 = arith.constant 1 : index
    %c0_64 = arith.constant 0 : index
    %c0_65 = arith.constant 0 : index
    %142 = vector.load %arg2[%c1, %c0_64, %c0_65] : memref<2x128x384xbf16, #tpu.memory_space<vmem>>, vector<1x128x384xbf16>
    %143 = vector.shape_cast %142 : vector<1x128x384xbf16> to vector<128x384xbf16>
    %c1_66 = arith.constant 1 : index
    %c0_67 = arith.constant 0 : index
    %c0_68 = arith.constant 0 : index
    %144 = vector.load %arg4[%c1_66, %c0_67, %c0_68] : memref<2x128x128xbf16, #tpu.memory_space<vmem>>, vector<1x128x128xbf16>
    %145 = vector.shape_cast %144 : vector<1x128x128xbf16> to vector<128x128xbf16>
    %c1_69 = arith.constant 1 : index
    %c0_70 = arith.constant 0 : index
    %c0_71 = arith.constant 0 : index
    %146 = vector.load %arg6[%c1_69, %c0_70, %c0_71] : memref<2x128x512xbf16, #tpu.memory_space<vmem>>, vector<1x128x512xbf16>
    %147 = vector.shape_cast %146 : vector<1x128x512xbf16> to vector<128x512xbf16>
    %c1_72 = arith.constant 1 : index
    %c0_73 = arith.constant 0 : index
    %c0_74 = arith.constant 0 : index
    %148 = vector.load %arg8[%c1_72, %c0_73, %c0_74] : memref<2x512x128xbf16, #tpu.memory_space<vmem>>, vector<1x512x128xbf16>
    %149 = vector.shape_cast %148 : vector<1x512x128xbf16> to vector<512x128xbf16>
    %cst_75 = arith.constant dense<0.000000e+00> : vector<16x384xf32>
    %150 = tpu.matmul %141, %143, %cst_75 {dimension_numbers = #tpu.dot_dimension_numbers<[1], [0], [0], [1], [0, 0, 1, 1], [], []>} : vector<16x128xbf16>, vector<128x384xbf16>, vector<16x384xf32> -> vector<16x384xf32>
    %c1_76 = arith.constant 1 : index
    %c0_77 = arith.constant 0 : index
    %c0_78 = arith.constant 0 : index
    %151 = vector.load %arg3[%c1_76, %c0_77, %c0_78] : memref<2x1x384xf32, #tpu.memory_space<vmem>>, vector<1x1x384xf32>
    %152 = vector.shape_cast %151 : vector<1x1x384xf32> to vector<1x384xf32>
    %153 = vector.broadcast %152 : vector<1x384xf32> to vector<16x384xf32>
    %154 = arith.addf %150, %153 : vector<16x384xf32>
    %155 = arith.truncf %154 : vector<16x384xf32> to vector<16x384xbf16>
    %156 = vector.extract_strided_slice %155 {offsets = [0, 0], sizes = [16, 128], strides = [1, 1]} : vector<16x384xbf16> to vector<16x128xbf16>
    %157 = vector.extract_strided_slice %156 {offsets = [0, 0], sizes = [16, 32], strides = [1, 1]} : vector<16x128xbf16> to vector<16x32xbf16>
    %158 = vector.extract_strided_slice %156 {offsets = [0, 32], sizes = [16, 32], strides = [1, 1]} : vector<16x128xbf16> to vector<16x32xbf16>
    %159 = vector.extract_strided_slice %156 {offsets = [0, 64], sizes = [16, 32], strides = [1, 1]} : vector<16x128xbf16> to vector<16x32xbf16>
    %160 = vector.extract_strided_slice %156 {offsets = [0, 96], sizes = [16, 32], strides = [1, 1]} : vector<16x128xbf16> to vector<16x32xbf16>
    %161 = tpu.concatenate %157, %158, %159, %160 in 0 : vector<16x32xbf16>, vector<16x32xbf16>, vector<16x32xbf16>, vector<16x32xbf16> -> vector<64x32xbf16>
    %162 = vector.shape_cast %161 : vector<64x32xbf16> to vector<32x2x32xbf16>
    %163 = vector.extract_strided_slice %155 {offsets = [0, 128], sizes = [16, 128], strides = [1, 1]} : vector<16x384xbf16> to vector<16x128xbf16>
    %164 = vector.extract_strided_slice %163 {offsets = [0, 0], sizes = [16, 32], strides = [1, 1]} : vector<16x128xbf16> to vector<16x32xbf16>
    %165 = vector.extract_strided_slice %163 {offsets = [0, 32], sizes = [16, 32], strides = [1, 1]} : vector<16x128xbf16> to vector<16x32xbf16>
    %166 = vector.extract_strided_slice %163 {offsets = [0, 64], sizes = [16, 32], strides = [1, 1]} : vector<16x128xbf16> to vector<16x32xbf16>
    %167 = vector.extract_strided_slice %163 {offsets = [0, 96], sizes = [16, 32], strides = [1, 1]} : vector<16x128xbf16> to vector<16x32xbf16>
    %168 = tpu.concatenate %164, %165, %166, %167 in 0 : vector<16x32xbf16>, vector<16x32xbf16>, vector<16x32xbf16>, vector<16x32xbf16> -> vector<64x32xbf16>
    %169 = vector.shape_cast %168 : vector<64x32xbf16> to vector<32x2x32xbf16>
    %170 = vector.extract_strided_slice %155 {offsets = [0, 256], sizes = [16, 128], strides = [1, 1]} : vector<16x384xbf16> to vector<16x128xbf16>
    %171 = vector.extract_strided_slice %170 {offsets = [0, 0], sizes = [16, 32], strides = [1, 1]} : vector<16x128xbf16> to vector<16x32xbf16>
    %172 = vector.extract_strided_slice %170 {offsets = [0, 32], sizes = [16, 32], strides = [1, 1]} : vector<16x128xbf16> to vector<16x32xbf16>
    %173 = vector.extract_strided_slice %170 {offsets = [0, 64], sizes = [16, 32], strides = [1, 1]} : vector<16x128xbf16> to vector<16x32xbf16>
    %174 = vector.extract_strided_slice %170 {offsets = [0, 96], sizes = [16, 32], strides = [1, 1]} : vector<16x128xbf16> to vector<16x32xbf16>
    %175 = tpu.concatenate %171, %172, %173, %174 in 0 : vector<16x32xbf16>, vector<16x32xbf16>, vector<16x32xbf16>, vector<16x32xbf16> -> vector<64x32xbf16>
    %176 = vector.shape_cast %175 : vector<64x32xbf16> to vector<32x2x32xbf16>
    "tpu.trace_start"() <{level = 10 : i32, message = "bqd,bkd->bqk"}> : () -> ()
    %cst_79 = arith.constant dense<0.000000e+00> : vector<32x2x2xf32>
    %177 = tpu.matmul %162, %169, %cst_79 {dimension_numbers = #tpu.dot_dimension_numbers<[2], [2], [1], [1], [0, 0, 0, 1, 1, 1], [0], [0]>} : vector<32x2x32xbf16>, vector<32x2x32xbf16>, vector<32x2x2xf32> -> vector<32x2x2xf32>
    "tpu.trace_stop"() : () -> ()
    %cst_80 = arith.constant 0.176776692 : f32
    %178 = vector.broadcast %cst_80 : f32 to vector<32x2x2xf32>
    %179 = arith.mulf %177, %178 : vector<32x2x2xf32>
    %cst_81 = arith.constant dense<0xFF800000> : vector<32x2xf32>
    %180 = vector.multi_reduction <maximumf>, %179, %cst_81 [2] : vector<32x2x2xf32> to vector<32x2xf32>
    %181 = vector.shape_cast %180 : vector<32x2xf32> to vector<32x2x1xf32>
    %182 = vector.broadcast %181 : vector<32x2x1xf32> to vector<32x2x2xf32>
    %183 = arith.subf %179, %182 : vector<32x2x2xf32>
    %184 = math.exp %183 : vector<32x2x2xf32>
    %cst_82 = arith.constant dense<0.000000e+00> : vector<32x2xf32>
    %185 = vector.multi_reduction <add>, %184, %cst_82 [2] : vector<32x2x2xf32> to vector<32x2xf32>
    %186 = vector.shape_cast %185 : vector<32x2xf32> to vector<32x2x1xf32>
    %187 = vector.broadcast %186 : vector<32x2x1xf32> to vector<32x2x2xf32>
    %188 = arith.divf %184, %187 : vector<32x2x2xf32>
    %189 = arith.truncf %188 : vector<32x2x2xf32> to vector<32x2x2xbf16>
    "tpu.trace_start"() <{level = 10 : i32, message = "bqk,bkd->bqd"}> : () -> ()
    %cst_83 = arith.constant dense<0.000000e+00> : vector<32x2x32xf32>
    %190 = tpu.matmul %189, %176, %cst_83 {dimension_numbers = #tpu.dot_dimension_numbers<[2], [1], [1], [2], [0, 0, 0, 1, 1, 2], [0], [0]>} : vector<32x2x2xbf16>, vector<32x2x32xbf16>, vector<32x2x32xf32> -> vector<32x2x32xf32>
    "tpu.trace_stop"() : () -> ()
    %191 = vector.shape_cast %190 : vector<32x2x32xf32> to vector<64x32xf32>
    %192 = vector.extract_strided_slice %191 {offsets = [0, 0], sizes = [16, 32], strides = [1, 1]} : vector<64x32xf32> to vector<16x32xf32>
    %193 = arith.truncf %192 : vector<16x32xf32> to vector<16x32xbf16>
    %c0_84 = arith.constant 0 : index
    %c0_85 = arith.constant 0 : index
    %194 = vector.load %arg18[%c0_84, %c0_85] : memref<16x128xbf16, #tpu.memory_space<vmem>>, vector<16x32xbf16>
    tpu.vector_store %arg18[%c0_84, %c0_85], %193 {strides = array<i32>} : memref<16x128xbf16, #tpu.memory_space<vmem>>, vector<16x32xbf16>,
    %195 = vector.extract_strided_slice %191 {offsets = [16, 0], sizes = [16, 32], strides = [1, 1]} : vector<64x32xf32> to vector<16x32xf32>
    %196 = arith.truncf %195 : vector<16x32xf32> to vector<16x32xbf16>
    %c0_86 = arith.constant 0 : index
    %c32_87 = arith.constant 32 : index
    %197 = vector.load %arg18[%c0_86, %c32_87] : memref<16x128xbf16, #tpu.memory_space<vmem>>, vector<16x32xbf16>
    tpu.vector_store %arg18[%c0_86, %c32_87], %196 {strides = array<i32>} : memref<16x128xbf16, #tpu.memory_space<vmem>>, vector<16x32xbf16>,
    %198 = vector.extract_strided_slice %191 {offsets = [32, 0], sizes = [16, 32], strides = [1, 1]} : vector<64x32xf32> to vector<16x32xf32>
    %199 = arith.truncf %198 : vector<16x32xf32> to vector<16x32xbf16>
    %c0_88 = arith.constant 0 : index
    %c64_89 = arith.constant 64 : index
    %200 = vector.load %arg18[%c0_88, %c64_89] : memref<16x128xbf16, #tpu.memory_space<vmem>>, vector<16x32xbf16>
    tpu.vector_store %arg18[%c0_88, %c64_89], %199 {strides = array<i32>} : memref<16x128xbf16, #tpu.memory_space<vmem>>, vector<16x32xbf16>,
    %201 = vector.extract_strided_slice %191 {offsets = [48, 0], sizes = [16, 32], strides = [1, 1]} : vector<64x32xf32> to vector<16x32xf32>
    %202 = arith.truncf %201 : vector<16x32xf32> to vector<16x32xbf16>
    %c0_90 = arith.constant 0 : index
    %c96_91 = arith.constant 96 : index
    %203 = vector.load %arg18[%c0_90, %c96_91] : memref<16x128xbf16, #tpu.memory_space<vmem>>, vector<16x32xbf16>
    tpu.vector_store %arg18[%c0_90, %c96_91], %202 {strides = array<i32>} : memref<16x128xbf16, #tpu.memory_space<vmem>>, vector<16x32xbf16>,
    %c0_92 = arith.constant 0 : index
    %c0_93 = arith.constant 0 : index
    %204 = vector.load %arg18[%c0_92, %c0_93] : memref<16x128xbf16, #tpu.memory_space<vmem>>, vector<16x128xbf16>
    %cst_94 = arith.constant dense<0.000000e+00> : vector<16x128xf32>
    %205 = tpu.matmul %204, %145, %cst_94 {dimension_numbers = #tpu.dot_dimension_numbers<[1], [0], [0], [1], [0, 0, 1, 1], [], []>} : vector<16x128xbf16>, vector<128x128xbf16>, vector<16x128xf32> -> vector<16x128xf32>
    %c1_95 = arith.constant 1 : index
    %c0_96 = arith.constant 0 : index
    %c0_97 = arith.constant 0 : index
    %206 = vector.load %arg5[%c1_95, %c0_96, %c0_97] : memref<2x1x128xf32, #tpu.memory_space<vmem>>, vector<1x1x128xf32>
    %207 = vector.shape_cast %206 : vector<1x1x128xf32> to vector<1x128xf32>
    %208 = vector.broadcast %207 : vector<1x128xf32> to vector<16x128xf32>
    %209 = arith.addf %205, %208 : vector<16x128xf32>
    %210 = arith.addf %140, %209 : vector<16x128xf32>
    %c1_98 = arith.constant 1 : index
    %c0_99 = arith.constant 0 : index
    %c0_100 = arith.constant 0 : index
    %211 = vector.load %arg10[%c1_98, %c0_99, %c0_100] : memref<2x1x128xf32, #tpu.memory_space<vmem>>, vector<1x1x128xf32>
    %212 = vector.shape_cast %211 : vector<1x1x128xf32> to vector<1x128xf32>
    %c1_101 = arith.constant 1 : index
    %c0_102 = arith.constant 0 : index
    %c0_103 = arith.constant 0 : index
    %213 = vector.load %arg11[%c1_101, %c0_102, %c0_103] : memref<2x1x128xf32, #tpu.memory_space<vmem>>, vector<1x1x128xf32>
    %214 = vector.shape_cast %213 : vector<1x1x128xf32> to vector<1x128xf32>
    %cst_104 = arith.constant dense<0.000000e+00> : vector<16xf32>
    %215 = vector.multi_reduction <add>, %210, %cst_104 [1] : vector<16x128xf32> to vector<16xf32>
    %216 = vector.shape_cast %215 : vector<16xf32> to vector<16x1xf32>
    %cst_105 = arith.constant 1.280000e+02 : f32
    %217 = vector.broadcast %cst_105 : f32 to vector<16x1xf32>
    %218 = arith.divf %216, %217 : vector<16x1xf32>
    %219 = vector.broadcast %218 : vector<16x1xf32> to vector<16x128xf32>
    %220 = arith.subf %210, %219 : vector<16x128xf32>
    %221 = arith.mulf %220, %220 : vector<16x128xf32>
    %cst_106 = arith.constant dense<0.000000e+00> : vector<16xf32>
    %222 = vector.multi_reduction <add>, %221, %cst_106 [1] : vector<16x128xf32> to vector<16xf32>
    %223 = vector.shape_cast %222 : vector<16xf32> to vector<16x1xf32>
    %cst_107 = arith.constant 1.280000e+02 : f32
    %224 = vector.broadcast %cst_107 : f32 to vector<16x1xf32>
    %225 = arith.divf %223, %224 : vector<16x1xf32>
    %226 = vector.broadcast %218 : vector<16x1xf32> to vector<16x128xf32>
    %227 = arith.subf %210, %226 : vector<16x128xf32>
    %cst_108 = arith.constant 9.99999974E-6 : f32
    %228 = vector.broadcast %cst_108 : f32 to vector<16x1xf32>
    %229 = arith.addf %225, %228 : vector<16x1xf32>
    %230 = math.rsqrt %229 : vector<16x1xf32>
    %231 = vector.broadcast %230 : vector<16x1xf32> to vector<16x128xf32>
    %232 = arith.mulf %227, %231 : vector<16x128xf32>
    %233 = vector.broadcast %212 : vector<1x128xf32> to vector<16x128xf32>
    %234 = arith.mulf %232, %233 : vector<16x128xf32>
    %235 = vector.broadcast %214 : vector<1x128xf32> to vector<16x128xf32>
    %236 = arith.addf %234, %235 : vector<16x128xf32>
    %237 = arith.truncf %236 : vector<16x128xf32> to vector<16x128xbf16>
    %cst_109 = arith.constant dense<0.000000e+00> : vector<16x512xf32>
    %238 = tpu.matmul %237, %147, %cst_109 {dimension_numbers = #tpu.dot_dimension_numbers<[1], [0], [0], [1], [0, 0, 1, 1], [], []>} : vector<16x128xbf16>, vector<128x512xbf16>, vector<16x512xf32> -> vector<16x512xf32>
    %c1_110 = arith.constant 1 : index
    %c0_111 = arith.constant 0 : index
    %c0_112 = arith.constant 0 : index
    %239 = vector.load %arg7[%c1_110, %c0_111, %c0_112] : memref<2x1x512xf32, #tpu.memory_space<vmem>>, vector<1x1x512xf32>
    %240 = vector.shape_cast %239 : vector<1x1x512xf32> to vector<1x512xf32>
    %241 = vector.broadcast %240 : vector<1x512xf32> to vector<16x512xf32>
    %242 = arith.addf %238, %241 : vector<16x512xf32>
    %cst_113 = arith.constant 0.000000e+00 : f32
    %243 = vector.broadcast %cst_113 : f32 to vector<16x512xf32>
    %244 = arith.maximumf %242, %243 : vector<16x512xf32>
    %245 = arith.truncf %244 : vector<16x512xf32> to vector<16x512xbf16>
    %cst_114 = arith.constant dense<0.000000e+00> : vector<16x128xf32>
    %246 = tpu.matmul %245, %149, %cst_114 {dimension_numbers = #tpu.dot_dimension_numbers<[1], [0], [0], [1], [0, 0, 1, 1], [], []>} : vector<16x512xbf16>, vector<512x128xbf16>, vector<16x128xf32> -> vector<16x128xf32>
    %c1_115 = arith.constant 1 : index
    %c0_116 = arith.constant 0 : index
    %c0_117 = arith.constant 0 : index
    %247 = vector.load %arg9[%c1_115, %c0_116, %c0_117] : memref<2x1x128xf32, #tpu.memory_space<vmem>>, vector<1x1x128xf32>
    %248 = vector.shape_cast %247 : vector<1x1x128xf32> to vector<1x128xf32>
    %249 = vector.broadcast %248 : vector<1x128xf32> to vector<16x128xf32>
    %250 = arith.addf %246, %249 : vector<16x128xf32>
    %251 = arith.addf %236, %250 : vector<16x128xf32>
    %c1_118 = arith.constant 1 : index
    %c0_119 = arith.constant 0 : index
    %c0_120 = arith.constant 0 : index
    %252 = vector.load %arg12[%c1_118, %c0_119, %c0_120] : memref<2x1x128xf32, #tpu.memory_space<vmem>>, vector<1x1x128xf32>
    %253 = vector.shape_cast %252 : vector<1x1x128xf32> to vector<1x128xf32>
    %c1_121 = arith.constant 1 : index
    %c0_122 = arith.constant 0 : index
    %c0_123 = arith.constant 0 : index
    %254 = vector.load %arg13[%c1_121, %c0_122, %c0_123] : memref<2x1x128xf32, #tpu.memory_space<vmem>>, vector<1x1x128xf32>
    %255 = vector.shape_cast %254 : vector<1x1x128xf32> to vector<1x128xf32>
    %cst_124 = arith.constant dense<0.000000e+00> : vector<16xf32>
    %256 = vector.multi_reduction <add>, %251, %cst_124 [1] : vector<16x128xf32> to vector<16xf32>
    %257 = vector.shape_cast %256 : vector<16xf32> to vector<16x1xf32>
    %cst_125 = arith.constant 1.280000e+02 : f32
    %258 = vector.broadcast %cst_125 : f32 to vector<16x1xf32>
    %259 = arith.divf %257, %258 : vector<16x1xf32>
    %260 = vector.broadcast %259 : vector<16x1xf32> to vector<16x128xf32>
    %261 = arith.subf %251, %260 : vector<16x128xf32>
    %262 = arith.mulf %261, %261 : vector<16x128xf32>
    %cst_126 = arith.constant dense<0.000000e+00> : vector<16xf32>
    %263 = vector.multi_reduction <add>, %262, %cst_126 [1] : vector<16x128xf32> to vector<16xf32>
    %264 = vector.shape_cast %263 : vector<16xf32> to vector<16x1xf32>
    %cst_127 = arith.constant 1.280000e+02 : f32
    %265 = vector.broadcast %cst_127 : f32 to vector<16x1xf32>
    %266 = arith.divf %264, %265 : vector<16x1xf32>
    %267 = vector.broadcast %259 : vector<16x1xf32> to vector<16x128xf32>
    %268 = arith.subf %251, %267 : vector<16x128xf32>
    %cst_128 = arith.constant 9.99999974E-6 : f32
    %269 = vector.broadcast %cst_128 : f32 to vector<16x1xf32>
    %270 = arith.addf %266, %269 : vector<16x1xf32>
    %271 = math.rsqrt %270 : vector<16x1xf32>
    %272 = vector.broadcast %271 : vector<16x1xf32> to vector<16x128xf32>
    %273 = arith.mulf %268, %272 : vector<16x128xf32>
    %274 = vector.broadcast %253 : vector<1x128xf32> to vector<16x128xf32>
    %275 = arith.mulf %273, %274 : vector<16x128xf32>
    %276 = vector.broadcast %255 : vector<1x128xf32> to vector<16x128xf32>
    %277 = arith.addf %275, %276 : vector<16x128xf32>
    %c0_129 = arith.constant 0 : index
    %c0_130 = arith.constant 0 : index
    %278 = vector.load %arg17[%c0_129, %c0_130] : memref<2x128xf32, #tpu.memory_space<vmem>>, vector<2x128xf32>
    %279 = vector.shape_cast %277 : vector<16x128xf32> to vector<8x2x128xf32>
    %cst_131 = arith.constant dense<0.000000e+00> : vector<2x128xf32>
    %280 = vector.multi_reduction <add>, %279, %cst_131 [0] : vector<8x2x128xf32> to vector<2x128xf32>
    %281 = arith.addf %278, %280 : vector<2x128xf32>
    %c0_132 = arith.constant 0 : index
    %c0_133 = arith.constant 0 : index
    %282 = vector.load %arg17[%c0_132, %c0_133] : memref<2x128xf32, #tpu.memory_space<vmem>>, vector<2x128xf32>
    tpu.vector_store %arg17[%c0_132, %c0_133], %281 {strides = array<i32>} : memref<2x128xf32, #tpu.memory_space<vmem>>, vector<2x128xf32>,
    %c0_i32_134 = arith.constant 0 : i32
    %283 = arith.cmpi eq, %arg0, %c0_i32_134 : i32
    %284 = arith.extui %283 : i1 to i32
    %c0_i32_135 = arith.constant 0 : i32
    %285 = arith.cmpi ne, %284, %c0_i32_135 : i32
    scf.if %285 {
      %c0_136 = arith.constant 0 : index
      %c0_137 = arith.constant 0 : index
      %286 = vector.load %arg17[%c0_136, %c0_137] : memref<2x128xf32, #tpu.memory_space<vmem>>, vector<2x128xf32>
      %cst_138 = arith.constant 1.250000e-01 : f32
      %287 = vector.broadcast %cst_138 : f32 to vector<2x128xf32>
      %288 = arith.mulf %286, %287 : vector<2x128xf32>
      %289 = arith.truncf %288 : vector<2x128xf32> to vector<2x128xbf16>
      %c0_139 = arith.constant 0 : index
      %c0_140 = arith.constant 0 : index
      %290 = vector.load %arg14[%c0_139, %c0_140] : memref<128x128xbf16, #tpu.memory_space<vmem>>, vector<128x128xbf16>
      %cst_141 = arith.constant dense<0.000000e+00> : vector<2x128xf32>
      %291 = tpu.matmul %289, %290, %cst_141 {dimension_numbers = #tpu.dot_dimension_numbers<[1], [0], [0], [1], [0, 0, 1, 1], [], []>} : vector<2x128xbf16>, vector<128x128xbf16>, vector<2x128xf32> -> vector<2x128xf32>
      %c0_142 = arith.constant 0 : index
      %c0_143 = arith.constant 0 : index
      %292 = vector.load %arg15[%c0_142, %c0_143] : memref<1x128xf32, #tpu.memory_space<vmem>>, vector<1x128xf32>
      %293 = vector.broadcast %292 : vector<1x128xf32> to vector<2x128xf32>
      %294 = arith.addf %291, %293 : vector<2x128xf32>
      %c0_144 = arith.constant 0 : index
      %c0_145 = arith.constant 0 : index
      %295 = vector.load %arg16[%c0_144, %c0_145] : memref<2x128xf32, #tpu.memory_space<vmem>>, vector<2x128xf32>
      tpu.vector_store %arg16[%c0_144, %c0_145], %294 {strides = array<i32>} : memref<2x128xf32, #tpu.memory_space<vmem>>, vector<2x128xf32>,
    } else {
    }
    return
  }
  func.func @transform_0(%arg0: i32) -> (i32, i32) {
    %c0_i32 = arith.constant 0 : i32
    %c0_i32_0 = arith.constant 0 : i32
    return %arg0, %c0_i32 : i32, i32
  }
  func.func @transform_1(%arg0: i32) -> (i32, i32, i32) {
    %c0_i32 = arith.constant 0 : i32
    %c0_i32_0 = arith.constant 0 : i32
    %c0_i32_1 = arith.constant 0 : i32
    %c0_i32_2 = arith.constant 0 : i32
    return %c0_i32, %c0_i32_0, %c0_i32_1 : i32, i32, i32
  }
  func.func @transform_2(%arg0: i32) -> (i32, i32, i32) {
    %c0_i32 = arith.constant 0 : i32
    %c0_i32_0 = arith.constant 0 : i32
    %c0_i32_1 = arith.constant 0 : i32
    %c0_i32_2 = arith.constant 0 : i32
    return %c0_i32, %c0_i32_0, %c0_i32_1 : i32, i32, i32
  }
  func.func @transform_3(%arg0: i32) -> (i32, i32, i32) {
    %c0_i32 = arith.constant 0 : i32
    %c0_i32_0 = arith.constant 0 : i32
    %c0_i32_1 = arith.constant 0 : i32
    %c0_i32_2 = arith.constant 0 : i32
    return %c0_i32, %c0_i32_0, %c0_i32_1 : i32, i32, i32
  }
  func.func @transform_4(%arg0: i32) -> (i32, i32, i32) {
    %c0_i32 = arith.constant 0 : i32
    %c0_i32_0 = arith.constant 0 : i32
    %c0_i32_1 = arith.constant 0 : i32
    %c0_i32_2 = arith.constant 0 : i32
    return %c0_i32, %c0_i32_0, %c0_i32_1 : i32, i32, i32
  }
  func.func @transform_5(%arg0: i32) -> (i32, i32, i32) {
    %c0_i32 = arith.constant 0 : i32
    %c0_i32_0 = arith.constant 0 : i32
    %c0_i32_1 = arith.constant 0 : i32
    %c0_i32_2 = arith.constant 0 : i32
    return %c0_i32, %c0_i32_0, %c0_i32_1 : i32, i32, i32
  }
  func.func @transform_6(%arg0: i32) -> (i32, i32, i32) {
    %c0_i32 = arith.constant 0 : i32
    %c0_i32_0 = arith.constant 0 : i32
    %c0_i32_1 = arith.constant 0 : i32
    %c0_i32_2 = arith.constant 0 : i32
    return %c0_i32, %c0_i32_0, %c0_i32_1 : i32, i32, i32
  }
  func.func @transform_7(%arg0: i32) -> (i32, i32, i32) {
    %c0_i32 = arith.constant 0 : i32
    %c0_i32_0 = arith.constant 0 : i32
    %c0_i32_1 = arith.constant 0 : i32
    %c0_i32_2 = arith.constant 0 : i32
    return %c0_i32, %c0_i32_0, %c0_i32_1 : i32, i32, i32
  }
  func.func @transform_8(%arg0: i32) -> (i32, i32, i32) {
    %c0_i32 = arith.constant 0 : i32
    %c0_i32_0 = arith.constant 0 : i32
    %c0_i32_1 = arith.constant 0 : i32
    %c0_i32_2 = arith.constant 0 : i32
    return %c0_i32, %c0_i32_0, %c0_i32_1 : i32, i32, i32
  }
  func.func @transform_9(%arg0: i32) -> (i32, i32, i32) {
    %c0_i32 = arith.constant 0 : i32
    %c0_i32_0 = arith.constant 0 : i32
    %c0_i32_1 = arith.constant 0 : i32
    %c0_i32_2 = arith.constant 0 : i32
    return %c0_i32, %c0_i32_0, %c0_i32_1 : i32, i32, i32
  }
  func.func @transform_10(%arg0: i32) -> (i32, i32, i32) {
    %c0_i32 = arith.constant 0 : i32
    %c0_i32_0 = arith.constant 0 : i32
    %c0_i32_1 = arith.constant 0 : i32
    %c0_i32_2 = arith.constant 0 : i32
    return %c0_i32, %c0_i32_0, %c0_i32_1 : i32, i32, i32
  }
  func.func @transform_11(%arg0: i32) -> (i32, i32, i32) {
    %c0_i32 = arith.constant 0 : i32
    %c0_i32_0 = arith.constant 0 : i32
    %c0_i32_1 = arith.constant 0 : i32
    %c0_i32_2 = arith.constant 0 : i32
    return %c0_i32, %c0_i32_0, %c0_i32_1 : i32, i32, i32
  }
  func.func @transform_12(%arg0: i32) -> (i32, i32, i32) {
    %c0_i32 = arith.constant 0 : i32
    %c0_i32_0 = arith.constant 0 : i32
    %c0_i32_1 = arith.constant 0 : i32
    %c0_i32_2 = arith.constant 0 : i32
    return %c0_i32, %c0_i32_0, %c0_i32_1 : i32, i32, i32
  }
  func.func @transform_13(%arg0: i32) -> (i32, i32) {
    %c0_i32 = arith.constant 0 : i32
    %c0_i32_0 = arith.constant 0 : i32
    %c0_i32_1 = arith.constant 0 : i32
    return %c0_i32, %c0_i32_0 : i32, i32
  }
  func.func @transform_14(%arg0: i32) -> (i32, i32) {
    %c0_i32 = arith.constant 0 : i32
    %c0_i32_0 = arith.constant 0 : i32
    %c0_i32_1 = arith.constant 0 : i32
    return %c0_i32, %c0_i32_0 : i32, i32
  }
  func.func @transform_15(%arg0: i32) -> (i32, i32) {
    %c0_i32 = arith.constant 0 : i32
    %c0_i32_0 = arith.constant 0 : i32
    %c0_i32_1 = arith.constant 0 : i32
    return %c0_i32, %c0_i32_0 : i32, i32
  }
}

</mosaic_0001>

<llo_original>
// kernel: transformer_classifier_forward.1
$region0: #{transformer_classifier_forward.1}
  #allocation0 [shape = 'u32[]', space=smem, size = 0x4, offset = 0x4, fixed_abs, tag = 'smem constant byte address 0x4 - core index']
  #allocation1 [shape = 'u32[144,128]{1,0:T(1,128)}', space=vmem, size = 0x12000, scoped, tag = 'internal scratch']
  #allocation2 [shape = 'f32[2,128]{1,0:T(2,128)}', space=vmem, size = 0x400, scoped, tag = 'scratch operand']
  #allocation3 [shape = 'bf16[16,128]{1,0:T(16,128)(2,1)}', space=vmem, size = 0x1000, scoped, tag = 'scratch operand']
  %s0 = inlined_call_operand.vmem [shape: bf16[16,128], index: 0, kind: input, shape index: {}]
  %s1 = inlined_call_operand.hbm [shape: bf16[2,128,384], index: 1, kind: input, shape index: {}]
  %s2 = inlined_call_operand.hbm [shape: f32[2,1,384], index: 2, kind: input, shape index: {}]
  %s3 = inlined_call_operand.hbm [shape: bf16[2,128,128], index: 3, kind: input, shape index: {}]
  %s4 = inlined_call_operand.hbm [shape: f32[2,1,128], index: 4, kind: input, shape index: {}]
  %s5 = inlined_call_operand.hbm [shape: bf16[2,128,512], index: 5, kind: input, shape index: {}]
  %s6 = inlined_call_operand.hbm [shape: f32[2,1,512], index: 6, kind: input, shape index: {}]
  %s7 = inlined_call_operand.hbm [shape: bf16[2,512,128], index: 7, kind: input, shape index: {}]
  %s8 = inlined_call_operand.hbm [shape: f32[2,1,128], index: 8, kind: input, shape index: {}]
  %s9 = inlined_call_operand.hbm [shape: f32[2,1,128], index: 9, kind: input, shape index: {}]
  %s10 = inlined_call_operand.hbm [shape: f32[2,1,128], index: 10, kind: input, shape index: {}]
  %s11 = inlined_call_operand.hbm [shape: f32[2,1,128], index: 11, kind: input, shape index: {}]
  %s12 = inlined_call_operand.hbm [shape: f32[2,1,128], index: 12, kind: input, shape index: {}]
  %s13 = inlined_call_operand.hbm [shape: bf16[128,128], index: 13, kind: input, shape index: {}]
  %s14 = inlined_call_operand.hbm [shape: f32[1,128], index: 14, kind: input, shape index: {}]
  %s15 = inlined_call_operand.hbm [shape: f32[2,128], index: 15, kind: output, shape index: {}]
  %s16 = sld [smem:[#allocation0]]
  $region134: #{transformer_classifier_forward.1} parent=0
    _
  %s18 = ssub.s32 1, %s16
  %s19 = scalar_select 0, %s18, %s16
  $region1: #{transformer_classifier_forward.1} parent=0
    #allocation4 [shape = 'u8[196608]{0}', space=vmem, size = 0x30000, scoped, tag = 'input window, operand 1, single buffered']
    #allocation5 [shape = 's32[1]{0}', space=sflag, size = 0x4, scoped, tag = 'scoped memory for transformer_classifier_forward.1']
    #allocation6 [shape = 's32[1]{0}', space=sflag, size = 0x4, scoped, tag = 'scoped memory for transformer_classifier_forward.1']
    #allocation7 [shape = 'u8[3072]{0}', space=vmem, size = 0xc00, scoped, tag = 'input window, operand 2, single buffered']
    #allocation8 [shape = 's32[1]{0}', space=sflag, size = 0x4, scoped, tag = 'scoped memory for transformer_classifier_forward.1']
    #allocation9 [shape = 'u8[65536]{0}', space=vmem, size = 0x10000, scoped, tag = 'input window, operand 3, single buffered']
    #allocation10 [shape = 'u8[1024]{0}', space=vmem, size = 0x400, scoped, tag = 'input window, operand 4, single buffered']
    #allocation11 [shape = 's32[1]{0}', space=sflag, size = 0x4, scoped, tag = 'scoped memory for transformer_classifier_forward.1']
    #allocation12 [shape = 'u8[262144]{0}', space=vmem, size = 0x40000, scoped, tag = 'input window, operand 5, single buffered']
    #allocation13 [shape = 'u8[4096]{0}', space=vmem, size = 0x1000, scoped, tag = 'input window, operand 6, single buffered']
    #allocation14 [shape = 's32[1]{0}', space=sflag, size = 0x4, scoped, tag = 'scoped memory for transformer_classifier_forward.1']
    #allocation15 [shape = 'u8[262144]{0}', space=vmem, size = 0x40000, scoped, tag = 'input window, operand 7, single buffered']
    #allocation16 [shape = 'u8[1024]{0}', space=vmem, size = 0x400, scoped, tag = 'input window, operand 8, single buffered']
    #allocation17 [shape = 's32[1]{0}', space=sflag, size = 0x4, scoped, tag = 'scoped memory for transformer_classifier_forward.1']
    #allocation18 [shape = 'u8[1024]{0}', space=vmem, size = 0x400, scoped, tag = 'input window, operand 9, single buffered']
    #allocation19 [shape = 'u8[1024]{0}', space=vmem, size = 0x400, scoped, tag = 'input window, operand 10, single buffered']
    #allocation20 [shape = 's32[1]{0}', space=sflag, size = 0x4, scoped, tag = 'scoped memory for transformer_classifier_forward.1']
    #allocation21 [shape = 'u8[1024]{0}', space=vmem, size = 0x400, scoped, tag = 'input window, operand 11, single buffered']
    #allocation22 [shape = 'u8[1024]{0}', space=vmem, size = 0x400, scoped, tag = 'input window, operand 12, single buffered']
    #allocation23 [shape = 's32[1]{0}', space=sflag, size = 0x4, scoped, tag = 'scoped memory for transformer_classifier_forward.1']
    #allocation24 [shape = 'u8[32768]{0}', space=vmem, size = 0x8000, scoped, tag = 'input window, operand 13, single buffered']
    #allocation25 [shape = 'u8[512]{0}', space=vmem, size = 0x400, scoped, tag = 'input window, operand 14, single buffered']
    #allocation26 [shape = 's32[1]{0}', space=sflag, size = 0x4, scoped, tag = 'scoped memory for transformer_classifier_forward.1']
    #allocation27 [shape = 'u8[1024]{0}', space=vmem, size = 0x400, scoped, tag = 'output window, operand 0, single buffered']
    %20 = vsyncpa [#allocation5], 0
    %21 = vsyncpa [#allocation8], 0
    %22 = vsyncpa [#allocation11], 0
    %23 = vsyncpa [#allocation14], 0
    %24 = vsyncpa [#allocation17], 0
    %25 = vsyncpa [#allocation20], 0
    %26 = vsyncpa [#allocation23], 0
    %27 = vsyncpa [#allocation26], 0
    %28 = vsyncpa [#allocation6], 0
    // Predicated region
    $region2: #{transformer_classifier_forward.1} parent=1 // pred_check
      _
    $region3: #{transformer_classifier_forward.1} parent=1 // pred_check_branch
      %30 = sbr.rel (0) target = $region5
    $region4: #{transformer_classifier_forward.1} parent=1 // pred_region
      _
    $region5: #{transformer_classifier_forward.1} parent=1 // pred_fallthru
      _
    // Predicated region
    $region6: #{transformer_classifier_forward.1} parent=1 // pred_check
      _
    $region7: #{transformer_classifier_forward.1} parent=1 // pred_check_branch
      %32 = sbr.rel (0) target = $region9
    $region8: #{transformer_classifier_forward.1} parent=1 // pred_region
      %s34 = ssub.s32 6144, 6144
      %35 = vsyncadd [#allocation5], %s34
      %s36 = sshll.u32 [#allocation4], 4
      %s37 = int_to_ptr.vmem [resolvable:$true] %s36
      %42 = dma.hbm_to_vmem [thread:$0]  %s1, 6144, %s37, [#allocation5], 192, 192, 12
    $region9: #{transformer_classifier_forward.1} parent=1 // pred_fallthru
      _
    // Predicated region
    $region10: #{transformer_classifier_forward.1} parent=1 // pred_check
      _
    $region11: #{transformer_classifier_forward.1} parent=1 // pred_check_branch
      %44 = sbr.rel (0) target = $region13
    $region12: #{transformer_classifier_forward.1} parent=1 // pred_region
      %s46 = ssub.s32 96, 96
      %47 = vsyncadd [#allocation8], %s46
      %s48 = sshll.u32 [#allocation7], 4
      %s49 = int_to_ptr.vmem [resolvable:$true] %s48
      %54 = dma.hbm_to_vmem [thread:$0]  %s2, 96, %s49, [#allocation8], 48, 48, 3
    $region13: #{transformer_classifier_forward.1} parent=1 // pred_fallthru
      _
    // Predicated region
    $region14: #{transformer_classifier_forward.1} parent=1 // pred_check
      _
    $region15: #{transformer_classifier_forward.1} parent=1 // pred_check_branch
      %56 = sbr.rel (0) target = $region17
    $region16: #{transformer_classifier_forward.1} parent=1 // pred_region
      %s58 = ssub.s32 2048, 2048
      %59 = vsyncadd [#allocation8], %s58
      %s60 = sshll.u32 [#allocation9], 4
      %s61 = int_to_ptr.vmem [resolvable:$true] %s60
      %66 = dma.hbm_to_vmem [thread:$0]  %s3, 2048, %s61, [#allocation8], 64, 64, 4
    $region17: #{transformer_classifier_forward.1} parent=1 // pred_fallthru
      _
    // Predicated region
    $region18: #{transformer_classifier_forward.1} parent=1 // pred_check
      _
    $region19: #{transformer_classifier_forward.1} parent=1 // pred_check_branch
      %68 = sbr.rel (0) target = $region21
    $region20: #{transformer_classifier_forward.1} parent=1 // pred_region
      %s70 = ssub.s32 32, 32
      %71 = vsyncadd [#allocation11], %s70
      %s72 = sshll.u32 [#allocation10], 4
      %s73 = int_to_ptr.vmem [resolvable:$true] %s72
      %78 = dma.hbm_to_vmem [thread:$0]  %s4, 32, %s73, [#allocation11], 16, 16, 1
    $region21: #{transformer_classifier_forward.1} parent=1 // pred_fallthru
      _
    // Predicated region
    $region22: #{transformer_classifier_forward.1} parent=1 // pred_check
      _
    $region23: #{transformer_classifier_forward.1} parent=1 // pred_check_branch
      %80 = sbr.rel (0) target = $region25
    $region24: #{transformer_classifier_forward.1} parent=1 // pred_region
      %s82 = ssub.s32 8192, 8192
      %83 = vsyncadd [#allocation11], %s82
      %s84 = sshll.u32 [#allocation12], 4
      %s85 = int_to_ptr.vmem [resolvable:$true] %s84
      %90 = dma.hbm_to_vmem [thread:$0]  %s5, 8192, %s85, [#allocation11], 256, 256, 16
    $region25: #{transformer_classifier_forward.1} parent=1 // pred_fallthru
      _
    // Predicated region
    $region26: #{transformer_classifier_forward.1} parent=1 // pred_check
      _
    $region27: #{transformer_classifier_forward.1} parent=1 // pred_check_branch
      %92 = sbr.rel (0) target = $region29
    $region28: #{transformer_classifier_forward.1} parent=1 // pred_region
      %s94 = ssub.s32 128, 128
      %95 = vsyncadd [#allocation14], %s94
      %s96 = sshll.u32 [#allocation13], 4
      %s97 = int_to_ptr.vmem [resolvable:$true] %s96
      %102 = dma.hbm_to_vmem [thread:$0]  %s6, 128, %s97, [#allocation14], 64, 64, 4
    $region29: #{transformer_classifier_forward.1} parent=1 // pred_fallthru
      _
    // Predicated region
    $region30: #{transformer_classifier_forward.1} parent=1 // pred_check
      _
    $region31: #{transformer_classifier_forward.1} parent=1 // pred_check_branch
      %104 = sbr.rel (0) target = $region33
    $region32: #{transformer_classifier_forward.1} parent=1 // pred_region
      %s106 = ssub.s32 8192, 8192
      %107 = vsyncadd [#allocation14], %s106
      %s108 = sshll.u32 [#allocation15], 4
      %s109 = int_to_ptr.vmem [resolvable:$true] %s108
      %114 = dma.hbm_to_vmem [thread:$0]  %s7, 8192, %s109, [#allocation14], 64, 64, 4
    $region33: #{transformer_classifier_forward.1} parent=1 // pred_fallthru
      _
    // Predicated region
    $region34: #{transformer_classifier_forward.1} parent=1 // pred_check
      _
    $region35: #{transformer_classifier_forward.1} parent=1 // pred_check_branch
      %116 = sbr.rel (0) target = $region37
    $region36: #{transformer_classifier_forward.1} parent=1 // pred_region
      %s118 = ssub.s32 32, 32
      %119 = vsyncadd [#allocation17], %s118
      %s120 = sshll.u32 [#allocation16], 4
      %s121 = int_to_ptr.vmem [resolvable:$true] %s120
      %126 = dma.hbm_to_vmem [thread:$0]  %s8, 32, %s121, [#allocation17], 16, 16, 1
    $region37: #{transformer_classifier_forward.1} parent=1 // pred_fallthru
      _
    // Predicated region
    $region38: #{transformer_classifier_forward.1} parent=1 // pred_check
      _
    $region39: #{transformer_classifier_forward.1} parent=1 // pred_check_branch
      %128 = sbr.rel (0) target = $region41
    $region40: #{transformer_classifier_forward.1} parent=1 // pred_region
      %s130 = ssub.s32 32, 32
      %131 = vsyncadd [#allocation17], %s130
      %s132 = sshll.u32 [#allocation18], 4
      %s133 = int_to_ptr.vmem [resolvable:$true] %s132
      %138 = dma.hbm_to_vmem [thread:$0]  %s9, 32, %s133, [#allocation17], 16, 16, 1
    $region41: #{transformer_classifier_forward.1} parent=1 // pred_fallthru
      _
    // Predicated region
    $region42: #{transformer_classifier_forward.1} parent=1 // pred_check
      _
    $region43: #{transformer_classifier_forward.1} parent=1 // pred_check_branch
      %140 = sbr.rel (0) target = $region45
    $region44: #{transformer_classifier_forward.1} parent=1 // pred_region
      %s142 = ssub.s32 32, 32
      %143 = vsyncadd [#allocation20], %s142
      %s144 = sshll.u32 [#allocation19], 4
      %s145 = int_to_ptr.vmem [resolvable:$true] %s144
      %150 = dma.hbm_to_vmem [thread:$0]  %s10, 32, %s145, [#allocation20], 16, 16, 1
    $region45: #{transformer_classifier_forward.1} parent=1 // pred_fallthru
      _
    // Predicated region
    $region46: #{transformer_classifier_forward.1} parent=1 // pred_check
      _
    $region47: #{transformer_classifier_forward.1} parent=1 // pred_check_branch
      %152 = sbr.rel (0) target = $region49
    $region48: #{transformer_classifier_forward.1} parent=1 // pred_region
      %s154 = ssub.s32 32, 32
      %155 = vsyncadd [#allocation20], %s154
      %s156 = sshll.u32 [#allocation21], 4
      %s157 = int_to_ptr.vmem [resolvable:$true] %s156
      %162 = dma.hbm_to_vmem [thread:$0]  %s11, 32, %s157, [#allocation20], 16, 16, 1
    $region49: #{transformer_classifier_forward.1} parent=1 // pred_fallthru
      _
    // Predicated region
    $region50: #{transformer_classifier_forward.1} parent=1 // pred_check
      _
    $region51: #{transformer_classifier_forward.1} parent=1 // pred_check_branch
      %164 = sbr.rel (0) target = $region53
    $region52: #{transformer_classifier_forward.1} parent=1 // pred_region
      %s166 = ssub.s32 32, 32
      %167 = vsyncadd [#allocation23], %s166
      %s168 = sshll.u32 [#allocation22], 4
      %s169 = int_to_ptr.vmem [resolvable:$true] %s168
      %174 = dma.hbm_to_vmem [thread:$0]  %s12, 32, %s169, [#allocation23], 16, 16, 1
    $region53: #{transformer_classifier_forward.1} parent=1 // pred_fallthru
      _
    // Predicated region
    $region54: #{transformer_classifier_forward.1} parent=1 // pred_check
      _
    $region55: #{transformer_classifier_forward.1} parent=1 // pred_check_branch
      %176 = sbr.rel (0) target = $region57
    $region56: #{transformer_classifier_forward.1} parent=1 // pred_region
      %s178 = ssub.s32 1024, 1024
      %179 = vsyncadd [#allocation23], %s178
      %s180 = sshll.u32 [#allocation24], 4
      %s181 = int_to_ptr.vmem [resolvable:$true] %s180
      %186 = dma.hbm_to_vmem [thread:$0]  %s13, 1024, %s181, [#allocation23], 64, 64, 4
    $region57: #{transformer_classifier_forward.1} parent=1 // pred_fallthru
      _
    // Predicated region
    $region58: #{transformer_classifier_forward.1} parent=1 // pred_check
      _
    $region59: #{transformer_classifier_forward.1} parent=1 // pred_check_branch
      %188 = sbr.rel (0) target = $region61
    $region60: #{transformer_classifier_forward.1} parent=1 // pred_region
      %s190 = ssub.s32 16, 16
      %191 = vsyncadd [#allocation26], %s190
      %s193 = sshll.u32 [#allocation25], 4
      %s194 = int_to_ptr.vmem [resolvable:$true] %s193
      %196 = dma.hbm_to_vmem [thread:$0]  %s14, 16, %s194, [#allocation26]
    $region61: #{transformer_classifier_forward.1} parent=1 // pred_fallthru
      _
    // Predicated region
    $region62: #{transformer_classifier_forward.1} parent=1 // pred_check
      _
    $region63: #{transformer_classifier_forward.1} parent=1 // pred_check_branch
      %198 = sbr.rel (0) target = $region65
    $region64: #{transformer_classifier_forward.1} parent=1 // pred_region
      %199 = dma.done [#allocation5], 6144
    $region65: #{transformer_classifier_forward.1} parent=1 // pred_fallthru
      _
    // Predicated region
    $region66: #{transformer_classifier_forward.1} parent=1 // pred_check
      _
    $region67: #{transformer_classifier_forward.1} parent=1 // pred_check_branch
      %201 = sbr.rel (0) target = $region69
    $region68: #{transformer_classifier_forward.1} parent=1 // pred_region
      %202 = dma.done [#allocation8], 96
    $region69: #{transformer_classifier_forward.1} parent=1 // pred_fallthru
      _
    // Predicated region
    $region70: #{transformer_classifier_forward.1} parent=1 // pred_check
      _
    $region71: #{transformer_classifier_forward.1} parent=1 // pred_check_branch
      %204 = sbr.rel (0) target = $region73
    $region72: #{transformer_classifier_forward.1} parent=1 // pred_region
      %205 = dma.done [#allocation8], 2048
    $region73: #{transformer_classifier_forward.1} parent=1 // pred_fallthru
      _
    // Predicated region
    $region74: #{transformer_classifier_forward.1} parent=1 // pred_check
      _
    $region75: #{transformer_classifier_forward.1} parent=1 // pred_check_branch
      %207 = sbr.rel (0) target = $region77
    $region76: #{transformer_classifier_forward.1} parent=1 // pred_region
      %208 = dma.done [#allocation11], 32
    $region77: #{transformer_classifier_forward.1} parent=1 // pred_fallthru
      _
    // Predicated region
    $region78: #{transformer_classifier_forward.1} parent=1 // pred_check
      _
    $region79: #{transformer_classifier_forward.1} parent=1 // pred_check_branch
      %210 = sbr.rel (0) target = $region81
    $region80: #{transformer_classifier_forward.1} parent=1 // pred_region
      %211 = dma.done [#allocation11], 8192
    $region81: #{transformer_classifier_forward.1} parent=1 // pred_fallthru
      _
    // Predicated region
    $region82: #{transformer_classifier_forward.1} parent=1 // pred_check
      _
    $region83: #{transformer_classifier_forward.1} parent=1 // pred_check_branch
      %213 = sbr.rel (0) target = $region85
    $region84: #{transformer_classifier_forward.1} parent=1 // pred_region
      %214 = dma.done [#allocation14], 128
    $region85: #{transformer_classifier_forward.1} parent=1 // pred_fallthru
      _
    // Predicated region
    $region86: #{transformer_classifier_forward.1} parent=1 // pred_check
      _
    $region87: #{transformer_classifier_forward.1} parent=1 // pred_check_branch
      %216 = sbr.rel (0) target = $region89
    $region88: #{transformer_classifier_forward.1} parent=1 // pred_region
      %217 = dma.done [#allocation14], 8192
    $region89: #{transformer_classifier_forward.1} parent=1 // pred_fallthru
      _
    // Predicated region
    $region90: #{transformer_classifier_forward.1} parent=1 // pred_check
      _
    $region91: #{transformer_classifier_forward.1} parent=1 // pred_check_branch
      %219 = sbr.rel (0) target = $region93
    $region92: #{transformer_classifier_forward.1} parent=1 // pred_region
      %220 = dma.done [#allocation17], 32
    $region93: #{transformer_classifier_forward.1} parent=1 // pred_fallthru
      _
    // Predicated region
    $region94: #{transformer_classifier_forward.1} parent=1 // pred_check
      _
    $region95: #{transformer_classifier_forward.1} parent=1 // pred_check_branch
      %222 = sbr.rel (0) target = $region97
    $region96: #{transformer_classifier_forward.1} parent=1 // pred_region
      %223 = dma.done [#allocation17], 32
    $region97: #{transformer_classifier_forward.1} parent=1 // pred_fallthru
      _
    // Predicated region
    $region98: #{transformer_classifier_forward.1} parent=1 // pred_check
      _
    $region99: #{transformer_classifier_forward.1} parent=1 // pred_check_branch
      %225 = sbr.rel (0) target = $region101
    $region100: #{transformer_classifier_forward.1} parent=1 // pred_region
      %226 = dma.done [#allocation20], 32
    $region101: #{transformer_classifier_forward.1} parent=1 // pred_fallthru
      _
    // Predicated region
    $region102: #{transformer_classifier_forward.1} parent=1 // pred_check
      _
    $region103: #{transformer_classifier_forward.1} parent=1 // pred_check_branch
      %228 = sbr.rel (0) target = $region105
    $region104: #{transformer_classifier_forward.1} parent=1 // pred_region
      %229 = dma.done [#allocation20], 32
    $region105: #{transformer_classifier_forward.1} parent=1 // pred_fallthru
      _
    // Predicated region
    $region106: #{transformer_classifier_forward.1} parent=1 // pred_check
      _
    $region107: #{transformer_classifier_forward.1} parent=1 // pred_check_branch
      %231 = sbr.rel (0) target = $region109
    $region108: #{transformer_classifier_forward.1} parent=1 // pred_region
      %232 = dma.done [#allocation23], 32
    $region109: #{transformer_classifier_forward.1} parent=1 // pred_fallthru
      _
    // Predicated region
    $region110: #{transformer_classifier_forward.1} parent=1 // pred_check
      _
    $region111: #{transformer_classifier_forward.1} parent=1 // pred_check_branch
      %234 = sbr.rel (0) target = $region113
    $region112: #{transformer_classifier_forward.1} parent=1 // pred_region
      %235 = dma.done [#allocation23], 1024
    $region113: #{transformer_classifier_forward.1} parent=1 // pred_fallthru
      _
    // Predicated region
    $region114: #{transformer_classifier_forward.1} parent=1 // pred_check
      _
    $region115: #{transformer_classifier_forward.1} parent=1 // pred_check_branch
      %237 = sbr.rel (0) target = $region117
    $region116: #{transformer_classifier_forward.1} parent=1 // pred_region
      %238 = dma.done [#allocation26], 16
    $region117: #{transformer_classifier_forward.1} parent=1 // pred_fallthru
      _
    %p240 = scmp.eq.s32.totalorder 0, 0
    // Predicated region
    $region118: #{transformer_classifier_forward.1} parent=1 // pred_check
      %p241 = pneg %p240
    $region119: #{transformer_classifier_forward.1} parent=1 // pred_check_branch
      %243 = sbr.rel (%p241) target = $region121
    $region120: #{transformer_classifier_forward.1} parent=1 // pred_region
      %244 = vst [vmem:[#allocation2] sm:$0x3] 0.0
    $region121: #{transformer_classifier_forward.1} parent=1 // pred_fallthru
      _
    %v245 = vld [vmem:[%s0] sm:$0xf]
    %v246 = vld [vmem:[%s0 + $0x4] sm:$0xf]
    %v247 = vunpack.c.l.bf16 %v245
    %v248 = vunpack.c.l.bf16 %v246
    %v249 = vld [vmem:[#allocation4] sm:$0xff]
    %v250 = vld [vmem:[#allocation4 + $0x8] sm:$0xf]
    %v251 = vld [vmem:[#allocation4 + $0xc] sm:$0xff]
    %v252 = vld [vmem:[#allocation4 + $0x14] sm:$0xf]
    %v253 = vld [vmem:[#allocation4 + $0x18] sm:$0xff]
    %v254 = vld [vmem:[#allocation4 + $0x20] sm:$0xf]
    %v255 = vld [vmem:[#allocation4 + $0x24] sm:$0xff]
    %v256 = vld [vmem:[#allocation4 + $0x2c] sm:$0xf]
    %v257 = vld [vmem:[#allocation4 + $0x30] sm:$0xff]
    %v258 = vld [vmem:[#allocation4 + $0x38] sm:$0xf]
    %v259 = vld [vmem:[#allocation4 + $0x3c] sm:$0xff]
    %v260 = vld [vmem:[#allocation4 + $0x44] sm:$0xf]
    %v261 = vld [vmem:[#allocation4 + $0x48] sm:$0xff]
    %v262 = vld [vmem:[#allocation4 + $0x50] sm:$0xf]
    %v263 = vld [vmem:[#allocation4 + $0x54] sm:$0xff]
    %v264 = vld [vmem:[#allocation4 + $0x5c] sm:$0xf]
    %v265 = vld [vmem:[#allocation4 + $0x60] sm:$0xff]
    %v266 = vld [vmem:[#allocation4 + $0x68] sm:$0xf]
    %v267 = vld [vmem:[#allocation4 + $0x6c] sm:$0xff]
    %v268 = vld [vmem:[#allocation4 + $0x74] sm:$0xf]
    %v269 = vld [vmem:[#allocation4 + $0x78] sm:$0xff]
    %v270 = vld [vmem:[#allocation4 + $0x80] sm:$0xf]
    %v271 = vld [vmem:[#allocation4 + $0x84] sm:$0xff]
    %v272 = vld [vmem:[#allocation4 + $0x8c] sm:$0xf]
    %v273 = vld [vmem:[#allocation4 + $0x90] sm:$0xff]
    %v274 = vld [vmem:[#allocation4 + $0x98] sm:$0xf]
    %v275 = vld [vmem:[#allocation4 + $0x9c] sm:$0xff]
    %v276 = vld [vmem:[#allocation4 + $0xa4] sm:$0xf]
    %v277 = vld [vmem:[#allocation4 + $0xa8] sm:$0xff]
    %v278 = vld [vmem:[#allocation4 + $0xb0] sm:$0xf]
    %v279 = vld [vmem:[#allocation4 + $0xb4] sm:$0xff]
    %v280 = vld [vmem:[#allocation4 + $0xbc] sm:$0xf]
    %v281 = vld [vmem:[#allocation9] sm:$0xf]
    %v282 = vld [vmem:[#allocation9 + $0x4] sm:$0xf]
    %v283 = vld [vmem:[#allocation9 + $0x8] sm:$0xf]
    %v284 = vld [vmem:[#allocation9 + $0xc] sm:$0xf]
    %v285 = vld [vmem:[#allocation9 + $0x10] sm:$0xf]
    %v286 = vld [vmem:[#allocation9 + $0x14] sm:$0xf]
    %v287 = vld [vmem:[#allocation9 + $0x18] sm:$0xf]
    %v288 = vld [vmem:[#allocation9 + $0x1c] sm:$0xf]
    %v289 = vld [vmem:[#allocation9 + $0x20] sm:$0xf]
    %v290 = vld [vmem:[#allocation9 + $0x24] sm:$0xf]
    %v291 = vld [vmem:[#allocation9 + $0x28] sm:$0xf]
    %v292 = vld [vmem:[#allocation9 + $0x2c] sm:$0xf]
    %v293 = vld [vmem:[#allocation9 + $0x30] sm:$0xf]
    %v294 = vld [vmem:[#allocation9 + $0x34] sm:$0xf]
    %v295 = vld [vmem:[#allocation9 + $0x38] sm:$0xf]
    %v296 = vld [vmem:[#allocation9 + $0x3c] sm:$0xf]
    %v297 = vld [vmem:[#allocation12] sm:$0xff]
    %v298 = vld [vmem:[#allocation12 + $0x8] sm:$0xff]
    %v299 = vld [vmem:[#allocation12 + $0x10] sm:$0xff]
    %v300 = vld [vmem:[#allocation12 + $0x18] sm:$0xff]
    %v301 = vld [vmem:[#allocation12 + $0x20] sm:$0xff]
    %v302 = vld [vmem:[#allocation12 + $0x28] sm:$0xff]
    %v303 = vld [vmem:[#allocation12 + $0x30] sm:$0xff]
    %v304 = vld [vmem:[#allocation12 + $0x38] sm:$0xff]
    %v305 = vld [vmem:[#allocation12 + $0x40] sm:$0xff]
    %v306 = vld [vmem:[#allocation12 + $0x48] sm:$0xff]
    %v307 = vld [vmem:[#allocation12 + $0x50] sm:$0xff]
    %v308 = vld [vmem:[#allocation12 + $0x58] sm:$0xff]
    %v309 = vld [vmem:[#allocation12 + $0x60] sm:$0xff]
    %v310 = vld [vmem:[#allocation12 + $0x68] sm:$0xff]
    %v311 = vld [vmem:[#allocation12 + $0x70] sm:$0xff]
    %v312 = vld [vmem:[#allocation12 + $0x78] sm:$0xff]
    %v313 = vld [vmem:[#allocation12 + $0x80] sm:$0xff]
    %v314 = vld [vmem:[#allocation12 + $0x88] sm:$0xff]
    %v315 = vld [vmem:[#allocation12 + $0x90] sm:$0xff]
    %v316 = vld [vmem:[#allocation12 + $0x98] sm:$0xff]
    %v317 = vld [vmem:[#allocation12 + $0xa0] sm:$0xff]
    %v318 = vld [vmem:[#allocation12 + $0xa8] sm:$0xff]
    %v319 = vld [vmem:[#allocation12 + $0xb0] sm:$0xff]
    %v320 = vld [vmem:[#allocation12 + $0xb8] sm:$0xff]
    %v321 = vld [vmem:[#allocation12 + $0xc0] sm:$0xff]
    %v322 = vld [vmem:[#allocation12 + $0xc8] sm:$0xff]
    %v323 = vld [vmem:[#allocation12 + $0xd0] sm:$0xff]
    %v324 = vld [vmem:[#allocation12 + $0xd8] sm:$0xff]
    %v325 = vld [vmem:[#allocation12 + $0xe0] sm:$0xff]
    %v326 = vld [vmem:[#allocation12 + $0xe8] sm:$0xff]
    %v327 = vld [vmem:[#allocation12 + $0xf0] sm:$0xff]
    %v328 = vld [vmem:[#allocation12 + $0xf8] sm:$0xff]
    %v329 = vld [vmem:[#allocation15] sm:$0xf]
    %v330 = vld [vmem:[#allocation15 + $0x4] sm:$0xf]
    %v331 = vld [vmem:[#allocation15 + $0x8] sm:$0xf]
    %v332 = vld [vmem:[#allocation15 + $0xc] sm:$0xf]
    %v333 = vld [vmem:[#allocation15 + $0x10] sm:$0xf]
    %v334 = vld [vmem:[#allocation15 + $0x14] sm:$0xf]
    %v335 = vld [vmem:[#allocation15 + $0x18] sm:$0xf]
    %v336 = vld [vmem:[#allocation15 + $0x1c] sm:$0xf]
    %v337 = vld [vmem:[#allocation15 + $0x20] sm:$0xf]
    %v338 = vld [vmem:[#allocation15 + $0x24] sm:$0xf]
    %v339 = vld [vmem:[#allocation15 + $0x28] sm:$0xf]
    %v340 = vld [vmem:[#allocation15 + $0x2c] sm:$0xf]
    %v341 = vld [vmem:[#allocation15 + $0x30] sm:$0xf]
    %v342 = vld [vmem:[#allocation15 + $0x34] sm:$0xf]
    %v343 = vld [vmem:[#allocation15 + $0x38] sm:$0xf]
    %v344 = vld [vmem:[#allocation15 + $0x3c] sm:$0xf]
    %v345 = vld [vmem:[#allocation15 + $0x40] sm:$0xf]
    %v346 = vld [vmem:[#allocation15 + $0x44] sm:$0xf]
    %v347 = vld [vmem:[#allocation15 + $0x48] sm:$0xf]
    %v348 = vld [vmem:[#allocation15 + $0x4c] sm:$0xf]
    %v349 = vld [vmem:[#allocation15 + $0x50] sm:$0xf]
    %v350 = vld [vmem:[#allocation15 + $0x54] sm:$0xf]
    %v351 = vld [vmem:[#allocation15 + $0x58] sm:$0xf]
    %v352 = vld [vmem:[#allocation15 + $0x5c] sm:$0xf]
    %v353 = vld [vmem:[#allocation15 + $0x60] sm:$0xf]
    %v354 = vld [vmem:[#allocation15 + $0x64] sm:$0xf]
    %v355 = vld [vmem:[#allocation15 + $0x68] sm:$0xf]
    %v356 = vld [vmem:[#allocation15 + $0x6c] sm:$0xf]
    %v357 = vld [vmem:[#allocation15 + $0x70] sm:$0xf]
    %v358 = vld [vmem:[#allocation15 + $0x74] sm:$0xf]
    %v359 = vld [vmem:[#allocation15 + $0x78] sm:$0xf]
    %v360 = vld [vmem:[#allocation15 + $0x7c] sm:$0xf]
    %v361 = vld [vmem:[#allocation15 + $0x80] sm:$0xf]
    %v362 = vld [vmem:[#allocation15 + $0x84] sm:$0xf]
    %v363 = vld [vmem:[#allocation15 + $0x88] sm:$0xf]
    %v364 = vld [vmem:[#allocation15 + $0x8c] sm:$0xf]
    %v365 = vld [vmem:[#allocation15 + $0x90] sm:$0xf]
    %v366 = vld [vmem:[#allocation15 + $0x94] sm:$0xf]
    %v367 = vld [vmem:[#allocation15 + $0x98] sm:$0xf]
    %v368 = vld [vmem:[#allocation15 + $0x9c] sm:$0xf]
    %v369 = vld [vmem:[#allocation15 + $0xa0] sm:$0xf]
    %v370 = vld [vmem:[#allocation15 + $0xa4] sm:$0xf]
    %v371 = vld [vmem:[#allocation15 + $0xa8] sm:$0xf]
    %v372 = vld [vmem:[#allocation15 + $0xac] sm:$0xf]
    %v373 = vld [vmem:[#allocation15 + $0xb0] sm:$0xf]
    %v374 = vld [vmem:[#allocation15 + $0xb4] sm:$0xf]
    %v375 = vld [vmem:[#allocation15 + $0xb8] sm:$0xf]
    %v376 = vld [vmem:[#allocation15 + $0xbc] sm:$0xf]
    %v377 = vld [vmem:[#allocation15 + $0xc0] sm:$0xf]
    %v378 = vld [vmem:[#allocation15 + $0xc4] sm:$0xf]
    %v379 = vld [vmem:[#allocation15 + $0xc8] sm:$0xf]
    %v380 = vld [vmem:[#allocation15 + $0xcc] sm:$0xf]
    %v381 = vld [vmem:[#allocation15 + $0xd0] sm:$0xf]
    %v382 = vld [vmem:[#allocation15 + $0xd4] sm:$0xf]
    %v383 = vld [vmem:[#allocation15 + $0xd8] sm:$0xf]
    %v384 = vld [vmem:[#allocation15 + $0xdc] sm:$0xf]
    %v385 = vld [vmem:[#allocation15 + $0xe0] sm:$0xf]
    %v386 = vld [vmem:[#allocation15 + $0xe4] sm:$0xf]
    %v387 = vld [vmem:[#allocation15 + $0xe8] sm:$0xf]
    %v388 = vld [vmem:[#allocation15 + $0xec] sm:$0xf]
    %v389 = vld [vmem:[#allocation15 + $0xf0] sm:$0xf]
    %v390 = vld [vmem:[#allocation15 + $0xf4] sm:$0xf]
    %v391 = vld [vmem:[#allocation15 + $0xf8] sm:$0xf]
    %v392 = vld [vmem:[#allocation15 + $0xfc] sm:$0xf]
    %v393 = vld [vmem:[#allocation7] sm:$0x7]
    %v395 = vlaneseq
    %v396 = vshrl.u32 %v395, 7
    %v397 = vsub.s32 0, %v396
    %v398 = vrot.slane %v393, %v397
    %v399 = vlaneseq
    %v400 = vshrl.u32 %v399, 7
    %v401 = vsub.s32 1, %v400
    %v402 = vrot.slane %v393, %v401
    %v403 = vlaneseq
    %v404 = vshrl.u32 %v403, 7
    %v405 = vsub.s32 2, %v404
    %v406 = vrot.slane %v393, %v405
    %v412 = vunpack.c.l.b16 %v245
    %v413 = vunpack.c.l.b16 %v246
    %v414 = vpack.c.b16 %v413, %v412
    %v448 = vunpack.c.l.b16 %v249
    %v449 = vunpack.c.h.b16 %v249
    %v450 = vunpack.c.l.b16 %v250
    %v451 = vunpack.c.l.b16 %v251
    %v452 = vunpack.c.h.b16 %v251
    %v453 = vunpack.c.l.b16 %v252
    %v454 = vunpack.c.l.b16 %v253
    %v455 = vunpack.c.h.b16 %v253
    %v456 = vunpack.c.l.b16 %v254
    %v457 = vunpack.c.l.b16 %v255
    %v458 = vunpack.c.h.b16 %v255
    %v459 = vunpack.c.l.b16 %v256
    %v460 = vunpack.c.l.b16 %v257
    %v461 = vunpack.c.h.b16 %v257
    %v462 = vunpack.c.l.b16 %v258
    %v463 = vunpack.c.l.b16 %v259
    %v464 = vunpack.c.h.b16 %v259
    %v465 = vunpack.c.l.b16 %v260
    %v466 = vunpack.c.l.b16 %v261
    %v467 = vunpack.c.h.b16 %v261
    %v468 = vunpack.c.l.b16 %v262
    %v469 = vunpack.c.l.b16 %v263
    %v470 = vunpack.c.h.b16 %v263
    %v471 = vunpack.c.l.b16 %v264
    %v472 = vunpack.c.l.b16 %v265
    %v473 = vunpack.c.h.b16 %v265
    %v474 = vunpack.c.l.b16 %v266
    %v475 = vunpack.c.l.b16 %v267
    %v476 = vunpack.c.h.b16 %v267
    %v477 = vunpack.c.l.b16 %v268
    %v478 = vunpack.c.l.b16 %v269
    %v479 = vunpack.c.h.b16 %v269
    %v480 = vunpack.c.l.b16 %v270
    %v481 = vunpack.c.l.b16 %v271
    %v482 = vunpack.c.h.b16 %v271
    %v483 = vunpack.c.l.b16 %v272
    %v484 = vunpack.c.l.b16 %v273
    %v485 = vunpack.c.h.b16 %v273
    %v486 = vunpack.c.l.b16 %v274
    %v487 = vunpack.c.l.b16 %v275
    %v488 = vunpack.c.h.b16 %v275
    %v489 = vunpack.c.l.b16 %v276
    %v490 = vunpack.c.l.b16 %v277
    %v491 = vunpack.c.h.b16 %v277
    %v492 = vunpack.c.l.b16 %v278
    %v493 = vunpack.c.l.b16 %v279
    %v494 = vunpack.c.h.b16 %v279
    %v495 = vunpack.c.l.b16 %v280
    %v496 = vpack.c.b16 %v451, %v448
    %v497 = vpack.c.b16 %v452, %v449
    %v498 = vpack.c.b16 %v453, %v450
    %v499 = vpack.c.b16 %v457, %v454
    %v500 = vpack.c.b16 %v458, %v455
    %v501 = vpack.c.b16 %v459, %v456
    %v502 = vpack.c.b16 %v463, %v460
    %v503 = vpack.c.b16 %v464, %v461
    %v504 = vpack.c.b16 %v465, %v462
    %v505 = vpack.c.b16 %v469, %v466
    %v506 = vpack.c.b16 %v470, %v467
    %v507 = vpack.c.b16 %v471, %v468
    %v508 = vpack.c.b16 %v475, %v472
    %v509 = vpack.c.b16 %v476, %v473
    %v510 = vpack.c.b16 %v477, %v474
    %v511 = vpack.c.b16 %v481, %v478
    %v512 = vpack.c.b16 %v482, %v479
    %v513 = vpack.c.b16 %v483, %v480
    %v514 = vpack.c.b16 %v487, %v484
    %v515 = vpack.c.b16 %v488, %v485
    %v516 = vpack.c.b16 %v489, %v486
    %v517 = vpack.c.b16 %v493, %v490
    %v518 = vpack.c.b16 %v494, %v491
    %v519 = vpack.c.b16 %v495, %v492
    %544 = vmatprep.subr.bf16.mxu0 %v497
    %545 = vmatpush1.bf16.msra.mxu0 %v496
    %546 = vmatprep.subr.bf16.mxu0 %v500
    %547 = vmatpush1.bf16.msra.mxu0 %v499
    %548 = vmatprep.subr.bf16.mxu0 %v503
    %549 = vmatpush1.bf16.msra.mxu0 %v502
    %550 = vmatprep.subr.bf16.mxu0 %v506
    %551 = vmatpush1.bf16.msra.mxu0 %v505
    %552 = vmatprep.subr.bf16.mxu0 %v509
    %553 = vmatpush1.bf16.msra.mxu0 %v508
    %554 = vmatprep.subr.bf16.mxu0 %v512
    %555 = vmatpush1.bf16.msra.mxu0 %v511
    %556 = vmatprep.subr.bf16.mxu0 %v515
    %557 = vmatpush1.bf16.msra.mxu0 %v514
    %558 = vmatprep.subr.bf16.mxu0 %v518
    %559 = vmatpush1.bf16.msra.mxu0 %v517
    %560 = vmatprep.subr.bf16.mxu0 0
    %561 = vmatpush1.bf16.msra.mxu0 0
    %562 = vmatprep.subr.bf16.mxu0 0
    %563 = vmatpush1.bf16.msra.mxu0 0
    %564 = vmatprep.subr.bf16.mxu0 0
    %565 = vmatpush1.bf16.msra.mxu0 0
    %566 = vmatprep.subr.bf16.mxu0 0
    %567 = vmatpush1.bf16.msra.mxu0 0
    %568 = vmatprep.subr.bf16.mxu0 0
    %569 = vmatpush1.bf16.msra.mxu0 0
    %570 = vmatprep.subr.bf16.mxu0 0
    %571 = vmatpush1.bf16.msra.mxu0 0
    %572 = vmatprep.subr.bf16.mxu0 0
    %573 = vmatpush1.bf16.msra.mxu0 0
    %574 = vmatprep.subr.bf16.mxu0 0
    %575 = vmatpush1.bf16.msra.mxu0 0
    %576 = vmatprep.mubr.bf16.mxu0 0
    %577 = vmatmul.mubr.bf16.gmra.mrb[0].mxu0 %v414
    %v578 = vpop.f32.mrb[0].mxu0
    %v579 = vadd.f32 %v398, %v578
    %v580 = vpop.f32.mrb[0].mxu0
    %v581 = vadd.f32 %v402, %v580
    %v582 = vpop.f32.mrb[0].mxu0
    %v583 = vadd.f32 %v398, %v582
    %v584 = vpop.f32.mrb[0].mxu0
    %v585 = vadd.f32 %v402, %v584
    %586 = vdwg.mxu0
    %587 = vmatprep.subr.bf16.mxu0 0
    %588 = vmatpush1.bf16.msra.mxu0 %v498
    %589 = vmatprep.subr.bf16.mxu0 0
    %590 = vmatpush1.bf16.msra.mxu0 %v501
    %591 = vmatprep.subr.bf16.mxu0 0
    %592 = vmatpush1.bf16.msra.mxu0 %v504
    %593 = vmatprep.subr.bf16.mxu0 0
    %594 = vmatpush1.bf16.msra.mxu0 %v507
    %595 = vmatprep.subr.bf16.mxu0 0
    %596 = vmatpush1.bf16.msra.mxu0 %v510
    %597 = vmatprep.subr.bf16.mxu0 0
    %598 = vmatpush1.bf16.msra.mxu0 %v513
    %599 = vmatprep.subr.bf16.mxu0 0
    %600 = vmatpush1.bf16.msra.mxu0 %v516
    %601 = vmatprep.subr.bf16.mxu0 0
    %602 = vmatpush1.bf16.msra.mxu0 %v519
    %603 = vmatprep.subr.bf16.mxu0 0
    %604 = vmatpush1.bf16.msra.mxu0 0
    %605 = vmatprep.subr.bf16.mxu0 0
    %606 = vmatpush1.bf16.msra.mxu0 0
    %607 = vmatprep.subr.bf16.mxu0 0
    %608 = vmatpush1.bf16.msra.mxu0 0
    %609 = vmatprep.subr.bf16.mxu0 0
    %610 = vmatpush1.bf16.msra.mxu0 0
    %611 = vmatprep.subr.bf16.mxu0 0
    %612 = vmatpush1.bf16.msra.mxu0 0
    %613 = vmatprep.subr.bf16.mxu0 0
    %614 = vmatpush1.bf16.msra.mxu0 0
    %615 = vmatprep.subr.bf16.mxu0 0
    %616 = vmatpush1.bf16.msra.mxu0 0
    %617 = vmatprep.subr.bf16.mxu0 0
    %618 = vmatpush1.bf16.msra.mxu0 0
    %619 = vmatprep.mubr.bf16.mxu0 0
    %620 = vmatmul.mubr.bf16.gmra.mrb[0].mxu0 %v414
    %v621 = vpop.f32.mrb[0].mxu0
    %v622 = vadd.f32 %v406, %v621
    %v623 = vpop.f32.mrb[0].mxu0
    %v624 = vpop.f32.mrb[0].mxu0
    %v625 = vadd.f32 %v406, %v624
    %v626 = vpop.f32.mrb[0].mxu0
    %627 = vdwg.mxu0
    %v628 = vpack.c.bf16 %v583, %v579
    %v629 = vpack.c.bf16 %v585, %v581
    %v630 = vpack.c.bf16 %v625, %v622
    %632 = vrot.lane.b32.xlu0 %v628, 96
    %v633 = vpop.permute.xlu0 %632
    %634 = vrot.lane.b32.xlu0 %v628, 64
    %v635 = vpop.permute.xlu0 %634
    %636 = vrot.lane.b32.xlu0 %v628, 32
    %v637 = vpop.permute.xlu0 %636
    %v638 = vcombine.high %v628, %v628
    %v640 = vunpack.c.l.s4 1966171168
    %v641 = vunpack.c.0.s8 %v640
    %v642 = vlaneseq
    %v643 = vshrl.u32 %v642, 7
    %v644 = vsub.s32 %v641, %v643
    %v645 = vrot.slane %v628, %v644
    %v647 = vunpack.c.l.s4 1966171168
    %v648 = vunpack.c.0.s8 %v647
    %v649 = vlaneseq
    %v650 = vshrl.u32 %v649, 7
    %v651 = vsub.s32 %v648, %v650
    %v652 = vrot.slane %v638, %v651
    %v653 = vcombine.high %v645, %v645
    %v654 = vcombine.high %v652, %v652
    %v656 = vunpack.c.l.s4 1966171168
    %v657 = vunpack.c.0.s8 %v656
    %v658 = vlaneseq
    %v659 = vshrl.u32 %v658, 7
    %v660 = vsub.s32 %v657, %v659
    %v661 = vrot.slane %v645, %v660
    %v663 = vunpack.c.l.s4 1966171168
    %v664 = vunpack.c.0.s8 %v663
    %v665 = vlaneseq
    %v666 = vshrl.u32 %v665, 7
    %v667 = vsub.s32 %v664, %v666
    %v668 = vrot.slane %v652, %v667
    %v670 = vunpack.c.l.s4 1966171168
    %v671 = vunpack.c.0.s8 %v670
    %v672 = vlaneseq
    %v673 = vshrl.u32 %v672, 7
    %v674 = vsub.s32 %v671, %v673
    %v675 = vrot.slane %v653, %v674
    %v677 = vunpack.c.l.s4 1966171168
    %v678 = vunpack.c.0.s8 %v677
    %v679 = vlaneseq
    %v680 = vshrl.u32 %v679, 7
    %v681 = vsub.s32 %v678, %v680
    %v682 = vrot.slane %v654, %v681
    %v683 = vcombine.high %v661, %v661
    %v684 = vcombine.high %v668, %v668
    %v685 = vcombine.high %v675, %v675
    %v686 = vcombine.high %v682, %v682
    %v687 = vcombine.high %v633, %v633
    %v689 = vunpack.c.l.s4 1966171168
    %v690 = vunpack.c.0.s8 %v689
    %v691 = vlaneseq
    %v692 = vshrl.u32 %v691, 7
    %v693 = vsub.s32 %v690, %v692
    %v694 = vrot.slane %v633, %v693
    %v696 = vunpack.c.l.s4 1966171168
    %v697 = vunpack.c.0.s8 %v696
    %v698 = vlaneseq
    %v699 = vshrl.u32 %v698, 7
    %v700 = vsub.s32 %v697, %v699
    %v701 = vrot.slane %v687, %v700
    %v702 = vcombine.high %v694, %v694
    %v703 = vcombine.high %v701, %v701
    %v705 = vunpack.c.l.s4 1966171168
    %v706 = vunpack.c.0.s8 %v705
    %v707 = vlaneseq
    %v708 = vshrl.u32 %v707, 7
    %v709 = vsub.s32 %v706, %v708
    %v710 = vrot.slane %v694, %v709
    %v712 = vunpack.c.l.s4 1966171168
    %v713 = vunpack.c.0.s8 %v712
    %v714 = vlaneseq
    %v715 = vshrl.u32 %v714, 7
    %v716 = vsub.s32 %v713, %v715
    %v717 = vrot.slane %v701, %v716
    %v719 = vunpack.c.l.s4 1966171168
    %v720 = vunpack.c.0.s8 %v719
    %v721 = vlaneseq
    %v722 = vshrl.u32 %v721, 7
    %v723 = vsub.s32 %v720, %v722
    %v724 = vrot.slane %v702, %v723
    %v726 = vunpack.c.l.s4 1966171168
    %v727 = vunpack.c.0.s8 %v726
    %v728 = vlaneseq
    %v729 = vshrl.u32 %v728, 7
    %v730 = vsub.s32 %v727, %v729
    %v731 = vrot.slane %v703, %v730
    %v732 = vcombine.high %v710, %v710
    %v733 = vcombine.high %v717, %v717
    %v734 = vcombine.high %v724, %v724
    %v735 = vcombine.high %v731, %v731
    %v736 = vcombine.high %v635, %v635
    %v738 = vunpack.c.l.s4 1966171168
    %v739 = vunpack.c.0.s8 %v738
    %v740 = vlaneseq
    %v741 = vshrl.u32 %v740, 7
    %v742 = vsub.s32 %v739, %v741
    %v743 = vrot.slane %v635, %v742
    %v745 = vunpack.c.l.s4 1966171168
    %v746 = vunpack.c.0.s8 %v745
    %v747 = vlaneseq
    %v748 = vshrl.u32 %v747, 7
    %v749 = vsub.s32 %v746, %v748
    %v750 = vrot.slane %v736, %v749
    %v751 = vcombine.high %v743, %v743
    %v752 = vcombine.high %v750, %v750
    %v754 = vunpack.c.l.s4 1966171168
    %v755 = vunpack.c.0.s8 %v754
    %v756 = vlaneseq
    %v757 = vshrl.u32 %v756, 7
    %v758 = vsub.s32 %v755, %v757
    %v759 = vrot.slane %v743, %v758
    %v761 = vunpack.c.l.s4 1966171168
    %v762 = vunpack.c.0.s8 %v761
    %v763 = vlaneseq
    %v764 = vshrl.u32 %v763, 7
    %v765 = vsub.s32 %v762, %v764
    %v766 = vrot.slane %v750, %v765
    %v768 = vunpack.c.l.s4 1966171168
    %v769 = vunpack.c.0.s8 %v768
    %v770 = vlaneseq
    %v771 = vshrl.u32 %v770, 7
    %v772 = vsub.s32 %v769, %v771
    %v773 = vrot.slane %v751, %v772
    %v775 = vunpack.c.l.s4 1966171168
    %v776 = vunpack.c.0.s8 %v775
    %v777 = vlaneseq
    %v778 = vshrl.u32 %v777, 7
    %v779 = vsub.s32 %v776, %v778
    %v780 = vrot.slane %v752, %v779
    %v781 = vcombine.high %v759, %v759
    %v782 = vcombine.high %v766, %v766
    %v783 = vcombine.high %v773, %v773
    %v784 = vcombine.high %v780, %v780
    %v785 = vcombine.high %v637, %v637
    %v787 = vunpack.c.l.s4 1966171168
    %v788 = vunpack.c.0.s8 %v787
    %v789 = vlaneseq
    %v790 = vshrl.u32 %v789, 7
    %v791 = vsub.s32 %v788, %v790
    %v792 = vrot.slane %v637, %v791
    %v794 = vunpack.c.l.s4 1966171168
    %v795 = vunpack.c.0.s8 %v794
    %v796 = vlaneseq
    %v797 = vshrl.u32 %v796, 7
    %v798 = vsub.s32 %v795, %v797
    %v799 = vrot.slane %v785, %v798
    %v800 = vcombine.high %v792, %v792
    %v801 = vcombine.high %v799, %v799
    %v803 = vunpack.c.l.s4 1966171168
    %v804 = vunpack.c.0.s8 %v803
    %v805 = vlaneseq
    %v806 = vshrl.u32 %v805, 7
    %v807 = vsub.s32 %v804, %v806
    %v808 = vrot.slane %v792, %v807
    %v810 = vunpack.c.l.s4 1966171168
    %v811 = vunpack.c.0.s8 %v810
    %v812 = vlaneseq
    %v813 = vshrl.u32 %v812, 7
    %v814 = vsub.s32 %v811, %v813
    %v815 = vrot.slane %v799, %v814
    %v817 = vunpack.c.l.s4 1966171168
    %v818 = vunpack.c.0.s8 %v817
    %v819 = vlaneseq
    %v820 = vshrl.u32 %v819, 7
    %v821 = vsub.s32 %v818, %v820
    %v822 = vrot.slane %v800, %v821
    %v824 = vunpack.c.l.s4 1966171168
    %v825 = vunpack.c.0.s8 %v824
    %v826 = vlaneseq
    %v827 = vshrl.u32 %v826, 7
    %v828 = vsub.s32 %v825, %v827
    %v829 = vrot.slane %v801, %v828
    %v830 = vcombine.high %v808, %v808
    %v831 = vcombine.high %v815, %v815
    %v832 = vcombine.high %v822, %v822
    %v833 = vcombine.high %v829, %v829
    %835 = vrot.lane.b32.xlu0 %v629, 96
    %v836 = vpop.permute.xlu0 %835
    %837 = vrot.lane.b32.xlu0 %v629, 64
    %v838 = vpop.permute.xlu0 %837
    %839 = vrot.lane.b32.xlu0 %v629, 32
    %v840 = vpop.permute.xlu0 %839
    %v841 = vcombine.high %v629, %v629
    %v843 = vunpack.c.l.s4 1966171168
    %v844 = vunpack.c.0.s8 %v843
    %v845 = vlaneseq
    %v846 = vshrl.u32 %v845, 7
    %v847 = vsub.s32 %v844, %v846
    %v848 = vrot.slane %v629, %v847
    %v850 = vunpack.c.l.s4 1966171168
    %v851 = vunpack.c.0.s8 %v850
    %v852 = vlaneseq
    %v853 = vshrl.u32 %v852, 7
    %v854 = vsub.s32 %v851, %v853
    %v855 = vrot.slane %v841, %v854
    %v856 = vcombine.high %v848, %v848
    %v857 = vcombine.high %v855, %v855
    %v859 = vunpack.c.l.s4 1966171168
    %v860 = vunpack.c.0.s8 %v859
    %v861 = vlaneseq
    %v862 = vshrl.u32 %v861, 7
    %v863 = vsub.s32 %v860, %v862
    %v864 = vrot.slane %v848, %v863
    %v866 = vunpack.c.l.s4 1966171168
    %v867 = vunpack.c.0.s8 %v866
    %v868 = vlaneseq
    %v869 = vshrl.u32 %v868, 7
    %v870 = vsub.s32 %v867, %v869
    %v871 = vrot.slane %v855, %v870
    %v873 = vunpack.c.l.s4 1966171168
    %v874 = vunpack.c.0.s8 %v873
    %v875 = vlaneseq
    %v876 = vshrl.u32 %v875, 7
    %v877 = vsub.s32 %v874, %v876
    %v878 = vrot.slane %v856, %v877
    %v880 = vunpack.c.l.s4 1966171168
    %v881 = vunpack.c.0.s8 %v880
    %v882 = vlaneseq
    %v883 = vshrl.u32 %v882, 7
    %v884 = vsub.s32 %v881, %v883
    %v885 = vrot.slane %v857, %v884
    %v886 = vcombine.high %v864, %v864
    %v887 = vcombine.high %v871, %v871
    %v888 = vcombine.high %v878, %v878
    %v889 = vcombine.high %v885, %v885
    %v890 = vcombine.high %v836, %v836
    %v892 = vunpack.c.l.s4 1966171168
    %v893 = vunpack.c.0.s8 %v892
    %v894 = vlaneseq
    %v895 = vshrl.u32 %v894, 7
    %v896 = vsub.s32 %v893, %v895
    %v897 = vrot.slane %v836, %v896
    %v899 = vunpack.c.l.s4 1966171168
    %v900 = vunpack.c.0.s8 %v899
    %v901 = vlaneseq
    %v902 = vshrl.u32 %v901, 7
    %v903 = vsub.s32 %v900, %v902
    %v904 = vrot.slane %v890, %v903
    %v905 = vcombine.high %v897, %v897
    %v906 = vcombine.high %v904, %v904
    %v908 = vunpack.c.l.s4 1966171168
    %v909 = vunpack.c.0.s8 %v908
    %v910 = vlaneseq
    %v911 = vshrl.u32 %v910, 7
    %v912 = vsub.s32 %v909, %v911
    %v913 = vrot.slane %v897, %v912
    %v915 = vunpack.c.l.s4 1966171168
    %v916 = vunpack.c.0.s8 %v915
    %v917 = vlaneseq
    %v918 = vshrl.u32 %v917, 7
    %v919 = vsub.s32 %v916, %v918
    %v920 = vrot.slane %v904, %v919
    %v922 = vunpack.c.l.s4 1966171168
    %v923 = vunpack.c.0.s8 %v922
    %v924 = vlaneseq
    %v925 = vshrl.u32 %v924, 7
    %v926 = vsub.s32 %v923, %v925
    %v927 = vrot.slane %v905, %v926
    %v929 = vunpack.c.l.s4 1966171168
    %v930 = vunpack.c.0.s8 %v929
    %v931 = vlaneseq
    %v932 = vshrl.u32 %v931, 7
    %v933 = vsub.s32 %v930, %v932
    %v934 = vrot.slane %v906, %v933
    %v935 = vcombine.high %v913, %v913
    %v936 = vcombine.high %v920, %v920
    %v937 = vcombine.high %v927, %v927
    %v938 = vcombine.high %v934, %v934
    %v939 = vcombine.high %v838, %v838
    %v941 = vunpack.c.l.s4 1966171168
    %v942 = vunpack.c.0.s8 %v941
    %v943 = vlaneseq
    %v944 = vshrl.u32 %v943, 7
    %v945 = vsub.s32 %v942, %v944
    %v946 = vrot.slane %v838, %v945
    %v948 = vunpack.c.l.s4 1966171168
    %v949 = vunpack.c.0.s8 %v948
    %v950 = vlaneseq
    %v951 = vshrl.u32 %v950, 7
    %v952 = vsub.s32 %v949, %v951
    %v953 = vrot.slane %v939, %v952
    %v954 = vcombine.high %v946, %v946
    %v955 = vcombine.high %v953, %v953
    %v957 = vunpack.c.l.s4 1966171168
    %v958 = vunpack.c.0.s8 %v957
    %v959 = vlaneseq
    %v960 = vshrl.u32 %v959, 7
    %v961 = vsub.s32 %v958, %v960
    %v962 = vrot.slane %v946, %v961
    %v964 = vunpack.c.l.s4 1966171168
    %v965 = vunpack.c.0.s8 %v964
    %v966 = vlaneseq
    %v967 = vshrl.u32 %v966, 7
    %v968 = vsub.s32 %v965, %v967
    %v969 = vrot.slane %v953, %v968
    %v971 = vunpack.c.l.s4 1966171168
    %v972 = vunpack.c.0.s8 %v971
    %v973 = vlaneseq
    %v974 = vshrl.u32 %v973, 7
    %v975 = vsub.s32 %v972, %v974
    %v976 = vrot.slane %v954, %v975
    %v978 = vunpack.c.l.s4 1966171168
    %v979 = vunpack.c.0.s8 %v978
    %v980 = vlaneseq
    %v981 = vshrl.u32 %v980, 7
    %v982 = vsub.s32 %v979, %v981
    %v983 = vrot.slane %v955, %v982
    %v984 = vcombine.high %v962, %v962
    %v985 = vcombine.high %v969, %v969
    %v986 = vcombine.high %v976, %v976
    %v987 = vcombine.high %v983, %v983
    %v988 = vcombine.high %v840, %v840
    %v990 = vunpack.c.l.s4 1966171168
    %v991 = vunpack.c.0.s8 %v990
    %v992 = vlaneseq
    %v993 = vshrl.u32 %v992, 7
    %v994 = vsub.s32 %v991, %v993
    %v995 = vrot.slane %v840, %v994
    %v997 = vunpack.c.l.s4 1966171168
    %v998 = vunpack.c.0.s8 %v997
    %v999 = vlaneseq
    %v1000 = vshrl.u32 %v999, 7
    %v1001 = vsub.s32 %v998, %v1000
    %v1002 = vrot.slane %v988, %v1001
    %v1003 = vcombine.high %v995, %v995
    %v1004 = vcombine.high %v1002, %v1002
    %v1006 = vunpack.c.l.s4 1966171168
    %v1007 = vunpack.c.0.s8 %v1006
    %v1008 = vlaneseq
    %v1009 = vshrl.u32 %v1008, 7
    %v1010 = vsub.s32 %v1007, %v1009
    %v1011 = vrot.slane %v995, %v1010
    %v1013 = vunpack.c.l.s4 1966171168
    %v1014 = vunpack.c.0.s8 %v1013
    %v1015 = vlaneseq
    %v1016 = vshrl.u32 %v1015, 7
    %v1017 = vsub.s32 %v1014, %v1016
    %v1018 = vrot.slane %v1002, %v1017
    %v1020 = vunpack.c.l.s4 1966171168
    %v1021 = vunpack.c.0.s8 %v1020
    %v1022 = vlaneseq
    %v1023 = vshrl.u32 %v1022, 7
    %v1024 = vsub.s32 %v1021, %v1023
    %v1025 = vrot.slane %v1003, %v1024
    %v1027 = vunpack.c.l.s4 1966171168
    %v1028 = vunpack.c.0.s8 %v1027
    %v1029 = vlaneseq
    %v1030 = vshrl.u32 %v1029, 7
    %v1031 = vsub.s32 %v1028, %v1030
    %v1032 = vrot.slane %v1004, %v1031
    %v1033 = vcombine.high %v1011, %v1011
    %v1034 = vcombine.high %v1018, %v1018
    %v1035 = vcombine.high %v1025, %v1025
    %v1036 = vcombine.high %v1032, %v1032
    %1038 = vrot.lane.b32.xlu0 %v630, 96
    %v1039 = vpop.permute.xlu0 %1038
    %1040 = vrot.lane.b32.xlu0 %v630, 64
    %v1041 = vpop.permute.xlu0 %1040
    %1042 = vrot.lane.b32.xlu0 %v630, 32
    %v1043 = vpop.permute.xlu0 %1042
    %v1044 = vcombine.high %v630, %v630
    %v1046 = vunpack.c.l.s4 1966171168
    %v1047 = vunpack.c.0.s8 %v1046
    %v1048 = vlaneseq
    %v1049 = vshrl.u32 %v1048, 7
    %v1050 = vsub.s32 %v1047, %v1049
    %v1051 = vrot.slane %v630, %v1050
    %v1053 = vunpack.c.l.s4 1966171168
    %v1054 = vunpack.c.0.s8 %v1053
    %v1055 = vlaneseq
    %v1056 = vshrl.u32 %v1055, 7
    %v1057 = vsub.s32 %v1054, %v1056
    %v1058 = vrot.slane %v1044, %v1057
    %v1059 = vcombine.high %v1051, %v1051
    %v1060 = vcombine.high %v1058, %v1058
    %v1062 = vunpack.c.l.s4 1966171168
    %v1063 = vunpack.c.0.s8 %v1062
    %v1064 = vlaneseq
    %v1065 = vshrl.u32 %v1064, 7
    %v1066 = vsub.s32 %v1063, %v1065
    %v1067 = vrot.slane %v1051, %v1066
    %v1069 = vunpack.c.l.s4 1966171168
    %v1070 = vunpack.c.0.s8 %v1069
    %v1071 = vlaneseq
    %v1072 = vshrl.u32 %v1071, 7
    %v1073 = vsub.s32 %v1070, %v1072
    %v1074 = vrot.slane %v1058, %v1073
    %v1076 = vunpack.c.l.s4 1966171168
    %v1077 = vunpack.c.0.s8 %v1076
    %v1078 = vlaneseq
    %v1079 = vshrl.u32 %v1078, 7
    %v1080 = vsub.s32 %v1077, %v1079
    %v1081 = vrot.slane %v1059, %v1080
    %v1083 = vunpack.c.l.s4 1966171168
    %v1084 = vunpack.c.0.s8 %v1083
    %v1085 = vlaneseq
    %v1086 = vshrl.u32 %v1085, 7
    %v1087 = vsub.s32 %v1084, %v1086
    %v1088 = vrot.slane %v1060, %v1087
    %v1089 = vcombine.high %v1067, %v1067
    %v1090 = vcombine.high %v1074, %v1074
    %v1091 = vcombine.high %v1081, %v1081
    %v1092 = vcombine.high %v1088, %v1088
    %v1093 = vcombine.high %v1039, %v1039
    %v1095 = vunpack.c.l.s4 1966171168
    %v1096 = vunpack.c.0.s8 %v1095
    %v1097 = vlaneseq
    %v1098 = vshrl.u32 %v1097, 7
    %v1099 = vsub.s32 %v1096, %v1098
    %v1100 = vrot.slane %v1039, %v1099
    %v1102 = vunpack.c.l.s4 1966171168
    %v1103 = vunpack.c.0.s8 %v1102
    %v1104 = vlaneseq
    %v1105 = vshrl.u32 %v1104, 7
    %v1106 = vsub.s32 %v1103, %v1105
    %v1107 = vrot.slane %v1093, %v1106
    %v1108 = vcombine.high %v1100, %v1100
    %v1109 = vcombine.high %v1107, %v1107
    %v1111 = vunpack.c.l.s4 1966171168
    %v1112 = vunpack.c.0.s8 %v1111
    %v1113 = vlaneseq
    %v1114 = vshrl.u32 %v1113, 7
    %v1115 = vsub.s32 %v1112, %v1114
    %v1116 = vrot.slane %v1100, %v1115
    %v1118 = vunpack.c.l.s4 1966171168
    %v1119 = vunpack.c.0.s8 %v1118
    %v1120 = vlaneseq
    %v1121 = vshrl.u32 %v1120, 7
    %v1122 = vsub.s32 %v1119, %v1121
    %v1123 = vrot.slane %v1107, %v1122
    %v1125 = vunpack.c.l.s4 1966171168
    %v1126 = vunpack.c.0.s8 %v1125
    %v1127 = vlaneseq
    %v1128 = vshrl.u32 %v1127, 7
    %v1129 = vsub.s32 %v1126, %v1128
    %v1130 = vrot.slane %v1108, %v1129
    %v1132 = vunpack.c.l.s4 1966171168
    %v1133 = vunpack.c.0.s8 %v1132
    %v1134 = vlaneseq
    %v1135 = vshrl.u32 %v1134, 7
    %v1136 = vsub.s32 %v1133, %v1135
    %v1137 = vrot.slane %v1109, %v1136
    %v1138 = vcombine.high %v1116, %v1116
    %v1139 = vcombine.high %v1123, %v1123
    %v1140 = vcombine.high %v1130, %v1130
    %v1141 = vcombine.high %v1137, %v1137
    %v1142 = vcombine.high %v1041, %v1041
    %v1144 = vunpack.c.l.s4 1966171168
    %v1145 = vunpack.c.0.s8 %v1144
    %v1146 = vlaneseq
    %v1147 = vshrl.u32 %v1146, 7
    %v1148 = vsub.s32 %v1145, %v1147
    %v1149 = vrot.slane %v1041, %v1148
    %v1151 = vunpack.c.l.s4 1966171168
    %v1152 = vunpack.c.0.s8 %v1151
    %v1153 = vlaneseq
    %v1154 = vshrl.u32 %v1153, 7
    %v1155 = vsub.s32 %v1152, %v1154
    %v1156 = vrot.slane %v1142, %v1155
    %v1157 = vcombine.high %v1149, %v1149
    %v1158 = vcombine.high %v1156, %v1156
    %v1160 = vunpack.c.l.s4 1966171168
    %v1161 = vunpack.c.0.s8 %v1160
    %v1162 = vlaneseq
    %v1163 = vshrl.u32 %v1162, 7
    %v1164 = vsub.s32 %v1161, %v1163
    %v1165 = vrot.slane %v1149, %v1164
    %v1167 = vunpack.c.l.s4 1966171168
    %v1168 = vunpack.c.0.s8 %v1167
    %v1169 = vlaneseq
    %v1170 = vshrl.u32 %v1169, 7
    %v1171 = vsub.s32 %v1168, %v1170
    %v1172 = vrot.slane %v1156, %v1171
    %v1174 = vunpack.c.l.s4 1966171168
    %v1175 = vunpack.c.0.s8 %v1174
    %v1176 = vlaneseq
    %v1177 = vshrl.u32 %v1176, 7
    %v1178 = vsub.s32 %v1175, %v1177
    %v1179 = vrot.slane %v1157, %v1178
    %v1181 = vunpack.c.l.s4 1966171168
    %v1182 = vunpack.c.0.s8 %v1181
    %v1183 = vlaneseq
    %v1184 = vshrl.u32 %v1183, 7
    %v1185 = vsub.s32 %v1182, %v1184
    %v1186 = vrot.slane %v1158, %v1185
    %v1187 = vcombine.high %v1165, %v1165
    %v1188 = vcombine.high %v1172, %v1172
    %v1189 = vcombine.high %v1179, %v1179
    %v1190 = vcombine.high %v1186, %v1186
    %v1191 = vcombine.high %v1043, %v1043
    %v1193 = vunpack.c.l.s4 1966171168
    %v1194 = vunpack.c.0.s8 %v1193
    %v1195 = vlaneseq
    %v1196 = vshrl.u32 %v1195, 7
    %v1197 = vsub.s32 %v1194, %v1196
    %v1198 = vrot.slane %v1043, %v1197
    %v1200 = vunpack.c.l.s4 1966171168
    %v1201 = vunpack.c.0.s8 %v1200
    %v1202 = vlaneseq
    %v1203 = vshrl.u32 %v1202, 7
    %v1204 = vsub.s32 %v1201, %v1203
    %v1205 = vrot.slane %v1191, %v1204
    %v1206 = vcombine.high %v1198, %v1198
    %v1207 = vcombine.high %v1205, %v1205
    %v1209 = vunpack.c.l.s4 1966171168
    %v1210 = vunpack.c.0.s8 %v1209
    %v1211 = vlaneseq
    %v1212 = vshrl.u32 %v1211, 7
    %v1213 = vsub.s32 %v1210, %v1212
    %v1214 = vrot.slane %v1198, %v1213
    %v1216 = vunpack.c.l.s4 1966171168
    %v1217 = vunpack.c.0.s8 %v1216
    %v1218 = vlaneseq
    %v1219 = vshrl.u32 %v1218, 7
    %v1220 = vsub.s32 %v1217, %v1219
    %v1221 = vrot.slane %v1205, %v1220
    %v1223 = vunpack.c.l.s4 1966171168
    %v1224 = vunpack.c.0.s8 %v1223
    %v1225 = vlaneseq
    %v1226 = vshrl.u32 %v1225, 7
    %v1227 = vsub.s32 %v1224, %v1226
    %v1228 = vrot.slane %v1206, %v1227
    %v1230 = vunpack.c.l.s4 1966171168
    %v1231 = vunpack.c.0.s8 %v1230
    %v1232 = vlaneseq
    %v1233 = vshrl.u32 %v1232, 7
    %v1234 = vsub.s32 %v1231, %v1233
    %v1235 = vrot.slane %v1207, %v1234
    %v1236 = vcombine.high %v1214, %v1214
    %v1237 = vcombine.high %v1221, %v1221
    %v1238 = vcombine.high %v1228, %v1228
    %v1239 = vcombine.high %v1235, %v1235
    %vm1240 = vcmask 261120
    %v1242 = vsel %vm1240, %v661, 0
    %v1245 = vsel %vm1240, %v864, 0
    %1247 = vmatprep.subr.bf16.mxu0 0
    %1248 = vmatpush1.bf16.xpose.msra.mxu0 %v1245
    %1249 = vmatprep.subr.bf16.mxu0 0
    %1250 = vmatpush1.bf16.xpose.msra.mxu0 0
    %1251 = vmatprep.subr.bf16.mxu0 0
    %1252 = vmatpush1.bf16.xpose.msra.mxu0 0
    %1253 = vmatprep.subr.bf16.mxu0 0
    %1254 = vmatpush1.bf16.xpose.msra.mxu0 0
    %1255 = vmatprep.subr.bf16.mxu0 0
    %1256 = vmatpush1.bf16.xpose.msra.mxu0 0
    %1257 = vmatprep.subr.bf16.mxu0 0
    %1258 = vmatpush1.bf16.xpose.msra.mxu0 0
    %1259 = vmatprep.subr.bf16.mxu0 0
    %1260 = vmatpush1.bf16.xpose.msra.mxu0 0
    %1261 = vmatprep.subr.bf16.mxu0 0
    %1262 = vmatpush1.bf16.xpose.msra.mxu0 0
    %1263 = vmatprep.subr.bf16.mxu0 0
    %1264 = vmatpush1.bf16.xpose.msra.mxu0 0
    %1265 = vmatprep.subr.bf16.mxu0 0
    %1266 = vmatpush1.bf16.xpose.msra.mxu0 0
    %1267 = vmatprep.subr.bf16.mxu0 0
    %1268 = vmatpush1.bf16.xpose.msra.mxu0 0
    %1269 = vmatprep.subr.bf16.mxu0 0
    %1270 = vmatpush1.bf16.xpose.msra.mxu0 0
    %1271 = vmatprep.subr.bf16.mxu0 0
    %1272 = vmatpush1.bf16.xpose.msra.mxu0 0
    %1273 = vmatprep.subr.bf16.mxu0 0
    %1274 = vmatpush1.bf16.xpose.msra.mxu0 0
    %1275 = vmatprep.subr.bf16.mxu0 0
    %1276 = vmatpush1.bf16.xpose.msra.mxu0 0
    %1277 = vmatprep.subr.bf16.mxu0 0
    %1278 = vmatpush1.bf16.xpose.msra.mxu0 0
    %1279 = vmatprep.mubr.bf16.mxu0 0
    %1280 = vmatmul.mubr.bf16.gmra.mrb[0].mxu0 %v1242
    %v1281 = vpop.f32.mrb[0].mxu0
    %v1282 = vadd.f32 0.0, %v1281
    %v1283 = vpop.f32.mrb[0].mxu0
    %v1284 = vpop.f32.mrb[0].mxu0
    %v1285 = vpop.f32.mrb[0].mxu0
    %1286 = vdwg.mxu0
    %v1288 = vsel %vm1240, %v675, 0
    %v1291 = vsel %vm1240, %v878, 0
    %1293 = vmatprep.subr.bf16.mxu0 0
    %1294 = vmatpush1.bf16.xpose.msra.mxu0 %v1291
    %1295 = vmatprep.subr.bf16.mxu0 0
    %1296 = vmatpush1.bf16.xpose.msra.mxu0 0
    %1297 = vmatprep.subr.bf16.mxu0 0
    %1298 = vmatpush1.bf16.xpose.msra.mxu0 0
    %1299 = vmatprep.subr.bf16.mxu0 0
    %1300 = vmatpush1.bf16.xpose.msra.mxu0 0
    %1301 = vmatprep.subr.bf16.mxu0 0
    %1302 = vmatpush1.bf16.xpose.msra.mxu0 0
    %1303 = vmatprep.subr.bf16.mxu0 0
    %1304 = vmatpush1.bf16.xpose.msra.mxu0 0
    %1305 = vmatprep.subr.bf16.mxu0 0
    %1306 = vmatpush1.bf16.xpose.msra.mxu0 0
    %1307 = vmatprep.subr.bf16.mxu0 0
    %1308 = vmatpush1.bf16.xpose.msra.mxu0 0
    %1309 = vmatprep.subr.bf16.mxu0 0
    %1310 = vmatpush1.bf16.xpose.msra.mxu0 0
    %1311 = vmatprep.subr.bf16.mxu0 0
    %1312 = vmatpush1.bf16.xpose.msra.mxu0 0
    %1313 = vmatprep.subr.bf16.mxu0 0
    %1314 = vmatpush1.bf16.xpose.msra.mxu0 0
    %1315 = vmatprep.subr.bf16.mxu0 0
    %1316 = vmatpush1.bf16.xpose.msra.mxu0 0
    %1317 = vmatprep.subr.bf16.mxu0 0
    %1318 = vmatpush1.bf16.xpose.msra.mxu0 0
    %1319 = vmatprep.subr.bf16.mxu0 0
    %1320 = vmatpush1.bf16.xpose.msra.mxu0 0
    %1321 = vmatprep.subr.bf16.mxu0 0
    %1322 = vmatpush1.bf16.xpose.msra.mxu0 0
    %1323 = vmatprep.subr.bf16.mxu0 0
    %1324 = vmatpush1.bf16.xpose.msra.mxu0 0
    %1325 = vmatprep.mubr.bf16.mxu0 0
    %1326 = vmatmul.mubr.bf16.gmra.mrb[0].mxu0 %v1288
    %v1327 = vpop.f32.mrb[0].mxu0
    %v1328 = vadd.f32 0.0, %v1327
    %v1329 = vpop.f32.mrb[0].mxu0
    %v1330 = vpop.f32.mrb[0].mxu0
    %v1331 = vpop.f32.mrb[0].mxu0
    %1332 = vdwg.mxu0
    %v1334 = vsel %vm1240, %v683, 0
    %v1337 = vsel %vm1240, %v886, 0
    %1339 = vmatprep.subr.bf16.mxu0 0
    %1340 = vmatpush1.bf16.xpose.msra.mxu0 %v1337
    %1341 = vmatprep.subr.bf16.mxu0 0
    %1342 = vmatpush1.bf16.xpose.msra.mxu0 0
    %1343 = vmatprep.subr.bf16.mxu0 0
    %1344 = vmatpush1.bf16.xpose.msra.mxu0 0
    %1345 = vmatprep.subr.bf16.mxu0 0
    %1346 = vmatpush1.bf16.xpose.msra.mxu0 0
    %1347 = vmatprep.subr.bf16.mxu0 0
    %1348 = vmatpush1.bf16.xpose.msra.mxu0 0
    %1349 = vmatprep.subr.bf16.mxu0 0
    %1350 = vmatpush1.bf16.xpose.msra.mxu0 0
    %1351 = vmatprep.subr.bf16.mxu0 0
    %1352 = vmatpush1.bf16.xpose.msra.mxu0 0
    %1353 = vmatprep.subr.bf16.mxu0 0
    %1354 = vmatpush1.bf16.xpose.msra.mxu0 0
    %1355 = vmatprep.subr.bf16.mxu0 0
    %1356 = vmatpush1.bf16.xpose.msra.mxu0 0
    %1357 = vmatprep.subr.bf16.mxu0 0
    %1358 = vmatpush1.bf16.xpose.msra.mxu0 0
    %1359 = vmatprep.subr.bf16.mxu0 0
    %1360 = vmatpush1.bf16.xpose.msra.mxu0 0
    %1361 = vmatprep.subr.bf16.mxu0 0
    %1362 = vmatpush1.bf16.xpose.msra.mxu0 0
    %1363 = vmatprep.subr.bf16.mxu0 0
    %1364 = vmatpush1.bf16.xpose.msra.mxu0 0
    %1365 = vmatprep.subr.bf16.mxu0 0
    %1366 = vmatpush1.bf16.xpose.msra.mxu0 0
    %1367 = vmatprep.subr.bf16.mxu0 0
    %1368 = vmatpush1.bf16.xpose.msra.mxu0 0
    %1369 = vmatprep.subr.bf16.mxu0 0
    %1370 = vmatpush1.bf16.xpose.msra.mxu0 0
    %1371 = vmatprep.mubr.bf16.mxu0 0
    %1372 = vmatmul.mubr.bf16.gmra.mrb[0].mxu0 %v1334
    %v1373 = vpop.f32.mrb[0].mxu0
    %v1374 = vadd.f32 0.0, %v1373
    %v1375 = vpop.f32.mrb[0].mxu0
    %v1376 = vpop.f32.mrb[0].mxu0
    %v1377 = vpop.f32.mrb[0].mxu0
    %1378 = vdwg.mxu0
    %v1380 = vsel %vm1240, %v685, 0
    %v1383 = vsel %vm1240, %v888, 0
    %1385 = vmatprep.subr.bf16.mxu0 0
    %1386 = vmatpush1.bf16.xpose.msra.mxu0 %v1383
    %1387 = vmatprep.subr.bf16.mxu0 0
    %1388 = vmatpush1.bf16.xpose.msra.mxu0 0
    %1389 = vmatprep.subr.bf16.mxu0 0
    %1390 = vmatpush1.bf16.xpose.msra.mxu0 0
    %1391 = vmatprep.subr.bf16.mxu0 0
    %1392 = vmatpush1.bf16.xpose.msra.mxu0 0
    %1393 = vmatprep.subr.bf16.mxu0 0
    %1394 = vmatpush1.bf16.xpose.msra.mxu0 0
    %1395 = vmatprep.subr.bf16.mxu0 0
    %1396 = vmatpush1.bf16.xpose.msra.mxu0 0
    %1397 = vmatprep.subr.bf16.mxu0 0
    %1398 = vmatpush1.bf16.xpose.msra.mxu0 0
    %1399 = vmatprep.subr.bf16.mxu0 0
    %1400 = vmatpush1.bf16.xpose.msra.mxu0 0
    %1401 = vmatprep.subr.bf16.mxu0 0
    %1402 = vmatpush1.bf16.xpose.msra.mxu0 0
    %1403 = vmatprep.subr.bf16.mxu0 0
    %1404 = vmatpush1.bf16.xpose.msra.mxu0 0
    %1405 = vmatprep.subr.bf16.mxu0 0
    %1406 = vmatpush1.bf16.xpose.msra.mxu0 0
    %1407 = vmatprep.subr.bf16.mxu0 0
    %1408 = vmatpush1.bf16.xpose.msra.mxu0 0
    %1409 = vmatprep.subr.bf16.mxu0 0
    %1410 = vmatpush1.bf16.xpose.msra.mxu0 0
    %1411 = vmatprep.subr.bf16.mxu0 0
    %1412 = vmatpush1.bf16.xpose.msra.mxu0 0
    %1413 = vmatprep.subr.bf16.mxu0 0
    %1414 = vmatpush1.bf16.xpose.msra.mxu0 0
    %1415 = vmatprep.subr.bf16.mxu0 0
    %1416 = vmatpush1.bf16.xpose.msra.mxu0 0
    %1417 = vmatprep.mubr.bf16.mxu0 0
    %1418 = vmatmul.mubr.bf16.gmra.mrb[0].mxu0 %v1380
    %v1419 = vpop.f32.mrb[0].mxu0
    %v1420 = vadd.f32 0.0, %v1419
    %v1421 = vpop.f32.mrb[0].mxu0
    %v1422 = vpop.f32.mrb[0].mxu0
    %v1423 = vpop.f32.mrb[0].mxu0
    %1424 = vdwg.mxu0
    %v1426 = vsel %vm1240, %v668, 0
    %v1429 = vsel %vm1240, %v871, 0
    %1431 = vmatprep.subr.bf16.mxu0 0
    %1432 = vmatpush1.bf16.xpose.msra.mxu0 %v1429
    %1433 = vmatprep.subr.bf16.mxu0 0
    %1434 = vmatpush1.bf16.xpose.msra.mxu0 0
    %1435 = vmatprep.subr.bf16.mxu0 0
    %1436 = vmatpush1.bf16.xpose.msra.mxu0 0
    %1437 = vmatprep.subr.bf16.mxu0 0
    %1438 = vmatpush1.bf16.xpose.msra.mxu0 0
    %1439 = vmatprep.subr.bf16.mxu0 0
    %1440 = vmatpush1.bf16.xpose.msra.mxu0 0
    %1441 = vmatprep.subr.bf16.mxu0 0
    %1442 = vmatpush1.bf16.xpose.msra.mxu0 0
    %1443 = vmatprep.subr.bf16.mxu0 0
    %1444 = vmatpush1.bf16.xpose.msra.mxu0 0
    %1445 = vmatprep.subr.bf16.mxu0 0
    %1446 = vmatpush1.bf16.xpose.msra.mxu0 0
    %1447 = vmatprep.subr.bf16.mxu0 0
    %1448 = vmatpush1.bf16.xpose.msra.mxu0 0
    %1449 = vmatprep.subr.bf16.mxu0 0
    %1450 = vmatpush1.bf16.xpose.msra.mxu0 0
    %1451 = vmatprep.subr.bf16.mxu0 0
    %1452 = vmatpush1.bf16.xpose.msra.mxu0 0
    %1453 = vmatprep.subr.bf16.mxu0 0
    %1454 = vmatpush1.bf16.xpose.msra.mxu0 0
    %1455 = vmatprep.subr.bf16.mxu0 0
    %1456 = vmatpush1.bf16.xpose.msra.mxu0 0
    %1457 = vmatprep.subr.bf16.mxu0 0
    %1458 = vmatpush1.bf16.xpose.msra.mxu0 0
    %1459 = vmatprep.subr.bf16.mxu0 0
    %1460 = vmatpush1.bf16.xpose.msra.mxu0 0
    %1461 = vmatprep.subr.bf16.mxu0 0
    %1462 = vmatpush1.bf16.xpose.msra.mxu0 0
    %1463 = vmatprep.mubr.bf16.mxu0 0
    %1464 = vmatmul.mubr.bf16.gmra.mrb[0].mxu0 %v1426
    %v1465 = vpop.f32.mrb[0].mxu0
    %v1466 = vadd.f32 0.0, %v1465
    %v1467 = vpop.f32.mrb[0].mxu0
    %v1468 = vpop.f32.mrb[0].mxu0
    %v1469 = vpop.f32.mrb[0].mxu0
    %1470 = vdwg.mxu0
    %v1472 = vsel %vm1240, %v682, 0
    %v1475 = vsel %vm1240, %v885, 0
    %1477 = vmatprep.subr.bf16.mxu0 0
    %1478 = vmatpush1.bf16.xpose.msra.mxu0 %v1475
    %1479 = vmatprep.subr.bf16.mxu0 0
    %1480 = vmatpush1.bf16.xpose.msra.mxu0 0
    %1481 = vmatprep.subr.bf16.mxu0 0
    %1482 = vmatpush1.bf16.xpose.msra.mxu0 0
    %1483 = vmatprep.subr.bf16.mxu0 0
    %1484 = vmatpush1.bf16.xpose.msra.mxu0 0
    %1485 = vmatprep.subr.bf16.mxu0 0
    %1486 = vmatpush1.bf16.xpose.msra.mxu0 0
    %1487 = vmatprep.subr.bf16.mxu0 0
    %1488 = vmatpush1.bf16.xpose.msra.mxu0 0
    %1489 = vmatprep.subr.bf16.mxu0 0
    %1490 = vmatpush1.bf16.xpose.msra.mxu0 0
    %1491 = vmatprep.subr.bf16.mxu0 0
    %1492 = vmatpush1.bf16.xpose.msra.mxu0 0
    %1493 = vmatprep.subr.bf16.mxu0 0
    %1494 = vmatpush1.bf16.xpose.msra.mxu0 0
    %1495 = vmatprep.subr.bf16.mxu0 0
    %1496 = vmatpush1.bf16.xpose.msra.mxu0 0
    %1497 = vmatprep.subr.bf16.mxu0 0
    %1498 = vmatpush1.bf16.xpose.msra.mxu0 0
    %1499 = vmatprep.subr.bf16.mxu0 0
    %1500 = vmatpush1.bf16.xpose.msra.mxu0 0
    %1501 = vmatprep.subr.bf16.mxu0 0
    %1502 = vmatpush1.bf16.xpose.msra.mxu0 0
    %1503 = vmatprep.subr.bf16.mxu0 0
    %1504 = vmatpush1.bf16.xpose.msra.mxu0 0
    %1505 = vmatprep.subr.bf16.mxu0 0
    %1506 = vmatpush1.bf16.xpose.msra.mxu0 0
    %1507 = vmatprep.subr.bf16.mxu0 0
    %1508 = vmatpush1.bf16.xpose.msra.mxu0 0
    %1509 = vmatprep.mubr.bf16.mxu0 0
    %1510 = vmatmul.mubr.bf16.gmra.mrb[0].mxu0 %v1472
    %v1511 = vpop.f32.mrb[0].mxu0
    %v1512 = vadd.f32 0.0, %v1511
    %v1513 = vpop.f32.mrb[0].mxu0
    %v1514 = vpop.f32.mrb[0].mxu0
    %v1515 = vpop.f32.mrb[0].mxu0
    %1516 = vdwg.mxu0
    %v1518 = vsel %vm1240, %v684, 0
    %v1521 = vsel %vm1240, %v887, 0
    %1523 = vmatprep.subr.bf16.mxu0 0
    %1524 = vmatpush1.bf16.xpose.msra.mxu0 %v1521
    %1525 = vmatprep.subr.bf16.mxu0 0
    %1526 = vmatpush1.bf16.xpose.msra.mxu0 0
    %1527 = vmatprep.subr.bf16.mxu0 0
    %1528 = vmatpush1.bf16.xpose.msra.mxu0 0
    %1529 = vmatprep.subr.bf16.mxu0 0
    %1530 = vmatpush1.bf16.xpose.msra.mxu0 0
    %1531 = vmatprep.subr.bf16.mxu0 0
    %1532 = vmatpush1.bf16.xpose.msra.mxu0 0
    %1533 = vmatprep.subr.bf16.mxu0 0
    %1534 = vmatpush1.bf16.xpose.msra.mxu0 0
    %1535 = vmatprep.subr.bf16.mxu0 0
    %1536 = vmatpush1.bf16.xpose.msra.mxu0 0
    %1537 = vmatprep.subr.bf16.mxu0 0
    %1538 = vmatpush1.bf16.xpose.msra.mxu0 0
    %1539 = vmatprep.subr.bf16.mxu0 0
    %1540 = vmatpush1.bf16.xpose.msra.mxu0 0
    %1541 = vmatprep.subr.bf16.mxu0 0
    %1542 = vmatpush1.bf16.xpose.msra.mxu0 0
    %1543 = vmatprep.subr.bf16.mxu0 0
    %1544 = vmatpush1.bf16.xpose.msra.mxu0 0
    %1545 = vmatprep.subr.bf16.mxu0 0
    %1546 = vmatpush1.bf16.xpose.msra.mxu0 0
    %1547 = vmatprep.subr.bf16.mxu0 0
    %1548 = vmatpush1.bf16.xpose.msra.mxu0 0
    %1549 = vmatprep.subr.bf16.mxu0 0
    %1550 = vmatpush1.bf16.xpose.msra.mxu0 0
    %1551 = vmatprep.subr.bf16.mxu0 0
    %1552 = vmatpush1.bf16.xpose.msra.mxu0 0
    %1553 = vmatprep.subr.bf16.mxu0 0
    %1554 = vmatpush1.bf16.xpose.msra.mxu0 0
    %1555 = vmatprep.mubr.bf16.mxu0 0
    %1556 = vmatmul.mubr.bf16.gmra.mrb[0].mxu0 %v1518
    %v1557 = vpop.f32.mrb[0].mxu0
    %v1558 = vadd.f32 0.0, %v1557
    %v1559 = vpop.f32.mrb[0].mxu0
    %v1560 = vpop.f32.mrb[0].mxu0
    %v1561 = vpop.f32.mrb[0].mxu0
    %1562 = vdwg.mxu0
    %v1564 = vsel %vm1240, %v686, 0
    %v1567 = vsel %vm1240, %v889, 0
    %1569 = vmatprep.subr.bf16.mxu0 0
    %1570 = vmatpush1.bf16.xpose.msra.mxu0 %v1567
    %1571 = vmatprep.subr.bf16.mxu0 0
    %1572 = vmatpush1.bf16.xpose.msra.mxu0 0
    %1573 = vmatprep.subr.bf16.mxu0 0
    %1574 = vmatpush1.bf16.xpose.msra.mxu0 0
    %1575 = vmatprep.subr.bf16.mxu0 0
    %1576 = vmatpush1.bf16.xpose.msra.mxu0 0
    %1577 = vmatprep.subr.bf16.mxu0 0
    %1578 = vmatpush1.bf16.xpose.msra.mxu0 0
    %1579 = vmatprep.subr.bf16.mxu0 0
    %1580 = vmatpush1.bf16.xpose.msra.mxu0 0
    %1581 = vmatprep.subr.bf16.mxu0 0
    %1582 = vmatpush1.bf16.xpose.msra.mxu0 0
    %1583 = vmatprep.subr.bf16.mxu0 0
    %1584 = vmatpush1.bf16.xpose.msra.mxu0 0
    %1585 = vmatprep.subr.bf16.mxu0 0
    %1586 = vmatpush1.bf16.xpose.msra.mxu0 0
    %1587 = vmatprep.subr.bf16.mxu0 0
    %1588 = vmatpush1.bf16.xpose.msra.mxu0 0
    %1589 = vmatprep.subr.bf16.mxu0 0
    %1590 = vmatpush1.bf16.xpose.msra.mxu0 0
    %1591 = vmatprep.subr.bf16.mxu0 0
    %1592 = vmatpush1.bf16.xpose.msra.mxu0 0
    %1593 = vmatprep.subr.bf16.mxu0 0
    %1594 = vmatpush1.bf16.xpose.msra.mxu0 0
    %1595 = vmatprep.subr.bf16.mxu0 0
    %1596 = vmatpush1.bf16.xpose.msra.mxu0 0
    %1597 = vmatprep.subr.bf16.mxu0 0
    %1598 = vmatpush1.bf16.xpose.msra.mxu0 0
    %1599 = vmatprep.subr.bf16.mxu0 0
    %1600 = vmatpush1.bf16.xpose.msra.mxu0 0
    %1601 = vmatprep.mubr.bf16.mxu0 0
    %1602 = vmatmul.mubr.bf16.gmra.mrb[0].mxu0 %v1564
    %v1603 = vpop.f32.mrb[0].mxu0
    %v1604 = vadd.f32 0.0, %v1603
    %v1605 = vpop.f32.mrb[0].mxu0
    %v1606 = vpop.f32.mrb[0].mxu0
    %v1607 = vpop.f32.mrb[0].mxu0
    %1608 = vdwg.mxu0
    %v1610 = vsel %vm1240, %v710, 0
    %v1613 = vsel %vm1240, %v913, 0
    %1615 = vmatprep.subr.bf16.mxu0 0
    %1616 = vmatpush1.bf16.xpose.msra.mxu0 %v1613
    %1617 = vmatprep.subr.bf16.mxu0 0
    %1618 = vmatpush1.bf16.xpose.msra.mxu0 0
    %1619 = vmatprep.subr.bf16.mxu0 0
    %1620 = vmatpush1.bf16.xpose.msra.mxu0 0
    %1621 = vmatprep.subr.bf16.mxu0 0
    %1622 = vmatpush1.bf16.xpose.msra.mxu0 0
    %1623 = vmatprep.subr.bf16.mxu0 0
    %1624 = vmatpush1.bf16.xpose.msra.mxu0 0
    %1625 = vmatprep.subr.bf16.mxu0 0
    %1626 = vmatpush1.bf16.xpose.msra.mxu0 0
    %1627 = vmatprep.subr.bf16.mxu0 0
    %1628 = vmatpush1.bf16.xpose.msra.mxu0 0
    %1629 = vmatprep.subr.bf16.mxu0 0
    %1630 = vmatpush1.bf16.xpose.msra.mxu0 0
    %1631 = vmatprep.subr.bf16.mxu0 0
    %1632 = vmatpush1.bf16.xpose.msra.mxu0 0
    %1633 = vmatprep.subr.bf16.mxu0 0
    %1634 = vmatpush1.bf16.xpose.msra.mxu0 0
    %1635 = vmatprep.subr.bf16.mxu0 0
    %1636 = vmatpush1.bf16.xpose.msra.mxu0 0
    %1637 = vmatprep.subr.bf16.mxu0 0
    %1638 = vmatpush1.bf16.xpose.msra.mxu0 0
    %1639 = vmatprep.subr.bf16.mxu0 0
    %1640 = vmatpush1.bf16.xpose.msra.mxu0 0
    %1641 = vmatprep.subr.bf16.mxu0 0
    %1642 = vmatpush1.bf16.xpose.msra.mxu0 0
    %1643 = vmatprep.subr.bf16.mxu0 0
    %1644 = vmatpush1.bf16.xpose.msra.mxu0 0
    %1645 = vmatprep.subr.bf16.mxu0 0
    %1646 = vmatpush1.bf16.xpose.msra.mxu0 0
    %1647 = vmatprep.mubr.bf16.mxu0 0
    %1648 = vmatmul.mubr.bf16.gmra.mrb[0].mxu0 %v1610
    %v1649 = vpop.f32.mrb[0].mxu0
    %v1650 = vadd.f32 0.0, %v1649
    %v1651 = vpop.f32.mrb[0].mxu0
    %v1652 = vpop.f32.mrb[0].mxu0
    %v1653 = vpop.f32.mrb[0].mxu0
    %1654 = vdwg.mxu0
    %v1656 = vsel %vm1240, %v724, 0
    %v1659 = vsel %vm1240, %v927, 0
    %1661 = vmatprep.subr.bf16.mxu0 0
    %1662 = vmatpush1.bf16.xpose.msra.mxu0 %v1659
    %1663 = vmatprep.subr.bf16.mxu0 0
    %1664 = vmatpush1.bf16.xpose.msra.mxu0 0
    %1665 = vmatprep.subr.bf16.mxu0 0
    %1666 = vmatpush1.bf16.xpose.msra.mxu0 0
    %1667 = vmatprep.subr.bf16.mxu0 0
    %1668 = vmatpush1.bf16.xpose.msra.mxu0 0
    %1669 = vmatprep.subr.bf16.mxu0 0
    %1670 = vmatpush1.bf16.xpose.msra.mxu0 0
    %1671 = vmatprep.subr.bf16.mxu0 0
    %1672 = vmatpush1.bf16.xpose.msra.mxu0 0
    %1673 = vmatprep.subr.bf16.mxu0 0
    %1674 = vmatpush1.bf16.xpose.msra.mxu0 0
    %1675 = vmatprep.subr.bf16.mxu0 0
    %1676 = vmatpush1.bf16.xpose.msra.mxu0 0
    %1677 = vmatprep.subr.bf16.mxu0 0
    %1678 = vmatpush1.bf16.xpose.msra.mxu0 0
    %1679 = vmatprep.subr.bf16.mxu0 0
    %1680 = vmatpush1.bf16.xpose.msra.mxu0 0
    %1681 = vmatprep.subr.bf16.mxu0 0
    %1682 = vmatpush1.bf16.xpose.msra.mxu0 0
    %1683 = vmatprep.subr.bf16.mxu0 0
    %1684 = vmatpush1.bf16.xpose.msra.mxu0 0
    %1685 = vmatprep.subr.bf16.mxu0 0
    %1686 = vmatpush1.bf16.xpose.msra.mxu0 0
    %1687 = vmatprep.subr.bf16.mxu0 0
    %1688 = vmatpush1.bf16.xpose.msra.mxu0 0
    %1689 = vmatprep.subr.bf16.mxu0 0
    %1690 = vmatpush1.bf16.xpose.msra.mxu0 0
    %1691 = vmatprep.subr.bf16.mxu0 0
    %1692 = vmatpush1.bf16.xpose.msra.mxu0 0
    %1693 = vmatprep.mubr.bf16.mxu0 0
    %1694 = vmatmul.mubr.bf16.gmra.mrb[0].mxu0 %v1656
    %v1695 = vpop.f32.mrb[0].mxu0
    %v1696 = vadd.f32 0.0, %v1695
    %v1697 = vpop.f32.mrb[0].mxu0
    %v1698 = vpop.f32.mrb[0].mxu0
    %v1699 = vpop.f32.mrb[0].mxu0
    %1700 = vdwg.mxu0
    %v1702 = vsel %vm1240, %v732, 0
    %v1705 = vsel %vm1240, %v935, 0
    %1707 = vmatprep.subr.bf16.mxu0 0
    %1708 = vmatpush1.bf16.xpose.msra.mxu0 %v1705
    %1709 = vmatprep.subr.bf16.mxu0 0
    %1710 = vmatpush1.bf16.xpose.msra.mxu0 0
    %1711 = vmatprep.subr.bf16.mxu0 0
    %1712 = vmatpush1.bf16.xpose.msra.mxu0 0
    %1713 = vmatprep.subr.bf16.mxu0 0
    %1714 = vmatpush1.bf16.xpose.msra.mxu0 0
    %1715 = vmatprep.subr.bf16.mxu0 0
    %1716 = vmatpush1.bf16.xpose.msra.mxu0 0
    %1717 = vmatprep.subr.bf16.mxu0 0
    %1718 = vmatpush1.bf16.xpose.msra.mxu0 0
    %1719 = vmatprep.subr.bf16.mxu0 0
    %1720 = vmatpush1.bf16.xpose.msra.mxu0 0
    %1721 = vmatprep.subr.bf16.mxu0 0
    %1722 = vmatpush1.bf16.xpose.msra.mxu0 0
    %1723 = vmatprep.subr.bf16.mxu0 0
    %1724 = vmatpush1.bf16.xpose.msra.mxu0 0
    %1725 = vmatprep.subr.bf16.mxu0 0
    %1726 = vmatpush1.bf16.xpose.msra.mxu0 0
    %1727 = vmatprep.subr.bf16.mxu0 0
    %1728 = vmatpush1.bf16.xpose.msra.mxu0 0
    %1729 = vmatprep.subr.bf16.mxu0 0
    %1730 = vmatpush1.bf16.xpose.msra.mxu0 0
    %1731 = vmatprep.subr.bf16.mxu0 0
    %1732 = vmatpush1.bf16.xpose.msra.mxu0 0
    %1733 = vmatprep.subr.bf16.mxu0 0
    %1734 = vmatpush1.bf16.xpose.msra.mxu0 0
    %1735 = vmatprep.subr.bf16.mxu0 0
    %1736 = vmatpush1.bf16.xpose.msra.mxu0 0
    %1737 = vmatprep.subr.bf16.mxu0 0
    %1738 = vmatpush1.bf16.xpose.msra.mxu0 0
    %1739 = vmatprep.mubr.bf16.mxu0 0
    %1740 = vmatmul.mubr.bf16.gmra.mrb[0].mxu0 %v1702
    %v1741 = vpop.f32.mrb[0].mxu0
    %v1742 = vadd.f32 0.0, %v1741
    %v1743 = vpop.f32.mrb[0].mxu0
    %v1744 = vpop.f32.mrb[0].mxu0
    %v1745 = vpop.f32.mrb[0].mxu0
    %1746 = vdwg.mxu0
    %v1748 = vsel %vm1240, %v734, 0
    %v1751 = vsel %vm1240, %v937, 0
    %1753 = vmatprep.subr.bf16.mxu0 0
    %1754 = vmatpush1.bf16.xpose.msra.mxu0 %v1751
    %1755 = vmatprep.subr.bf16.mxu0 0
    %1756 = vmatpush1.bf16.xpose.msra.mxu0 0
    %1757 = vmatprep.subr.bf16.mxu0 0
    %1758 = vmatpush1.bf16.xpose.msra.mxu0 0
    %1759 = vmatprep.subr.bf16.mxu0 0
    %1760 = vmatpush1.bf16.xpose.msra.mxu0 0
    %1761 = vmatprep.subr.bf16.mxu0 0
    %1762 = vmatpush1.bf16.xpose.msra.mxu0 0
    %1763 = vmatprep.subr.bf16.mxu0 0
    %1764 = vmatpush1.bf16.xpose.msra.mxu0 0
    %1765 = vmatprep.subr.bf16.mxu0 0
    %1766 = vmatpush1.bf16.xpose.msra.mxu0 0
    %1767 = vmatprep.subr.bf16.mxu0 0
    %1768 = vmatpush1.bf16.xpose.msra.mxu0 0
    %1769 = vmatprep.subr.bf16.mxu0 0
    %1770 = vmatpush1.bf16.xpose.msra.mxu0 0
    %1771 = vmatprep.subr.bf16.mxu0 0
    %1772 = vmatpush1.bf16.xpose.msra.mxu0 0
    %1773 = vmatprep.subr.bf16.mxu0 0
    %1774 = vmatpush1.bf16.xpose.msra.mxu0 0
    %1775 = vmatprep.subr.bf16.mxu0 0
    %1776 = vmatpush1.bf16.xpose.msra.mxu0 0
    %1777 = vmatprep.subr.bf16.mxu0 0
    %1778 = vmatpush1.bf16.xpose.msra.mxu0 0
    %1779 = vmatprep.subr.bf16.mxu0 0
    %1780 = vmatpush1.bf16.xpose.msra.mxu0 0
    %1781 = vmatprep.subr.bf16.mxu0 0
    %1782 = vmatpush1.bf16.xpose.msra.mxu0 0
    %1783 = vmatprep.subr.bf16.mxu0 0
    %1784 = vmatpush1.bf16.xpose.msra.mxu0 0
    %1785 = vmatprep.mubr.bf16.mxu0 0
    %1786 = vmatmul.mubr.bf16.gmra.mrb[0].mxu0 %v1748
    %v1787 = vpop.f32.mrb[0].mxu0
    %v1788 = vadd.f32 0.0, %v1787
    %v1789 = vpop.f32.mrb[0].mxu0
    %v1790 = vpop.f32.mrb[0].mxu0
    %v1791 = vpop.f32.mrb[0].mxu0
    %1792 = vdwg.mxu0
    %v1794 = vsel %vm1240, %v717, 0
    %v1797 = vsel %vm1240, %v920, 0
    %1799 = vmatprep.subr.bf16.mxu0 0
    %1800 = vmatpush1.bf16.xpose.msra.mxu0 %v1797
    %1801 = vmatprep.subr.bf16.mxu0 0
    %1802 = vmatpush1.bf16.xpose.msra.mxu0 0
    %1803 = vmatprep.subr.bf16.mxu0 0
    %1804 = vmatpush1.bf16.xpose.msra.mxu0 0
    %1805 = vmatprep.subr.bf16.mxu0 0
    %1806 = vmatpush1.bf16.xpose.msra.mxu0 0
    %1807 = vmatprep.subr.bf16.mxu0 0
    %1808 = vmatpush1.bf16.xpose.msra.mxu0 0
    %1809 = vmatprep.subr.bf16.mxu0 0
    %1810 = vmatpush1.bf16.xpose.msra.mxu0 0
    %1811 = vmatprep.subr.bf16.mxu0 0
    %1812 = vmatpush1.bf16.xpose.msra.mxu0 0
    %1813 = vmatprep.subr.bf16.mxu0 0
    %1814 = vmatpush1.bf16.xpose.msra.mxu0 0
    %1815 = vmatprep.subr.bf16.mxu0 0
    %1816 = vmatpush1.bf16.xpose.msra.mxu0 0
    %1817 = vmatprep.subr.bf16.mxu0 0
    %1818 = vmatpush1.bf16.xpose.msra.mxu0 0
    %1819 = vmatprep.subr.bf16.mxu0 0
    %1820 = vmatpush1.bf16.xpose.msra.mxu0 0
    %1821 = vmatprep.subr.bf16.mxu0 0
    %1822 = vmatpush1.bf16.xpose.msra.mxu0 0
    %1823 = vmatprep.subr.bf16.mxu0 0
    %1824 = vmatpush1.bf16.xpose.msra.mxu0 0
    %1825 = vmatprep.subr.bf16.mxu0 0
    %1826 = vmatpush1.bf16.xpose.msra.mxu0 0
    %1827 = vmatprep.subr.bf16.mxu0 0
    %1828 = vmatpush1.bf16.xpose.msra.mxu0 0
    %1829 = vmatprep.subr.bf16.mxu0 0
    %1830 = vmatpush1.bf16.xpose.msra.mxu0 0
    %1831 = vmatprep.mubr.bf16.mxu0 0
    %1832 = vmatmul.mubr.bf16.gmra.mrb[0].mxu0 %v1794
    %v1833 = vpop.f32.mrb[0].mxu0
    %v1834 = vadd.f32 0.0, %v1833
    %v1835 = vpop.f32.mrb[0].mxu0
    %v1836 = vpop.f32.mrb[0].mxu0
    %v1837 = vpop.f32.mrb[0].mxu0
    %1838 = vdwg.mxu0
    %v1840 = vsel %vm1240, %v731, 0
    %v1843 = vsel %vm1240, %v934, 0
    %1845 = vmatprep.subr.bf16.mxu0 0
    %1846 = vmatpush1.bf16.xpose.msra.mxu0 %v1843
    %1847 = vmatprep.subr.bf16.mxu0 0
    %1848 = vmatpush1.bf16.xpose.msra.mxu0 0
    %1849 = vmatprep.subr.bf16.mxu0 0
    %1850 = vmatpush1.bf16.xpose.msra.mxu0 0
    %1851 = vmatprep.subr.bf16.mxu0 0
    %1852 = vmatpush1.bf16.xpose.msra.mxu0 0
    %1853 = vmatprep.subr.bf16.mxu0 0
    %1854 = vmatpush1.bf16.xpose.msra.mxu0 0
    %1855 = vmatprep.subr.bf16.mxu0 0
    %1856 = vmatpush1.bf16.xpose.msra.mxu0 0
    %1857 = vmatprep.subr.bf16.mxu0 0
    %1858 = vmatpush1.bf16.xpose.msra.mxu0 0
    %1859 = vmatprep.subr.bf16.mxu0 0
    %1860 = vmatpush1.bf16.xpose.msra.mxu0 0
    %1861 = vmatprep.subr.bf16.mxu0 0
    %1862 = vmatpush1.bf16.xpose.msra.mxu0 0
    %1863 = vmatprep.subr.bf16.mxu0 0
    %1864 = vmatpush1.bf16.xpose.msra.mxu0 0
    %1865 = vmatprep.subr.bf16.mxu0 0
    %1866 = vmatpush1.bf16.xpose.msra.mxu0 0
    %1867 = vmatprep.subr.bf16.mxu0 0
    %1868 = vmatpush1.bf16.xpose.msra.mxu0 0
    %1869 = vmatprep.subr.bf16.mxu0 0
    %1870 = vmatpush1.bf16.xpose.msra.mxu0 0
    %1871 = vmatprep.subr.bf16.mxu0 0
    %1872 = vmatpush1.bf16.xpose.msra.mxu0 0
    %1873 = vmatprep.subr.bf16.mxu0 0
    %1874 = vmatpush1.bf16.xpose.msra.mxu0 0
    %1875 = vmatprep.subr.bf16.mxu0 0
    %1876 = vmatpush1.bf16.xpose.msra.mxu0 0
    %1877 = vmatprep.mubr.bf16.mxu0 0
    %1878 = vmatmul.mubr.bf16.gmra.mrb[0].mxu0 %v1840
    %v1879 = vpop.f32.mrb[0].mxu0
    %v1880 = vadd.f32 0.0, %v1879
    %v1881 = vpop.f32.mrb[0].mxu0
    %v1882 = vpop.f32.mrb[0].mxu0
    %v1883 = vpop.f32.mrb[0].mxu0
    %1884 = vdwg.mxu0
    %v1886 = vsel %vm1240, %v733, 0
    %v1889 = vsel %vm1240, %v936, 0
    %1891 = vmatprep.subr.bf16.mxu0 0
    %1892 = vmatpush1.bf16.xpose.msra.mxu0 %v1889
    %1893 = vmatprep.subr.bf16.mxu0 0
    %1894 = vmatpush1.bf16.xpose.msra.mxu0 0
    %1895 = vmatprep.subr.bf16.mxu0 0
    %1896 = vmatpush1.bf16.xpose.msra.mxu0 0
    %1897 = vmatprep.subr.bf16.mxu0 0
    %1898 = vmatpush1.bf16.xpose.msra.mxu0 0
    %1899 = vmatprep.subr.bf16.mxu0 0
    %1900 = vmatpush1.bf16.xpose.msra.mxu0 0
    %1901 = vmatprep.subr.bf16.mxu0 0
    %1902 = vmatpush1.bf16.xpose.msra.mxu0 0
    %1903 = vmatprep.subr.bf16.mxu0 0
    %1904 = vmatpush1.bf16.xpose.msra.mxu0 0
    %1905 = vmatprep.subr.bf16.mxu0 0
    %1906 = vmatpush1.bf16.xpose.msra.mxu0 0
    %1907 = vmatprep.subr.bf16.mxu0 0
    %1908 = vmatpush1.bf16.xpose.msra.mxu0 0
    %1909 = vmatprep.subr.bf16.mxu0 0
    %1910 = vmatpush1.bf16.xpose.msra.mxu0 0
    %1911 = vmatprep.subr.bf16.mxu0 0
    %1912 = vmatpush1.bf16.xpose.msra.mxu0 0
    %1913 = vmatprep.subr.bf16.mxu0 0
    %1914 = vmatpush1.bf16.xpose.msra.mxu0 0
    %1915 = vmatprep.subr.bf16.mxu0 0
    %1916 = vmatpush1.bf16.xpose.msra.mxu0 0
    %1917 = vmatprep.subr.bf16.mxu0 0
    %1918 = vmatpush1.bf16.xpose.msra.mxu0 0
    %1919 = vmatprep.subr.bf16.mxu0 0
    %1920 = vmatpush1.bf16.xpose.msra.mxu0 0
    %1921 = vmatprep.subr.bf16.mxu0 0
    %1922 = vmatpush1.bf16.xpose.msra.mxu0 0
    %1923 = vmatprep.mubr.bf16.mxu0 0
    %1924 = vmatmul.mubr.bf16.gmra.mrb[0].mxu0 %v1886
    %v1925 = vpop.f32.mrb[0].mxu0
    %v1926 = vadd.f32 0.0, %v1925
    %v1927 = vpop.f32.mrb[0].mxu0
    %v1928 = vpop.f32.mrb[0].mxu0
    %v1929 = vpop.f32.mrb[0].mxu0
    %1930 = vdwg.mxu0
    %v1932 = vsel %vm1240, %v735, 0
    %v1935 = vsel %vm1240, %v938, 0
    %1937 = vmatprep.subr.bf16.mxu0 0
    %1938 = vmatpush1.bf16.xpose.msra.mxu0 %v1935
    %1939 = vmatprep.subr.bf16.mxu0 0
    %1940 = vmatpush1.bf16.xpose.msra.mxu0 0
    %1941 = vmatprep.subr.bf16.mxu0 0
    %1942 = vmatpush1.bf16.xpose.msra.mxu0 0
    %1943 = vmatprep.subr.bf16.mxu0 0
    %1944 = vmatpush1.bf16.xpose.msra.mxu0 0
    %1945 = vmatprep.subr.bf16.mxu0 0
    %1946 = vmatpush1.bf16.xpose.msra.mxu0 0
    %1947 = vmatprep.subr.bf16.mxu0 0
    %1948 = vmatpush1.bf16.xpose.msra.mxu0 0
    %1949 = vmatprep.subr.bf16.mxu0 0
    %1950 = vmatpush1.bf16.xpose.msra.mxu0 0
    %1951 = vmatprep.subr.bf16.mxu0 0
    %1952 = vmatpush1.bf16.xpose.msra.mxu0 0
    %1953 = vmatprep.subr.bf16.mxu0 0
    %1954 = vmatpush1.bf16.xpose.msra.mxu0 0
    %1955 = vmatprep.subr.bf16.mxu0 0
    %1956 = vmatpush1.bf16.xpose.msra.mxu0 0
    %1957 = vmatprep.subr.bf16.mxu0 0
    %1958 = vmatpush1.bf16.xpose.msra.mxu0 0
    %1959 = vmatprep.subr.bf16.mxu0 0
    %1960 = vmatpush1.bf16.xpose.msra.mxu0 0
    %1961 = vmatprep.subr.bf16.mxu0 0
    %1962 = vmatpush1.bf16.xpose.msra.mxu0 0
    %1963 = vmatprep.subr.bf16.mxu0 0
    %1964 = vmatpush1.bf16.xpose.msra.mxu0 0
    %1965 = vmatprep.subr.bf16.mxu0 0
    %1966 = vmatpush1.bf16.xpose.msra.mxu0 0
    %1967 = vmatprep.subr.bf16.mxu0 0
    %1968 = vmatpush1.bf16.xpose.msra.mxu0 0
    %1969 = vmatprep.mubr.bf16.mxu0 0
    %1970 = vmatmul.mubr.bf16.gmra.mrb[0].mxu0 %v1932
    %v1971 = vpop.f32.mrb[0].mxu0
    %v1972 = vadd.f32 0.0, %v1971
    %v1973 = vpop.f32.mrb[0].mxu0
    %v1974 = vpop.f32.mrb[0].mxu0
    %v1975 = vpop.f32.mrb[0].mxu0
    %1976 = vdwg.mxu0
    %v1978 = vsel %vm1240, %v759, 0
    %v1981 = vsel %vm1240, %v962, 0
    %1983 = vmatprep.subr.bf16.mxu0 0
    %1984 = vmatpush1.bf16.xpose.msra.mxu0 %v1981
    %1985 = vmatprep.subr.bf16.mxu0 0
    %1986 = vmatpush1.bf16.xpose.msra.mxu0 0
    %1987 = vmatprep.subr.bf16.mxu0 0
    %1988 = vmatpush1.bf16.xpose.msra.mxu0 0
    %1989 = vmatprep.subr.bf16.mxu0 0
    %1990 = vmatpush1.bf16.xpose.msra.mxu0 0
    %1991 = vmatprep.subr.bf16.mxu0 0
    %1992 = vmatpush1.bf16.xpose.msra.mxu0 0
    %1993 = vmatprep.subr.bf16.mxu0 0
    %1994 = vmatpush1.bf16.xpose.msra.mxu0 0
    %1995 = vmatprep.subr.bf16.mxu0 0
    %1996 = vmatpush1.bf16.xpose.msra.mxu0 0
    %1997 = vmatprep.subr.bf16.mxu0 0
    %1998 = vmatpush1.bf16.xpose.msra.mxu0 0
    %1999 = vmatprep.subr.bf16.mxu0 0
    %2000 = vmatpush1.bf16.xpose.msra.mxu0 0
    %2001 = vmatprep.subr.bf16.mxu0 0
    %2002 = vmatpush1.bf16.xpose.msra.mxu0 0
    %2003 = vmatprep.subr.bf16.mxu0 0
    %2004 = vmatpush1.bf16.xpose.msra.mxu0 0
    %2005 = vmatprep.subr.bf16.mxu0 0
    %2006 = vmatpush1.bf16.xpose.msra.mxu0 0
    %2007 = vmatprep.subr.bf16.mxu0 0
    %2008 = vmatpush1.bf16.xpose.msra.mxu0 0
    %2009 = vmatprep.subr.bf16.mxu0 0
    %2010 = vmatpush1.bf16.xpose.msra.mxu0 0
    %2011 = vmatprep.subr.bf16.mxu0 0
    %2012 = vmatpush1.bf16.xpose.msra.mxu0 0
    %2013 = vmatprep.subr.bf16.mxu0 0
    %2014 = vmatpush1.bf16.xpose.msra.mxu0 0
    %2015 = vmatprep.mubr.bf16.mxu0 0
    %2016 = vmatmul.mubr.bf16.gmra.mrb[0].mxu0 %v1978
    %v2017 = vpop.f32.mrb[0].mxu0
    %v2018 = vadd.f32 0.0, %v2017
    %v2019 = vpop.f32.mrb[0].mxu0
    %v2020 = vpop.f32.mrb[0].mxu0
    %v2021 = vpop.f32.mrb[0].mxu0
    %2022 = vdwg.mxu0
    %v2024 = vsel %vm1240, %v773, 0
    %v2027 = vsel %vm1240, %v976, 0
    %2029 = vmatprep.subr.bf16.mxu0 0
    %2030 = vmatpush1.bf16.xpose.msra.mxu0 %v2027
    %2031 = vmatprep.subr.bf16.mxu0 0
    %2032 = vmatpush1.bf16.xpose.msra.mxu0 0
    %2033 = vmatprep.subr.bf16.mxu0 0
    %2034 = vmatpush1.bf16.xpose.msra.mxu0 0
    %2035 = vmatprep.subr.bf16.mxu0 0
    %2036 = vmatpush1.bf16.xpose.msra.mxu0 0
    %2037 = vmatprep.subr.bf16.mxu0 0
    %2038 = vmatpush1.bf16.xpose.msra.mxu0 0
    %2039 = vmatprep.subr.bf16.mxu0 0
    %2040 = vmatpush1.bf16.xpose.msra.mxu0 0
    %2041 = vmatprep.subr.bf16.mxu0 0
    %2042 = vmatpush1.bf16.xpose.msra.mxu0 0
    %2043 = vmatprep.subr.bf16.mxu0 0
    %2044 = vmatpush1.bf16.xpose.msra.mxu0 0
    %2045 = vmatprep.subr.bf16.mxu0 0
    %2046 = vmatpush1.bf16.xpose.msra.mxu0 0
    %2047 = vmatprep.subr.bf16.mxu0 0
    %2048 = vmatpush1.bf16.xpose.msra.mxu0 0
    %2049 = vmatprep.subr.bf16.mxu0 0
    %2050 = vmatpush1.bf16.xpose.msra.mxu0 0
    %2051 = vmatprep.subr.bf16.mxu0 0
    %2052 = vmatpush1.bf16.xpose.msra.mxu0 0
    %2053 = vmatprep.subr.bf16.mxu0 0
    %2054 = vmatpush1.bf16.xpose.msra.mxu0 0
    %2055 = vmatprep.subr.bf16.mxu0 0
    %2056 = vmatpush1.bf16.xpose.msra.mxu0 0
    %2057 = vmatprep.subr.bf16.mxu0 0
    %2058 = vmatpush1.bf16.xpose.msra.mxu0 0
    %2059 = vmatprep.subr.bf16.mxu0 0
    %2060 = vmatpush1.bf16.xpose.msra.mxu0 0
    %2061 = vmatprep.mubr.bf16.mxu0 0
    %2062 = vmatmul.mubr.bf16.gmra.mrb[0].mxu0 %v2024
    %v2063 = vpop.f32.mrb[0].mxu0
    %v2064 = vadd.f32 0.0, %v2063
    %v2065 = vpop.f32.mrb[0].mxu0
    %v2066 = vpop.f32.mrb[0].mxu0
    %v2067 = vpop.f32.mrb[0].mxu0
    %2068 = vdwg.mxu0
    %v2070 = vsel %vm1240, %v781, 0
    %v2073 = vsel %vm1240, %v984, 0
    %2075 = vmatprep.subr.bf16.mxu0 0
    %2076 = vmatpush1.bf16.xpose.msra.mxu0 %v2073
    %2077 = vmatprep.subr.bf16.mxu0 0
    %2078 = vmatpush1.bf16.xpose.msra.mxu0 0
    %2079 = vmatprep.subr.bf16.mxu0 0
    %2080 = vmatpush1.bf16.xpose.msra.mxu0 0
    %2081 = vmatprep.subr.bf16.mxu0 0
    %2082 = vmatpush1.bf16.xpose.msra.mxu0 0
    %2083 = vmatprep.subr.bf16.mxu0 0
    %2084 = vmatpush1.bf16.xpose.msra.mxu0 0
    %2085 = vmatprep.subr.bf16.mxu0 0
    %2086 = vmatpush1.bf16.xpose.msra.mxu0 0
    %2087 = vmatprep.subr.bf16.mxu0 0
    %2088 = vmatpush1.bf16.xpose.msra.mxu0 0
    %2089 = vmatprep.subr.bf16.mxu0 0
    %2090 = vmatpush1.bf16.xpose.msra.mxu0 0
    %2091 = vmatprep.subr.bf16.mxu0 0
    %2092 = vmatpush1.bf16.xpose.msra.mxu0 0
    %2093 = vmatprep.subr.bf16.mxu0 0
    %2094 = vmatpush1.bf16.xpose.msra.mxu0 0
    %2095 = vmatprep.subr.bf16.mxu0 0
    %2096 = vmatpush1.bf16.xpose.msra.mxu0 0
    %2097 = vmatprep.subr.bf16.mxu0 0
    %2098 = vmatpush1.bf16.xpose.msra.mxu0 0
    %2099 = vmatprep.subr.bf16.mxu0 0
    %2100 = vmatpush1.bf16.xpose.msra.mxu0 0
    %2101 = vmatprep.subr.bf16.mxu0 0
    %2102 = vmatpush1.bf16.xpose.msra.mxu0 0
    %2103 = vmatprep.subr.bf16.mxu0 0
    %2104 = vmatpush1.bf16.xpose.msra.mxu0 0
    %2105 = vmatprep.subr.bf16.mxu0 0
    %2106 = vmatpush1.bf16.xpose.msra.mxu0 0
    %2107 = vmatprep.mubr.bf16.mxu0 0
    %2108 = vmatmul.mubr.bf16.gmra.mrb[0].mxu0 %v2070
    %v2109 = vpop.f32.mrb[0].mxu0
    %v2110 = vadd.f32 0.0, %v2109
    %v2111 = vpop.f32.mrb[0].mxu0
    %v2112 = vpop.f32.mrb[0].mxu0
    %v2113 = vpop.f32.mrb[0].mxu0
    %2114 = vdwg.mxu0
    %v2116 = vsel %vm1240, %v783, 0
    %v2119 = vsel %vm1240, %v986, 0
    %2121 = vmatprep.subr.bf16.mxu0 0
    %2122 = vmatpush1.bf16.xpose.msra.mxu0 %v2119
    %2123 = vmatprep.subr.bf16.mxu0 0
    %2124 = vmatpush1.bf16.xpose.msra.mxu0 0
    %2125 = vmatprep.subr.bf16.mxu0 0
    %2126 = vmatpush1.bf16.xpose.msra.mxu0 0
    %2127 = vmatprep.subr.bf16.mxu0 0
    %2128 = vmatpush1.bf16.xpose.msra.mxu0 0
    %2129 = vmatprep.subr.bf16.mxu0 0
    %2130 = vmatpush1.bf16.xpose.msra.mxu0 0
    %2131 = vmatprep.subr.bf16.mxu0 0
    %2132 = vmatpush1.bf16.xpose.msra.mxu0 0
    %2133 = vmatprep.subr.bf16.mxu0 0
    %2134 = vmatpush1.bf16.xpose.msra.mxu0 0
    %2135 = vmatprep.subr.bf16.mxu0 0
    %2136 = vmatpush1.bf16.xpose.msra.mxu0 0
    %2137 = vmatprep.subr.bf16.mxu0 0
    %2138 = vmatpush1.bf16.xpose.msra.mxu0 0
    %2139 = vmatprep.subr.bf16.mxu0 0
    %2140 = vmatpush1.bf16.xpose.msra.mxu0 0
    %2141 = vmatprep.subr.bf16.mxu0 0
    %2142 = vmatpush1.bf16.xpose.msra.mxu0 0
    %2143 = vmatprep.subr.bf16.mxu0 0
    %2144 = vmatpush1.bf16.xpose.msra.mxu0 0
    %2145 = vmatprep.subr.bf16.mxu0 0
    %2146 = vmatpush1.bf16.xpose.msra.mxu0 0
    %2147 = vmatprep.subr.bf16.mxu0 0
    %2148 = vmatpush1.bf16.xpose.msra.mxu0 0
    %2149 = vmatprep.subr.bf16.mxu0 0
    %2150 = vmatpush1.bf16.xpose.msra.mxu0 0
    %2151 = vmatprep.subr.bf16.mxu0 0
    %2152 = vmatpush1.bf16.xpose.msra.mxu0 0
    %2153 = vmatprep.mubr.bf16.mxu0 0
    %2154 = vmatmul.mubr.bf16.gmra.mrb[0].mxu0 %v2116
    %v2155 = vpop.f32.mrb[0].mxu0
    %v2156 = vadd.f32 0.0, %v2155
    %v2157 = vpop.f32.mrb[0].mxu0
    %v2158 = vpop.f32.mrb[0].mxu0
    %v2159 = vpop.f32.mrb[0].mxu0
    %2160 = vdwg.mxu0
    %v2162 = vsel %vm1240, %v766, 0
    %v2165 = vsel %vm1240, %v969, 0
    %2167 = vmatprep.subr.bf16.mxu0 0
    %2168 = vmatpush1.bf16.xpose.msra.mxu0 %v2165
    %2169 = vmatprep.subr.bf16.mxu0 0
    %2170 = vmatpush1.bf16.xpose.msra.mxu0 0
    %2171 = vmatprep.subr.bf16.mxu0 0
    %2172 = vmatpush1.bf16.xpose.msra.mxu0 0
    %2173 = vmatprep.subr.bf16.mxu0 0
    %2174 = vmatpush1.bf16.xpose.msra.mxu0 0
    %2175 = vmatprep.subr.bf16.mxu0 0
    %2176 = vmatpush1.bf16.xpose.msra.mxu0 0
    %2177 = vmatprep.subr.bf16.mxu0 0
    %2178 = vmatpush1.bf16.xpose.msra.mxu0 0
    %2179 = vmatprep.subr.bf16.mxu0 0
    %2180 = vmatpush1.bf16.xpose.msra.mxu0 0
    %2181 = vmatprep.subr.bf16.mxu0 0
    %2182 = vmatpush1.bf16.xpose.msra.mxu0 0
    %2183 = vmatprep.subr.bf16.mxu0 0
    %2184 = vmatpush1.bf16.xpose.msra.mxu0 0
    %2185 = vmatprep.subr.bf16.mxu0 0
    %2186 = vmatpush1.bf16.xpose.msra.mxu0 0
    %2187 = vmatprep.subr.bf16.mxu0 0
    %2188 = vmatpush1.bf16.xpose.msra.mxu0 0
    %2189 = vmatprep.subr.bf16.mxu0 0
    %2190 = vmatpush1.bf16.xpose.msra.mxu0 0
    %2191 = vmatprep.subr.bf16.mxu0 0
    %2192 = vmatpush1.bf16.xpose.msra.mxu0 0
    %2193 = vmatprep.subr.bf16.mxu0 0
    %2194 = vmatpush1.bf16.xpose.msra.mxu0 0
    %2195 = vmatprep.subr.bf16.mxu0 0
    %2196 = vmatpush1.bf16.xpose.msra.mxu0 0
    %2197 = vmatprep.subr.bf16.mxu0 0
    %2198 = vmatpush1.bf16.xpose.msra.mxu0 0
    %2199 = vmatprep.mubr.bf16.mxu0 0
    %2200 = vmatmul.mubr.bf16.gmra.mrb[0].mxu0 %v2162
    %v2201 = vpop.f32.mrb[0].mxu0
    %v2202 = vadd.f32 0.0, %v2201
    %v2203 = vpop.f32.mrb[0].mxu0
    %v2204 = vpop.f32.mrb[0].mxu0
    %v2205 = vpop.f32.mrb[0].mxu0
    %2206 = vdwg.mxu0
    %v2208 = vsel %vm1240, %v780, 0
    %v2211 = vsel %vm1240, %v983, 0
    %2213 = vmatprep.subr.bf16.mxu0 0
    %2214 = vmatpush1.bf16.xpose.msra.mxu0 %v2211
    %2215 = vmatprep.subr.bf16.mxu0 0
    %2216 = vmatpush1.bf16.xpose.msra.mxu0 0
    %2217 = vmatprep.subr.bf16.mxu0 0
    %2218 = vmatpush1.bf16.xpose.msra.mxu0 0
    %2219 = vmatprep.subr.bf16.mxu0 0
    %2220 = vmatpush1.bf16.xpose.msra.mxu0 0
    %2221 = vmatprep.subr.bf16.mxu0 0
    %2222 = vmatpush1.bf16.xpose.msra.mxu0 0
    %2223 = vmatprep.subr.bf16.mxu0 0
    %2224 = vmatpush1.bf16.xpose.msra.mxu0 0
    %2225 = vmatprep.subr.bf16.mxu0 0
    %2226 = vmatpush1.bf16.xpose.msra.mxu0 0
    %2227 = vmatprep.subr.bf16.mxu0 0
    %2228 = vmatpush1.bf16.xpose.msra.mxu0 0
    %2229 = vmatprep.subr.bf16.mxu0 0
    %2230 = vmatpush1.bf16.xpose.msra.mxu0 0
    %2231 = vmatprep.subr.bf16.mxu0 0
    %2232 = vmatpush1.bf16.xpose.msra.mxu0 0
    %2233 = vmatprep.subr.bf16.mxu0 0
    %2234 = vmatpush1.bf16.xpose.msra.mxu0 0
    %2235 = vmatprep.subr.bf16.mxu0 0
    %2236 = vmatpush1.bf16.xpose.msra.mxu0 0
    %2237 = vmatprep.subr.bf16.mxu0 0
    %2238 = vmatpush1.bf16.xpose.msra.mxu0 0
    %2239 = vmatprep.subr.bf16.mxu0 0
    %2240 = vmatpush1.bf16.xpose.msra.mxu0 0
    %2241 = vmatprep.subr.bf16.mxu0 0
    %2242 = vmatpush1.bf16.xpose.msra.mxu0 0
    %2243 = vmatprep.subr.bf16.mxu0 0
    %2244 = vmatpush1.bf16.xpose.msra.mxu0 0
    %2245 = vmatprep.mubr.bf16.mxu0 0
    %2246 = vmatmul.mubr.bf16.gmra.mrb[0].mxu0 %v2208
    %v2247 = vpop.f32.mrb[0].mxu0
    %v2248 = vadd.f32 0.0, %v2247
    %v2249 = vpop.f32.mrb[0].mxu0
    %v2250 = vpop.f32.mrb[0].mxu0
    %v2251 = vpop.f32.mrb[0].mxu0
    %2252 = vdwg.mxu0
    %v2254 = vsel %vm1240, %v782, 0
    %v2257 = vsel %vm1240, %v985, 0
    %2259 = vmatprep.subr.bf16.mxu0 0
    %2260 = vmatpush1.bf16.xpose.msra.mxu0 %v2257
    %2261 = vmatprep.subr.bf16.mxu0 0
    %2262 = vmatpush1.bf16.xpose.msra.mxu0 0
    %2263 = vmatprep.subr.bf16.mxu0 0
    %2264 = vmatpush1.bf16.xpose.msra.mxu0 0
    %2265 = vmatprep.subr.bf16.mxu0 0
    %2266 = vmatpush1.bf16.xpose.msra.mxu0 0
    %2267 = vmatprep.subr.bf16.mxu0 0
    %2268 = vmatpush1.bf16.xpose.msra.mxu0 0
    %2269 = vmatprep.subr.bf16.mxu0 0
    %2270 = vmatpush1.bf16.xpose.msra.mxu0 0
    %2271 = vmatprep.subr.bf16.mxu0 0
    %2272 = vmatpush1.bf16.xpose.msra.mxu0 0
    %2273 = vmatprep.subr.bf16.mxu0 0
    %2274 = vmatpush1.bf16.xpose.msra.mxu0 0
    %2275 = vmatprep.subr.bf16.mxu0 0
    %2276 = vmatpush1.bf16.xpose.msra.mxu0 0
    %2277 = vmatprep.subr.bf16.mxu0 0
    %2278 = vmatpush1.bf16.xpose.msra.mxu0 0
    %2279 = vmatprep.subr.bf16.mxu0 0
    %2280 = vmatpush1.bf16.xpose.msra.mxu0 0
    %2281 = vmatprep.subr.bf16.mxu0 0
    %2282 = vmatpush1.bf16.xpose.msra.mxu0 0
    %2283 = vmatprep.subr.bf16.mxu0 0
    %2284 = vmatpush1.bf16.xpose.msra.mxu0 0
    %2285 = vmatprep.subr.bf16.mxu0 0
    %2286 = vmatpush1.bf16.xpose.msra.mxu0 0
    %2287 = vmatprep.subr.bf16.mxu0 0
    %2288 = vmatpush1.bf16.xpose.msra.mxu0 0
    %2289 = vmatprep.subr.bf16.mxu0 0
    %2290 = vmatpush1.bf16.xpose.msra.mxu0 0
    %2291 = vmatprep.mubr.bf16.mxu0 0
    %2292 = vmatmul.mubr.bf16.gmra.mrb[0].mxu0 %v2254
    %v2293 = vpop.f32.mrb[0].mxu0
    %v2294 = vadd.f32 0.0, %v2293
    %v2295 = vpop.f32.mrb[0].mxu0
    %v2296 = vpop.f32.mrb[0].mxu0
    %v2297 = vpop.f32.mrb[0].mxu0
    %2298 = vdwg.mxu0
    %v2300 = vsel %vm1240, %v784, 0
    %v2303 = vsel %vm1240, %v987, 0
    %2305 = vmatprep.subr.bf16.mxu0 0
    %2306 = vmatpush1.bf16.xpose.msra.mxu0 %v2303
    %2307 = vmatprep.subr.bf16.mxu0 0
    %2308 = vmatpush1.bf16.xpose.msra.mxu0 0
    %2309 = vmatprep.subr.bf16.mxu0 0
    %2310 = vmatpush1.bf16.xpose.msra.mxu0 0
    %2311 = vmatprep.subr.bf16.mxu0 0
    %2312 = vmatpush1.bf16.xpose.msra.mxu0 0
    %2313 = vmatprep.subr.bf16.mxu0 0
    %2314 = vmatpush1.bf16.xpose.msra.mxu0 0
    %2315 = vmatprep.subr.bf16.mxu0 0
    %2316 = vmatpush1.bf16.xpose.msra.mxu0 0
    %2317 = vmatprep.subr.bf16.mxu0 0
    %2318 = vmatpush1.bf16.xpose.msra.mxu0 0
    %2319 = vmatprep.subr.bf16.mxu0 0
    %2320 = vmatpush1.bf16.xpose.msra.mxu0 0
    %2321 = vmatprep.subr.bf16.mxu0 0
    %2322 = vmatpush1.bf16.xpose.msra.mxu0 0
    %2323 = vmatprep.subr.bf16.mxu0 0
    %2324 = vmatpush1.bf16.xpose.msra.mxu0 0
    %2325 = vmatprep.subr.bf16.mxu0 0
    %2326 = vmatpush1.bf16.xpose.msra.mxu0 0
    %2327 = vmatprep.subr.bf16.mxu0 0
    %2328 = vmatpush1.bf16.xpose.msra.mxu0 0
    %2329 = vmatprep.subr.bf16.mxu0 0
    %2330 = vmatpush1.bf16.xpose.msra.mxu0 0
    %2331 = vmatprep.subr.bf16.mxu0 0
    %2332 = vmatpush1.bf16.xpose.msra.mxu0 0
    %2333 = vmatprep.subr.bf16.mxu0 0
    %2334 = vmatpush1.bf16.xpose.msra.mxu0 0
    %2335 = vmatprep.subr.bf16.mxu0 0
    %2336 = vmatpush1.bf16.xpose.msra.mxu0 0
    %2337 = vmatprep.mubr.bf16.mxu0 0
    %2338 = vmatmul.mubr.bf16.gmra.mrb[0].mxu0 %v2300
    %v2339 = vpop.f32.mrb[0].mxu0
    %v2340 = vadd.f32 0.0, %v2339
    %v2341 = vpop.f32.mrb[0].mxu0
    %v2342 = vpop.f32.mrb[0].mxu0
    %v2343 = vpop.f32.mrb[0].mxu0
    %2344 = vdwg.mxu0
    %v2346 = vsel %vm1240, %v808, 0
    %v2349 = vsel %vm1240, %v1011, 0
    %2351 = vmatprep.subr.bf16.mxu0 0
    %2352 = vmatpush1.bf16.xpose.msra.mxu0 %v2349
    %2353 = vmatprep.subr.bf16.mxu0 0
    %2354 = vmatpush1.bf16.xpose.msra.mxu0 0
    %2355 = vmatprep.subr.bf16.mxu0 0
    %2356 = vmatpush1.bf16.xpose.msra.mxu0 0
    %2357 = vmatprep.subr.bf16.mxu0 0
    %2358 = vmatpush1.bf16.xpose.msra.mxu0 0
    %2359 = vmatprep.subr.bf16.mxu0 0
    %2360 = vmatpush1.bf16.xpose.msra.mxu0 0
    %2361 = vmatprep.subr.bf16.mxu0 0
    %2362 = vmatpush1.bf16.xpose.msra.mxu0 0
    %2363 = vmatprep.subr.bf16.mxu0 0
    %2364 = vmatpush1.bf16.xpose.msra.mxu0 0
    %2365 = vmatprep.subr.bf16.mxu0 0
    %2366 = vmatpush1.bf16.xpose.msra.mxu0 0
    %2367 = vmatprep.subr.bf16.mxu0 0
    %2368 = vmatpush1.bf16.xpose.msra.mxu0 0
    %2369 = vmatprep.subr.bf16.mxu0 0
    %2370 = vmatpush1.bf16.xpose.msra.mxu0 0
    %2371 = vmatprep.subr.bf16.mxu0 0
    %2372 = vmatpush1.bf16.xpose.msra.mxu0 0
    %2373 = vmatprep.subr.bf16.mxu0 0
    %2374 = vmatpush1.bf16.xpose.msra.mxu0 0
    %2375 = vmatprep.subr.bf16.mxu0 0
    %2376 = vmatpush1.bf16.xpose.msra.mxu0 0
    %2377 = vmatprep.subr.bf16.mxu0 0
    %2378 = vmatpush1.bf16.xpose.msra.mxu0 0
    %2379 = vmatprep.subr.bf16.mxu0 0
    %2380 = vmatpush1.bf16.xpose.msra.mxu0 0
    %2381 = vmatprep.subr.bf16.mxu0 0
    %2382 = vmatpush1.bf16.xpose.msra.mxu0 0
    %2383 = vmatprep.mubr.bf16.mxu0 0
    %2384 = vmatmul.mubr.bf16.gmra.mrb[0].mxu0 %v2346
    %v2385 = vpop.f32.mrb[0].mxu0
    %v2386 = vadd.f32 0.0, %v2385
    %v2387 = vpop.f32.mrb[0].mxu0
    %v2388 = vpop.f32.mrb[0].mxu0
    %v2389 = vpop.f32.mrb[0].mxu0
    %2390 = vdwg.mxu0
    %v2392 = vsel %vm1240, %v822, 0
    %v2395 = vsel %vm1240, %v1025, 0
    %2397 = vmatprep.subr.bf16.mxu0 0
    %2398 = vmatpush1.bf16.xpose.msra.mxu0 %v2395
    %2399 = vmatprep.subr.bf16.mxu0 0
    %2400 = vmatpush1.bf16.xpose.msra.mxu0 0
    %2401 = vmatprep.subr.bf16.mxu0 0
    %2402 = vmatpush1.bf16.xpose.msra.mxu0 0
    %2403 = vmatprep.subr.bf16.mxu0 0
    %2404 = vmatpush1.bf16.xpose.msra.mxu0 0
    %2405 = vmatprep.subr.bf16.mxu0 0
    %2406 = vmatpush1.bf16.xpose.msra.mxu0 0
    %2407 = vmatprep.subr.bf16.mxu0 0
    %2408 = vmatpush1.bf16.xpose.msra.mxu0 0
    %2409 = vmatprep.subr.bf16.mxu0 0
    %2410 = vmatpush1.bf16.xpose.msra.mxu0 0
    %2411 = vmatprep.subr.bf16.mxu0 0
    %2412 = vmatpush1.bf16.xpose.msra.mxu0 0
    %2413 = vmatprep.subr.bf16.mxu0 0
    %2414 = vmatpush1.bf16.xpose.msra.mxu0 0
    %2415 = vmatprep.subr.bf16.mxu0 0
    %2416 = vmatpush1.bf16.xpose.msra.mxu0 0
    %2417 = vmatprep.subr.bf16.mxu0 0
    %2418 = vmatpush1.bf16.xpose.msra.mxu0 0
    %2419 = vmatprep.subr.bf16.mxu0 0
    %2420 = vmatpush1.bf16.xpose.msra.mxu0 0
    %2421 = vmatprep.subr.bf16.mxu0 0
    %2422 = vmatpush1.bf16.xpose.msra.mxu0 0
    %2423 = vmatprep.subr.bf16.mxu0 0
    %2424 = vmatpush1.bf16.xpose.msra.mxu0 0
    %2425 = vmatprep.subr.bf16.mxu0 0
    %2426 = vmatpush1.bf16.xpose.msra.mxu0 0
    %2427 = vmatprep.subr.bf16.mxu0 0
    %2428 = vmatpush1.bf16.xpose.msra.mxu0 0
    %2429 = vmatprep.mubr.bf16.mxu0 0
    %2430 = vmatmul.mubr.bf16.gmra.mrb[0].mxu0 %v2392
    %v2431 = vpop.f32.mrb[0].mxu0
    %v2432 = vadd.f32 0.0, %v2431
    %v2433 = vpop.f32.mrb[0].mxu0
    %v2434 = vpop.f32.mrb[0].mxu0
    %v2435 = vpop.f32.mrb[0].mxu0
    %2436 = vdwg.mxu0
    %v2438 = vsel %vm1240, %v830, 0
    %v2441 = vsel %vm1240, %v1033, 0
    %2443 = vmatprep.subr.bf16.mxu0 0
    %2444 = vmatpush1.bf16.xpose.msra.mxu0 %v2441
    %2445 = vmatprep.subr.bf16.mxu0 0
    %2446 = vmatpush1.bf16.xpose.msra.mxu0 0
    %2447 = vmatprep.subr.bf16.mxu0 0
    %2448 = vmatpush1.bf16.xpose.msra.mxu0 0
    %2449 = vmatprep.subr.bf16.mxu0 0
    %2450 = vmatpush1.bf16.xpose.msra.mxu0 0
    %2451 = vmatprep.subr.bf16.mxu0 0
    %2452 = vmatpush1.bf16.xpose.msra.mxu0 0
    %2453 = vmatprep.subr.bf16.mxu0 0
    %2454 = vmatpush1.bf16.xpose.msra.mxu0 0
    %2455 = vmatprep.subr.bf16.mxu0 0
    %2456 = vmatpush1.bf16.xpose.msra.mxu0 0
    %2457 = vmatprep.subr.bf16.mxu0 0
    %2458 = vmatpush1.bf16.xpose.msra.mxu0 0
    %2459 = vmatprep.subr.bf16.mxu0 0
    %2460 = vmatpush1.bf16.xpose.msra.mxu0 0
    %2461 = vmatprep.subr.bf16.mxu0 0
    %2462 = vmatpush1.bf16.xpose.msra.mxu0 0
    %2463 = vmatprep.subr.bf16.mxu0 0
    %2464 = vmatpush1.bf16.xpose.msra.mxu0 0
    %2465 = vmatprep.subr.bf16.mxu0 0
    %2466 = vmatpush1.bf16.xpose.msra.mxu0 0
    %2467 = vmatprep.subr.bf16.mxu0 0
    %2468 = vmatpush1.bf16.xpose.msra.mxu0 0
    %2469 = vmatprep.subr.bf16.mxu0 0
    %2470 = vmatpush1.bf16.xpose.msra.mxu0 0
    %2471 = vmatprep.subr.bf16.mxu0 0
    %2472 = vmatpush1.bf16.xpose.msra.mxu0 0
    %2473 = vmatprep.subr.bf16.mxu0 0
    %2474 = vmatpush1.bf16.xpose.msra.mxu0 0
    %2475 = vmatprep.mubr.bf16.mxu0 0
    %2476 = vmatmul.mubr.bf16.gmra.mrb[0].mxu0 %v2438
    %v2477 = vpop.f32.mrb[0].mxu0
    %v2478 = vadd.f32 0.0, %v2477
    %v2479 = vpop.f32.mrb[0].mxu0
    %v2480 = vpop.f32.mrb[0].mxu0
    %v2481 = vpop.f32.mrb[0].mxu0
    %2482 = vdwg.mxu0
    %v2484 = vsel %vm1240, %v832, 0
    %v2487 = vsel %vm1240, %v1035, 0
    %2489 = vmatprep.subr.bf16.mxu0 0
    %2490 = vmatpush1.bf16.xpose.msra.mxu0 %v2487
    %2491 = vmatprep.subr.bf16.mxu0 0
    %2492 = vmatpush1.bf16.xpose.msra.mxu0 0
    %2493 = vmatprep.subr.bf16.mxu0 0
    %2494 = vmatpush1.bf16.xpose.msra.mxu0 0
    %2495 = vmatprep.subr.bf16.mxu0 0
    %2496 = vmatpush1.bf16.xpose.msra.mxu0 0
    %2497 = vmatprep.subr.bf16.mxu0 0
    %2498 = vmatpush1.bf16.xpose.msra.mxu0 0
    %2499 = vmatprep.subr.bf16.mxu0 0
    %2500 = vmatpush1.bf16.xpose.msra.mxu0 0
    %2501 = vmatprep.subr.bf16.mxu0 0
    %2502 = vmatpush1.bf16.xpose.msra.mxu0 0
    %2503 = vmatprep.subr.bf16.mxu0 0
    %2504 = vmatpush1.bf16.xpose.msra.mxu0 0
    %2505 = vmatprep.subr.bf16.mxu0 0
    %2506 = vmatpush1.bf16.xpose.msra.mxu0 0
    %2507 = vmatprep.subr.bf16.mxu0 0
    %2508 = vmatpush1.bf16.xpose.msra.mxu0 0
    %2509 = vmatprep.subr.bf16.mxu0 0
    %2510 = vmatpush1.bf16.xpose.msra.mxu0 0
    %2511 = vmatprep.subr.bf16.mxu0 0
    %2512 = vmatpush1.bf16.xpose.msra.mxu0 0
    %2513 = vmatprep.subr.bf16.mxu0 0
    %2514 = vmatpush1.bf16.xpose.msra.mxu0 0
    %2515 = vmatprep.subr.bf16.mxu0 0
    %2516 = vmatpush1.bf16.xpose.msra.mxu0 0
    %2517 = vmatprep.subr.bf16.mxu0 0
    %2518 = vmatpush1.bf16.xpose.msra.mxu0 0
    %2519 = vmatprep.subr.bf16.mxu0 0
    %2520 = vmatpush1.bf16.xpose.msra.mxu0 0
    %2521 = vmatprep.mubr.bf16.mxu0 0
    %2522 = vmatmul.mubr.bf16.gmra.mrb[0].mxu0 %v2484
    %v2523 = vpop.f32.mrb[0].mxu0
    %v2524 = vadd.f32 0.0, %v2523
    %v2525 = vpop.f32.mrb[0].mxu0
    %v2526 = vpop.f32.mrb[0].mxu0
    %v2527 = vpop.f32.mrb[0].mxu0
    %2528 = vdwg.mxu0
    %v2530 = vsel %vm1240, %v815, 0
    %v2533 = vsel %vm1240, %v1018, 0
    %2535 = vmatprep.subr.bf16.mxu0 0
    %2536 = vmatpush1.bf16.xpose.msra.mxu0 %v2533
    %2537 = vmatprep.subr.bf16.mxu0 0
    %2538 = vmatpush1.bf16.xpose.msra.mxu0 0
    %2539 = vmatprep.subr.bf16.mxu0 0
    %2540 = vmatpush1.bf16.xpose.msra.mxu0 0
    %2541 = vmatprep.subr.bf16.mxu0 0
    %2542 = vmatpush1.bf16.xpose.msra.mxu0 0
    %2543 = vmatprep.subr.bf16.mxu0 0
    %2544 = vmatpush1.bf16.xpose.msra.mxu0 0
    %2545 = vmatprep.subr.bf16.mxu0 0
    %2546 = vmatpush1.bf16.xpose.msra.mxu0 0
    %2547 = vmatprep.subr.bf16.mxu0 0
    %2548 = vmatpush1.bf16.xpose.msra.mxu0 0
    %2549 = vmatprep.subr.bf16.mxu0 0
    %2550 = vmatpush1.bf16.xpose.msra.mxu0 0
    %2551 = vmatprep.subr.bf16.mxu0 0
    %2552 = vmatpush1.bf16.xpose.msra.mxu0 0
    %2553 = vmatprep.subr.bf16.mxu0 0
    %2554 = vmatpush1.bf16.xpose.msra.mxu0 0
    %2555 = vmatprep.subr.bf16.mxu0 0
    %2556 = vmatpush1.bf16.xpose.msra.mxu0 0
    %2557 = vmatprep.subr.bf16.mxu0 0
    %2558 = vmatpush1.bf16.xpose.msra.mxu0 0
    %2559 = vmatprep.subr.bf16.mxu0 0
    %2560 = vmatpush1.bf16.xpose.msra.mxu0 0
    %2561 = vmatprep.subr.bf16.mxu0 0
    %2562 = vmatpush1.bf16.xpose.msra.mxu0 0
    %2563 = vmatprep.subr.bf16.mxu0 0
    %2564 = vmatpush1.bf16.xpose.msra.mxu0 0
    %2565 = vmatprep.subr.bf16.mxu0 0
    %2566 = vmatpush1.bf16.xpose.msra.mxu0 0
    %2567 = vmatprep.mubr.bf16.mxu0 0
    %2568 = vmatmul.mubr.bf16.gmra.mrb[0].mxu0 %v2530
    %v2569 = vpop.f32.mrb[0].mxu0
    %v2570 = vadd.f32 0.0, %v2569
    %v2571 = vpop.f32.mrb[0].mxu0
    %v2572 = vpop.f32.mrb[0].mxu0
    %v2573 = vpop.f32.mrb[0].mxu0
    %2574 = vdwg.mxu0
    %v2576 = vsel %vm1240, %v829, 0
    %v2579 = vsel %vm1240, %v1032, 0
    %2581 = vmatprep.subr.bf16.mxu0 0
    %2582 = vmatpush1.bf16.xpose.msra.mxu0 %v2579
    %2583 = vmatprep.subr.bf16.mxu0 0
    %2584 = vmatpush1.bf16.xpose.msra.mxu0 0
    %2585 = vmatprep.subr.bf16.mxu0 0
    %2586 = vmatpush1.bf16.xpose.msra.mxu0 0
    %2587 = vmatprep.subr.bf16.mxu0 0
    %2588 = vmatpush1.bf16.xpose.msra.mxu0 0
    %2589 = vmatprep.subr.bf16.mxu0 0
    %2590 = vmatpush1.bf16.xpose.msra.mxu0 0
    %2591 = vmatprep.subr.bf16.mxu0 0
    %2592 = vmatpush1.bf16.xpose.msra.mxu0 0
    %2593 = vmatprep.subr.bf16.mxu0 0
    %2594 = vmatpush1.bf16.xpose.msra.mxu0 0
    %2595 = vmatprep.subr.bf16.mxu0 0
    %2596 = vmatpush1.bf16.xpose.msra.mxu0 0
    %2597 = vmatprep.subr.bf16.mxu0 0
    %2598 = vmatpush1.bf16.xpose.msra.mxu0 0
    %2599 = vmatprep.subr.bf16.mxu0 0
    %2600 = vmatpush1.bf16.xpose.msra.mxu0 0
    %2601 = vmatprep.subr.bf16.mxu0 0
    %2602 = vmatpush1.bf16.xpose.msra.mxu0 0
    %2603 = vmatprep.subr.bf16.mxu0 0
    %2604 = vmatpush1.bf16.xpose.msra.mxu0 0
    %2605 = vmatprep.subr.bf16.mxu0 0
    %2606 = vmatpush1.bf16.xpose.msra.mxu0 0
    %2607 = vmatprep.subr.bf16.mxu0 0
    %2608 = vmatpush1.bf16.xpose.msra.mxu0 0
    %2609 = vmatprep.subr.bf16.mxu0 0
    %2610 = vmatpush1.bf16.xpose.msra.mxu0 0
    %2611 = vmatprep.subr.bf16.mxu0 0
    %2612 = vmatpush1.bf16.xpose.msra.mxu0 0
    %2613 = vmatprep.mubr.bf16.mxu0 0
    %2614 = vmatmul.mubr.bf16.gmra.mrb[0].mxu0 %v2576
    %v2615 = vpop.f32.mrb[0].mxu0
    %v2616 = vadd.f32 0.0, %v2615
    %v2617 = vpop.f32.mrb[0].mxu0
    %v2618 = vpop.f32.mrb[0].mxu0
    %v2619 = vpop.f32.mrb[0].mxu0
    %2620 = vdwg.mxu0
    %v2622 = vsel %vm1240, %v831, 0
    %v2625 = vsel %vm1240, %v1034, 0
    %2627 = vmatprep.subr.bf16.mxu0 0
    %2628 = vmatpush1.bf16.xpose.msra.mxu0 %v2625
    %2629 = vmatprep.subr.bf16.mxu0 0
    %2630 = vmatpush1.bf16.xpose.msra.mxu0 0
    %2631 = vmatprep.subr.bf16.mxu0 0
    %2632 = vmatpush1.bf16.xpose.msra.mxu0 0
    %2633 = vmatprep.subr.bf16.mxu0 0
    %2634 = vmatpush1.bf16.xpose.msra.mxu0 0
    %2635 = vmatprep.subr.bf16.mxu0 0
    %2636 = vmatpush1.bf16.xpose.msra.mxu0 0
    %2637 = vmatprep.subr.bf16.mxu0 0
    %2638 = vmatpush1.bf16.xpose.msra.mxu0 0
    %2639 = vmatprep.subr.bf16.mxu0 0
    %2640 = vmatpush1.bf16.xpose.msra.mxu0 0
    %2641 = vmatprep.subr.bf16.mxu0 0
    %2642 = vmatpush1.bf16.xpose.msra.mxu0 0
    %2643 = vmatprep.subr.bf16.mxu0 0
    %2644 = vmatpush1.bf16.xpose.msra.mxu0 0
    %2645 = vmatprep.subr.bf16.mxu0 0
    %2646 = vmatpush1.bf16.xpose.msra.mxu0 0
    %2647 = vmatprep.subr.bf16.mxu0 0
    %2648 = vmatpush1.bf16.xpose.msra.mxu0 0
    %2649 = vmatprep.subr.bf16.mxu0 0
    %2650 = vmatpush1.bf16.xpose.msra.mxu0 0
    %2651 = vmatprep.subr.bf16.mxu0 0
    %2652 = vmatpush1.bf16.xpose.msra.mxu0 0
    %2653 = vmatprep.subr.bf16.mxu0 0
    %2654 = vmatpush1.bf16.xpose.msra.mxu0 0
    %2655 = vmatprep.subr.bf16.mxu0 0
    %2656 = vmatpush1.bf16.xpose.msra.mxu0 0
    %2657 = vmatprep.subr.bf16.mxu0 0
    %2658 = vmatpush1.bf16.xpose.msra.mxu0 0
    %2659 = vmatprep.mubr.bf16.mxu0 0
    %2660 = vmatmul.mubr.bf16.gmra.mrb[0].mxu0 %v2622
    %v2661 = vpop.f32.mrb[0].mxu0
    %v2662 = vadd.f32 0.0, %v2661
    %v2663 = vpop.f32.mrb[0].mxu0
    %v2664 = vpop.f32.mrb[0].mxu0
    %v2665 = vpop.f32.mrb[0].mxu0
    %2666 = vdwg.mxu0
    %v2668 = vsel %vm1240, %v833, 0
    %v2671 = vsel %vm1240, %v1036, 0
    %2673 = vmatprep.subr.bf16.mxu0 0
    %2674 = vmatpush1.bf16.xpose.msra.mxu0 %v2671
    %2675 = vmatprep.subr.bf16.mxu0 0
    %2676 = vmatpush1.bf16.xpose.msra.mxu0 0
    %2677 = vmatprep.subr.bf16.mxu0 0
    %2678 = vmatpush1.bf16.xpose.msra.mxu0 0
    %2679 = vmatprep.subr.bf16.mxu0 0
    %2680 = vmatpush1.bf16.xpose.msra.mxu0 0
    %2681 = vmatprep.subr.bf16.mxu0 0
    %2682 = vmatpush1.bf16.xpose.msra.mxu0 0
    %2683 = vmatprep.subr.bf16.mxu0 0
    %2684 = vmatpush1.bf16.xpose.msra.mxu0 0
    %2685 = vmatprep.subr.bf16.mxu0 0
    %2686 = vmatpush1.bf16.xpose.msra.mxu0 0
    %2687 = vmatprep.subr.bf16.mxu0 0
    %2688 = vmatpush1.bf16.xpose.msra.mxu0 0
    %2689 = vmatprep.subr.bf16.mxu0 0
    %2690 = vmatpush1.bf16.xpose.msra.mxu0 0
    %2691 = vmatprep.subr.bf16.mxu0 0
    %2692 = vmatpush1.bf16.xpose.msra.mxu0 0
    %2693 = vmatprep.subr.bf16.mxu0 0
    %2694 = vmatpush1.bf16.xpose.msra.mxu0 0
    %2695 = vmatprep.subr.bf16.mxu0 0
    %2696 = vmatpush1.bf16.xpose.msra.mxu0 0
    %2697 = vmatprep.subr.bf16.mxu0 0
    %2698 = vmatpush1.bf16.xpose.msra.mxu0 0
    %2699 = vmatprep.subr.bf16.mxu0 0
    %2700 = vmatpush1.bf16.xpose.msra.mxu0 0
    %2701 = vmatprep.subr.bf16.mxu0 0
    %2702 = vmatpush1.bf16.xpose.msra.mxu0 0
    %2703 = vmatprep.subr.bf16.mxu0 0
    %2704 = vmatpush1.bf16.xpose.msra.mxu0 0
    %2705 = vmatprep.mubr.bf16.mxu0 0
    %2706 = vmatmul.mubr.bf16.gmra.mrb[0].mxu0 %v2668
    %v2707 = vpop.f32.mrb[0].mxu0
    %v2708 = vadd.f32 0.0, %v2707
    %v2709 = vpop.f32.mrb[0].mxu0
    %v2710 = vpop.f32.mrb[0].mxu0
    %v2711 = vpop.f32.mrb[0].mxu0
    %2712 = vdwg.mxu0
    %v2713 = vmul.f32 %v1282, 0.17677669
    %v2714 = vmul.f32 %v1328, 0.17677669
    %v2715 = vmul.f32 %v1374, 0.17677669
    %v2716 = vmul.f32 %v1420, 0.17677669
    %v2717 = vmul.f32 %v1466, 0.17677669
    %v2718 = vmul.f32 %v1512, 0.17677669
    %v2719 = vmul.f32 %v1558, 0.17677669
    %v2720 = vmul.f32 %v1604, 0.17677669
    %v2721 = vmul.f32 %v1650, 0.17677669
    %v2722 = vmul.f32 %v1696, 0.17677669
    %v2723 = vmul.f32 %v1742, 0.17677669
    %v2724 = vmul.f32 %v1788, 0.17677669
    %v2725 = vmul.f32 %v1834, 0.17677669
    %v2726 = vmul.f32 %v1880, 0.17677669
    %v2727 = vmul.f32 %v1926, 0.17677669
    %v2728 = vmul.f32 %v1972, 0.17677669
    %v2729 = vmul.f32 %v2018, 0.17677669
    %v2730 = vmul.f32 %v2064, 0.17677669
    %v2731 = vmul.f32 %v2110, 0.17677669
    %v2732 = vmul.f32 %v2156, 0.17677669
    %v2733 = vmul.f32 %v2202, 0.17677669
    %v2734 = vmul.f32 %v2248, 0.17677669
    %v2735 = vmul.f32 %v2294, 0.17677669
    %v2736 = vmul.f32 %v2340, 0.17677669
    %v2737 = vmul.f32 %v2386, 0.17677669
    %v2738 = vmul.f32 %v2432, 0.17677669
    %v2739 = vmul.f32 %v2478, 0.17677669
    %v2740 = vmul.f32 %v2524, 0.17677669
    %v2741 = vmul.f32 %v2570, 0.17677669
    %v2742 = vmul.f32 %v2616, 0.17677669
    %v2743 = vmul.f32 %v2662, 0.17677669
    %v2744 = vmul.f32 %v2708, 0.17677669
    %vm2745 = vcmask 9216
    %v2746 = vsel %vm2745, %v2713, -inf
    %2747 = vmax.xlane.f32.xlu0 %v2746
    %v2748 = vpop.xlane.xlu0 %2747
    %v2749 = vsel %vm2745, %v2714, -inf
    %2750 = vmax.xlane.f32.xlu0 %v2749
    %v2751 = vpop.xlane.xlu0 %2750
    %v2752 = vsel %vm2745, %v2715, -inf
    %2753 = vmax.xlane.f32.xlu0 %v2752
    %v2754 = vpop.xlane.xlu0 %2753
    %v2755 = vsel %vm2745, %v2716, -inf
    %2756 = vmax.xlane.f32.xlu0 %v2755
    %v2757 = vpop.xlane.xlu0 %2756
    %v2758 = vsel %vm2745, %v2717, -inf
    %2759 = vmax.xlane.f32.xlu0 %v2758
    %v2760 = vpop.xlane.xlu0 %2759
    %v2761 = vsel %vm2745, %v2718, -inf
    %2762 = vmax.xlane.f32.xlu0 %v2761
    %v2763 = vpop.xlane.xlu0 %2762
    %v2764 = vsel %vm2745, %v2719, -inf
    %2765 = vmax.xlane.f32.xlu0 %v2764
    %v2766 = vpop.xlane.xlu0 %2765
    %v2767 = vsel %vm2745, %v2720, -inf
    %2768 = vmax.xlane.f32.xlu0 %v2767
    %v2769 = vpop.xlane.xlu0 %2768
    %v2770 = vsel %vm2745, %v2721, -inf
    %2771 = vmax.xlane.f32.xlu0 %v2770
    %v2772 = vpop.xlane.xlu0 %2771
    %v2773 = vsel %vm2745, %v2722, -inf
    %2774 = vmax.xlane.f32.xlu0 %v2773
    %v2775 = vpop.xlane.xlu0 %2774
    %v2776 = vsel %vm2745, %v2723, -inf
    %2777 = vmax.xlane.f32.xlu0 %v2776
    %v2778 = vpop.xlane.xlu0 %2777
    %v2779 = vsel %vm2745, %v2724, -inf
    %2780 = vmax.xlane.f32.xlu0 %v2779
    %v2781 = vpop.xlane.xlu0 %2780
    %v2782 = vsel %vm2745, %v2725, -inf
    %2783 = vmax.xlane.f32.xlu0 %v2782
    %v2784 = vpop.xlane.xlu0 %2783
    %v2785 = vsel %vm2745, %v2726, -inf
    %2786 = vmax.xlane.f32.xlu0 %v2785
    %v2787 = vpop.xlane.xlu0 %2786
    %v2788 = vsel %vm2745, %v2727, -inf
    %2789 = vmax.xlane.f32.xlu0 %v2788
    %v2790 = vpop.xlane.xlu0 %2789
    %v2791 = vsel %vm2745, %v2728, -inf
    %2792 = vmax.xlane.f32.xlu0 %v2791
    %v2793 = vpop.xlane.xlu0 %2792
    %v2794 = vsel %vm2745, %v2729, -inf
    %2795 = vmax.xlane.f32.xlu0 %v2794
    %v2796 = vpop.xlane.xlu0 %2795
    %v2797 = vsel %vm2745, %v2730, -inf
    %2798 = vmax.xlane.f32.xlu0 %v2797
    %v2799 = vpop.xlane.xlu0 %2798
    %v2800 = vsel %vm2745, %v2731, -inf
    %2801 = vmax.xlane.f32.xlu0 %v2800
    %v2802 = vpop.xlane.xlu0 %2801
    %v2803 = vsel %vm2745, %v2732, -inf
    %2804 = vmax.xlane.f32.xlu0 %v2803
    %v2805 = vpop.xlane.xlu0 %2804
    %v2806 = vsel %vm2745, %v2733, -inf
    %2807 = vmax.xlane.f32.xlu0 %v2806
    %v2808 = vpop.xlane.xlu0 %2807
    %v2809 = vsel %vm2745, %v2734, -inf
    %2810 = vmax.xlane.f32.xlu0 %v2809
    %v2811 = vpop.xlane.xlu0 %2810
    %v2812 = vsel %vm2745, %v2735, -inf
    %2813 = vmax.xlane.f32.xlu0 %v2812
    %v2814 = vpop.xlane.xlu0 %2813
    %v2815 = vsel %vm2745, %v2736, -inf
    %2816 = vmax.xlane.f32.xlu0 %v2815
    %v2817 = vpop.xlane.xlu0 %2816
    %v2818 = vsel %vm2745, %v2737, -inf
    %2819 = vmax.xlane.f32.xlu0 %v2818
    %v2820 = vpop.xlane.xlu0 %2819
    %v2821 = vsel %vm2745, %v2738, -inf
    %2822 = vmax.xlane.f32.xlu0 %v2821
    %v2823 = vpop.xlane.xlu0 %2822
    %v2824 = vsel %vm2745, %v2739, -inf
    %2825 = vmax.xlane.f32.xlu0 %v2824
    %v2826 = vpop.xlane.xlu0 %2825
    %v2827 = vsel %vm2745, %v2740, -inf
    %2828 = vmax.xlane.f32.xlu0 %v2827
    %v2829 = vpop.xlane.xlu0 %2828
    %v2830 = vsel %vm2745, %v2741, -inf
    %2831 = vmax.xlane.f32.xlu0 %v2830
    %v2832 = vpop.xlane.xlu0 %2831
    %v2833 = vsel %vm2745, %v2742, -inf
    %2834 = vmax.xlane.f32.xlu0 %v2833
    %v2835 = vpop.xlane.xlu0 %2834
    %v2836 = vsel %vm2745, %v2743, -inf
    %2837 = vmax.xlane.f32.xlu0 %v2836
    %v2838 = vpop.xlane.xlu0 %2837
    %v2839 = vsel %vm2745, %v2744, -inf
    %2840 = vmax.xlane.f32.xlu0 %v2839
    %v2841 = vpop.xlane.xlu0 %2840
    %v2842 = vsub.f32 %v2713, %v2748
    %v2843 = vsub.f32 %v2714, %v2751
    %v2844 = vsub.f32 %v2715, %v2754
    %v2845 = vsub.f32 %v2716, %v2757
    %v2846 = vsub.f32 %v2717, %v2760
    %v2847 = vsub.f32 %v2718, %v2763
    %v2848 = vsub.f32 %v2719, %v2766
    %v2849 = vsub.f32 %v2720, %v2769
    %v2850 = vsub.f32 %v2721, %v2772
    %v2851 = vsub.f32 %v2722, %v2775
    %v2852 = vsub.f32 %v2723, %v2778
    %v2853 = vsub.f32 %v2724, %v2781
    %v2854 = vsub.f32 %v2725, %v2784
    %v2855 = vsub.f32 %v2726, %v2787
    %v2856 = vsub.f32 %v2727, %v2790
    %v2857 = vsub.f32 %v2728, %v2793
    %v2858 = vsub.f32 %v2729, %v2796
    %v2859 = vsub.f32 %v2730, %v2799
    %v2860 = vsub.f32 %v2731, %v2802
    %v2861 = vsub.f32 %v2732, %v2805
    %v2862 = vsub.f32 %v2733, %v2808
    %v2863 = vsub.f32 %v2734, %v2811
    %v2864 = vsub.f32 %v2735, %v2814
    %v2865 = vsub.f32 %v2736, %v2817
    %v2866 = vsub.f32 %v2737, %v2820
    %v2867 = vsub.f32 %v2738, %v2823
    %v2868 = vsub.f32 %v2739, %v2826
    %v2869 = vsub.f32 %v2740, %v2829
    %v2870 = vsub.f32 %v2741, %v2832
    %v2871 = vsub.f32 %v2742, %v2835
    %v2872 = vsub.f32 %v2743, %v2838
    %v2873 = vsub.f32 %v2744, %v2841
    %v2874 = vmul.f32 %v2842, 1.442695
    %v2875 = vpow.pop %v2874
    %v2876 = vmul.f32 %v2843, 1.442695
    %v2877 = vpow.pop %v2876
    %v2878 = vmul.f32 %v2844, 1.442695
    %v2879 = vpow.pop %v2878
    %v2880 = vmul.f32 %v2845, 1.442695
    %v2881 = vpow.pop %v2880
    %v2882 = vmul.f32 %v2846, 1.442695
    %v2883 = vpow.pop %v2882
    %v2884 = vmul.f32 %v2847, 1.442695
    %v2885 = vpow.pop %v2884
    %v2886 = vmul.f32 %v2848, 1.442695
    %v2887 = vpow.pop %v2886
    %v2888 = vmul.f32 %v2849, 1.442695
    %v2889 = vpow.pop %v2888
    %v2890 = vmul.f32 %v2850, 1.442695
    %v2891 = vpow.pop %v2890
    %v2892 = vmul.f32 %v2851, 1.442695
    %v2893 = vpow.pop %v2892
    %v2894 = vmul.f32 %v2852, 1.442695
    %v2895 = vpow.pop %v2894
    %v2896 = vmul.f32 %v2853, 1.442695
    %v2897 = vpow.pop %v2896
    %v2898 = vmul.f32 %v2854, 1.442695
    %v2899 = vpow.pop %v2898
    %v2900 = vmul.f32 %v2855, 1.442695
    %v2901 = vpow.pop %v2900
    %v2902 = vmul.f32 %v2856, 1.442695
    %v2903 = vpow.pop %v2902
    %v2904 = vmul.f32 %v2857, 1.442695
    %v2905 = vpow.pop %v2904
    %v2906 = vmul.f32 %v2858, 1.442695
    %v2907 = vpow.pop %v2906
    %v2908 = vmul.f32 %v2859, 1.442695
    %v2909 = vpow.pop %v2908
    %v2910 = vmul.f32 %v2860, 1.442695
    %v2911 = vpow.pop %v2910
    %v2912 = vmul.f32 %v2861, 1.442695
    %v2913 = vpow.pop %v2912
    %v2914 = vmul.f32 %v2862, 1.442695
    %v2915 = vpow.pop %v2914
    %v2916 = vmul.f32 %v2863, 1.442695
    %v2917 = vpow.pop %v2916
    %v2918 = vmul.f32 %v2864, 1.442695
    %v2919 = vpow.pop %v2918
    %v2920 = vmul.f32 %v2865, 1.442695
    %v2921 = vpow.pop %v2920
    %v2922 = vmul.f32 %v2866, 1.442695
    %v2923 = vpow.pop %v2922
    %v2924 = vmul.f32 %v2867, 1.442695
    %v2925 = vpow.pop %v2924
    %v2926 = vmul.f32 %v2868, 1.442695
    %v2927 = vpow.pop %v2926
    %v2928 = vmul.f32 %v2869, 1.442695
    %v2929 = vpow.pop %v2928
    %v2930 = vmul.f32 %v2870, 1.442695
    %v2931 = vpow.pop %v2930
    %v2932 = vmul.f32 %v2871, 1.442695
    %v2933 = vpow.pop %v2932
    %v2934 = vmul.f32 %v2872, 1.442695
    %v2935 = vpow.pop %v2934
    %v2936 = vmul.f32 %v2873, 1.442695
    %v2937 = vpow.pop %v2936
    %v2938 = vsel %vm2745, %v2875, 0.0
    %2939 = vadd.xlane.f32.xlu0 %v2938
    %v2940 = vpop.xlane.xlu0 %2939
    %v2941 = vsel %vm2745, %v2877, 0.0
    %2942 = vadd.xlane.f32.xlu0 %v2941
    %v2943 = vpop.xlane.xlu0 %2942
    %v2944 = vsel %vm2745, %v2879, 0.0
    %2945 = vadd.xlane.f32.xlu0 %v2944
    %v2946 = vpop.xlane.xlu0 %2945
    %v2947 = vsel %vm2745, %v2881, 0.0
    %2948 = vadd.xlane.f32.xlu0 %v2947
    %v2949 = vpop.xlane.xlu0 %2948
    %v2950 = vsel %vm2745, %v2883, 0.0
    %2951 = vadd.xlane.f32.xlu0 %v2950
    %v2952 = vpop.xlane.xlu0 %2951
    %v2953 = vsel %vm2745, %v2885, 0.0
    %2954 = vadd.xlane.f32.xlu0 %v2953
    %v2955 = vpop.xlane.xlu0 %2954
    %v2956 = vsel %vm2745, %v2887, 0.0
    %2957 = vadd.xlane.f32.xlu0 %v2956
    %v2958 = vpop.xlane.xlu0 %2957
    %v2959 = vsel %vm2745, %v2889, 0.0
    %2960 = vadd.xlane.f32.xlu0 %v2959
    %v2961 = vpop.xlane.xlu0 %2960
    %v2962 = vsel %vm2745, %v2891, 0.0
    %2963 = vadd.xlane.f32.xlu0 %v2962
    %v2964 = vpop.xlane.xlu0 %2963
    %v2965 = vsel %vm2745, %v2893, 0.0
    %2966 = vadd.xlane.f32.xlu0 %v2965
    %v2967 = vpop.xlane.xlu0 %2966
    %v2968 = vsel %vm2745, %v2895, 0.0
    %2969 = vadd.xlane.f32.xlu0 %v2968
    %v2970 = vpop.xlane.xlu0 %2969
    %v2971 = vsel %vm2745, %v2897, 0.0
    %2972 = vadd.xlane.f32.xlu0 %v2971
    %v2973 = vpop.xlane.xlu0 %2972
    %v2974 = vsel %vm2745, %v2899, 0.0
    %2975 = vadd.xlane.f32.xlu0 %v2974
    %v2976 = vpop.xlane.xlu0 %2975
    %v2977 = vsel %vm2745, %v2901, 0.0
    %2978 = vadd.xlane.f32.xlu0 %v2977
    %v2979 = vpop.xlane.xlu0 %2978
    %v2980 = vsel %vm2745, %v2903, 0.0
    %2981 = vadd.xlane.f32.xlu0 %v2980
    %v2982 = vpop.xlane.xlu0 %2981
    %v2983 = vsel %vm2745, %v2905, 0.0
    %2984 = vadd.xlane.f32.xlu0 %v2983
    %v2985 = vpop.xlane.xlu0 %2984
    %v2986 = vsel %vm2745, %v2907, 0.0
    %2987 = vadd.xlane.f32.xlu0 %v2986
    %v2988 = vpop.xlane.xlu0 %2987
    %v2989 = vsel %vm2745, %v2909, 0.0
    %2990 = vadd.xlane.f32.xlu0 %v2989
    %v2991 = vpop.xlane.xlu0 %2990
    %v2992 = vsel %vm2745, %v2911, 0.0
    %2993 = vadd.xlane.f32.xlu0 %v2992
    %v2994 = vpop.xlane.xlu0 %2993
    %v2995 = vsel %vm2745, %v2913, 0.0
    %2996 = vadd.xlane.f32.xlu0 %v2995
    %v2997 = vpop.xlane.xlu0 %2996
    %v2998 = vsel %vm2745, %v2915, 0.0
    %2999 = vadd.xlane.f32.xlu0 %v2998
    %v3000 = vpop.xlane.xlu0 %2999
    %v3001 = vsel %vm2745, %v2917, 0.0
    %3002 = vadd.xlane.f32.xlu0 %v3001
    %v3003 = vpop.xlane.xlu0 %3002
    %v3004 = vsel %vm2745, %v2919, 0.0
    %3005 = vadd.xlane.f32.xlu0 %v3004
    %v3006 = vpop.xlane.xlu0 %3005
    %v3007 = vsel %vm2745, %v2921, 0.0
    %3008 = vadd.xlane.f32.xlu0 %v3007
    %v3009 = vpop.xlane.xlu0 %3008
    %v3010 = vsel %vm2745, %v2923, 0.0
    %3011 = vadd.xlane.f32.xlu0 %v3010
    %v3012 = vpop.xlane.xlu0 %3011
    %v3013 = vsel %vm2745, %v2925, 0.0
    %3014 = vadd.xlane.f32.xlu0 %v3013
    %v3015 = vpop.xlane.xlu0 %3014
    %v3016 = vsel %vm2745, %v2927, 0.0
    %3017 = vadd.xlane.f32.xlu0 %v3016
    %v3018 = vpop.xlane.xlu0 %3017
    %v3019 = vsel %vm2745, %v2929, 0.0
    %3020 = vadd.xlane.f32.xlu0 %v3019
    %v3021 = vpop.xlane.xlu0 %3020
    %v3022 = vsel %vm2745, %v2931, 0.0
    %3023 = vadd.xlane.f32.xlu0 %v3022
    %v3024 = vpop.xlane.xlu0 %3023
    %v3025 = vsel %vm2745, %v2933, 0.0
    %3026 = vadd.xlane.f32.xlu0 %v3025
    %v3027 = vpop.xlane.xlu0 %3026
    %v3028 = vsel %vm2745, %v2935, 0.0
    %3029 = vadd.xlane.f32.xlu0 %v3028
    %v3030 = vpop.xlane.xlu0 %3029
    %v3031 = vsel %vm2745, %v2937, 0.0
    %3032 = vadd.xlane.f32.xlu0 %v3031
    %v3033 = vpop.xlane.xlu0 %3032
    %v3034 = vrcp.pop %v2940
    %v3035 = vmul.f32 %v2875, %v3034
    %v3036 = vrcp.pop %v2943
    %v3037 = vmul.f32 %v2877, %v3036
    %v3038 = vrcp.pop %v2946
    %v3039 = vmul.f32 %v2879, %v3038
    %v3040 = vrcp.pop %v2949
    %v3041 = vmul.f32 %v2881, %v3040
    %v3042 = vrcp.pop %v2952
    %v3043 = vmul.f32 %v2883, %v3042
    %v3044 = vrcp.pop %v2955
    %v3045 = vmul.f32 %v2885, %v3044
    %v3046 = vrcp.pop %v2958
    %v3047 = vmul.f32 %v2887, %v3046
    %v3048 = vrcp.pop %v2961
    %v3049 = vmul.f32 %v2889, %v3048
    %v3050 = vrcp.pop %v2964
    %v3051 = vmul.f32 %v2891, %v3050
    %v3052 = vrcp.pop %v2967
    %v3053 = vmul.f32 %v2893, %v3052
    %v3054 = vrcp.pop %v2970
    %v3055 = vmul.f32 %v2895, %v3054
    %v3056 = vrcp.pop %v2973
    %v3057 = vmul.f32 %v2897, %v3056
    %v3058 = vrcp.pop %v2976
    %v3059 = vmul.f32 %v2899, %v3058
    %v3060 = vrcp.pop %v2979
    %v3061 = vmul.f32 %v2901, %v3060
    %v3062 = vrcp.pop %v2982
    %v3063 = vmul.f32 %v2903, %v3062
    %v3064 = vrcp.pop %v2985
    %v3065 = vmul.f32 %v2905, %v3064
    %v3066 = vrcp.pop %v2988
    %v3067 = vmul.f32 %v2907, %v3066
    %v3068 = vrcp.pop %v2991
    %v3069 = vmul.f32 %v2909, %v3068
    %v3070 = vrcp.pop %v2994
    %v3071 = vmul.f32 %v2911, %v3070
    %v3072 = vrcp.pop %v2997
    %v3073 = vmul.f32 %v2913, %v3072
    %v3074 = vrcp.pop %v3000
    %v3075 = vmul.f32 %v2915, %v3074
    %v3076 = vrcp.pop %v3003
    %v3077 = vmul.f32 %v2917, %v3076
    %v3078 = vrcp.pop %v3006
    %v3079 = vmul.f32 %v2919, %v3078
    %v3080 = vrcp.pop %v3009
    %v3081 = vmul.f32 %v2921, %v3080
    %v3082 = vrcp.pop %v3012
    %v3083 = vmul.f32 %v2923, %v3082
    %v3084 = vrcp.pop %v3015
    %v3085 = vmul.f32 %v2925, %v3084
    %v3086 = vrcp.pop %v3018
    %v3087 = vmul.f32 %v2927, %v3086
    %v3088 = vrcp.pop %v3021
    %v3089 = vmul.f32 %v2929, %v3088
    %v3090 = vrcp.pop %v3024
    %v3091 = vmul.f32 %v2931, %v3090
    %v3092 = vrcp.pop %v3027
    %v3093 = vmul.f32 %v2933, %v3092
    %v3094 = vrcp.pop %v3030
    %v3095 = vmul.f32 %v2935, %v3094
    %v3096 = vrcp.pop %v3033
    %v3097 = vmul.f32 %v2937, %v3096
    %v3098 = vpack.c.bf16 %v3035, %v3035
    %v3099 = vpack.c.bf16 %v3037, %v3037
    %v3100 = vpack.c.bf16 %v3039, %v3039
    %v3101 = vpack.c.bf16 %v3041, %v3041
    %v3102 = vpack.c.bf16 %v3043, %v3043
    %v3103 = vpack.c.bf16 %v3045, %v3045
    %v3104 = vpack.c.bf16 %v3047, %v3047
    %v3105 = vpack.c.bf16 %v3049, %v3049
    %v3106 = vpack.c.bf16 %v3051, %v3051
    %v3107 = vpack.c.bf16 %v3053, %v3053
    %v3108 = vpack.c.bf16 %v3055, %v3055
    %v3109 = vpack.c.bf16 %v3057, %v3057
    %v3110 = vpack.c.bf16 %v3059, %v3059
    %v3111 = vpack.c.bf16 %v3061, %v3061
    %v3112 = vpack.c.bf16 %v3063, %v3063
    %v3113 = vpack.c.bf16 %v3065, %v3065
    %v3114 = vpack.c.bf16 %v3067, %v3067
    %v3115 = vpack.c.bf16 %v3069, %v3069
    %v3116 = vpack.c.bf16 %v3071, %v3071
    %v3117 = vpack.c.bf16 %v3073, %v3073
    %v3118 = vpack.c.bf16 %v3075, %v3075
    %v3119 = vpack.c.bf16 %v3077, %v3077
    %v3120 = vpack.c.bf16 %v3079, %v3079
    %v3121 = vpack.c.bf16 %v3081, %v3081
    %v3122 = vpack.c.bf16 %v3083, %v3083
    %v3123 = vpack.c.bf16 %v3085, %v3085
    %v3124 = vpack.c.bf16 %v3087, %v3087
    %v3125 = vpack.c.bf16 %v3089, %v3089
    %v3126 = vpack.c.bf16 %v3091, %v3091
    %v3127 = vpack.c.bf16 %v3093, %v3093
    %v3128 = vpack.c.bf16 %v3095, %v3095
    %v3129 = vpack.c.bf16 %v3097, %v3097
    %vm3130 = vcmask 15360
    %v3132 = vsel %vm3130, %v3098, 0
    %vm3134 = vcmask 1040384
    %v3136 = vsel %vm3134, %v1067, 0
    %3138 = vmatprep.subr.bf16.mxu0 0
    %3139 = vmatpush1.bf16.msra.mxu0 %v3136
    %3140 = vmatprep.subr.bf16.mxu0 0
    %3141 = vmatpush1.bf16.msra.mxu0 0
    %3142 = vmatprep.subr.bf16.mxu0 0
    %3143 = vmatpush1.bf16.msra.mxu0 0
    %3144 = vmatprep.subr.bf16.mxu0 0
    %3145 = vmatpush1.bf16.msra.mxu0 0
    %3146 = vmatprep.subr.bf16.mxu0 0
    %3147 = vmatpush1.bf16.msra.mxu0 0
    %3148 = vmatprep.subr.bf16.mxu0 0
    %3149 = vmatpush1.bf16.msra.mxu0 0
    %3150 = vmatprep.subr.bf16.mxu0 0
    %3151 = vmatpush1.bf16.msra.mxu0 0
    %3152 = vmatprep.subr.bf16.mxu0 0
    %3153 = vmatpush1.bf16.msra.mxu0 0
    %3154 = vmatprep.subr.bf16.mxu0 0
    %3155 = vmatpush1.bf16.msra.mxu0 0
    %3156 = vmatprep.subr.bf16.mxu0 0
    %3157 = vmatpush1.bf16.msra.mxu0 0
    %3158 = vmatprep.subr.bf16.mxu0 0
    %3159 = vmatpush1.bf16.msra.mxu0 0
    %3160 = vmatprep.subr.bf16.mxu0 0
    %3161 = vmatpush1.bf16.msra.mxu0 0
    %3162 = vmatprep.subr.bf16.mxu0 0
    %3163 = vmatpush1.bf16.msra.mxu0 0
    %3164 = vmatprep.subr.bf16.mxu0 0
    %3165 = vmatpush1.bf16.msra.mxu0 0
    %3166 = vmatprep.subr.bf16.mxu0 0
    %3167 = vmatpush1.bf16.msra.mxu0 0
    %3168 = vmatprep.subr.bf16.mxu0 0
    %3169 = vmatpush1.bf16.msra.mxu0 0
    %3170 = vmatprep.mubr.bf16.mxu0 0
    %3171 = vmatmul.mubr.bf16.gmra.mrb[0].mxu0 %v3132
    %v3172 = vpop.f32.mrb[0].mxu0
    %v3173 = vadd.f32 0.0, %v3172
    %v3174 = vpop.f32.mrb[0].mxu0
    %v3175 = vpop.f32.mrb[0].mxu0
    %v3176 = vpop.f32.mrb[0].mxu0
    %3177 = vdwg.mxu0
    %v3179 = vsel %vm3130, %v3099, 0
    %v3182 = vsel %vm3134, %v1081, 0
    %3184 = vmatprep.subr.bf16.mxu0 0
    %3185 = vmatpush1.bf16.msra.mxu0 %v3182
    %3186 = vmatprep.subr.bf16.mxu0 0
    %3187 = vmatpush1.bf16.msra.mxu0 0
    %3188 = vmatprep.subr.bf16.mxu0 0
    %3189 = vmatpush1.bf16.msra.mxu0 0
    %3190 = vmatprep.subr.bf16.mxu0 0
    %3191 = vmatpush1.bf16.msra.mxu0 0
    %3192 = vmatprep.subr.bf16.mxu0 0
    %3193 = vmatpush1.bf16.msra.mxu0 0
    %3194 = vmatprep.subr.bf16.mxu0 0
    %3195 = vmatpush1.bf16.msra.mxu0 0
    %3196 = vmatprep.subr.bf16.mxu0 0
    %3197 = vmatpush1.bf16.msra.mxu0 0
    %3198 = vmatprep.subr.bf16.mxu0 0
    %3199 = vmatpush1.bf16.msra.mxu0 0
    %3200 = vmatprep.subr.bf16.mxu0 0
    %3201 = vmatpush1.bf16.msra.mxu0 0
    %3202 = vmatprep.subr.bf16.mxu0 0
    %3203 = vmatpush1.bf16.msra.mxu0 0
    %3204 = vmatprep.subr.bf16.mxu0 0
    %3205 = vmatpush1.bf16.msra.mxu0 0
    %3206 = vmatprep.subr.bf16.mxu0 0
    %3207 = vmatpush1.bf16.msra.mxu0 0
    %3208 = vmatprep.subr.bf16.mxu0 0
    %3209 = vmatpush1.bf16.msra.mxu0 0
    %3210 = vmatprep.subr.bf16.mxu0 0
    %3211 = vmatpush1.bf16.msra.mxu0 0
    %3212 = vmatprep.subr.bf16.mxu0 0
    %3213 = vmatpush1.bf16.msra.mxu0 0
    %3214 = vmatprep.subr.bf16.mxu0 0
    %3215 = vmatpush1.bf16.msra.mxu0 0
    %3216 = vmatprep.mubr.bf16.mxu0 0
    %3217 = vmatmul.mubr.bf16.gmra.mrb[0].mxu0 %v3179
    %v3218 = vpop.f32.mrb[0].mxu0
    %v3219 = vadd.f32 0.0, %v3218
    %v3220 = vpop.f32.mrb[0].mxu0
    %v3221 = vpop.f32.mrb[0].mxu0
    %v3222 = vpop.f32.mrb[0].mxu0
    %3223 = vdwg.mxu0
    %v3225 = vsel %vm3130, %v3100, 0
    %v3228 = vsel %vm3134, %v1089, 0
    %3230 = vmatprep.subr.bf16.mxu0 0
    %3231 = vmatpush1.bf16.msra.mxu0 %v3228
    %3232 = vmatprep.subr.bf16.mxu0 0
    %3233 = vmatpush1.bf16.msra.mxu0 0
    %3234 = vmatprep.subr.bf16.mxu0 0
    %3235 = vmatpush1.bf16.msra.mxu0 0
    %3236 = vmatprep.subr.bf16.mxu0 0
    %3237 = vmatpush1.bf16.msra.mxu0 0
    %3238 = vmatprep.subr.bf16.mxu0 0
    %3239 = vmatpush1.bf16.msra.mxu0 0
    %3240 = vmatprep.subr.bf16.mxu0 0
    %3241 = vmatpush1.bf16.msra.mxu0 0
    %3242 = vmatprep.subr.bf16.mxu0 0
    %3243 = vmatpush1.bf16.msra.mxu0 0
    %3244 = vmatprep.subr.bf16.mxu0 0
    %3245 = vmatpush1.bf16.msra.mxu0 0
    %3246 = vmatprep.subr.bf16.mxu0 0
    %3247 = vmatpush1.bf16.msra.mxu0 0
    %3248 = vmatprep.subr.bf16.mxu0 0
    %3249 = vmatpush1.bf16.msra.mxu0 0
    %3250 = vmatprep.subr.bf16.mxu0 0
    %3251 = vmatpush1.bf16.msra.mxu0 0
    %3252 = vmatprep.subr.bf16.mxu0 0
    %3253 = vmatpush1.bf16.msra.mxu0 0
    %3254 = vmatprep.subr.bf16.mxu0 0
    %3255 = vmatpush1.bf16.msra.mxu0 0
    %3256 = vmatprep.subr.bf16.mxu0 0
    %3257 = vmatpush1.bf16.msra.mxu0 0
    %3258 = vmatprep.subr.bf16.mxu0 0
    %3259 = vmatpush1.bf16.msra.mxu0 0
    %3260 = vmatprep.subr.bf16.mxu0 0
    %3261 = vmatpush1.bf16.msra.mxu0 0
    %3262 = vmatprep.mubr.bf16.mxu0 0
    %3263 = vmatmul.mubr.bf16.gmra.mrb[0].mxu0 %v3225
    %v3264 = vpop.f32.mrb[0].mxu0
    %v3265 = vadd.f32 0.0, %v3264
    %v3266 = vpop.f32.mrb[0].mxu0
    %v3267 = vpop.f32.mrb[0].mxu0
    %v3268 = vpop.f32.mrb[0].mxu0
    %3269 = vdwg.mxu0
    %v3271 = vsel %vm3130, %v3101, 0
    %v3274 = vsel %vm3134, %v1091, 0
    %3276 = vmatprep.subr.bf16.mxu0 0
    %3277 = vmatpush1.bf16.msra.mxu0 %v3274
    %3278 = vmatprep.subr.bf16.mxu0 0
    %3279 = vmatpush1.bf16.msra.mxu0 0
    %3280 = vmatprep.subr.bf16.mxu0 0
    %3281 = vmatpush1.bf16.msra.mxu0 0
    %3282 = vmatprep.subr.bf16.mxu0 0
    %3283 = vmatpush1.bf16.msra.mxu0 0
    %3284 = vmatprep.subr.bf16.mxu0 0
    %3285 = vmatpush1.bf16.msra.mxu0 0
    %3286 = vmatprep.subr.bf16.mxu0 0
    %3287 = vmatpush1.bf16.msra.mxu0 0
    %3288 = vmatprep.subr.bf16.mxu0 0
    %3289 = vmatpush1.bf16.msra.mxu0 0
    %3290 = vmatprep.subr.bf16.mxu0 0
    %3291 = vmatpush1.bf16.msra.mxu0 0
    %3292 = vmatprep.subr.bf16.mxu0 0
    %3293 = vmatpush1.bf16.msra.mxu0 0
    %3294 = vmatprep.subr.bf16.mxu0 0
    %3295 = vmatpush1.bf16.msra.mxu0 0
    %3296 = vmatprep.subr.bf16.mxu0 0
    %3297 = vmatpush1.bf16.msra.mxu0 0
    %3298 = vmatprep.subr.bf16.mxu0 0
    %3299 = vmatpush1.bf16.msra.mxu0 0
    %3300 = vmatprep.subr.bf16.mxu0 0
    %3301 = vmatpush1.bf16.msra.mxu0 0
    %3302 = vmatprep.subr.bf16.mxu0 0
    %3303 = vmatpush1.bf16.msra.mxu0 0
    %3304 = vmatprep.subr.bf16.mxu0 0
    %3305 = vmatpush1.bf16.msra.mxu0 0
    %3306 = vmatprep.subr.bf16.mxu0 0
    %3307 = vmatpush1.bf16.msra.mxu0 0
    %3308 = vmatprep.mubr.bf16.mxu0 0
    %3309 = vmatmul.mubr.bf16.gmra.mrb[0].mxu0 %v3271
    %v3310 = vpop.f32.mrb[0].mxu0
    %v3311 = vadd.f32 0.0, %v3310
    %v3312 = vpop.f32.mrb[0].mxu0
    %v3313 = vpop.f32.mrb[0].mxu0
    %v3314 = vpop.f32.mrb[0].mxu0
    %3315 = vdwg.mxu0
    %v3317 = vsel %vm3130, %v3102, 0
    %v3320 = vsel %vm3134, %v1074, 0
    %3322 = vmatprep.subr.bf16.mxu0 0
    %3323 = vmatpush1.bf16.msra.mxu0 %v3320
    %3324 = vmatprep.subr.bf16.mxu0 0
    %3325 = vmatpush1.bf16.msra.mxu0 0
    %3326 = vmatprep.subr.bf16.mxu0 0
    %3327 = vmatpush1.bf16.msra.mxu0 0
    %3328 = vmatprep.subr.bf16.mxu0 0
    %3329 = vmatpush1.bf16.msra.mxu0 0
    %3330 = vmatprep.subr.bf16.mxu0 0
    %3331 = vmatpush1.bf16.msra.mxu0 0
    %3332 = vmatprep.subr.bf16.mxu0 0
    %3333 = vmatpush1.bf16.msra.mxu0 0
    %3334 = vmatprep.subr.bf16.mxu0 0
    %3335 = vmatpush1.bf16.msra.mxu0 0
    %3336 = vmatprep.subr.bf16.mxu0 0
    %3337 = vmatpush1.bf16.msra.mxu0 0
    %3338 = vmatprep.subr.bf16.mxu0 0
    %3339 = vmatpush1.bf16.msra.mxu0 0
    %3340 = vmatprep.subr.bf16.mxu0 0
    %3341 = vmatpush1.bf16.msra.mxu0 0
    %3342 = vmatprep.subr.bf16.mxu0 0
    %3343 = vmatpush1.bf16.msra.mxu0 0
    %3344 = vmatprep.subr.bf16.mxu0 0
    %3345 = vmatpush1.bf16.msra.mxu0 0
    %3346 = vmatprep.subr.bf16.mxu0 0
    %3347 = vmatpush1.bf16.msra.mxu0 0
    %3348 = vmatprep.subr.bf16.mxu0 0
    %3349 = vmatpush1.bf16.msra.mxu0 0
    %3350 = vmatprep.subr.bf16.mxu0 0
    %3351 = vmatpush1.bf16.msra.mxu0 0
    %3352 = vmatprep.subr.bf16.mxu0 0
    %3353 = vmatpush1.bf16.msra.mxu0 0
    %3354 = vmatprep.mubr.bf16.mxu0 0
    %3355 = vmatmul.mubr.bf16.gmra.mrb[0].mxu0 %v3317
    %v3356 = vpop.f32.mrb[0].mxu0
    %v3357 = vadd.f32 0.0, %v3356
    %v3358 = vpop.f32.mrb[0].mxu0
    %v3359 = vpop.f32.mrb[0].mxu0
    %v3360 = vpop.f32.mrb[0].mxu0
    %3361 = vdwg.mxu0
    %v3363 = vsel %vm3130, %v3103, 0
    %v3366 = vsel %vm3134, %v1088, 0
    %3368 = vmatprep.subr.bf16.mxu0 0
    %3369 = vmatpush1.bf16.msra.mxu0 %v3366
    %3370 = vmatprep.subr.bf16.mxu0 0
    %3371 = vmatpush1.bf16.msra.mxu0 0
    %3372 = vmatprep.subr.bf16.mxu0 0
    %3373 = vmatpush1.bf16.msra.mxu0 0
    %3374 = vmatprep.subr.bf16.mxu0 0
    %3375 = vmatpush1.bf16.msra.mxu0 0
    %3376 = vmatprep.subr.bf16.mxu0 0
    %3377 = vmatpush1.bf16.msra.mxu0 0
    %3378 = vmatprep.subr.bf16.mxu0 0
    %3379 = vmatpush1.bf16.msra.mxu0 0
    %3380 = vmatprep.subr.bf16.mxu0 0
    %3381 = vmatpush1.bf16.msra.mxu0 0
    %3382 = vmatprep.subr.bf16.mxu0 0
    %3383 = vmatpush1.bf16.msra.mxu0 0
    %3384 = vmatprep.subr.bf16.mxu0 0
    %3385 = vmatpush1.bf16.msra.mxu0 0
    %3386 = vmatprep.subr.bf16.mxu0 0
    %3387 = vmatpush1.bf16.msra.mxu0 0
    %3388 = vmatprep.subr.bf16.mxu0 0
    %3389 = vmatpush1.bf16.msra.mxu0 0
    %3390 = vmatprep.subr.bf16.mxu0 0
    %3391 = vmatpush1.bf16.msra.mxu0 0
    %3392 = vmatprep.subr.bf16.mxu0 0
    %3393 = vmatpush1.bf16.msra.mxu0 0
    %3394 = vmatprep.subr.bf16.mxu0 0
    %3395 = vmatpush1.bf16.msra.mxu0 0
    %3396 = vmatprep.subr.bf16.mxu0 0
    %3397 = vmatpush1.bf16.msra.mxu0 0
    %3398 = vmatprep.subr.bf16.mxu0 0
    %3399 = vmatpush1.bf16.msra.mxu0 0
    %3400 = vmatprep.mubr.bf16.mxu0 0
    %3401 = vmatmul.mubr.bf16.gmra.mrb[0].mxu0 %v3363
    %v3402 = vpop.f32.mrb[0].mxu0
    %v3403 = vadd.f32 0.0, %v3402
    %v3404 = vpop.f32.mrb[0].mxu0
    %v3405 = vpop.f32.mrb[0].mxu0
    %v3406 = vpop.f32.mrb[0].mxu0
    %3407 = vdwg.mxu0
    %v3409 = vsel %vm3130, %v3104, 0
    %v3412 = vsel %vm3134, %v1090, 0
    %3414 = vmatprep.subr.bf16.mxu0 0
    %3415 = vmatpush1.bf16.msra.mxu0 %v3412
    %3416 = vmatprep.subr.bf16.mxu0 0
    %3417 = vmatpush1.bf16.msra.mxu0 0
    %3418 = vmatprep.subr.bf16.mxu0 0
    %3419 = vmatpush1.bf16.msra.mxu0 0
    %3420 = vmatprep.subr.bf16.mxu0 0
    %3421 = vmatpush1.bf16.msra.mxu0 0
    %3422 = vmatprep.subr.bf16.mxu0 0
    %3423 = vmatpush1.bf16.msra.mxu0 0
    %3424 = vmatprep.subr.bf16.mxu0 0
    %3425 = vmatpush1.bf16.msra.mxu0 0
    %3426 = vmatprep.subr.bf16.mxu0 0
    %3427 = vmatpush1.bf16.msra.mxu0 0
    %3428 = vmatprep.subr.bf16.mxu0 0
    %3429 = vmatpush1.bf16.msra.mxu0 0
    %3430 = vmatprep.subr.bf16.mxu0 0
    %3431 = vmatpush1.bf16.msra.mxu0 0
    %3432 = vmatprep.subr.bf16.mxu0 0
    %3433 = vmatpush1.bf16.msra.mxu0 0
    %3434 = vmatprep.subr.bf16.mxu0 0
    %3435 = vmatpush1.bf16.msra.mxu0 0
    %3436 = vmatprep.subr.bf16.mxu0 0
    %3437 = vmatpush1.bf16.msra.mxu0 0
    %3438 = vmatprep.subr.bf16.mxu0 0
    %3439 = vmatpush1.bf16.msra.mxu0 0
    %3440 = vmatprep.subr.bf16.mxu0 0
    %3441 = vmatpush1.bf16.msra.mxu0 0
    %3442 = vmatprep.subr.bf16.mxu0 0
    %3443 = vmatpush1.bf16.msra.mxu0 0
    %3444 = vmatprep.subr.bf16.mxu0 0
    %3445 = vmatpush1.bf16.msra.mxu0 0
    %3446 = vmatprep.mubr.bf16.mxu0 0
    %3447 = vmatmul.mubr.bf16.gmra.mrb[0].mxu0 %v3409
    %v3448 = vpop.f32.mrb[0].mxu0
    %v3449 = vadd.f32 0.0, %v3448
    %v3450 = vpop.f32.mrb[0].mxu0
    %v3451 = vpop.f32.mrb[0].mxu0
    %v3452 = vpop.f32.mrb[0].mxu0
    %3453 = vdwg.mxu0
    %v3455 = vsel %vm3130, %v3105, 0
    %v3458 = vsel %vm3134, %v1092, 0
    %3460 = vmatprep.subr.bf16.mxu0 0
    %3461 = vmatpush1.bf16.msra.mxu0 %v3458
    %3462 = vmatprep.subr.bf16.mxu0 0
    %3463 = vmatpush1.bf16.msra.mxu0 0
    %3464 = vmatprep.subr.bf16.mxu0 0
    %3465 = vmatpush1.bf16.msra.mxu0 0
    %3466 = vmatprep.subr.bf16.mxu0 0
    %3467 = vmatpush1.bf16.msra.mxu0 0
    %3468 = vmatprep.subr.bf16.mxu0 0
    %3469 = vmatpush1.bf16.msra.mxu0 0
    %3470 = vmatprep.subr.bf16.mxu0 0
    %3471 = vmatpush1.bf16.msra.mxu0 0
    %3472 = vmatprep.subr.bf16.mxu0 0
    %3473 = vmatpush1.bf16.msra.mxu0 0
    %3474 = vmatprep.subr.bf16.mxu0 0
    %3475 = vmatpush1.bf16.msra.mxu0 0
    %3476 = vmatprep.subr.bf16.mxu0 0
    %3477 = vmatpush1.bf16.msra.mxu0 0
    %3478 = vmatprep.subr.bf16.mxu0 0
    %3479 = vmatpush1.bf16.msra.mxu0 0
    %3480 = vmatprep.subr.bf16.mxu0 0
    %3481 = vmatpush1.bf16.msra.mxu0 0
    %3482 = vmatprep.subr.bf16.mxu0 0
    %3483 = vmatpush1.bf16.msra.mxu0 0
    %3484 = vmatprep.subr.bf16.mxu0 0
    %3485 = vmatpush1.bf16.msra.mxu0 0
    %3486 = vmatprep.subr.bf16.mxu0 0
    %3487 = vmatpush1.bf16.msra.mxu0 0
    %3488 = vmatprep.subr.bf16.mxu0 0
    %3489 = vmatpush1.bf16.msra.mxu0 0
    %3490 = vmatprep.subr.bf16.mxu0 0
    %3491 = vmatpush1.bf16.msra.mxu0 0
    %3492 = vmatprep.mubr.bf16.mxu0 0
    %3493 = vmatmul.mubr.bf16.gmra.mrb[0].mxu0 %v3455
    %v3494 = vpop.f32.mrb[0].mxu0
    %v3495 = vadd.f32 0.0, %v3494
    %v3496 = vpop.f32.mrb[0].mxu0
    %v3497 = vpop.f32.mrb[0].mxu0
    %v3498 = vpop.f32.mrb[0].mxu0
    %3499 = vdwg.mxu0
    %v3501 = vsel %vm3130, %v3106, 0
    %v3504 = vsel %vm3134, %v1116, 0
    %3506 = vmatprep.subr.bf16.mxu0 0
    %3507 = vmatpush1.bf16.msra.mxu0 %v3504
    %3508 = vmatprep.subr.bf16.mxu0 0
    %3509 = vmatpush1.bf16.msra.mxu0 0
    %3510 = vmatprep.subr.bf16.mxu0 0
    %3511 = vmatpush1.bf16.msra.mxu0 0
    %3512 = vmatprep.subr.bf16.mxu0 0
    %3513 = vmatpush1.bf16.msra.mxu0 0
    %3514 = vmatprep.subr.bf16.mxu0 0
    %3515 = vmatpush1.bf16.msra.mxu0 0
    %3516 = vmatprep.subr.bf16.mxu0 0
    %3517 = vmatpush1.bf16.msra.mxu0 0
    %3518 = vmatprep.subr.bf16.mxu0 0
    %3519 = vmatpush1.bf16.msra.mxu0 0
    %3520 = vmatprep.subr.bf16.mxu0 0
    %3521 = vmatpush1.bf16.msra.mxu0 0
    %3522 = vmatprep.subr.bf16.mxu0 0
    %3523 = vmatpush1.bf16.msra.mxu0 0
    %3524 = vmatprep.subr.bf16.mxu0 0
    %3525 = vmatpush1.bf16.msra.mxu0 0
    %3526 = vmatprep.subr.bf16.mxu0 0
    %3527 = vmatpush1.bf16.msra.mxu0 0
    %3528 = vmatprep.subr.bf16.mxu0 0
    %3529 = vmatpush1.bf16.msra.mxu0 0
    %3530 = vmatprep.subr.bf16.mxu0 0
    %3531 = vmatpush1.bf16.msra.mxu0 0
    %3532 = vmatprep.subr.bf16.mxu0 0
    %3533 = vmatpush1.bf16.msra.mxu0 0
    %3534 = vmatprep.subr.bf16.mxu0 0
    %3535 = vmatpush1.bf16.msra.mxu0 0
    %3536 = vmatprep.subr.bf16.mxu0 0
    %3537 = vmatpush1.bf16.msra.mxu0 0
    %3538 = vmatprep.mubr.bf16.mxu0 0
    %3539 = vmatmul.mubr.bf16.gmra.mrb[0].mxu0 %v3501
    %v3540 = vpop.f32.mrb[0].mxu0
    %v3541 = vadd.f32 0.0, %v3540
    %v3542 = vpop.f32.mrb[0].mxu0
    %v3543 = vpop.f32.mrb[0].mxu0
    %v3544 = vpop.f32.mrb[0].mxu0
    %3545 = vdwg.mxu0
    %v3547 = vsel %vm3130, %v3107, 0
    %v3550 = vsel %vm3134, %v1130, 0
    %3552 = vmatprep.subr.bf16.mxu0 0
    %3553 = vmatpush1.bf16.msra.mxu0 %v3550
    %3554 = vmatprep.subr.bf16.mxu0 0
    %3555 = vmatpush1.bf16.msra.mxu0 0
    %3556 = vmatprep.subr.bf16.mxu0 0
    %3557 = vmatpush1.bf16.msra.mxu0 0
    %3558 = vmatprep.subr.bf16.mxu0 0
    %3559 = vmatpush1.bf16.msra.mxu0 0
    %3560 = vmatprep.subr.bf16.mxu0 0
    %3561 = vmatpush1.bf16.msra.mxu0 0
    %3562 = vmatprep.subr.bf16.mxu0 0
    %3563 = vmatpush1.bf16.msra.mxu0 0
    %3564 = vmatprep.subr.bf16.mxu0 0
    %3565 = vmatpush1.bf16.msra.mxu0 0
    %3566 = vmatprep.subr.bf16.mxu0 0
    %3567 = vmatpush1.bf16.msra.mxu0 0
    %3568 = vmatprep.subr.bf16.mxu0 0
    %3569 = vmatpush1.bf16.msra.mxu0 0
    %3570 = vmatprep.subr.bf16.mxu0 0
    %3571 = vmatpush1.bf16.msra.mxu0 0
    %3572 = vmatprep.subr.bf16.mxu0 0
    %3573 = vmatpush1.bf16.msra.mxu0 0
    %3574 = vmatprep.subr.bf16.mxu0 0
    %3575 = vmatpush1.bf16.msra.mxu0 0
    %3576 = vmatprep.subr.bf16.mxu0 0
    %3577 = vmatpush1.bf16.msra.mxu0 0
    %3578 = vmatprep.subr.bf16.mxu0 0
    %3579 = vmatpush1.bf16.msra.mxu0 0
    %3580 = vmatprep.subr.bf16.mxu0 0
    %3581 = vmatpush1.bf16.msra.mxu0 0
    %3582 = vmatprep.subr.bf16.mxu0 0
    %3583 = vmatpush1.bf16.msra.mxu0 0
    %3584 = vmatprep.mubr.bf16.mxu0 0
    %3585 = vmatmul.mubr.bf16.gmra.mrb[0].mxu0 %v3547
    %v3586 = vpop.f32.mrb[0].mxu0
    %v3587 = vadd.f32 0.0, %v3586
    %v3588 = vpop.f32.mrb[0].mxu0
    %v3589 = vpop.f32.mrb[0].mxu0
    %v3590 = vpop.f32.mrb[0].mxu0
    %3591 = vdwg.mxu0
    %v3593 = vsel %vm3130, %v3108, 0
    %v3596 = vsel %vm3134, %v1138, 0
    %3598 = vmatprep.subr.bf16.mxu0 0
    %3599 = vmatpush1.bf16.msra.mxu0 %v3596
    %3600 = vmatprep.subr.bf16.mxu0 0
    %3601 = vmatpush1.bf16.msra.mxu0 0
    %3602 = vmatprep.subr.bf16.mxu0 0
    %3603 = vmatpush1.bf16.msra.mxu0 0
    %3604 = vmatprep.subr.bf16.mxu0 0
    %3605 = vmatpush1.bf16.msra.mxu0 0
    %3606 = vmatprep.subr.bf16.mxu0 0
    %3607 = vmatpush1.bf16.msra.mxu0 0
    %3608 = vmatprep.subr.bf16.mxu0 0
    %3609 = vmatpush1.bf16.msra.mxu0 0
    %3610 = vmatprep.subr.bf16.mxu0 0
    %3611 = vmatpush1.bf16.msra.mxu0 0
    %3612 = vmatprep.subr.bf16.mxu0 0
    %3613 = vmatpush1.bf16.msra.mxu0 0
    %3614 = vmatprep.subr.bf16.mxu0 0
    %3615 = vmatpush1.bf16.msra.mxu0 0
    %3616 = vmatprep.subr.bf16.mxu0 0
    %3617 = vmatpush1.bf16.msra.mxu0 0
    %3618 = vmatprep.subr.bf16.mxu0 0
    %3619 = vmatpush1.bf16.msra.mxu0 0
    %3620 = vmatprep.subr.bf16.mxu0 0
    %3621 = vmatpush1.bf16.msra.mxu0 0
    %3622 = vmatprep.subr.bf16.mxu0 0
    %3623 = vmatpush1.bf16.msra.mxu0 0
    %3624 = vmatprep.subr.bf16.mxu0 0
    %3625 = vmatpush1.bf16.msra.mxu0 0
    %3626 = vmatprep.subr.bf16.mxu0 0
    %3627 = vmatpush1.bf16.msra.mxu0 0
    %3628 = vmatprep.subr.bf16.mxu0 0
    %3629 = vmatpush1.bf16.msra.mxu0 0
    %3630 = vmatprep.mubr.bf16.mxu0 0
    %3631 = vmatmul.mubr.bf16.gmra.mrb[0].mxu0 %v3593
    %v3632 = vpop.f32.mrb[0].mxu0
    %v3633 = vadd.f32 0.0, %v3632
    %v3634 = vpop.f32.mrb[0].mxu0
    %v3635 = vpop.f32.mrb[0].mxu0
    %v3636 = vpop.f32.mrb[0].mxu0
    %3637 = vdwg.mxu0
    %v3639 = vsel %vm3130, %v3109, 0
    %v3642 = vsel %vm3134, %v1140, 0
    %3644 = vmatprep.subr.bf16.mxu0 0
    %3645 = vmatpush1.bf16.msra.mxu0 %v3642
    %3646 = vmatprep.subr.bf16.mxu0 0
    %3647 = vmatpush1.bf16.msra.mxu0 0
    %3648 = vmatprep.subr.bf16.mxu0 0
    %3649 = vmatpush1.bf16.msra.mxu0 0
    %3650 = vmatprep.subr.bf16.mxu0 0
    %3651 = vmatpush1.bf16.msra.mxu0 0
    %3652 = vmatprep.subr.bf16.mxu0 0
    %3653 = vmatpush1.bf16.msra.mxu0 0
    %3654 = vmatprep.subr.bf16.mxu0 0
    %3655 = vmatpush1.bf16.msra.mxu0 0
    %3656 = vmatprep.subr.bf16.mxu0 0
    %3657 = vmatpush1.bf16.msra.mxu0 0
    %3658 = vmatprep.subr.bf16.mxu0 0
    %3659 = vmatpush1.bf16.msra.mxu0 0
    %3660 = vmatprep.subr.bf16.mxu0 0
    %3661 = vmatpush1.bf16.msra.mxu0 0
    %3662 = vmatprep.subr.bf16.mxu0 0
    %3663 = vmatpush1.bf16.msra.mxu0 0
    %3664 = vmatprep.subr.bf16.mxu0 0
    %3665 = vmatpush1.bf16.msra.mxu0 0
    %3666 = vmatprep.subr.bf16.mxu0 0
    %3667 = vmatpush1.bf16.msra.mxu0 0
    %3668 = vmatprep.subr.bf16.mxu0 0
    %3669 = vmatpush1.bf16.msra.mxu0 0
    %3670 = vmatprep.subr.bf16.mxu0 0
    %3671 = vmatpush1.bf16.msra.mxu0 0
    %3672 = vmatprep.subr.bf16.mxu0 0
    %3673 = vmatpush1.bf16.msra.mxu0 0
    %3674 = vmatprep.subr.bf16.mxu0 0
    %3675 = vmatpush1.bf16.msra.mxu0 0
    %3676 = vmatprep.mubr.bf16.mxu0 0
    %3677 = vmatmul.mubr.bf16.gmra.mrb[0].mxu0 %v3639
    %v3678 = vpop.f32.mrb[0].mxu0
    %v3679 = vadd.f32 0.0, %v3678
    %v3680 = vpop.f32.mrb[0].mxu0
    %v3681 = vpop.f32.mrb[0].mxu0
    %v3682 = vpop.f32.mrb[0].mxu0
    %3683 = vdwg.mxu0
    %v3685 = vsel %vm3130, %v3110, 0
    %v3688 = vsel %vm3134, %v1123, 0
    %3690 = vmatprep.subr.bf16.mxu0 0
    %3691 = vmatpush1.bf16.msra.mxu0 %v3688
    %3692 = vmatprep.subr.bf16.mxu0 0
    %3693 = vmatpush1.bf16.msra.mxu0 0
    %3694 = vmatprep.subr.bf16.mxu0 0
    %3695 = vmatpush1.bf16.msra.mxu0 0
    %3696 = vmatprep.subr.bf16.mxu0 0
    %3697 = vmatpush1.bf16.msra.mxu0 0
    %3698 = vmatprep.subr.bf16.mxu0 0
    %3699 = vmatpush1.bf16.msra.mxu0 0
    %3700 = vmatprep.subr.bf16.mxu0 0
    %3701 = vmatpush1.bf16.msra.mxu0 0
    %3702 = vmatprep.subr.bf16.mxu0 0
    %3703 = vmatpush1.bf16.msra.mxu0 0
    %3704 = vmatprep.subr.bf16.mxu0 0
    %3705 = vmatpush1.bf16.msra.mxu0 0
    %3706 = vmatprep.subr.bf16.mxu0 0
    %3707 = vmatpush1.bf16.msra.mxu0 0
    %3708 = vmatprep.subr.bf16.mxu0 0
    %3709 = vmatpush1.bf16.msra.mxu0 0
    %3710 = vmatprep.subr.bf16.mxu0 0
    %3711 = vmatpush1.bf16.msra.mxu0 0
    %3712 = vmatprep.subr.bf16.mxu0 0
    %3713 = vmatpush1.bf16.msra.mxu0 0
    %3714 = vmatprep.subr.bf16.mxu0 0
    %3715 = vmatpush1.bf16.msra.mxu0 0
    %3716 = vmatprep.subr.bf16.mxu0 0
    %3717 = vmatpush1.bf16.msra.mxu0 0
    %3718 = vmatprep.subr.bf16.mxu0 0
    %3719 = vmatpush1.bf16.msra.mxu0 0
    %3720 = vmatprep.subr.bf16.mxu0 0
    %3721 = vmatpush1.bf16.msra.mxu0 0
    %3722 = vmatprep.mubr.bf16.mxu0 0
    %3723 = vmatmul.mubr.bf16.gmra.mrb[0].mxu0 %v3685
    %v3724 = vpop.f32.mrb[0].mxu0
    %v3725 = vadd.f32 0.0, %v3724
    %v3726 = vpop.f32.mrb[0].mxu0
    %v3727 = vpop.f32.mrb[0].mxu0
    %v3728 = vpop.f32.mrb[0].mxu0
    %3729 = vdwg.mxu0
    %v3731 = vsel %vm3130, %v3111, 0
    %v3734 = vsel %vm3134, %v1137, 0
    %3736 = vmatprep.subr.bf16.mxu0 0
    %3737 = vmatpush1.bf16.msra.mxu0 %v3734
    %3738 = vmatprep.subr.bf16.mxu0 0
    %3739 = vmatpush1.bf16.msra.mxu0 0
    %3740 = vmatprep.subr.bf16.mxu0 0
    %3741 = vmatpush1.bf16.msra.mxu0 0
    %3742 = vmatprep.subr.bf16.mxu0 0
    %3743 = vmatpush1.bf16.msra.mxu0 0
    %3744 = vmatprep.subr.bf16.mxu0 0
    %3745 = vmatpush1.bf16.msra.mxu0 0
    %3746 = vmatprep.subr.bf16.mxu0 0
    %3747 = vmatpush1.bf16.msra.mxu0 0
    %3748 = vmatprep.subr.bf16.mxu0 0
    %3749 = vmatpush1.bf16.msra.mxu0 0
    %3750 = vmatprep.subr.bf16.mxu0 0
    %3751 = vmatpush1.bf16.msra.mxu0 0
    %3752 = vmatprep.subr.bf16.mxu0 0
    %3753 = vmatpush1.bf16.msra.mxu0 0
    %3754 = vmatprep.subr.bf16.mxu0 0
    %3755 = vmatpush1.bf16.msra.mxu0 0
    %3756 = vmatprep.subr.bf16.mxu0 0
    %3757 = vmatpush1.bf16.msra.mxu0 0
    %3758 = vmatprep.subr.bf16.mxu0 0
    %3759 = vmatpush1.bf16.msra.mxu0 0
    %3760 = vmatprep.subr.bf16.mxu0 0
    %3761 = vmatpush1.bf16.msra.mxu0 0
    %3762 = vmatprep.subr.bf16.mxu0 0
    %3763 = vmatpush1.bf16.msra.mxu0 0
    %3764 = vmatprep.subr.bf16.mxu0 0
    %3765 = vmatpush1.bf16.msra.mxu0 0
    %3766 = vmatprep.subr.bf16.mxu0 0
    %3767 = vmatpush1.bf16.msra.mxu0 0
    %3768 = vmatprep.mubr.bf16.mxu0 0
    %3769 = vmatmul.mubr.bf16.gmra.mrb[0].mxu0 %v3731
    %v3770 = vpop.f32.mrb[0].mxu0
    %v3771 = vadd.f32 0.0, %v3770
    %v3772 = vpop.f32.mrb[0].mxu0
    %v3773 = vpop.f32.mrb[0].mxu0
    %v3774 = vpop.f32.mrb[0].mxu0
    %3775 = vdwg.mxu0
    %v3777 = vsel %vm3130, %v3112, 0
    %v3780 = vsel %vm3134, %v1139, 0
    %3782 = vmatprep.subr.bf16.mxu0 0
    %3783 = vmatpush1.bf16.msra.mxu0 %v3780
    %3784 = vmatprep.subr.bf16.mxu0 0
    %3785 = vmatpush1.bf16.msra.mxu0 0
    %3786 = vmatprep.subr.bf16.mxu0 0
    %3787 = vmatpush1.bf16.msra.mxu0 0
    %3788 = vmatprep.subr.bf16.mxu0 0
    %3789 = vmatpush1.bf16.msra.mxu0 0
    %3790 = vmatprep.subr.bf16.mxu0 0
    %3791 = vmatpush1.bf16.msra.mxu0 0
    %3792 = vmatprep.subr.bf16.mxu0 0
    %3793 = vmatpush1.bf16.msra.mxu0 0
    %3794 = vmatprep.subr.bf16.mxu0 0
    %3795 = vmatpush1.bf16.msra.mxu0 0
    %3796 = vmatprep.subr.bf16.mxu0 0
    %3797 = vmatpush1.bf16.msra.mxu0 0
    %3798 = vmatprep.subr.bf16.mxu0 0
    %3799 = vmatpush1.bf16.msra.mxu0 0
    %3800 = vmatprep.subr.bf16.mxu0 0
    %3801 = vmatpush1.bf16.msra.mxu0 0
    %3802 = vmatprep.subr.bf16.mxu0 0
    %3803 = vmatpush1.bf16.msra.mxu0 0
    %3804 = vmatprep.subr.bf16.mxu0 0
    %3805 = vmatpush1.bf16.msra.mxu0 0
    %3806 = vmatprep.subr.bf16.mxu0 0
    %3807 = vmatpush1.bf16.msra.mxu0 0
    %3808 = vmatprep.subr.bf16.mxu0 0
    %3809 = vmatpush1.bf16.msra.mxu0 0
    %3810 = vmatprep.subr.bf16.mxu0 0
    %3811 = vmatpush1.bf16.msra.mxu0 0
    %3812 = vmatprep.subr.bf16.mxu0 0
    %3813 = vmatpush1.bf16.msra.mxu0 0
    %3814 = vmatprep.mubr.bf16.mxu0 0
    %3815 = vmatmul.mubr.bf16.gmra.mrb[0].mxu0 %v3777
    %v3816 = vpop.f32.mrb[0].mxu0
    %v3817 = vadd.f32 0.0, %v3816
    %v3818 = vpop.f32.mrb[0].mxu0
    %v3819 = vpop.f32.mrb[0].mxu0
    %v3820 = vpop.f32.mrb[0].mxu0
    %3821 = vdwg.mxu0
    %v3823 = vsel %vm3130, %v3113, 0
    %v3826 = vsel %vm3134, %v1141, 0
    %3828 = vmatprep.subr.bf16.mxu0 0
    %3829 = vmatpush1.bf16.msra.mxu0 %v3826
    %3830 = vmatprep.subr.bf16.mxu0 0
    %3831 = vmatpush1.bf16.msra.mxu0 0
    %3832 = vmatprep.subr.bf16.mxu0 0
    %3833 = vmatpush1.bf16.msra.mxu0 0
    %3834 = vmatprep.subr.bf16.mxu0 0
    %3835 = vmatpush1.bf16.msra.mxu0 0
    %3836 = vmatprep.subr.bf16.mxu0 0
    %3837 = vmatpush1.bf16.msra.mxu0 0
    %3838 = vmatprep.subr.bf16.mxu0 0
    %3839 = vmatpush1.bf16.msra.mxu0 0
    %3840 = vmatprep.subr.bf16.mxu0 0
    %3841 = vmatpush1.bf16.msra.mxu0 0
    %3842 = vmatprep.subr.bf16.mxu0 0
    %3843 = vmatpush1.bf16.msra.mxu0 0
    %3844 = vmatprep.subr.bf16.mxu0 0
    %3845 = vmatpush1.bf16.msra.mxu0 0
    %3846 = vmatprep.subr.bf16.mxu0 0
    %3847 = vmatpush1.bf16.msra.mxu0 0
    %3848 = vmatprep.subr.bf16.mxu0 0
    %3849 = vmatpush1.bf16.msra.mxu0 0
    %3850 = vmatprep.subr.bf16.mxu0 0
    %3851 = vmatpush1.bf16.msra.mxu0 0
    %3852 = vmatprep.subr.bf16.mxu0 0
    %3853 = vmatpush1.bf16.msra.mxu0 0
    %3854 = vmatprep.subr.bf16.mxu0 0
    %3855 = vmatpush1.bf16.msra.mxu0 0
    %3856 = vmatprep.subr.bf16.mxu0 0
    %3857 = vmatpush1.bf16.msra.mxu0 0
    %3858 = vmatprep.subr.bf16.mxu0 0
    %3859 = vmatpush1.bf16.msra.mxu0 0
    %3860 = vmatprep.mubr.bf16.mxu0 0
    %3861 = vmatmul.mubr.bf16.gmra.mrb[0].mxu0 %v3823
    %v3862 = vpop.f32.mrb[0].mxu0
    %v3863 = vadd.f32 0.0, %v3862
    %v3864 = vpop.f32.mrb[0].mxu0
    %v3865 = vpop.f32.mrb[0].mxu0
    %v3866 = vpop.f32.mrb[0].mxu0
    %3867 = vdwg.mxu0
    %v3869 = vsel %vm3130, %v3114, 0
    %v3872 = vsel %vm3134, %v1165, 0
    %3874 = vmatprep.subr.bf16.mxu0 0
    %3875 = vmatpush1.bf16.msra.mxu0 %v3872
    %3876 = vmatprep.subr.bf16.mxu0 0
    %3877 = vmatpush1.bf16.msra.mxu0 0
    %3878 = vmatprep.subr.bf16.mxu0 0
    %3879 = vmatpush1.bf16.msra.mxu0 0
    %3880 = vmatprep.subr.bf16.mxu0 0
    %3881 = vmatpush1.bf16.msra.mxu0 0
    %3882 = vmatprep.subr.bf16.mxu0 0
    %3883 = vmatpush1.bf16.msra.mxu0 0
    %3884 = vmatprep.subr.bf16.mxu0 0
    %3885 = vmatpush1.bf16.msra.mxu0 0
    %3886 = vmatprep.subr.bf16.mxu0 0
    %3887 = vmatpush1.bf16.msra.mxu0 0
    %3888 = vmatprep.subr.bf16.mxu0 0
    %3889 = vmatpush1.bf16.msra.mxu0 0
    %3890 = vmatprep.subr.bf16.mxu0 0
    %3891 = vmatpush1.bf16.msra.mxu0 0
    %3892 = vmatprep.subr.bf16.mxu0 0
    %3893 = vmatpush1.bf16.msra.mxu0 0
    %3894 = vmatprep.subr.bf16.mxu0 0
    %3895 = vmatpush1.bf16.msra.mxu0 0
    %3896 = vmatprep.subr.bf16.mxu0 0
    %3897 = vmatpush1.bf16.msra.mxu0 0
    %3898 = vmatprep.subr.bf16.mxu0 0
    %3899 = vmatpush1.bf16.msra.mxu0 0
    %3900 = vmatprep.subr.bf16.mxu0 0
    %3901 = vmatpush1.bf16.msra.mxu0 0
    %3902 = vmatprep.subr.bf16.mxu0 0
    %3903 = vmatpush1.bf16.msra.mxu0 0
    %3904 = vmatprep.subr.bf16.mxu0 0
    %3905 = vmatpush1.bf16.msra.mxu0 0
    %3906 = vmatprep.mubr.bf16.mxu0 0
    %3907 = vmatmul.mubr.bf16.gmra.mrb[0].mxu0 %v3869
    %v3908 = vpop.f32.mrb[0].mxu0
    %v3909 = vadd.f32 0.0, %v3908
    %v3910 = vpop.f32.mrb[0].mxu0
    %v3911 = vpop.f32.mrb[0].mxu0
    %v3912 = vpop.f32.mrb[0].mxu0
    %3913 = vdwg.mxu0
    %v3915 = vsel %vm3130, %v3115, 0
    %v3918 = vsel %vm3134, %v1179, 0
    %3920 = vmatprep.subr.bf16.mxu0 0
    %3921 = vmatpush1.bf16.msra.mxu0 %v3918
    %3922 = vmatprep.subr.bf16.mxu0 0
    %3923 = vmatpush1.bf16.msra.mxu0 0
    %3924 = vmatprep.subr.bf16.mxu0 0
    %3925 = vmatpush1.bf16.msra.mxu0 0
    %3926 = vmatprep.subr.bf16.mxu0 0
    %3927 = vmatpush1.bf16.msra.mxu0 0
    %3928 = vmatprep.subr.bf16.mxu0 0
    %3929 = vmatpush1.bf16.msra.mxu0 0
    %3930 = vmatprep.subr.bf16.mxu0 0
    %3931 = vmatpush1.bf16.msra.mxu0 0
    %3932 = vmatprep.subr.bf16.mxu0 0
    %3933 = vmatpush1.bf16.msra.mxu0 0
    %3934 = vmatprep.subr.bf16.mxu0 0
    %3935 = vmatpush1.bf16.msra.mxu0 0
    %3936 = vmatprep.subr.bf16.mxu0 0
    %3937 = vmatpush1.bf16.msra.mxu0 0
    %3938 = vmatprep.subr.bf16.mxu0 0
    %3939 = vmatpush1.bf16.msra.mxu0 0
    %3940 = vmatprep.subr.bf16.mxu0 0
    %3941 = vmatpush1.bf16.msra.mxu0 0
    %3942 = vmatprep.subr.bf16.mxu0 0
    %3943 = vmatpush1.bf16.msra.mxu0 0
    %3944 = vmatprep.subr.bf16.mxu0 0
    %3945 = vmatpush1.bf16.msra.mxu0 0
    %3946 = vmatprep.subr.bf16.mxu0 0
    %3947 = vmatpush1.bf16.msra.mxu0 0
    %3948 = vmatprep.subr.bf16.mxu0 0
    %3949 = vmatpush1.bf16.msra.mxu0 0
    %3950 = vmatprep.subr.bf16.mxu0 0
    %3951 = vmatpush1.bf16.msra.mxu0 0
    %3952 = vmatprep.mubr.bf16.mxu0 0
    %3953 = vmatmul.mubr.bf16.gmra.mrb[0].mxu0 %v3915
    %v3954 = vpop.f32.mrb[0].mxu0
    %v3955 = vadd.f32 0.0, %v3954
    %v3956 = vpop.f32.mrb[0].mxu0
    %v3957 = vpop.f32.mrb[0].mxu0
    %v3958 = vpop.f32.mrb[0].mxu0
    %3959 = vdwg.mxu0
    %v3961 = vsel %vm3130, %v3116, 0
    %v3964 = vsel %vm3134, %v1187, 0
    %3966 = vmatprep.subr.bf16.mxu0 0
    %3967 = vmatpush1.bf16.msra.mxu0 %v3964
    %3968 = vmatprep.subr.bf16.mxu0 0
    %3969 = vmatpush1.bf16.msra.mxu0 0
    %3970 = vmatprep.subr.bf16.mxu0 0
    %3971 = vmatpush1.bf16.msra.mxu0 0
    %3972 = vmatprep.subr.bf16.mxu0 0
    %3973 = vmatpush1.bf16.msra.mxu0 0
    %3974 = vmatprep.subr.bf16.mxu0 0
    %3975 = vmatpush1.bf16.msra.mxu0 0
    %3976 = vmatprep.subr.bf16.mxu0 0
    %3977 = vmatpush1.bf16.msra.mxu0 0
    %3978 = vmatprep.subr.bf16.mxu0 0
    %3979 = vmatpush1.bf16.msra.mxu0 0
    %3980 = vmatprep.subr.bf16.mxu0 0
    %3981 = vmatpush1.bf16.msra.mxu0 0
    %3982 = vmatprep.subr.bf16.mxu0 0
    %3983 = vmatpush1.bf16.msra.mxu0 0
    %3984 = vmatprep.subr.bf16.mxu0 0
    %3985 = vmatpush1.bf16.msra.mxu0 0
    %3986 = vmatprep.subr.bf16.mxu0 0
    %3987 = vmatpush1.bf16.msra.mxu0 0
    %3988 = vmatprep.subr.bf16.mxu0 0
    %3989 = vmatpush1.bf16.msra.mxu0 0
    %3990 = vmatprep.subr.bf16.mxu0 0
    %3991 = vmatpush1.bf16.msra.mxu0 0
    %3992 = vmatprep.subr.bf16.mxu0 0
    %3993 = vmatpush1.bf16.msra.mxu0 0
    %3994 = vmatprep.subr.bf16.mxu0 0
    %3995 = vmatpush1.bf16.msra.mxu0 0
    %3996 = vmatprep.subr.bf16.mxu0 0
    %3997 = vmatpush1.bf16.msra.mxu0 0
    %3998 = vmatprep.mubr.bf16.mxu0 0
    %3999 = vmatmul.mubr.bf16.gmra.mrb[0].mxu0 %v3961
    %v4000 = vpop.f32.mrb[0].mxu0
    %v4001 = vadd.f32 0.0, %v4000
    %v4002 = vpop.f32.mrb[0].mxu0
    %v4003 = vpop.f32.mrb[0].mxu0
    %v4004 = vpop.f32.mrb[0].mxu0
    %4005 = vdwg.mxu0
    %v4007 = vsel %vm3130, %v3117, 0
    %v4010 = vsel %vm3134, %v1189, 0
    %4012 = vmatprep.subr.bf16.mxu0 0
    %4013 = vmatpush1.bf16.msra.mxu0 %v4010
    %4014 = vmatprep.subr.bf16.mxu0 0
    %4015 = vmatpush1.bf16.msra.mxu0 0
    %4016 = vmatprep.subr.bf16.mxu0 0
    %4017 = vmatpush1.bf16.msra.mxu0 0
    %4018 = vmatprep.subr.bf16.mxu0 0
    %4019 = vmatpush1.bf16.msra.mxu0 0
    %4020 = vmatprep.subr.bf16.mxu0 0
    %4021 = vmatpush1.bf16.msra.mxu0 0
    %4022 = vmatprep.subr.bf16.mxu0 0
    %4023 = vmatpush1.bf16.msra.mxu0 0
    %4024 = vmatprep.subr.bf16.mxu0 0
    %4025 = vmatpush1.bf16.msra.mxu0 0
    %4026 = vmatprep.subr.bf16.mxu0 0
    %4027 = vmatpush1.bf16.msra.mxu0 0
    %4028 = vmatprep.subr.bf16.mxu0 0
    %4029 = vmatpush1.bf16.msra.mxu0 0
    %4030 = vmatprep.subr.bf16.mxu0 0
    %4031 = vmatpush1.bf16.msra.mxu0 0
    %4032 = vmatprep.subr.bf16.mxu0 0
    %4033 = vmatpush1.bf16.msra.mxu0 0
    %4034 = vmatprep.subr.bf16.mxu0 0
    %4035 = vmatpush1.bf16.msra.mxu0 0
    %4036 = vmatprep.subr.bf16.mxu0 0
    %4037 = vmatpush1.bf16.msra.mxu0 0
    %4038 = vmatprep.subr.bf16.mxu0 0
    %4039 = vmatpush1.bf16.msra.mxu0 0
    %4040 = vmatprep.subr.bf16.mxu0 0
    %4041 = vmatpush1.bf16.msra.mxu0 0
    %4042 = vmatprep.subr.bf16.mxu0 0
    %4043 = vmatpush1.bf16.msra.mxu0 0
    %4044 = vmatprep.mubr.bf16.mxu0 0
    %4045 = vmatmul.mubr.bf16.gmra.mrb[0].mxu0 %v4007
    %v4046 = vpop.f32.mrb[0].mxu0
    %v4047 = vadd.f32 0.0, %v4046
    %v4048 = vpop.f32.mrb[0].mxu0
    %v4049 = vpop.f32.mrb[0].mxu0
    %v4050 = vpop.f32.mrb[0].mxu0
    %4051 = vdwg.mxu0
    %v4053 = vsel %vm3130, %v3118, 0
    %v4056 = vsel %vm3134, %v1172, 0
    %4058 = vmatprep.subr.bf16.mxu0 0
    %4059 = vmatpush1.bf16.msra.mxu0 %v4056
    %4060 = vmatprep.subr.bf16.mxu0 0
    %4061 = vmatpush1.bf16.msra.mxu0 0
    %4062 = vmatprep.subr.bf16.mxu0 0
    %4063 = vmatpush1.bf16.msra.mxu0 0
    %4064 = vmatprep.subr.bf16.mxu0 0
    %4065 = vmatpush1.bf16.msra.mxu0 0
    %4066 = vmatprep.subr.bf16.mxu0 0
    %4067 = vmatpush1.bf16.msra.mxu0 0
    %4068 = vmatprep.subr.bf16.mxu0 0
    %4069 = vmatpush1.bf16.msra.mxu0 0
    %4070 = vmatprep.subr.bf16.mxu0 0
    %4071 = vmatpush1.bf16.msra.mxu0 0
    %4072 = vmatprep.subr.bf16.mxu0 0
    %4073 = vmatpush1.bf16.msra.mxu0 0
    %4074 = vmatprep.subr.bf16.mxu0 0
    %4075 = vmatpush1.bf16.msra.mxu0 0
    %4076 = vmatprep.subr.bf16.mxu0 0
    %4077 = vmatpush1.bf16.msra.mxu0 0
    %4078 = vmatprep.subr.bf16.mxu0 0
    %4079 = vmatpush1.bf16.msra.mxu0 0
    %4080 = vmatprep.subr.bf16.mxu0 0
    %4081 = vmatpush1.bf16.msra.mxu0 0
    %4082 = vmatprep.subr.bf16.mxu0 0
    %4083 = vmatpush1.bf16.msra.mxu0 0
    %4084 = vmatprep.subr.bf16.mxu0 0
    %4085 = vmatpush1.bf16.msra.mxu0 0
    %4086 = vmatprep.subr.bf16.mxu0 0
    %4087 = vmatpush1.bf16.msra.mxu0 0
    %4088 = vmatprep.subr.bf16.mxu0 0
    %4089 = vmatpush1.bf16.msra.mxu0 0
    %4090 = vmatprep.mubr.bf16.mxu0 0
    %4091 = vmatmul.mubr.bf16.gmra.mrb[0].mxu0 %v4053
    %v4092 = vpop.f32.mrb[0].mxu0
    %v4093 = vadd.f32 0.0, %v4092
    %v4094 = vpop.f32.mrb[0].mxu0
    %v4095 = vpop.f32.mrb[0].mxu0
    %v4096 = vpop.f32.mrb[0].mxu0
    %4097 = vdwg.mxu0
    %v4099 = vsel %vm3130, %v3119, 0
    %v4102 = vsel %vm3134, %v1186, 0
    %4104 = vmatprep.subr.bf16.mxu0 0
    %4105 = vmatpush1.bf16.msra.mxu0 %v4102
    %4106 = vmatprep.subr.bf16.mxu0 0
    %4107 = vmatpush1.bf16.msra.mxu0 0
    %4108 = vmatprep.subr.bf16.mxu0 0
    %4109 = vmatpush1.bf16.msra.mxu0 0
    %4110 = vmatprep.subr.bf16.mxu0 0
    %4111 = vmatpush1.bf16.msra.mxu0 0
    %4112 = vmatprep.subr.bf16.mxu0 0
    %4113 = vmatpush1.bf16.msra.mxu0 0
    %4114 = vmatprep.subr.bf16.mxu0 0
    %4115 = vmatpush1.bf16.msra.mxu0 0
    %4116 = vmatprep.subr.bf16.mxu0 0
    %4117 = vmatpush1.bf16.msra.mxu0 0
    %4118 = vmatprep.subr.bf16.mxu0 0
    %4119 = vmatpush1.bf16.msra.mxu0 0
    %4120 = vmatprep.subr.bf16.mxu0 0
    %4121 = vmatpush1.bf16.msra.mxu0 0
    %4122 = vmatprep.subr.bf16.mxu0 0
    %4123 = vmatpush1.bf16.msra.mxu0 0
    %4124 = vmatprep.subr.bf16.mxu0 0
    %4125 = vmatpush1.bf16.msra.mxu0 0
    %4126 = vmatprep.subr.bf16.mxu0 0
    %4127 = vmatpush1.bf16.msra.mxu0 0
    %4128 = vmatprep.subr.bf16.mxu0 0
    %4129 = vmatpush1.bf16.msra.mxu0 0
    %4130 = vmatprep.subr.bf16.mxu0 0
    %4131 = vmatpush1.bf16.msra.mxu0 0
    %4132 = vmatprep.subr.bf16.mxu0 0
    %4133 = vmatpush1.bf16.msra.mxu0 0
    %4134 = vmatprep.subr.bf16.mxu0 0
    %4135 = vmatpush1.bf16.msra.mxu0 0
    %4136 = vmatprep.mubr.bf16.mxu0 0
    %4137 = vmatmul.mubr.bf16.gmra.mrb[0].mxu0 %v4099
    %v4138 = vpop.f32.mrb[0].mxu0
    %v4139 = vadd.f32 0.0, %v4138
    %v4140 = vpop.f32.mrb[0].mxu0
    %v4141 = vpop.f32.mrb[0].mxu0
    %v4142 = vpop.f32.mrb[0].mxu0
    %4143 = vdwg.mxu0
    %v4145 = vsel %vm3130, %v3120, 0
    %v4148 = vsel %vm3134, %v1188, 0
    %4150 = vmatprep.subr.bf16.mxu0 0
    %4151 = vmatpush1.bf16.msra.mxu0 %v4148
    %4152 = vmatprep.subr.bf16.mxu0 0
    %4153 = vmatpush1.bf16.msra.mxu0 0
    %4154 = vmatprep.subr.bf16.mxu0 0
    %4155 = vmatpush1.bf16.msra.mxu0 0
    %4156 = vmatprep.subr.bf16.mxu0 0
    %4157 = vmatpush1.bf16.msra.mxu0 0
    %4158 = vmatprep.subr.bf16.mxu0 0
    %4159 = vmatpush1.bf16.msra.mxu0 0
    %4160 = vmatprep.subr.bf16.mxu0 0
    %4161 = vmatpush1.bf16.msra.mxu0 0
    %4162 = vmatprep.subr.bf16.mxu0 0
    %4163 = vmatpush1.bf16.msra.mxu0 0
    %4164 = vmatprep.subr.bf16.mxu0 0
    %4165 = vmatpush1.bf16.msra.mxu0 0
    %4166 = vmatprep.subr.bf16.mxu0 0
    %4167 = vmatpush1.bf16.msra.mxu0 0
    %4168 = vmatprep.subr.bf16.mxu0 0
    %4169 = vmatpush1.bf16.msra.mxu0 0
    %4170 = vmatprep.subr.bf16.mxu0 0
    %4171 = vmatpush1.bf16.msra.mxu0 0
    %4172 = vmatprep.subr.bf16.mxu0 0
    %4173 = vmatpush1.bf16.msra.mxu0 0
    %4174 = vmatprep.subr.bf16.mxu0 0
    %4175 = vmatpush1.bf16.msra.mxu0 0
    %4176 = vmatprep.subr.bf16.mxu0 0
    %4177 = vmatpush1.bf16.msra.mxu0 0
    %4178 = vmatprep.subr.bf16.mxu0 0
    %4179 = vmatpush1.bf16.msra.mxu0 0
    %4180 = vmatprep.subr.bf16.mxu0 0
    %4181 = vmatpush1.bf16.msra.mxu0 0
    %4182 = vmatprep.mubr.bf16.mxu0 0
    %4183 = vmatmul.mubr.bf16.gmra.mrb[0].mxu0 %v4145
    %v4184 = vpop.f32.mrb[0].mxu0
    %v4185 = vadd.f32 0.0, %v4184
    %v4186 = vpop.f32.mrb[0].mxu0
    %v4187 = vpop.f32.mrb[0].mxu0
    %v4188 = vpop.f32.mrb[0].mxu0
    %4189 = vdwg.mxu0
    %v4191 = vsel %vm3130, %v3121, 0
    %v4194 = vsel %vm3134, %v1190, 0
    %4196 = vmatprep.subr.bf16.mxu0 0
    %4197 = vmatpush1.bf16.msra.mxu0 %v4194
    %4198 = vmatprep.subr.bf16.mxu0 0
    %4199 = vmatpush1.bf16.msra.mxu0 0
    %4200 = vmatprep.subr.bf16.mxu0 0
    %4201 = vmatpush1.bf16.msra.mxu0 0
    %4202 = vmatprep.subr.bf16.mxu0 0
    %4203 = vmatpush1.bf16.msra.mxu0 0
    %4204 = vmatprep.subr.bf16.mxu0 0
    %4205 = vmatpush1.bf16.msra.mxu0 0
    %4206 = vmatprep.subr.bf16.mxu0 0
    %4207 = vmatpush1.bf16.msra.mxu0 0
    %4208 = vmatprep.subr.bf16.mxu0 0
    %4209 = vmatpush1.bf16.msra.mxu0 0
    %4210 = vmatprep.subr.bf16.mxu0 0
    %4211 = vmatpush1.bf16.msra.mxu0 0
    %4212 = vmatprep.subr.bf16.mxu0 0
    %4213 = vmatpush1.bf16.msra.mxu0 0
    %4214 = vmatprep.subr.bf16.mxu0 0
    %4215 = vmatpush1.bf16.msra.mxu0 0
    %4216 = vmatprep.subr.bf16.mxu0 0
    %4217 = vmatpush1.bf16.msra.mxu0 0
    %4218 = vmatprep.subr.bf16.mxu0 0
    %4219 = vmatpush1.bf16.msra.mxu0 0
    %4220 = vmatprep.subr.bf16.mxu0 0
    %4221 = vmatpush1.bf16.msra.mxu0 0
    %4222 = vmatprep.subr.bf16.mxu0 0
    %4223 = vmatpush1.bf16.msra.mxu0 0
    %4224 = vmatprep.subr.bf16.mxu0 0
    %4225 = vmatpush1.bf16.msra.mxu0 0
    %4226 = vmatprep.subr.bf16.mxu0 0
    %4227 = vmatpush1.bf16.msra.mxu0 0
    %4228 = vmatprep.mubr.bf16.mxu0 0
    %4229 = vmatmul.mubr.bf16.gmra.mrb[0].mxu0 %v4191
    %v4230 = vpop.f32.mrb[0].mxu0
    %v4231 = vadd.f32 0.0, %v4230
    %v4232 = vpop.f32.mrb[0].mxu0
    %v4233 = vpop.f32.mrb[0].mxu0
    %v4234 = vpop.f32.mrb[0].mxu0
    %4235 = vdwg.mxu0
    %v4237 = vsel %vm3130, %v3122, 0
    %v4240 = vsel %vm3134, %v1214, 0
    %4242 = vmatprep.subr.bf16.mxu0 0
    %4243 = vmatpush1.bf16.msra.mxu0 %v4240
    %4244 = vmatprep.subr.bf16.mxu0 0
    %4245 = vmatpush1.bf16.msra.mxu0 0
    %4246 = vmatprep.subr.bf16.mxu0 0
    %4247 = vmatpush1.bf16.msra.mxu0 0
    %4248 = vmatprep.subr.bf16.mxu0 0
    %4249 = vmatpush1.bf16.msra.mxu0 0
    %4250 = vmatprep.subr.bf16.mxu0 0
    %4251 = vmatpush1.bf16.msra.mxu0 0
    %4252 = vmatprep.subr.bf16.mxu0 0
    %4253 = vmatpush1.bf16.msra.mxu0 0
    %4254 = vmatprep.subr.bf16.mxu0 0
    %4255 = vmatpush1.bf16.msra.mxu0 0
    %4256 = vmatprep.subr.bf16.mxu0 0
    %4257 = vmatpush1.bf16.msra.mxu0 0
    %4258 = vmatprep.subr.bf16.mxu0 0
    %4259 = vmatpush1.bf16.msra.mxu0 0
    %4260 = vmatprep.subr.bf16.mxu0 0
    %4261 = vmatpush1.bf16.msra.mxu0 0
    %4262 = vmatprep.subr.bf16.mxu0 0
    %4263 = vmatpush1.bf16.msra.mxu0 0
    %4264 = vmatprep.subr.bf16.mxu0 0
    %4265 = vmatpush1.bf16.msra.mxu0 0
    %4266 = vmatprep.subr.bf16.mxu0 0
    %4267 = vmatpush1.bf16.msra.mxu0 0
    %4268 = vmatprep.subr.bf16.mxu0 0
    %4269 = vmatpush1.bf16.msra.mxu0 0
    %4270 = vmatprep.subr.bf16.mxu0 0
    %4271 = vmatpush1.bf16.msra.mxu0 0
    %4272 = vmatprep.subr.bf16.mxu0 0
    %4273 = vmatpush1.bf16.msra.mxu0 0
    %4274 = vmatprep.mubr.bf16.mxu0 0
    %4275 = vmatmul.mubr.bf16.gmra.mrb[0].mxu0 %v4237
    %v4276 = vpop.f32.mrb[0].mxu0
    %v4277 = vadd.f32 0.0, %v4276
    %v4278 = vpop.f32.mrb[0].mxu0
    %v4279 = vpop.f32.mrb[0].mxu0
    %v4280 = vpop.f32.mrb[0].mxu0
    %4281 = vdwg.mxu0
    %v4283 = vsel %vm3130, %v3123, 0
    %v4286 = vsel %vm3134, %v1228, 0
    %4288 = vmatprep.subr.bf16.mxu0 0
    %4289 = vmatpush1.bf16.msra.mxu0 %v4286
    %4290 = vmatprep.subr.bf16.mxu0 0
    %4291 = vmatpush1.bf16.msra.mxu0 0
    %4292 = vmatprep.subr.bf16.mxu0 0
    %4293 = vmatpush1.bf16.msra.mxu0 0
    %4294 = vmatprep.subr.bf16.mxu0 0
    %4295 = vmatpush1.bf16.msra.mxu0 0
    %4296 = vmatprep.subr.bf16.mxu0 0
    %4297 = vmatpush1.bf16.msra.mxu0 0
    %4298 = vmatprep.subr.bf16.mxu0 0
    %4299 = vmatpush1.bf16.msra.mxu0 0
    %4300 = vmatprep.subr.bf16.mxu0 0
    %4301 = vmatpush1.bf16.msra.mxu0 0
    %4302 = vmatprep.subr.bf16.mxu0 0
    %4303 = vmatpush1.bf16.msra.mxu0 0
    %4304 = vmatprep.subr.bf16.mxu0 0
    %4305 = vmatpush1.bf16.msra.mxu0 0
    %4306 = vmatprep.subr.bf16.mxu0 0
    %4307 = vmatpush1.bf16.msra.mxu0 0
    %4308 = vmatprep.subr.bf16.mxu0 0
    %4309 = vmatpush1.bf16.msra.mxu0 0
    %4310 = vmatprep.subr.bf16.mxu0 0
    %4311 = vmatpush1.bf16.msra.mxu0 0
    %4312 = vmatprep.subr.bf16.mxu0 0
    %4313 = vmatpush1.bf16.msra.mxu0 0
    %4314 = vmatprep.subr.bf16.mxu0 0
    %4315 = vmatpush1.bf16.msra.mxu0 0
    %4316 = vmatprep.subr.bf16.mxu0 0
    %4317 = vmatpush1.bf16.msra.mxu0 0
    %4318 = vmatprep.subr.bf16.mxu0 0
    %4319 = vmatpush1.bf16.msra.mxu0 0
    %4320 = vmatprep.mubr.bf16.mxu0 0
    %4321 = vmatmul.mubr.bf16.gmra.mrb[0].mxu0 %v4283
    %v4322 = vpop.f32.mrb[0].mxu0
    %v4323 = vadd.f32 0.0, %v4322
    %v4324 = vpop.f32.mrb[0].mxu0
    %v4325 = vpop.f32.mrb[0].mxu0
    %v4326 = vpop.f32.mrb[0].mxu0
    %4327 = vdwg.mxu0
    %v4329 = vsel %vm3130, %v3124, 0
    %v4332 = vsel %vm3134, %v1236, 0
    %4334 = vmatprep.subr.bf16.mxu0 0
    %4335 = vmatpush1.bf16.msra.mxu0 %v4332
    %4336 = vmatprep.subr.bf16.mxu0 0
    %4337 = vmatpush1.bf16.msra.mxu0 0
    %4338 = vmatprep.subr.bf16.mxu0 0
    %4339 = vmatpush1.bf16.msra.mxu0 0
    %4340 = vmatprep.subr.bf16.mxu0 0
    %4341 = vmatpush1.bf16.msra.mxu0 0
    %4342 = vmatprep.subr.bf16.mxu0 0
    %4343 = vmatpush1.bf16.msra.mxu0 0
    %4344 = vmatprep.subr.bf16.mxu0 0
    %4345 = vmatpush1.bf16.msra.mxu0 0
    %4346 = vmatprep.subr.bf16.mxu0 0
    %4347 = vmatpush1.bf16.msra.mxu0 0
    %4348 = vmatprep.subr.bf16.mxu0 0
    %4349 = vmatpush1.bf16.msra.mxu0 0
    %4350 = vmatprep.subr.bf16.mxu0 0
    %4351 = vmatpush1.bf16.msra.mxu0 0
    %4352 = vmatprep.subr.bf16.mxu0 0
    %4353 = vmatpush1.bf16.msra.mxu0 0
    %4354 = vmatprep.subr.bf16.mxu0 0
    %4355 = vmatpush1.bf16.msra.mxu0 0
    %4356 = vmatprep.subr.bf16.mxu0 0
    %4357 = vmatpush1.bf16.msra.mxu0 0
    %4358 = vmatprep.subr.bf16.mxu0 0
    %4359 = vmatpush1.bf16.msra.mxu0 0
    %4360 = vmatprep.subr.bf16.mxu0 0
    %4361 = vmatpush1.bf16.msra.mxu0 0
    %4362 = vmatprep.subr.bf16.mxu0 0
    %4363 = vmatpush1.bf16.msra.mxu0 0
    %4364 = vmatprep.subr.bf16.mxu0 0
    %4365 = vmatpush1.bf16.msra.mxu0 0
    %4366 = vmatprep.mubr.bf16.mxu0 0
    %4367 = vmatmul.mubr.bf16.gmra.mrb[0].mxu0 %v4329
    %v4368 = vpop.f32.mrb[0].mxu0
    %v4369 = vadd.f32 0.0, %v4368
    %v4370 = vpop.f32.mrb[0].mxu0
    %v4371 = vpop.f32.mrb[0].mxu0
    %v4372 = vpop.f32.mrb[0].mxu0
    %4373 = vdwg.mxu0
    %v4375 = vsel %vm3130, %v3125, 0
    %v4378 = vsel %vm3134, %v1238, 0
    %4380 = vmatprep.subr.bf16.mxu0 0
    %4381 = vmatpush1.bf16.msra.mxu0 %v4378
    %4382 = vmatprep.subr.bf16.mxu0 0
    %4383 = vmatpush1.bf16.msra.mxu0 0
    %4384 = vmatprep.subr.bf16.mxu0 0
    %4385 = vmatpush1.bf16.msra.mxu0 0
    %4386 = vmatprep.subr.bf16.mxu0 0
    %4387 = vmatpush1.bf16.msra.mxu0 0
    %4388 = vmatprep.subr.bf16.mxu0 0
    %4389 = vmatpush1.bf16.msra.mxu0 0
    %4390 = vmatprep.subr.bf16.mxu0 0
    %4391 = vmatpush1.bf16.msra.mxu0 0
    %4392 = vmatprep.subr.bf16.mxu0 0
    %4393 = vmatpush1.bf16.msra.mxu0 0
    %4394 = vmatprep.subr.bf16.mxu0 0
    %4395 = vmatpush1.bf16.msra.mxu0 0
    %4396 = vmatprep.subr.bf16.mxu0 0
    %4397 = vmatpush1.bf16.msra.mxu0 0
    %4398 = vmatprep.subr.bf16.mxu0 0
    %4399 = vmatpush1.bf16.msra.mxu0 0
    %4400 = vmatprep.subr.bf16.mxu0 0
    %4401 = vmatpush1.bf16.msra.mxu0 0
    %4402 = vmatprep.subr.bf16.mxu0 0
    %4403 = vmatpush1.bf16.msra.mxu0 0
    %4404 = vmatprep.subr.bf16.mxu0 0
    %4405 = vmatpush1.bf16.msra.mxu0 0
    %4406 = vmatprep.subr.bf16.mxu0 0
    %4407 = vmatpush1.bf16.msra.mxu0 0
    %4408 = vmatprep.subr.bf16.mxu0 0
    %4409 = vmatpush1.bf16.msra.mxu0 0
    %4410 = vmatprep.subr.bf16.mxu0 0
    %4411 = vmatpush1.bf16.msra.mxu0 0
    %4412 = vmatprep.mubr.bf16.mxu0 0
    %4413 = vmatmul.mubr.bf16.gmra.mrb[0].mxu0 %v4375
    %v4414 = vpop.f32.mrb[0].mxu0
    %v4415 = vadd.f32 0.0, %v4414
    %v4416 = vpop.f32.mrb[0].mxu0
    %v4417 = vpop.f32.mrb[0].mxu0
    %v4418 = vpop.f32.mrb[0].mxu0
    %4419 = vdwg.mxu0
    %v4421 = vsel %vm3130, %v3126, 0
    %v4424 = vsel %vm3134, %v1221, 0
    %4426 = vmatprep.subr.bf16.mxu0 0
    %4427 = vmatpush1.bf16.msra.mxu0 %v4424
    %4428 = vmatprep.subr.bf16.mxu0 0
    %4429 = vmatpush1.bf16.msra.mxu0 0
    %4430 = vmatprep.subr.bf16.mxu0 0
    %4431 = vmatpush1.bf16.msra.mxu0 0
    %4432 = vmatprep.subr.bf16.mxu0 0
    %4433 = vmatpush1.bf16.msra.mxu0 0
    %4434 = vmatprep.subr.bf16.mxu0 0
    %4435 = vmatpush1.bf16.msra.mxu0 0
    %4436 = vmatprep.subr.bf16.mxu0 0
    %4437 = vmatpush1.bf16.msra.mxu0 0
    %4438 = vmatprep.subr.bf16.mxu0 0
    %4439 = vmatpush1.bf16.msra.mxu0 0
    %4440 = vmatprep.subr.bf16.mxu0 0
    %4441 = vmatpush1.bf16.msra.mxu0 0
    %4442 = vmatprep.subr.bf16.mxu0 0
    %4443 = vmatpush1.bf16.msra.mxu0 0
    %4444 = vmatprep.subr.bf16.mxu0 0
    %4445 = vmatpush1.bf16.msra.mxu0 0
    %4446 = vmatprep.subr.bf16.mxu0 0
    %4447 = vmatpush1.bf16.msra.mxu0 0
    %4448 = vmatprep.subr.bf16.mxu0 0
    %4449 = vmatpush1.bf16.msra.mxu0 0
    %4450 = vmatprep.subr.bf16.mxu0 0
    %4451 = vmatpush1.bf16.msra.mxu0 0
    %4452 = vmatprep.subr.bf16.mxu0 0
    %4453 = vmatpush1.bf16.msra.mxu0 0
    %4454 = vmatprep.subr.bf16.mxu0 0
    %4455 = vmatpush1.bf16.msra.mxu0 0
    %4456 = vmatprep.subr.bf16.mxu0 0
    %4457 = vmatpush1.bf16.msra.mxu0 0
    %4458 = vmatprep.mubr.bf16.mxu0 0
    %4459 = vmatmul.mubr.bf16.gmra.mrb[0].mxu0 %v4421
    %v4460 = vpop.f32.mrb[0].mxu0
    %v4461 = vadd.f32 0.0, %v4460
    %v4462 = vpop.f32.mrb[0].mxu0
    %v4463 = vpop.f32.mrb[0].mxu0
    %v4464 = vpop.f32.mrb[0].mxu0
    %4465 = vdwg.mxu0
    %v4467 = vsel %vm3130, %v3127, 0
    %v4470 = vsel %vm3134, %v1235, 0
    %4472 = vmatprep.subr.bf16.mxu0 0
    %4473 = vmatpush1.bf16.msra.mxu0 %v4470
    %4474 = vmatprep.subr.bf16.mxu0 0
    %4475 = vmatpush1.bf16.msra.mxu0 0
    %4476 = vmatprep.subr.bf16.mxu0 0
    %4477 = vmatpush1.bf16.msra.mxu0 0
    %4478 = vmatprep.subr.bf16.mxu0 0
    %4479 = vmatpush1.bf16.msra.mxu0 0
    %4480 = vmatprep.subr.bf16.mxu0 0
    %4481 = vmatpush1.bf16.msra.mxu0 0
    %4482 = vmatprep.subr.bf16.mxu0 0
    %4483 = vmatpush1.bf16.msra.mxu0 0
    %4484 = vmatprep.subr.bf16.mxu0 0
    %4485 = vmatpush1.bf16.msra.mxu0 0
    %4486 = vmatprep.subr.bf16.mxu0 0
    %4487 = vmatpush1.bf16.msra.mxu0 0
    %4488 = vmatprep.subr.bf16.mxu0 0
    %4489 = vmatpush1.bf16.msra.mxu0 0
    %4490 = vmatprep.subr.bf16.mxu0 0
    %4491 = vmatpush1.bf16.msra.mxu0 0
    %4492 = vmatprep.subr.bf16.mxu0 0
    %4493 = vmatpush1.bf16.msra.mxu0 0
    %4494 = vmatprep.subr.bf16.mxu0 0
    %4495 = vmatpush1.bf16.msra.mxu0 0
    %4496 = vmatprep.subr.bf16.mxu0 0
    %4497 = vmatpush1.bf16.msra.mxu0 0
    %4498 = vmatprep.subr.bf16.mxu0 0
    %4499 = vmatpush1.bf16.msra.mxu0 0
    %4500 = vmatprep.subr.bf16.mxu0 0
    %4501 = vmatpush1.bf16.msra.mxu0 0
    %4502 = vmatprep.subr.bf16.mxu0 0
    %4503 = vmatpush1.bf16.msra.mxu0 0
    %4504 = vmatprep.mubr.bf16.mxu0 0
    %4505 = vmatmul.mubr.bf16.gmra.mrb[0].mxu0 %v4467
    %v4506 = vpop.f32.mrb[0].mxu0
    %v4507 = vadd.f32 0.0, %v4506
    %v4508 = vpop.f32.mrb[0].mxu0
    %v4509 = vpop.f32.mrb[0].mxu0
    %v4510 = vpop.f32.mrb[0].mxu0
    %4511 = vdwg.mxu0
    %v4513 = vsel %vm3130, %v3128, 0
    %v4516 = vsel %vm3134, %v1237, 0
    %4518 = vmatprep.subr.bf16.mxu0 0
    %4519 = vmatpush1.bf16.msra.mxu0 %v4516
    %4520 = vmatprep.subr.bf16.mxu0 0
    %4521 = vmatpush1.bf16.msra.mxu0 0
    %4522 = vmatprep.subr.bf16.mxu0 0
    %4523 = vmatpush1.bf16.msra.mxu0 0
    %4524 = vmatprep.subr.bf16.mxu0 0
    %4525 = vmatpush1.bf16.msra.mxu0 0
    %4526 = vmatprep.subr.bf16.mxu0 0
    %4527 = vmatpush1.bf16.msra.mxu0 0
    %4528 = vmatprep.subr.bf16.mxu0 0
    %4529 = vmatpush1.bf16.msra.mxu0 0
    %4530 = vmatprep.subr.bf16.mxu0 0
    %4531 = vmatpush1.bf16.msra.mxu0 0
    %4532 = vmatprep.subr.bf16.mxu0 0
    %4533 = vmatpush1.bf16.msra.mxu0 0
    %4534 = vmatprep.subr.bf16.mxu0 0
    %4535 = vmatpush1.bf16.msra.mxu0 0
    %4536 = vmatprep.subr.bf16.mxu0 0
    %4537 = vmatpush1.bf16.msra.mxu0 0
    %4538 = vmatprep.subr.bf16.mxu0 0
    %4539 = vmatpush1.bf16.msra.mxu0 0
    %4540 = vmatprep.subr.bf16.mxu0 0
    %4541 = vmatpush1.bf16.msra.mxu0 0
    %4542 = vmatprep.subr.bf16.mxu0 0
    %4543 = vmatpush1.bf16.msra.mxu0 0
    %4544 = vmatprep.subr.bf16.mxu0 0
    %4545 = vmatpush1.bf16.msra.mxu0 0
    %4546 = vmatprep.subr.bf16.mxu0 0
    %4547 = vmatpush1.bf16.msra.mxu0 0
    %4548 = vmatprep.subr.bf16.mxu0 0
    %4549 = vmatpush1.bf16.msra.mxu0 0
    %4550 = vmatprep.mubr.bf16.mxu0 0
    %4551 = vmatmul.mubr.bf16.gmra.mrb[0].mxu0 %v4513
    %v4552 = vpop.f32.mrb[0].mxu0
    %v4553 = vadd.f32 0.0, %v4552
    %v4554 = vpop.f32.mrb[0].mxu0
    %v4555 = vpop.f32.mrb[0].mxu0
    %v4556 = vpop.f32.mrb[0].mxu0
    %4557 = vdwg.mxu0
    %v4559 = vsel %vm3130, %v3129, 0
    %v4562 = vsel %vm3134, %v1239, 0
    %4564 = vmatprep.subr.bf16.mxu0 0
    %4565 = vmatpush1.bf16.msra.mxu0 %v4562
    %4566 = vmatprep.subr.bf16.mxu0 0
    %4567 = vmatpush1.bf16.msra.mxu0 0
    %4568 = vmatprep.subr.bf16.mxu0 0
    %4569 = vmatpush1.bf16.msra.mxu0 0
    %4570 = vmatprep.subr.bf16.mxu0 0
    %4571 = vmatpush1.bf16.msra.mxu0 0
    %4572 = vmatprep.subr.bf16.mxu0 0
    %4573 = vmatpush1.bf16.msra.mxu0 0
    %4574 = vmatprep.subr.bf16.mxu0 0
    %4575 = vmatpush1.bf16.msra.mxu0 0
    %4576 = vmatprep.subr.bf16.mxu0 0
    %4577 = vmatpush1.bf16.msra.mxu0 0
    %4578 = vmatprep.subr.bf16.mxu0 0
    %4579 = vmatpush1.bf16.msra.mxu0 0
    %4580 = vmatprep.subr.bf16.mxu0 0
    %4581 = vmatpush1.bf16.msra.mxu0 0
    %4582 = vmatprep.subr.bf16.mxu0 0
    %4583 = vmatpush1.bf16.msra.mxu0 0
    %4584 = vmatprep.subr.bf16.mxu0 0
    %4585 = vmatpush1.bf16.msra.mxu0 0
    %4586 = vmatprep.subr.bf16.mxu0 0
    %4587 = vmatpush1.bf16.msra.mxu0 0
    %4588 = vmatprep.subr.bf16.mxu0 0
    %4589 = vmatpush1.bf16.msra.mxu0 0
    %4590 = vmatprep.subr.bf16.mxu0 0
    %4591 = vmatpush1.bf16.msra.mxu0 0
    %4592 = vmatprep.subr.bf16.mxu0 0
    %4593 = vmatpush1.bf16.msra.mxu0 0
    %4594 = vmatprep.subr.bf16.mxu0 0
    %4595 = vmatpush1.bf16.msra.mxu0 0
    %4596 = vmatprep.mubr.bf16.mxu0 0
    %4597 = vmatmul.mubr.bf16.gmra.mrb[0].mxu0 %v4559
    %v4598 = vpop.f32.mrb[0].mxu0
    %v4599 = vadd.f32 0.0, %v4598
    %v4600 = vpop.f32.mrb[0].mxu0
    %v4601 = vpop.f32.mrb[0].mxu0
    %v4602 = vpop.f32.mrb[0].mxu0
    %4603 = vdwg.mxu0
    %v4612 = vcombine.low %v3173, %v3219
    %v4613 = vcombine.low %v3265, %v3311
    %v4615 = vunpack.c.l.s4 1983009808
    %v4616 = vunpack.c.0.s8 %v4615
    %v4617 = vlaneseq
    %v4618 = vshrl.u32 %v4617, 7
    %v4619 = vsub.s32 %v4616, %v4618
    %v4620 = vrot.slane %v4612, %v4619
    %v4622 = vunpack.c.l.s4 1983009808
    %v4623 = vunpack.c.0.s8 %v4622
    %v4624 = vlaneseq
    %v4625 = vshrl.u32 %v4624, 7
    %v4626 = vsub.s32 %v4623, %v4625
    %v4627 = vrot.slane %v4613, %v4626
    %v4628 = vcombine.low %v4620, %v4627
    %v4629 = vcombine.low %v3357, %v3403
    %v4630 = vcombine.low %v3449, %v3495
    %v4632 = vunpack.c.l.s4 1983009808
    %v4633 = vunpack.c.0.s8 %v4632
    %v4634 = vlaneseq
    %v4635 = vshrl.u32 %v4634, 7
    %v4636 = vsub.s32 %v4633, %v4635
    %v4637 = vrot.slane %v4629, %v4636
    %v4639 = vunpack.c.l.s4 1983009808
    %v4640 = vunpack.c.0.s8 %v4639
    %v4641 = vlaneseq
    %v4642 = vshrl.u32 %v4641, 7
    %v4643 = vsub.s32 %v4640, %v4642
    %v4644 = vrot.slane %v4630, %v4643
    %v4645 = vcombine.low %v4637, %v4644
    %v4648 = vpack.c.bf16 %v4645, %v4628
    %4649 = vst.msk [vmem:[#allocation3] sm:$0xff] %vm1240, %v4648
    %v4658 = vcombine.low %v3541, %v3587
    %v4659 = vcombine.low %v3633, %v3679
    %v4661 = vunpack.c.l.s4 1983009808
    %v4662 = vunpack.c.0.s8 %v4661
    %v4663 = vlaneseq
    %v4664 = vshrl.u32 %v4663, 7
    %v4665 = vsub.s32 %v4662, %v4664
    %v4666 = vrot.slane %v4658, %v4665
    %v4668 = vunpack.c.l.s4 1983009808
    %v4669 = vunpack.c.0.s8 %v4668
    %v4670 = vlaneseq
    %v4671 = vshrl.u32 %v4670, 7
    %v4672 = vsub.s32 %v4669, %v4671
    %v4673 = vrot.slane %v4659, %v4672
    %v4674 = vcombine.low %v4666, %v4673
    %v4675 = vcombine.low %v3725, %v3771
    %v4676 = vcombine.low %v3817, %v3863
    %v4678 = vunpack.c.l.s4 1983009808
    %v4679 = vunpack.c.0.s8 %v4678
    %v4680 = vlaneseq
    %v4681 = vshrl.u32 %v4680, 7
    %v4682 = vsub.s32 %v4679, %v4681
    %v4683 = vrot.slane %v4675, %v4682
    %v4685 = vunpack.c.l.s4 1983009808
    %v4686 = vunpack.c.0.s8 %v4685
    %v4687 = vlaneseq
    %v4688 = vshrl.u32 %v4687, 7
    %v4689 = vsub.s32 %v4686, %v4688
    %v4690 = vrot.slane %v4676, %v4689
    %v4691 = vcombine.low %v4683, %v4690
    %v4694 = vpack.c.bf16 %v4691, %v4674
    %4696 = vrot.lane.b32.xlu0 %v4694, 32
    %v4697 = vpop.permute.xlu0 %4696
    %vm4699 = vcmask 523520
    %4700 = vst.msk [vmem:[#allocation3] sm:$0xff] %vm4699, %v4697
    %v4709 = vcombine.low %v3909, %v3955
    %v4710 = vcombine.low %v4001, %v4047
    %v4712 = vunpack.c.l.s4 1983009808
    %v4713 = vunpack.c.0.s8 %v4712
    %v4714 = vlaneseq
    %v4715 = vshrl.u32 %v4714, 7
    %v4716 = vsub.s32 %v4713, %v4715
    %v4717 = vrot.slane %v4709, %v4716
    %v4719 = vunpack.c.l.s4 1983009808
    %v4720 = vunpack.c.0.s8 %v4719
    %v4721 = vlaneseq
    %v4722 = vshrl.u32 %v4721, 7
    %v4723 = vsub.s32 %v4720, %v4722
    %v4724 = vrot.slane %v4710, %v4723
    %v4725 = vcombine.low %v4717, %v4724
    %v4726 = vcombine.low %v4093, %v4139
    %v4727 = vcombine.low %v4185, %v4231
    %v4729 = vunpack.c.l.s4 1983009808
    %v4730 = vunpack.c.0.s8 %v4729
    %v4731 = vlaneseq
    %v4732 = vshrl.u32 %v4731, 7
    %v4733 = vsub.s32 %v4730, %v4732
    %v4734 = vrot.slane %v4726, %v4733
    %v4736 = vunpack.c.l.s4 1983009808
    %v4737 = vunpack.c.0.s8 %v4736
    %v4738 = vlaneseq
    %v4739 = vshrl.u32 %v4738, 7
    %v4740 = vsub.s32 %v4737, %v4739
    %v4741 = vrot.slane %v4727, %v4740
    %v4742 = vcombine.low %v4734, %v4741
    %v4745 = vpack.c.bf16 %v4742, %v4725
    %4747 = vrot.lane.b32.xlu0 %v4745, 64
    %v4748 = vpop.permute.xlu0 %4747
    %vm4750 = vcmask 785920
    %4751 = vst.msk [vmem:[#allocation3] sm:$0xff] %vm4750, %v4748
    %v4760 = vcombine.low %v4277, %v4323
    %v4761 = vcombine.low %v4369, %v4415
    %v4763 = vunpack.c.l.s4 1983009808
    %v4764 = vunpack.c.0.s8 %v4763
    %v4765 = vlaneseq
    %v4766 = vshrl.u32 %v4765, 7
    %v4767 = vsub.s32 %v4764, %v4766
    %v4768 = vrot.slane %v4760, %v4767
    %v4770 = vunpack.c.l.s4 1983009808
    %v4771 = vunpack.c.0.s8 %v4770
    %v4772 = vlaneseq
    %v4773 = vshrl.u32 %v4772, 7
    %v4774 = vsub.s32 %v4771, %v4773
    %v4775 = vrot.slane %v4761, %v4774
    %v4776 = vcombine.low %v4768, %v4775
    %v4777 = vcombine.low %v4461, %v4507
    %v4778 = vcombine.low %v4553, %v4599
    %v4780 = vunpack.c.l.s4 1983009808
    %v4781 = vunpack.c.0.s8 %v4780
    %v4782 = vlaneseq
    %v4783 = vshrl.u32 %v4782, 7
    %v4784 = vsub.s32 %v4781, %v4783
    %v4785 = vrot.slane %v4777, %v4784
    %v4787 = vunpack.c.l.s4 1983009808
    %v4788 = vunpack.c.0.s8 %v4787
    %v4789 = vlaneseq
    %v4790 = vshrl.u32 %v4789, 7
    %v4791 = vsub.s32 %v4788, %v4790
    %v4792 = vrot.slane %v4778, %v4791
    %v4793 = vcombine.low %v4785, %v4792
    %v4796 = vpack.c.bf16 %v4793, %v4776
    %4798 = vrot.lane.b32.xlu0 %v4796, 96
    %v4799 = vpop.permute.xlu0 %4798
    %vm4801 = vcmask 1048320
    %4802 = vst.msk [vmem:[#allocation3] sm:$0xff] %vm4801, %v4799
    %v4803 = vld [vmem:[#allocation3] sm:$0xff]
    %v4804 = vld [vmem:[#allocation10] sm:$0x1]
    %v4806 = vlaneseq
    %v4807 = vshrl.u32 %v4806, 7
    %v4808 = vsub.s32 0, %v4807
    %v4809 = vrot.slane %v4804, %v4808
    %v4827 = vunpack.c.l.b16 %v281
    %v4828 = vunpack.c.l.b16 %v282
    %v4829 = vunpack.c.l.b16 %v283
    %v4830 = vunpack.c.l.b16 %v284
    %v4831 = vunpack.c.l.b16 %v285
    %v4832 = vunpack.c.l.b16 %v286
    %v4833 = vunpack.c.l.b16 %v287
    %v4834 = vunpack.c.l.b16 %v288
    %v4835 = vunpack.c.l.b16 %v289
    %v4836 = vunpack.c.l.b16 %v290
    %v4837 = vunpack.c.l.b16 %v291
    %v4838 = vunpack.c.l.b16 %v292
    %v4839 = vunpack.c.l.b16 %v293
    %v4840 = vunpack.c.l.b16 %v294
    %v4841 = vunpack.c.l.b16 %v295
    %v4842 = vunpack.c.l.b16 %v296
    %v4843 = vpack.c.b16 %v4828, %v4827
    %v4844 = vpack.c.b16 %v4830, %v4829
    %v4845 = vpack.c.b16 %v4832, %v4831
    %v4846 = vpack.c.b16 %v4834, %v4833
    %v4847 = vpack.c.b16 %v4836, %v4835
    %v4848 = vpack.c.b16 %v4838, %v4837
    %v4849 = vpack.c.b16 %v4840, %v4839
    %v4850 = vpack.c.b16 %v4842, %v4841
    %4859 = vmatprep.subr.bf16.mxu0 0
    %4860 = vmatpush1.bf16.msra.mxu0 %v4843
    %4861 = vmatprep.subr.bf16.mxu0 0
    %4862 = vmatpush1.bf16.msra.mxu0 %v4844
    %4863 = vmatprep.subr.bf16.mxu0 0
    %4864 = vmatpush1.bf16.msra.mxu0 %v4845
    %4865 = vmatprep.subr.bf16.mxu0 0
    %4866 = vmatpush1.bf16.msra.mxu0 %v4846
    %4867 = vmatprep.subr.bf16.mxu0 0
    %4868 = vmatpush1.bf16.msra.mxu0 %v4847
    %4869 = vmatprep.subr.bf16.mxu0 0
    %4870 = vmatpush1.bf16.msra.mxu0 %v4848
    %4871 = vmatprep.subr.bf16.mxu0 0
    %4872 = vmatpush1.bf16.msra.mxu0 %v4849
    %4873 = vmatprep.subr.bf16.mxu0 0
    %4874 = vmatpush1.bf16.msra.mxu0 %v4850
    %4875 = vmatprep.subr.bf16.mxu0 0
    %4876 = vmatpush1.bf16.msra.mxu0 0
    %4877 = vmatprep.subr.bf16.mxu0 0
    %4878 = vmatpush1.bf16.msra.mxu0 0
    %4879 = vmatprep.subr.bf16.mxu0 0
    %4880 = vmatpush1.bf16.msra.mxu0 0
    %4881 = vmatprep.subr.bf16.mxu0 0
    %4882 = vmatpush1.bf16.msra.mxu0 0
    %4883 = vmatprep.subr.bf16.mxu0 0
    %4884 = vmatpush1.bf16.msra.mxu0 0
    %4885 = vmatprep.subr.bf16.mxu0 0
    %4886 = vmatpush1.bf16.msra.mxu0 0
    %4887 = vmatprep.subr.bf16.mxu0 0
    %4888 = vmatpush1.bf16.msra.mxu0 0
    %4889 = vmatprep.subr.bf16.mxu0 0
    %4890 = vmatpush1.bf16.msra.mxu0 0
    %4891 = vmatprep.mubr.bf16.mxu0 0
    %4892 = vmatmul.mubr.bf16.gmra.mrb[0].mxu0 %v4803
    %v4893 = vpop.f32.mrb[0].mxu0
    %v4894 = vadd.f32 %v4809, %v4893
    %v4895 = vpop.f32.mrb[0].mxu0
    %v4896 = vpop.f32.mrb[0].mxu0
    %v4897 = vadd.f32 %v4809, %v4896
    %v4898 = vpop.f32.mrb[0].mxu0
    %4899 = vdwg.mxu0
    %v4900 = vadd.f32 %v247, %v4894
    %v4901 = vadd.f32 %v248, %v4897
    %v4902 = vld [vmem:[#allocation18] sm:$0x1]
    %v4903 = vld [vmem:[#allocation19] sm:$0x1]
    %4904 = vadd.xlane.f32.xlu0 %v4900
    %v4905 = vpop.xlane.xlu0 %4904
    %4906 = vadd.xlane.f32.xlu0 %v4901
    %v4907 = vpop.xlane.xlu0 %4906
    %v4908 = vrcp.pop 128.0
    %v4909 = vmul.f32 %v4905, %v4908
    %v4910 = vmul.f32 %v4907, %v4908
    %v4911 = vsub.f32 %v4900, %v4909
    %v4912 = vsub.f32 %v4901, %v4910
    %v4913 = vmul.f32 %v4911, %v4911
    %v4914 = vmul.f32 %v4912, %v4912
    %4915 = vadd.xlane.f32.xlu0 %v4913
    %v4916 = vpop.xlane.xlu0 %4915
    %4917 = vadd.xlane.f32.xlu0 %v4914
    %v4918 = vpop.xlane.xlu0 %4917
    %v4919 = vmul.f32 %v4916, %v4908
    %v4920 = vmul.f32 %v4918, %v4908
    %v4921 = vadd.f32 %v4919, 1e-05
    %v4922 = vadd.f32 %v4920, 1e-05
    %v4923 = vrsqrt.pop %v4921
    %v4924 = vrsqrt.pop %v4922
    %v4925 = vmul.f32 %v4911, %v4923
    %v4926 = vmul.f32 %v4912, %v4924
    %v4928 = vlaneseq
    %v4929 = vshrl.u32 %v4928, 7
    %v4930 = vsub.s32 0, %v4929
    %v4931 = vrot.slane %v4902, %v4930
    %v4933 = vmul.f32 %v4925, %v4931
    %v4934 = vmul.f32 %v4926, %v4931
    %v4936 = vlaneseq
    %v4937 = vshrl.u32 %v4936, 7
    %v4938 = vsub.s32 0, %v4937
    %v4939 = vrot.slane %v4903, %v4938
    %v4941 = vadd.f32 %v4933, %v4939
    %v4942 = vadd.f32 %v4934, %v4939
    %v4943 = vpack.c.bf16 %v4942, %v4941
    %v4944 = vld [vmem:[#allocation13] sm:$0xf]
    %v4946 = vlaneseq
    %v4947 = vshrl.u32 %v4946, 7
    %v4948 = vsub.s32 0, %v4947
    %v4949 = vrot.slane %v4944, %v4948
    %v4950 = vlaneseq
    %v4951 = vshrl.u32 %v4950, 7
    %v4952 = vsub.s32 1, %v4951
    %v4953 = vrot.slane %v4944, %v4952
    %v4954 = vlaneseq
    %v4955 = vshrl.u32 %v4954, 7
    %v4956 = vsub.s32 2, %v4955
    %v4957 = vrot.slane %v4944, %v4956
    %v4958 = vlaneseq
    %v4959 = vshrl.u32 %v4958, 7
    %v4960 = vsub.s32 3, %v4959
    %v4961 = vrot.slane %v4944, %v4960
    %v4998 = vunpack.c.l.b16 %v297
    %v4999 = vunpack.c.h.b16 %v297
    %v5000 = vunpack.c.l.b16 %v298
    %v5001 = vunpack.c.h.b16 %v298
    %v5002 = vunpack.c.l.b16 %v299
    %v5003 = vunpack.c.h.b16 %v299
    %v5004 = vunpack.c.l.b16 %v300
    %v5005 = vunpack.c.h.b16 %v300
    %v5006 = vunpack.c.l.b16 %v301
    %v5007 = vunpack.c.h.b16 %v301
    %v5008 = vunpack.c.l.b16 %v302
    %v5009 = vunpack.c.h.b16 %v302
    %v5010 = vunpack.c.l.b16 %v303
    %v5011 = vunpack.c.h.b16 %v303
    %v5012 = vunpack.c.l.b16 %v304
    %v5013 = vunpack.c.h.b16 %v304
    %v5014 = vunpack.c.l.b16 %v305
    %v5015 = vunpack.c.h.b16 %v305
    %v5016 = vunpack.c.l.b16 %v306
    %v5017 = vunpack.c.h.b16 %v306
    %v5018 = vunpack.c.l.b16 %v307
    %v5019 = vunpack.c.h.b16 %v307
    %v5020 = vunpack.c.l.b16 %v308
    %v5021 = vunpack.c.h.b16 %v308
    %v5022 = vunpack.c.l.b16 %v309
    %v5023 = vunpack.c.h.b16 %v309
    %v5024 = vunpack.c.l.b16 %v310
    %v5025 = vunpack.c.h.b16 %v310
    %v5026 = vunpack.c.l.b16 %v311
    %v5027 = vunpack.c.h.b16 %v311
    %v5028 = vunpack.c.l.b16 %v312
    %v5029 = vunpack.c.h.b16 %v312
    %v5030 = vunpack.c.l.b16 %v313
    %v5031 = vunpack.c.h.b16 %v313
    %v5032 = vunpack.c.l.b16 %v314
    %v5033 = vunpack.c.h.b16 %v314
    %v5034 = vunpack.c.l.b16 %v315
    %v5035 = vunpack.c.h.b16 %v315
    %v5036 = vunpack.c.l.b16 %v316
    %v5037 = vunpack.c.h.b16 %v316
    %v5038 = vunpack.c.l.b16 %v317
    %v5039 = vunpack.c.h.b16 %v317
    %v5040 = vunpack.c.l.b16 %v318
    %v5041 = vunpack.c.h.b16 %v318
    %v5042 = vunpack.c.l.b16 %v319
    %v5043 = vunpack.c.h.b16 %v319
    %v5044 = vunpack.c.l.b16 %v320
    %v5045 = vunpack.c.h.b16 %v320
    %v5046 = vunpack.c.l.b16 %v321
    %v5047 = vunpack.c.h.b16 %v321
    %v5048 = vunpack.c.l.b16 %v322
    %v5049 = vunpack.c.h.b16 %v322
    %v5050 = vunpack.c.l.b16 %v323
    %v5051 = vunpack.c.h.b16 %v323
    %v5052 = vunpack.c.l.b16 %v324
    %v5053 = vunpack.c.h.b16 %v324
    %v5054 = vunpack.c.l.b16 %v325
    %v5055 = vunpack.c.h.b16 %v325
    %v5056 = vunpack.c.l.b16 %v326
    %v5057 = vunpack.c.h.b16 %v326
    %v5058 = vunpack.c.l.b16 %v327
    %v5059 = vunpack.c.h.b16 %v327
    %v5060 = vunpack.c.l.b16 %v328
    %v5061 = vunpack.c.h.b16 %v328
    %v5062 = vpack.c.b16 %v5002, %v4998
    %v5063 = vpack.c.b16 %v5003, %v4999
    %v5064 = vpack.c.b16 %v5004, %v5000
    %v5065 = vpack.c.b16 %v5005, %v5001
    %v5066 = vpack.c.b16 %v5010, %v5006
    %v5067 = vpack.c.b16 %v5011, %v5007
    %v5068 = vpack.c.b16 %v5012, %v5008
    %v5069 = vpack.c.b16 %v5013, %v5009
    %v5070 = vpack.c.b16 %v5018, %v5014
    %v5071 = vpack.c.b16 %v5019, %v5015
    %v5072 = vpack.c.b16 %v5020, %v5016
    %v5073 = vpack.c.b16 %v5021, %v5017
    %v5074 = vpack.c.b16 %v5026, %v5022
    %v5075 = vpack.c.b16 %v5027, %v5023
    %v5076 = vpack.c.b16 %v5028, %v5024
    %v5077 = vpack.c.b16 %v5029, %v5025
    %v5078 = vpack.c.b16 %v5034, %v5030
    %v5079 = vpack.c.b16 %v5035, %v5031
    %v5080 = vpack.c.b16 %v5036, %v5032
    %v5081 = vpack.c.b16 %v5037, %v5033
    %v5082 = vpack.c.b16 %v5042, %v5038
    %v5083 = vpack.c.b16 %v5043, %v5039
    %v5084 = vpack.c.b16 %v5044, %v5040
    %v5085 = vpack.c.b16 %v5045, %v5041
    %v5086 = vpack.c.b16 %v5050, %v5046
    %v5087 = vpack.c.b16 %v5051, %v5047
    %v5088 = vpack.c.b16 %v5052, %v5048
    %v5089 = vpack.c.b16 %v5053, %v5049
    %v5090 = vpack.c.b16 %v5058, %v5054
    %v5091 = vpack.c.b16 %v5059, %v5055
    %v5092 = vpack.c.b16 %v5060, %v5056
    %v5093 = vpack.c.b16 %v5061, %v5057
    %5126 = vmatprep.subr.bf16.mxu0 %v5063
    %5127 = vmatpush1.bf16.msra.mxu0 %v5062
    %5128 = vmatprep.subr.bf16.mxu0 %v5067
    %5129 = vmatpush1.bf16.msra.mxu0 %v5066
    %5130 = vmatprep.subr.bf16.mxu0 %v5071
    %5131 = vmatpush1.bf16.msra.mxu0 %v5070
    %5132 = vmatprep.subr.bf16.mxu0 %v5075
    %5133 = vmatpush1.bf16.msra.mxu0 %v5074
    %5134 = vmatprep.subr.bf16.mxu0 %v5079
    %5135 = vmatpush1.bf16.msra.mxu0 %v5078
    %5136 = vmatprep.subr.bf16.mxu0 %v5083
    %5137 = vmatpush1.bf16.msra.mxu0 %v5082
    %5138 = vmatprep.subr.bf16.mxu0 %v5087
    %5139 = vmatpush1.bf16.msra.mxu0 %v5086
    %5140 = vmatprep.subr.bf16.mxu0 %v5091
    %5141 = vmatpush1.bf16.msra.mxu0 %v5090
    %5142 = vmatprep.subr.bf16.mxu0 0
    %5143 = vmatpush1.bf16.msra.mxu0 0
    %5144 = vmatprep.subr.bf16.mxu0 0
    %5145 = vmatpush1.bf16.msra.mxu0 0
    %5146 = vmatprep.subr.bf16.mxu0 0
    %5147 = vmatpush1.bf16.msra.mxu0 0
    %5148 = vmatprep.subr.bf16.mxu0 0
    %5149 = vmatpush1.bf16.msra.mxu0 0
    %5150 = vmatprep.subr.bf16.mxu0 0
    %5151 = vmatpush1.bf16.msra.mxu0 0
    %5152 = vmatprep.subr.bf16.mxu0 0
    %5153 = vmatpush1.bf16.msra.mxu0 0
    %5154 = vmatprep.subr.bf16.mxu0 0
    %5155 = vmatpush1.bf16.msra.mxu0 0
    %5156 = vmatprep.subr.bf16.mxu0 0
    %5157 = vmatpush1.bf16.msra.mxu0 0
    %5158 = vmatprep.mubr.bf16.mxu0 0
    %5159 = vmatmul.mubr.bf16.gmra.mrb[0].mxu0 %v4943
    %v5160 = vpop.f32.mrb[0].mxu0
    %v5161 = vadd.f32 %v4949, %v5160
    %v5162 = vpop.f32.mrb[0].mxu0
    %v5163 = vadd.f32 %v4953, %v5162
    %v5164 = vpop.f32.mrb[0].mxu0
    %v5165 = vadd.f32 %v4949, %v5164
    %v5166 = vpop.f32.mrb[0].mxu0
    %v5167 = vadd.f32 %v4953, %v5166
    %5168 = vdwg.mxu0
    %5169 = vmatprep.subr.bf16.mxu0 %v5065
    %5170 = vmatpush1.bf16.msra.mxu0 %v5064
    %5171 = vmatprep.subr.bf16.mxu0 %v5069
    %5172 = vmatpush1.bf16.msra.mxu0 %v5068
    %5173 = vmatprep.subr.bf16.mxu0 %v5073
    %5174 = vmatpush1.bf16.msra.mxu0 %v5072
    %5175 = vmatprep.subr.bf16.mxu0 %v5077
    %5176 = vmatpush1.bf16.msra.mxu0 %v5076
    %5177 = vmatprep.subr.bf16.mxu0 %v5081
    %5178 = vmatpush1.bf16.msra.mxu0 %v5080
    %5179 = vmatprep.subr.bf16.mxu0 %v5085
    %5180 = vmatpush1.bf16.msra.mxu0 %v5084
    %5181 = vmatprep.subr.bf16.mxu0 %v5089
    %5182 = vmatpush1.bf16.msra.mxu0 %v5088
    %5183 = vmatprep.subr.bf16.mxu0 %v5093
    %5184 = vmatpush1.bf16.msra.mxu0 %v5092
    %5185 = vmatprep.subr.bf16.mxu0 0
    %5186 = vmatpush1.bf16.msra.mxu0 0
    %5187 = vmatprep.subr.bf16.mxu0 0
    %5188 = vmatpush1.bf16.msra.mxu0 0
    %5189 = vmatprep.subr.bf16.mxu0 0
    %5190 = vmatpush1.bf16.msra.mxu0 0
    %5191 = vmatprep.subr.bf16.mxu0 0
    %5192 = vmatpush1.bf16.msra.mxu0 0
    %5193 = vmatprep.subr.bf16.mxu0 0
    %5194 = vmatpush1.bf16.msra.mxu0 0
    %5195 = vmatprep.subr.bf16.mxu0 0
    %5196 = vmatpush1.bf16.msra.mxu0 0
    %5197 = vmatprep.subr.bf16.mxu0 0
    %5198 = vmatpush1.bf16.msra.mxu0 0
    %5199 = vmatprep.subr.bf16.mxu0 0
    %5200 = vmatpush1.bf16.msra.mxu0 0
    %5201 = vmatprep.mubr.bf16.mxu0 0
    %5202 = vmatmul.mubr.bf16.gmra.mrb[0].mxu0 %v4943
    %v5203 = vpop.f32.mrb[0].mxu0
    %v5204 = vadd.f32 %v4957, %v5203
    %v5205 = vpop.f32.mrb[0].mxu0
    %v5206 = vadd.f32 %v4961, %v5205
    %v5207 = vpop.f32.mrb[0].mxu0
    %v5208 = vadd.f32 %v4957, %v5207
    %v5209 = vpop.f32.mrb[0].mxu0
    %v5210 = vadd.f32 %v4961, %v5209
    %5211 = vdwg.mxu0
    %v5212 = vmax.f32 %v5161, 0.0
    %v5213 = vmax.f32 %v5163, 0.0
    %v5214 = vmax.f32 %v5204, 0.0
    %v5215 = vmax.f32 %v5206, 0.0
    %v5216 = vmax.f32 %v5165, 0.0
    %v5217 = vmax.f32 %v5167, 0.0
    %v5218 = vmax.f32 %v5208, 0.0
    %v5219 = vmax.f32 %v5210, 0.0
    %v5220 = vpack.c.bf16 %v5216, %v5212
    %v5221 = vpack.c.bf16 %v5217, %v5213
    %v5222 = vpack.c.bf16 %v5218, %v5214
    %v5223 = vpack.c.bf16 %v5219, %v5215
    %v5224 = vld [vmem:[#allocation16] sm:$0x1]
    %v5226 = vlaneseq
    %v5227 = vshrl.u32 %v5226, 7
    %v5228 = vsub.s32 0, %v5227
    %v5229 = vrot.slane %v5224, %v5228
    %v5295 = vunpack.c.l.b16 %v329
    %v5296 = vunpack.c.l.b16 %v330
    %v5297 = vunpack.c.l.b16 %v331
    %v5298 = vunpack.c.l.b16 %v332
    %v5299 = vunpack.c.l.b16 %v333
    %v5300 = vunpack.c.l.b16 %v334
    %v5301 = vunpack.c.l.b16 %v335
    %v5302 = vunpack.c.l.b16 %v336
    %v5303 = vunpack.c.l.b16 %v337
    %v5304 = vunpack.c.l.b16 %v338
    %v5305 = vunpack.c.l.b16 %v339
    %v5306 = vunpack.c.l.b16 %v340
    %v5307 = vunpack.c.l.b16 %v341
    %v5308 = vunpack.c.l.b16 %v342
    %v5309 = vunpack.c.l.b16 %v343
    %v5310 = vunpack.c.l.b16 %v344
    %v5311 = vunpack.c.l.b16 %v345
    %v5312 = vunpack.c.l.b16 %v346
    %v5313 = vunpack.c.l.b16 %v347
    %v5314 = vunpack.c.l.b16 %v348
    %v5315 = vunpack.c.l.b16 %v349
    %v5316 = vunpack.c.l.b16 %v350
    %v5317 = vunpack.c.l.b16 %v351
    %v5318 = vunpack.c.l.b16 %v352
    %v5319 = vunpack.c.l.b16 %v353
    %v5320 = vunpack.c.l.b16 %v354
    %v5321 = vunpack.c.l.b16 %v355
    %v5322 = vunpack.c.l.b16 %v356
    %v5323 = vunpack.c.l.b16 %v357
    %v5324 = vunpack.c.l.b16 %v358
    %v5325 = vunpack.c.l.b16 %v359
    %v5326 = vunpack.c.l.b16 %v360
    %v5327 = vunpack.c.l.b16 %v361
    %v5328 = vunpack.c.l.b16 %v362
    %v5329 = vunpack.c.l.b16 %v363
    %v5330 = vunpack.c.l.b16 %v364
    %v5331 = vunpack.c.l.b16 %v365
    %v5332 = vunpack.c.l.b16 %v366
    %v5333 = vunpack.c.l.b16 %v367
    %v5334 = vunpack.c.l.b16 %v368
    %v5335 = vunpack.c.l.b16 %v369
    %v5336 = vunpack.c.l.b16 %v370
    %v5337 = vunpack.c.l.b16 %v371
    %v5338 = vunpack.c.l.b16 %v372
    %v5339 = vunpack.c.l.b16 %v373
    %v5340 = vunpack.c.l.b16 %v374
    %v5341 = vunpack.c.l.b16 %v375
    %v5342 = vunpack.c.l.b16 %v376
    %v5343 = vunpack.c.l.b16 %v377
    %v5344 = vunpack.c.l.b16 %v378
    %v5345 = vunpack.c.l.b16 %v379
    %v5346 = vunpack.c.l.b16 %v380
    %v5347 = vunpack.c.l.b16 %v381
    %v5348 = vunpack.c.l.b16 %v382
    %v5349 = vunpack.c.l.b16 %v383
    %v5350 = vunpack.c.l.b16 %v384
    %v5351 = vunpack.c.l.b16 %v385
    %v5352 = vunpack.c.l.b16 %v386
    %v5353 = vunpack.c.l.b16 %v387
    %v5354 = vunpack.c.l.b16 %v388
    %v5355 = vunpack.c.l.b16 %v389
    %v5356 = vunpack.c.l.b16 %v390
    %v5357 = vunpack.c.l.b16 %v391
    %v5358 = vunpack.c.l.b16 %v392
    %v5359 = vpack.c.b16 %v5296, %v5295
    %v5360 = vpack.c.b16 %v5298, %v5297
    %v5361 = vpack.c.b16 %v5300, %v5299
    %v5362 = vpack.c.b16 %v5302, %v5301
    %v5363 = vpack.c.b16 %v5304, %v5303
    %v5364 = vpack.c.b16 %v5306, %v5305
    %v5365 = vpack.c.b16 %v5308, %v5307
    %v5366 = vpack.c.b16 %v5310, %v5309
    %v5367 = vpack.c.b16 %v5312, %v5311
    %v5368 = vpack.c.b16 %v5314, %v5313
    %v5369 = vpack.c.b16 %v5316, %v5315
    %v5370 = vpack.c.b16 %v5318, %v5317
    %v5371 = vpack.c.b16 %v5320, %v5319
    %v5372 = vpack.c.b16 %v5322, %v5321
    %v5373 = vpack.c.b16 %v5324, %v5323
    %v5374 = vpack.c.b16 %v5326, %v5325
    %v5375 = vpack.c.b16 %v5328, %v5327
    %v5376 = vpack.c.b16 %v5330, %v5329
    %v5377 = vpack.c.b16 %v5332, %v5331
    %v5378 = vpack.c.b16 %v5334, %v5333
    %v5379 = vpack.c.b16 %v5336, %v5335
    %v5380 = vpack.c.b16 %v5338, %v5337
    %v5381 = vpack.c.b16 %v5340, %v5339
    %v5382 = vpack.c.b16 %v5342, %v5341
    %v5383 = vpack.c.b16 %v5344, %v5343
    %v5384 = vpack.c.b16 %v5346, %v5345
    %v5385 = vpack.c.b16 %v5348, %v5347
    %v5386 = vpack.c.b16 %v5350, %v5349
    %v5387 = vpack.c.b16 %v5352, %v5351
    %v5388 = vpack.c.b16 %v5354, %v5353
    %v5389 = vpack.c.b16 %v5356, %v5355
    %v5390 = vpack.c.b16 %v5358, %v5357
    %5423 = vmatprep.subr.bf16.mxu0 0
    %5424 = vmatpush1.bf16.msra.mxu0 %v5359
    %5425 = vmatprep.subr.bf16.mxu0 0
    %5426 = vmatpush1.bf16.msra.mxu0 %v5360
    %5427 = vmatprep.subr.bf16.mxu0 0
    %5428 = vmatpush1.bf16.msra.mxu0 %v5361
    %5429 = vmatprep.subr.bf16.mxu0 0
    %5430 = vmatpush1.bf16.msra.mxu0 %v5362
    %5431 = vmatprep.subr.bf16.mxu0 0
    %5432 = vmatpush1.bf16.msra.mxu0 %v5363
    %5433 = vmatprep.subr.bf16.mxu0 0
    %5434 = vmatpush1.bf16.msra.mxu0 %v5364
    %5435 = vmatprep.subr.bf16.mxu0 0
    %5436 = vmatpush1.bf16.msra.mxu0 %v5365
    %5437 = vmatprep.subr.bf16.mxu0 0
    %5438 = vmatpush1.bf16.msra.mxu0 %v5366
    %5439 = vmatprep.subr.bf16.mxu0 0
    %5440 = vmatpush1.bf16.msra.mxu0 %v5367
    %5441 = vmatprep.subr.bf16.mxu0 0
    %5442 = vmatpush1.bf16.msra.mxu0 %v5368
    %5443 = vmatprep.subr.bf16.mxu0 0
    %5444 = vmatpush1.bf16.msra.mxu0 %v5369
    %5445 = vmatprep.subr.bf16.mxu0 0
    %5446 = vmatpush1.bf16.msra.mxu0 %v5370
    %5447 = vmatprep.subr.bf16.mxu0 0
    %5448 = vmatpush1.bf16.msra.mxu0 %v5371
    %5449 = vmatprep.subr.bf16.mxu0 0
    %5450 = vmatpush1.bf16.msra.mxu0 %v5372
    %5451 = vmatprep.subr.bf16.mxu0 0
    %5452 = vmatpush1.bf16.msra.mxu0 %v5373
    %5453 = vmatprep.subr.bf16.mxu0 0
    %5454 = vmatpush1.bf16.msra.mxu0 %v5374
    %5455 = vmatprep.mubr.bf16.mxu0 %v5221
    %5456 = vmatmul.mubr.bf16.gmra.mrb[0].mxu0 %v5220
    %v5457 = vpop.f32.mrb[0].mxu0
    %v5458 = vadd.f32 %v5229, %v5457
    %v5459 = vpop.f32.mrb[0].mxu0
    %v5460 = vpop.f32.mrb[0].mxu0
    %v5461 = vadd.f32 %v5229, %v5460
    %v5462 = vpop.f32.mrb[0].mxu0
    %5463 = vdwg.mxu0
    %5464 = vmatprep.subr.bf16.mxu0 0
    %5465 = vmatpush1.bf16.msra.mxu0 %v5375
    %5466 = vmatprep.subr.bf16.mxu0 0
    %5467 = vmatpush1.bf16.msra.mxu0 %v5376
    %5468 = vmatprep.subr.bf16.mxu0 0
    %5469 = vmatpush1.bf16.msra.mxu0 %v5377
    %5470 = vmatprep.subr.bf16.mxu0 0
    %5471 = vmatpush1.bf16.msra.mxu0 %v5378
    %5472 = vmatprep.subr.bf16.mxu0 0
    %5473 = vmatpush1.bf16.msra.mxu0 %v5379
    %5474 = vmatprep.subr.bf16.mxu0 0
    %5475 = vmatpush1.bf16.msra.mxu0 %v5380
    %5476 = vmatprep.subr.bf16.mxu0 0
    %5477 = vmatpush1.bf16.msra.mxu0 %v5381
    %5478 = vmatprep.subr.bf16.mxu0 0
    %5479 = vmatpush1.bf16.msra.mxu0 %v5382
    %5480 = vmatprep.subr.bf16.mxu0 0
    %5481 = vmatpush1.bf16.msra.mxu0 %v5383
    %5482 = vmatprep.subr.bf16.mxu0 0
    %5483 = vmatpush1.bf16.msra.mxu0 %v5384
    %5484 = vmatprep.subr.bf16.mxu0 0
    %5485 = vmatpush1.bf16.msra.mxu0 %v5385
    %5486 = vmatprep.subr.bf16.mxu0 0
    %5487 = vmatpush1.bf16.msra.mxu0 %v5386
    %5488 = vmatprep.subr.bf16.mxu0 0
    %5489 = vmatpush1.bf16.msra.mxu0 %v5387
    %5490 = vmatprep.subr.bf16.mxu0 0
    %5491 = vmatpush1.bf16.msra.mxu0 %v5388
    %5492 = vmatprep.subr.bf16.mxu0 0
    %5493 = vmatpush1.bf16.msra.mxu0 %v5389
    %5494 = vmatprep.subr.bf16.mxu0 0
    %5495 = vmatpush1.bf16.msra.mxu0 %v5390
    %5496 = vmatprep.mubr.bf16.mxu0 %v5223
    %5497 = vmatmul.mubr.bf16.gmra.mrb[0].mxu0 %v5222
    %v5498 = vpop.f32.mrb[0].mxu0
    %v5499 = vadd.f32 %v5458, %v5498
    %v5500 = vpop.f32.mrb[0].mxu0
    %v5501 = vpop.f32.mrb[0].mxu0
    %v5502 = vadd.f32 %v5461, %v5501
    %v5503 = vpop.f32.mrb[0].mxu0
    %5504 = vdwg.mxu0
    %v5505 = vadd.f32 %v4941, %v5499
    %v5506 = vadd.f32 %v4942, %v5502
    %v5507 = vld [vmem:[#allocation21] sm:$0x1]
    %v5508 = vld [vmem:[#allocation22] sm:$0x1]
    %5509 = vadd.xlane.f32.xlu0 %v5505
    %v5510 = vpop.xlane.xlu0 %5509
    %5511 = vadd.xlane.f32.xlu0 %v5506
    %v5512 = vpop.xlane.xlu0 %5511
    %v5513 = vmul.f32 %v5510, %v4908
    %v5514 = vmul.f32 %v5512, %v4908
    %v5515 = vsub.f32 %v5505, %v5513
    %v5516 = vsub.f32 %v5506, %v5514
    %v5517 = vmul.f32 %v5515, %v5515
    %v5518 = vmul.f32 %v5516, %v5516
    %5519 = vadd.xlane.f32.xlu0 %v5517
    %v5520 = vpop.xlane.xlu0 %5519
    %5521 = vadd.xlane.f32.xlu0 %v5518
    %v5522 = vpop.xlane.xlu0 %5521
    %v5523 = vmul.f32 %v5520, %v4908
    %v5524 = vmul.f32 %v5522, %v4908
    %v5525 = vadd.f32 %v5523, 1e-05
    %v5526 = vadd.f32 %v5524, 1e-05
    %v5527 = vrsqrt.pop %v5525
    %v5528 = vrsqrt.pop %v5526
    %v5529 = vmul.f32 %v5515, %v5527
    %v5530 = vmul.f32 %v5516, %v5528
    %v5532 = vlaneseq
    %v5533 = vshrl.u32 %v5532, 7
    %v5534 = vsub.s32 0, %v5533
    %v5535 = vrot.slane %v5507, %v5534
    %v5537 = vmul.f32 %v5529, %v5535
    %v5538 = vmul.f32 %v5530, %v5535
    %v5540 = vlaneseq
    %v5541 = vshrl.u32 %v5540, 7
    %v5542 = vsub.s32 0, %v5541
    %v5543 = vrot.slane %v5508, %v5542
    %v5545 = vadd.f32 %v5537, %v5543
    %v5546 = vadd.f32 %v5538, %v5543
    %v5547 = vpack.c.bf16 %v5546, %v5545
    %s5548 = scalar_lea.vmem [#allocation4], 192
    %v5549 = vld [vmem:[%s5548] sm:$0xff]
    %v5550 = vld [vmem:[%s5548 + $0x8] sm:$0xf]
    %v5551 = vld [vmem:[%s5548 + $0xc] sm:$0xff]
    %v5552 = vld [vmem:[%s5548 + $0x14] sm:$0xf]
    %v5553 = vld [vmem:[%s5548 + $0x18] sm:$0xff]
    %v5554 = vld [vmem:[%s5548 + $0x20] sm:$0xf]
    %v5555 = vld [vmem:[%s5548 + $0x24] sm:$0xff]
    %v5556 = vld [vmem:[%s5548 + $0x2c] sm:$0xf]
    %v5557 = vld [vmem:[%s5548 + $0x30] sm:$0xff]
    %v5558 = vld [vmem:[%s5548 + $0x38] sm:$0xf]
    %v5559 = vld [vmem:[%s5548 + $0x3c] sm:$0xff]
    %v5560 = vld [vmem:[%s5548 + $0x44] sm:$0xf]
    %v5561 = vld [vmem:[%s5548 + $0x48] sm:$0xff]
    %v5562 = vld [vmem:[%s5548 + $0x50] sm:$0xf]
    %v5563 = vld [vmem:[%s5548 + $0x54] sm:$0xff]
    %v5564 = vld [vmem:[%s5548 + $0x5c] sm:$0xf]
    %v5565 = vld [vmem:[%s5548 + $0x60] sm:$0xff]
    %v5566 = vld [vmem:[%s5548 + $0x68] sm:$0xf]
    %v5567 = vld [vmem:[%s5548 + $0x6c] sm:$0xff]
    %v5568 = vld [vmem:[%s5548 + $0x74] sm:$0xf]
    %v5569 = vld [vmem:[%s5548 + $0x78] sm:$0xff]
    %v5570 = vld [vmem:[%s5548 + $0x80] sm:$0xf]
    %v5571 = vld [vmem:[%s5548 + $0x84] sm:$0xff]
    %v5572 = vld [vmem:[%s5548 + $0x8c] sm:$0xf]
    %v5573 = vld [vmem:[%s5548 + $0x90] sm:$0xff]
    %v5574 = vld [vmem:[%s5548 + $0x98] sm:$0xf]
    %v5575 = vld [vmem:[%s5548 + $0x9c] sm:$0xff]
    %v5576 = vld [vmem:[%s5548 + $0xa4] sm:$0xf]
    %v5577 = vld [vmem:[%s5548 + $0xa8] sm:$0xff]
    %v5578 = vld [vmem:[%s5548 + $0xb0] sm:$0xf]
    %v5579 = vld [vmem:[%s5548 + $0xb4] sm:$0xff]
    %v5580 = vld [vmem:[%s5548 + $0xbc] sm:$0xf]
    %s5581 = scalar_lea.vmem [#allocation9], 64
    %v5582 = vld [vmem:[%s5581] sm:$0xf]
    %v5583 = vld [vmem:[%s5581 + $0x4] sm:$0xf]
    %v5584 = vld [vmem:[%s5581 + $0x8] sm:$0xf]
    %v5585 = vld [vmem:[%s5581 + $0xc] sm:$0xf]
    %v5586 = vld [vmem:[%s5581 + $0x10] sm:$0xf]
    %v5587 = vld [vmem:[%s5581 + $0x14] sm:$0xf]
    %v5588 = vld [vmem:[%s5581 + $0x18] sm:$0xf]
    %v5589 = vld [vmem:[%s5581 + $0x1c] sm:$0xf]
    %v5590 = vld [vmem:[%s5581 + $0x20] sm:$0xf]
    %v5591 = vld [vmem:[%s5581 + $0x24] sm:$0xf]
    %v5592 = vld [vmem:[%s5581 + $0x28] sm:$0xf]
    %v5593 = vld [vmem:[%s5581 + $0x2c] sm:$0xf]
    %v5594 = vld [vmem:[%s5581 + $0x30] sm:$0xf]
    %v5595 = vld [vmem:[%s5581 + $0x34] sm:$0xf]
    %v5596 = vld [vmem:[%s5581 + $0x38] sm:$0xf]
    %v5597 = vld [vmem:[%s5581 + $0x3c] sm:$0xf]
    %s5598 = scalar_lea.vmem [#allocation12], 256
    %v5599 = vld [vmem:[%s5598] sm:$0xff]
    %v5600 = vld [vmem:[%s5598 + $0x8] sm:$0xff]
    %v5601 = vld [vmem:[%s5598 + $0x10] sm:$0xff]
    %v5602 = vld [vmem:[%s5598 + $0x18] sm:$0xff]
    %v5603 = vld [vmem:[%s5598 + $0x20] sm:$0xff]
    %v5604 = vld [vmem:[%s5598 + $0x28] sm:$0xff]
    %v5605 = vld [vmem:[%s5598 + $0x30] sm:$0xff]
    %v5606 = vld [vmem:[%s5598 + $0x38] sm:$0xff]
    %v5607 = vld [vmem:[%s5598 + $0x40] sm:$0xff]
    %v5608 = vld [vmem:[%s5598 + $0x48] sm:$0xff]
    %v5609 = vld [vmem:[%s5598 + $0x50] sm:$0xff]
    %v5610 = vld [vmem:[%s5598 + $0x58] sm:$0xff]
    %v5611 = vld [vmem:[%s5598 + $0x60] sm:$0xff]
    %v5612 = vld [vmem:[%s5598 + $0x68] sm:$0xff]
    %v5613 = vld [vmem:[%s5598 + $0x70] sm:$0xff]
    %v5614 = vld [vmem:[%s5598 + $0x78] sm:$0xff]
    %v5615 = vld [vmem:[%s5598 + $0x80] sm:$0xff]
    %v5616 = vld [vmem:[%s5598 + $0x88] sm:$0xff]
    %v5617 = vld [vmem:[%s5598 + $0x90] sm:$0xff]
    %v5618 = vld [vmem:[%s5598 + $0x98] sm:$0xff]
    %v5619 = vld [vmem:[%s5598 + $0xa0] sm:$0xff]
    %v5620 = vld [vmem:[%s5598 + $0xa8] sm:$0xff]
    %v5621 = vld [vmem:[%s5598 + $0xb0] sm:$0xff]
    %v5622 = vld [vmem:[%s5598 + $0xb8] sm:$0xff]
    %v5623 = vld [vmem:[%s5598 + $0xc0] sm:$0xff]
    %v5624 = vld [vmem:[%s5598 + $0xc8] sm:$0xff]
    %v5625 = vld [vmem:[%s5598 + $0xd0] sm:$0xff]
    %v5626 = vld [vmem:[%s5598 + $0xd8] sm:$0xff]
    %v5627 = vld [vmem:[%s5598 + $0xe0] sm:$0xff]
    %v5628 = vld [vmem:[%s5598 + $0xe8] sm:$0xff]
    %v5629 = vld [vmem:[%s5598 + $0xf0] sm:$0xff]
    %v5630 = vld [vmem:[%s5598 + $0xf8] sm:$0xff]
    %s5631 = scalar_lea.vmem [#allocation15], 256
    %v5632 = vld [vmem:[%s5631] sm:$0xf]
    %v5633 = vld [vmem:[%s5631 + $0x4] sm:$0xf]
    %v5634 = vld [vmem:[%s5631 + $0x8] sm:$0xf]
    %v5635 = vld [vmem:[%s5631 + $0xc] sm:$0xf]
    %v5636 = vld [vmem:[%s5631 + $0x10] sm:$0xf]
    %v5637 = vld [vmem:[%s5631 + $0x14] sm:$0xf]
    %v5638 = vld [vmem:[%s5631 + $0x18] sm:$0xf]
    %v5639 = vld [vmem:[%s5631 + $0x1c] sm:$0xf]
    %v5640 = vld [vmem:[%s5631 + $0x20] sm:$0xf]
    %v5641 = vld [vmem:[%s5631 + $0x24] sm:$0xf]
    %v5642 = vld [vmem:[%s5631 + $0x28] sm:$0xf]
    %v5643 = vld [vmem:[%s5631 + $0x2c] sm:$0xf]
    %v5644 = vld [vmem:[%s5631 + $0x30] sm:$0xf]
    %v5645 = vld [vmem:[%s5631 + $0x34] sm:$0xf]
    %v5646 = vld [vmem:[%s5631 + $0x38] sm:$0xf]
    %v5647 = vld [vmem:[%s5631 + $0x3c] sm:$0xf]
    %v5648 = vld [vmem:[%s5631 + $0x40] sm:$0xf]
    %v5649 = vld [vmem:[%s5631 + $0x44] sm:$0xf]
    %v5650 = vld [vmem:[%s5631 + $0x48] sm:$0xf]
    %v5651 = vld [vmem:[%s5631 + $0x4c] sm:$0xf]
    %v5652 = vld [vmem:[%s5631 + $0x50] sm:$0xf]
    %v5653 = vld [vmem:[%s5631 + $0x54] sm:$0xf]
    %v5654 = vld [vmem:[%s5631 + $0x58] sm:$0xf]
    %v5655 = vld [vmem:[%s5631 + $0x5c] sm:$0xf]
    %v5656 = vld [vmem:[%s5631 + $0x60] sm:$0xf]
    %v5657 = vld [vmem:[%s5631 + $0x64] sm:$0xf]
    %v5658 = vld [vmem:[%s5631 + $0x68] sm:$0xf]
    %v5659 = vld [vmem:[%s5631 + $0x6c] sm:$0xf]
    %v5660 = vld [vmem:[%s5631 + $0x70] sm:$0xf]
    %v5661 = vld [vmem:[%s5631 + $0x74] sm:$0xf]
    %v5662 = vld [vmem:[%s5631 + $0x78] sm:$0xf]
    %v5663 = vld [vmem:[%s5631 + $0x7c] sm:$0xf]
    %v5664 = vld [vmem:[%s5631 + $0x80] sm:$0xf]
    %v5665 = vld [vmem:[%s5631 + $0x84] sm:$0xf]
    %v5666 = vld [vmem:[%s5631 + $0x88] sm:$0xf]
    %v5667 = vld [vmem:[%s5631 + $0x8c] sm:$0xf]
    %v5668 = vld [vmem:[%s5631 + $0x90] sm:$0xf]
    %v5669 = vld [vmem:[%s5631 + $0x94] sm:$0xf]
    %v5670 = vld [vmem:[%s5631 + $0x98] sm:$0xf]
    %v5671 = vld [vmem:[%s5631 + $0x9c] sm:$0xf]
    %v5672 = vld [vmem:[%s5631 + $0xa0] sm:$0xf]
    %v5673 = vld [vmem:[%s5631 + $0xa4] sm:$0xf]
    %v5674 = vld [vmem:[%s5631 + $0xa8] sm:$0xf]
    %v5675 = vld [vmem:[%s5631 + $0xac] sm:$0xf]
    %v5676 = vld [vmem:[%s5631 + $0xb0] sm:$0xf]
    %v5677 = vld [vmem:[%s5631 + $0xb4] sm:$0xf]
    %v5678 = vld [vmem:[%s5631 + $0xb8] sm:$0xf]
    %v5679 = vld [vmem:[%s5631 + $0xbc] sm:$0xf]
    %v5680 = vld [vmem:[%s5631 + $0xc0] sm:$0xf]
    %v5681 = vld [vmem:[%s5631 + $0xc4] sm:$0xf]
    %v5682 = vld [vmem:[%s5631 + $0xc8] sm:$0xf]
    %v5683 = vld [vmem:[%s5631 + $0xcc] sm:$0xf]
    %v5684 = vld [vmem:[%s5631 + $0xd0] sm:$0xf]
    %v5685 = vld [vmem:[%s5631 + $0xd4] sm:$0xf]
    %v5686 = vld [vmem:[%s5631 + $0xd8] sm:$0xf]
    %v5687 = vld [vmem:[%s5631 + $0xdc] sm:$0xf]
    %v5688 = vld [vmem:[%s5631 + $0xe0] sm:$0xf]
    %v5689 = vld [vmem:[%s5631 + $0xe4] sm:$0xf]
    %v5690 = vld [vmem:[%s5631 + $0xe8] sm:$0xf]
    %v5691 = vld [vmem:[%s5631 + $0xec] sm:$0xf]
    %v5692 = vld [vmem:[%s5631 + $0xf0] sm:$0xf]
    %v5693 = vld [vmem:[%s5631 + $0xf4] sm:$0xf]
    %v5694 = vld [vmem:[%s5631 + $0xf8] sm:$0xf]
    %v5695 = vld [vmem:[%s5631 + $0xfc] sm:$0xf]
    %s5696 = scalar_lea.vmem [#allocation7], 3
    %v5697 = vld [vmem:[%s5696] sm:$0x7]
    %v5699 = vlaneseq
    %v5700 = vshrl.u32 %v5699, 7
    %v5701 = vsub.s32 0, %v5700
    %v5702 = vrot.slane %v5697, %v5701
    %v5703 = vlaneseq
    %v5704 = vshrl.u32 %v5703, 7
    %v5705 = vsub.s32 1, %v5704
    %v5706 = vrot.slane %v5697, %v5705
    %v5707 = vlaneseq
    %v5708 = vshrl.u32 %v5707, 7
    %v5709 = vsub.s32 2, %v5708
    %v5710 = vrot.slane %v5697, %v5709
    %v5746 = vunpack.c.l.b16 %v5549
    %v5747 = vunpack.c.h.b16 %v5549
    %v5748 = vunpack.c.l.b16 %v5550
    %v5749 = vunpack.c.l.b16 %v5551
    %v5750 = vunpack.c.h.b16 %v5551
    %v5751 = vunpack.c.l.b16 %v5552
    %v5752 = vunpack.c.l.b16 %v5553
    %v5753 = vunpack.c.h.b16 %v5553
    %v5754 = vunpack.c.l.b16 %v5554
    %v5755 = vunpack.c.l.b16 %v5555
    %v5756 = vunpack.c.h.b16 %v5555
    %v5757 = vunpack.c.l.b16 %v5556
    %v5758 = vunpack.c.l.b16 %v5557
    %v5759 = vunpack.c.h.b16 %v5557
    %v5760 = vunpack.c.l.b16 %v5558
    %v5761 = vunpack.c.l.b16 %v5559
    %v5762 = vunpack.c.h.b16 %v5559
    %v5763 = vunpack.c.l.b16 %v5560
    %v5764 = vunpack.c.l.b16 %v5561
    %v5765 = vunpack.c.h.b16 %v5561
    %v5766 = vunpack.c.l.b16 %v5562
    %v5767 = vunpack.c.l.b16 %v5563
    %v5768 = vunpack.c.h.b16 %v5563
    %v5769 = vunpack.c.l.b16 %v5564
    %v5770 = vunpack.c.l.b16 %v5565
    %v5771 = vunpack.c.h.b16 %v5565
    %v5772 = vunpack.c.l.b16 %v5566
    %v5773 = vunpack.c.l.b16 %v5567
    %v5774 = vunpack.c.h.b16 %v5567
    %v5775 = vunpack.c.l.b16 %v5568
    %v5776 = vunpack.c.l.b16 %v5569
    %v5777 = vunpack.c.h.b16 %v5569
    %v5778 = vunpack.c.l.b16 %v5570
    %v5779 = vunpack.c.l.b16 %v5571
    %v5780 = vunpack.c.h.b16 %v5571
    %v5781 = vunpack.c.l.b16 %v5572
    %v5782 = vunpack.c.l.b16 %v5573
    %v5783 = vunpack.c.h.b16 %v5573
    %v5784 = vunpack.c.l.b16 %v5574
    %v5785 = vunpack.c.l.b16 %v5575
    %v5786 = vunpack.c.h.b16 %v5575
    %v5787 = vunpack.c.l.b16 %v5576
    %v5788 = vunpack.c.l.b16 %v5577
    %v5789 = vunpack.c.h.b16 %v5577
    %v5790 = vunpack.c.l.b16 %v5578
    %v5791 = vunpack.c.l.b16 %v5579
    %v5792 = vunpack.c.h.b16 %v5579
    %v5793 = vunpack.c.l.b16 %v5580
    %v5794 = vpack.c.b16 %v5749, %v5746
    %v5795 = vpack.c.b16 %v5750, %v5747
    %v5796 = vpack.c.b16 %v5751, %v5748
    %v5797 = vpack.c.b16 %v5755, %v5752
    %v5798 = vpack.c.b16 %v5756, %v5753
    %v5799 = vpack.c.b16 %v5757, %v5754
    %v5800 = vpack.c.b16 %v5761, %v5758
    %v5801 = vpack.c.b16 %v5762, %v5759
    %v5802 = vpack.c.b16 %v5763, %v5760
    %v5803 = vpack.c.b16 %v5767, %v5764
    %v5804 = vpack.c.b16 %v5768, %v5765
    %v5805 = vpack.c.b16 %v5769, %v5766
    %v5806 = vpack.c.b16 %v5773, %v5770
    %v5807 = vpack.c.b16 %v5774, %v5771
    %v5808 = vpack.c.b16 %v5775, %v5772
    %v5809 = vpack.c.b16 %v5779, %v5776
    %v5810 = vpack.c.b16 %v5780, %v5777
    %v5811 = vpack.c.b16 %v5781, %v5778
    %v5812 = vpack.c.b16 %v5785, %v5782
    %v5813 = vpack.c.b16 %v5786, %v5783
    %v5814 = vpack.c.b16 %v5787, %v5784
    %v5815 = vpack.c.b16 %v5791, %v5788
    %v5816 = vpack.c.b16 %v5792, %v5789
    %v5817 = vpack.c.b16 %v5793, %v5790
    %5842 = vmatprep.subr.bf16.mxu0 %v5795
    %5843 = vmatpush1.bf16.msra.mxu0 %v5794
    %5844 = vmatprep.subr.bf16.mxu0 %v5798
    %5845 = vmatpush1.bf16.msra.mxu0 %v5797
    %5846 = vmatprep.subr.bf16.mxu0 %v5801
    %5847 = vmatpush1.bf16.msra.mxu0 %v5800
    %5848 = vmatprep.subr.bf16.mxu0 %v5804
    %5849 = vmatpush1.bf16.msra.mxu0 %v5803
    %5850 = vmatprep.subr.bf16.mxu0 %v5807
    %5851 = vmatpush1.bf16.msra.mxu0 %v5806
    %5852 = vmatprep.subr.bf16.mxu0 %v5810
    %5853 = vmatpush1.bf16.msra.mxu0 %v5809
    %5854 = vmatprep.subr.bf16.mxu0 %v5813
    %5855 = vmatpush1.bf16.msra.mxu0 %v5812
    %5856 = vmatprep.subr.bf16.mxu0 %v5816
    %5857 = vmatpush1.bf16.msra.mxu0 %v5815
    %5858 = vmatprep.subr.bf16.mxu0 0
    %5859 = vmatpush1.bf16.msra.mxu0 0
    %5860 = vmatprep.subr.bf16.mxu0 0
    %5861 = vmatpush1.bf16.msra.mxu0 0
    %5862 = vmatprep.subr.bf16.mxu0 0
    %5863 = vmatpush1.bf16.msra.mxu0 0
    %5864 = vmatprep.subr.bf16.mxu0 0
    %5865 = vmatpush1.bf16.msra.mxu0 0
    %5866 = vmatprep.subr.bf16.mxu0 0
    %5867 = vmatpush1.bf16.msra.mxu0 0
    %5868 = vmatprep.subr.bf16.mxu0 0
    %5869 = vmatpush1.bf16.msra.mxu0 0
    %5870 = vmatprep.subr.bf16.mxu0 0
    %5871 = vmatpush1.bf16.msra.mxu0 0
    %5872 = vmatprep.subr.bf16.mxu0 0
    %5873 = vmatpush1.bf16.msra.mxu0 0
    %5874 = vmatprep.mubr.bf16.mxu0 0
    %5875 = vmatmul.mubr.bf16.gmra.mrb[0].mxu0 %v5547
    %v5876 = vpop.f32.mrb[0].mxu0
    %v5877 = vadd.f32 %v5702, %v5876
    %v5878 = vpop.f32.mrb[0].mxu0
    %v5879 = vadd.f32 %v5706, %v5878
    %v5880 = vpop.f32.mrb[0].mxu0
    %v5881 = vadd.f32 %v5702, %v5880
    %v5882 = vpop.f32.mrb[0].mxu0
    %v5883 = vadd.f32 %v5706, %v5882
    %5884 = vdwg.mxu0
    %5885 = vmatprep.subr.bf16.mxu0 0
    %5886 = vmatpush1.bf16.msra.mxu0 %v5796
    %5887 = vmatprep.subr.bf16.mxu0 0
    %5888 = vmatpush1.bf16.msra.mxu0 %v5799
    %5889 = vmatprep.subr.bf16.mxu0 0
    %5890 = vmatpush1.bf16.msra.mxu0 %v5802
    %5891 = vmatprep.subr.bf16.mxu0 0
    %5892 = vmatpush1.bf16.msra.mxu0 %v5805
    %5893 = vmatprep.subr.bf16.mxu0 0
    %5894 = vmatpush1.bf16.msra.mxu0 %v5808
    %5895 = vmatprep.subr.bf16.mxu0 0
    %5896 = vmatpush1.bf16.msra.mxu0 %v5811
    %5897 = vmatprep.subr.bf16.mxu0 0
    %5898 = vmatpush1.bf16.msra.mxu0 %v5814
    %5899 = vmatprep.subr.bf16.mxu0 0
    %5900 = vmatpush1.bf16.msra.mxu0 %v5817
    %5901 = vmatprep.subr.bf16.mxu0 0
    %5902 = vmatpush1.bf16.msra.mxu0 0
    %5903 = vmatprep.subr.bf16.mxu0 0
    %5904 = vmatpush1.bf16.msra.mxu0 0
    %5905 = vmatprep.subr.bf16.mxu0 0
    %5906 = vmatpush1.bf16.msra.mxu0 0
    %5907 = vmatprep.subr.bf16.mxu0 0
    %5908 = vmatpush1.bf16.msra.mxu0 0
    %5909 = vmatprep.subr.bf16.mxu0 0
    %5910 = vmatpush1.bf16.msra.mxu0 0
    %5911 = vmatprep.subr.bf16.mxu0 0
    %5912 = vmatpush1.bf16.msra.mxu0 0
    %5913 = vmatprep.subr.bf16.mxu0 0
    %5914 = vmatpush1.bf16.msra.mxu0 0
    %5915 = vmatprep.subr.bf16.mxu0 0
    %5916 = vmatpush1.bf16.msra.mxu0 0
    %5917 = vmatprep.mubr.bf16.mxu0 0
    %5918 = vmatmul.mubr.bf16.gmra.mrb[0].mxu0 %v5547
    %v5919 = vpop.f32.mrb[0].mxu0
    %v5920 = vadd.f32 %v5710, %v5919
    %v5921 = vpop.f32.mrb[0].mxu0
    %v5922 = vpop.f32.mrb[0].mxu0
    %v5923 = vadd.f32 %v5710, %v5922
    %v5924 = vpop.f32.mrb[0].mxu0
    %5925 = vdwg.mxu0
    %v5926 = vpack.c.bf16 %v5881, %v5877
    %v5927 = vpack.c.bf16 %v5883, %v5879
    %v5928 = vpack.c.bf16 %v5923, %v5920
    %5930 = vrot.lane.b32.xlu0 %v5926, 96
    %v5931 = vpop.permute.xlu0 %5930
    %5932 = vrot.lane.b32.xlu0 %v5926, 64
    %v5933 = vpop.permute.xlu0 %5932
    %5934 = vrot.lane.b32.xlu0 %v5926, 32
    %v5935 = vpop.permute.xlu0 %5934
    %v5936 = vcombine.high %v5926, %v5926
    %v5938 = vunpack.c.l.s4 1966171168
    %v5939 = vunpack.c.0.s8 %v5938
    %v5940 = vlaneseq
    %v5941 = vshrl.u32 %v5940, 7
    %v5942 = vsub.s32 %v5939, %v5941
    %v5943 = vrot.slane %v5926, %v5942
    %v5945 = vunpack.c.l.s4 1966171168
    %v5946 = vunpack.c.0.s8 %v5945
    %v5947 = vlaneseq
    %v5948 = vshrl.u32 %v5947, 7
    %v5949 = vsub.s32 %v5946, %v5948
    %v5950 = vrot.slane %v5936, %v5949
    %v5951 = vcombine.high %v5943, %v5943
    %v5952 = vcombine.high %v5950, %v5950
    %v5954 = vunpack.c.l.s4 1966171168
    %v5955 = vunpack.c.0.s8 %v5954
    %v5956 = vlaneseq
    %v5957 = vshrl.u32 %v5956, 7
    %v5958 = vsub.s32 %v5955, %v5957
    %v5959 = vrot.slane %v5943, %v5958
    %v5961 = vunpack.c.l.s4 1966171168
    %v5962 = vunpack.c.0.s8 %v5961
    %v5963 = vlaneseq
    %v5964 = vshrl.u32 %v5963, 7
    %v5965 = vsub.s32 %v5962, %v5964
    %v5966 = vrot.slane %v5950, %v5965
    %v5968 = vunpack.c.l.s4 1966171168
    %v5969 = vunpack.c.0.s8 %v5968
    %v5970 = vlaneseq
    %v5971 = vshrl.u32 %v5970, 7
    %v5972 = vsub.s32 %v5969, %v5971
    %v5973 = vrot.slane %v5951, %v5972
    %v5975 = vunpack.c.l.s4 1966171168
    %v5976 = vunpack.c.0.s8 %v5975
    %v5977 = vlaneseq
    %v5978 = vshrl.u32 %v5977, 7
    %v5979 = vsub.s32 %v5976, %v5978
    %v5980 = vrot.slane %v5952, %v5979
    %v5981 = vcombine.high %v5959, %v5959
    %v5982 = vcombine.high %v5966, %v5966
    %v5983 = vcombine.high %v5973, %v5973
    %v5984 = vcombine.high %v5980, %v5980
    %v5985 = vcombine.high %v5931, %v5931
    %v5987 = vunpack.c.l.s4 1966171168
    %v5988 = vunpack.c.0.s8 %v5987
    %v5989 = vlaneseq
    %v5990 = vshrl.u32 %v5989, 7
    %v5991 = vsub.s32 %v5988, %v5990
    %v5992 = vrot.slane %v5931, %v5991
    %v5994 = vunpack.c.l.s4 1966171168
    %v5995 = vunpack.c.0.s8 %v5994
    %v5996 = vlaneseq
    %v5997 = vshrl.u32 %v5996, 7
    %v5998 = vsub.s32 %v5995, %v5997
    %v5999 = vrot.slane %v5985, %v5998
    %v6000 = vcombine.high %v5992, %v5992
    %v6001 = vcombine.high %v5999, %v5999
    %v6003 = vunpack.c.l.s4 1966171168
    %v6004 = vunpack.c.0.s8 %v6003
    %v6005 = vlaneseq
    %v6006 = vshrl.u32 %v6005, 7
    %v6007 = vsub.s32 %v6004, %v6006
    %v6008 = vrot.slane %v5992, %v6007
    %v6010 = vunpack.c.l.s4 1966171168
    %v6011 = vunpack.c.0.s8 %v6010
    %v6012 = vlaneseq
    %v6013 = vshrl.u32 %v6012, 7
    %v6014 = vsub.s32 %v6011, %v6013
    %v6015 = vrot.slane %v5999, %v6014
    %v6017 = vunpack.c.l.s4 1966171168
    %v6018 = vunpack.c.0.s8 %v6017
    %v6019 = vlaneseq
    %v6020 = vshrl.u32 %v6019, 7
    %v6021 = vsub.s32 %v6018, %v6020
    %v6022 = vrot.slane %v6000, %v6021
    %v6024 = vunpack.c.l.s4 1966171168
    %v6025 = vunpack.c.0.s8 %v6024
    %v6026 = vlaneseq
    %v6027 = vshrl.u32 %v6026, 7
    %v6028 = vsub.s32 %v6025, %v6027
    %v6029 = vrot.slane %v6001, %v6028
    %v6030 = vcombine.high %v6008, %v6008
    %v6031 = vcombine.high %v6015, %v6015
    %v6032 = vcombine.high %v6022, %v6022
    %v6033 = vcombine.high %v6029, %v6029
    %v6034 = vcombine.high %v5933, %v5933
    %v6036 = vunpack.c.l.s4 1966171168
    %v6037 = vunpack.c.0.s8 %v6036
    %v6038 = vlaneseq
    %v6039 = vshrl.u32 %v6038, 7
    %v6040 = vsub.s32 %v6037, %v6039
    %v6041 = vrot.slane %v5933, %v6040
    %v6043 = vunpack.c.l.s4 1966171168
    %v6044 = vunpack.c.0.s8 %v6043
    %v6045 = vlaneseq
    %v6046 = vshrl.u32 %v6045, 7
    %v6047 = vsub.s32 %v6044, %v6046
    %v6048 = vrot.slane %v6034, %v6047
    %v6049 = vcombine.high %v6041, %v6041
    %v6050 = vcombine.high %v6048, %v6048
    %v6052 = vunpack.c.l.s4 1966171168
    %v6053 = vunpack.c.0.s8 %v6052
    %v6054 = vlaneseq
    %v6055 = vshrl.u32 %v6054, 7
    %v6056 = vsub.s32 %v6053, %v6055
    %v6057 = vrot.slane %v6041, %v6056
    %v6059 = vunpack.c.l.s4 1966171168
    %v6060 = vunpack.c.0.s8 %v6059
    %v6061 = vlaneseq
    %v6062 = vshrl.u32 %v6061, 7
    %v6063 = vsub.s32 %v6060, %v6062
    %v6064 = vrot.slane %v6048, %v6063
    %v6066 = vunpack.c.l.s4 1966171168
    %v6067 = vunpack.c.0.s8 %v6066
    %v6068 = vlaneseq
    %v6069 = vshrl.u32 %v6068, 7
    %v6070 = vsub.s32 %v6067, %v6069
    %v6071 = vrot.slane %v6049, %v6070
    %v6073 = vunpack.c.l.s4 1966171168
    %v6074 = vunpack.c.0.s8 %v6073
    %v6075 = vlaneseq
    %v6076 = vshrl.u32 %v6075, 7
    %v6077 = vsub.s32 %v6074, %v6076
    %v6078 = vrot.slane %v6050, %v6077
    %v6079 = vcombine.high %v6057, %v6057
    %v6080 = vcombine.high %v6064, %v6064
    %v6081 = vcombine.high %v6071, %v6071
    %v6082 = vcombine.high %v6078, %v6078
    %v6083 = vcombine.high %v5935, %v5935
    %v6085 = vunpack.c.l.s4 1966171168
    %v6086 = vunpack.c.0.s8 %v6085
    %v6087 = vlaneseq
    %v6088 = vshrl.u32 %v6087, 7
    %v6089 = vsub.s32 %v6086, %v6088
    %v6090 = vrot.slane %v5935, %v6089
    %v6092 = vunpack.c.l.s4 1966171168
    %v6093 = vunpack.c.0.s8 %v6092
    %v6094 = vlaneseq
    %v6095 = vshrl.u32 %v6094, 7
    %v6096 = vsub.s32 %v6093, %v6095
    %v6097 = vrot.slane %v6083, %v6096
    %v6098 = vcombine.high %v6090, %v6090
    %v6099 = vcombine.high %v6097, %v6097
    %v6101 = vunpack.c.l.s4 1966171168
    %v6102 = vunpack.c.0.s8 %v6101
    %v6103 = vlaneseq
    %v6104 = vshrl.u32 %v6103, 7
    %v6105 = vsub.s32 %v6102, %v6104
    %v6106 = vrot.slane %v6090, %v6105
    %v6108 = vunpack.c.l.s4 1966171168
    %v6109 = vunpack.c.0.s8 %v6108
    %v6110 = vlaneseq
    %v6111 = vshrl.u32 %v6110, 7
    %v6112 = vsub.s32 %v6109, %v6111
    %v6113 = vrot.slane %v6097, %v6112
    %v6115 = vunpack.c.l.s4 1966171168
    %v6116 = vunpack.c.0.s8 %v6115
    %v6117 = vlaneseq
    %v6118 = vshrl.u32 %v6117, 7
    %v6119 = vsub.s32 %v6116, %v6118
    %v6120 = vrot.slane %v6098, %v6119
    %v6122 = vunpack.c.l.s4 1966171168
    %v6123 = vunpack.c.0.s8 %v6122
    %v6124 = vlaneseq
    %v6125 = vshrl.u32 %v6124, 7
    %v6126 = vsub.s32 %v6123, %v6125
    %v6127 = vrot.slane %v6099, %v6126
    %v6128 = vcombine.high %v6106, %v6106
    %v6129 = vcombine.high %v6113, %v6113
    %v6130 = vcombine.high %v6120, %v6120
    %v6131 = vcombine.high %v6127, %v6127
    %6133 = vrot.lane.b32.xlu0 %v5927, 96
    %v6134 = vpop.permute.xlu0 %6133
    %6135 = vrot.lane.b32.xlu0 %v5927, 64
    %v6136 = vpop.permute.xlu0 %6135
    %6137 = vrot.lane.b32.xlu0 %v5927, 32
    %v6138 = vpop.permute.xlu0 %6137
    %v6139 = vcombine.high %v5927, %v5927
    %v6141 = vunpack.c.l.s4 1966171168
    %v6142 = vunpack.c.0.s8 %v6141
    %v6143 = vlaneseq
    %v6144 = vshrl.u32 %v6143, 7
    %v6145 = vsub.s32 %v6142, %v6144
    %v6146 = vrot.slane %v5927, %v6145
    %v6148 = vunpack.c.l.s4 1966171168
    %v6149 = vunpack.c.0.s8 %v6148
    %v6150 = vlaneseq
    %v6151 = vshrl.u32 %v6150, 7
    %v6152 = vsub.s32 %v6149, %v6151
    %v6153 = vrot.slane %v6139, %v6152
    %v6154 = vcombine.high %v6146, %v6146
    %v6155 = vcombine.high %v6153, %v6153
    %v6157 = vunpack.c.l.s4 1966171168
    %v6158 = vunpack.c.0.s8 %v6157
    %v6159 = vlaneseq
    %v6160 = vshrl.u32 %v6159, 7
    %v6161 = vsub.s32 %v6158, %v6160
    %v6162 = vrot.slane %v6146, %v6161
    %v6164 = vunpack.c.l.s4 1966171168
    %v6165 = vunpack.c.0.s8 %v6164
    %v6166 = vlaneseq
    %v6167 = vshrl.u32 %v6166, 7
    %v6168 = vsub.s32 %v6165, %v6167
    %v6169 = vrot.slane %v6153, %v6168
    %v6171 = vunpack.c.l.s4 1966171168
    %v6172 = vunpack.c.0.s8 %v6171
    %v6173 = vlaneseq
    %v6174 = vshrl.u32 %v6173, 7
    %v6175 = vsub.s32 %v6172, %v6174
    %v6176 = vrot.slane %v6154, %v6175
    %v6178 = vunpack.c.l.s4 1966171168
    %v6179 = vunpack.c.0.s8 %v6178
    %v6180 = vlaneseq
    %v6181 = vshrl.u32 %v6180, 7
    %v6182 = vsub.s32 %v6179, %v6181
    %v6183 = vrot.slane %v6155, %v6182
    %v6184 = vcombine.high %v6162, %v6162
    %v6185 = vcombine.high %v6169, %v6169
    %v6186 = vcombine.high %v6176, %v6176
    %v6187 = vcombine.high %v6183, %v6183
    %v6188 = vcombine.high %v6134, %v6134
    %v6190 = vunpack.c.l.s4 1966171168
    %v6191 = vunpack.c.0.s8 %v6190
    %v6192 = vlaneseq
    %v6193 = vshrl.u32 %v6192, 7
    %v6194 = vsub.s32 %v6191, %v6193
    %v6195 = vrot.slane %v6134, %v6194
    %v6197 = vunpack.c.l.s4 1966171168
    %v6198 = vunpack.c.0.s8 %v6197
    %v6199 = vlaneseq
    %v6200 = vshrl.u32 %v6199, 7
    %v6201 = vsub.s32 %v6198, %v6200
    %v6202 = vrot.slane %v6188, %v6201
    %v6203 = vcombine.high %v6195, %v6195
    %v6204 = vcombine.high %v6202, %v6202
    %v6206 = vunpack.c.l.s4 1966171168
    %v6207 = vunpack.c.0.s8 %v6206
    %v6208 = vlaneseq
    %v6209 = vshrl.u32 %v6208, 7
    %v6210 = vsub.s32 %v6207, %v6209
    %v6211 = vrot.slane %v6195, %v6210
    %v6213 = vunpack.c.l.s4 1966171168
    %v6214 = vunpack.c.0.s8 %v6213
    %v6215 = vlaneseq
    %v6216 = vshrl.u32 %v6215, 7
    %v6217 = vsub.s32 %v6214, %v6216
    %v6218 = vrot.slane %v6202, %v6217
    %v6220 = vunpack.c.l.s4 1966171168
    %v6221 = vunpack.c.0.s8 %v6220
    %v6222 = vlaneseq
    %v6223 = vshrl.u32 %v6222, 7
    %v6224 = vsub.s32 %v6221, %v6223
    %v6225 = vrot.slane %v6203, %v6224
    %v6227 = vunpack.c.l.s4 1966171168
    %v6228 = vunpack.c.0.s8 %v6227
    %v6229 = vlaneseq
    %v6230 = vshrl.u32 %v6229, 7
    %v6231 = vsub.s32 %v6228, %v6230
    %v6232 = vrot.slane %v6204, %v6231
    %v6233 = vcombine.high %v6211, %v6211
    %v6234 = vcombine.high %v6218, %v6218
    %v6235 = vcombine.high %v6225, %v6225
    %v6236 = vcombine.high %v6232, %v6232
    %v6237 = vcombine.high %v6136, %v6136
    %v6239 = vunpack.c.l.s4 1966171168
    %v6240 = vunpack.c.0.s8 %v6239
    %v6241 = vlaneseq
    %v6242 = vshrl.u32 %v6241, 7
    %v6243 = vsub.s32 %v6240, %v6242
    %v6244 = vrot.slane %v6136, %v6243
    %v6246 = vunpack.c.l.s4 1966171168
    %v6247 = vunpack.c.0.s8 %v6246
    %v6248 = vlaneseq
    %v6249 = vshrl.u32 %v6248, 7
    %v6250 = vsub.s32 %v6247, %v6249
    %v6251 = vrot.slane %v6237, %v6250
    %v6252 = vcombine.high %v6244, %v6244
    %v6253 = vcombine.high %v6251, %v6251
    %v6255 = vunpack.c.l.s4 1966171168
    %v6256 = vunpack.c.0.s8 %v6255
    %v6257 = vlaneseq
    %v6258 = vshrl.u32 %v6257, 7
    %v6259 = vsub.s32 %v6256, %v6258
    %v6260 = vrot.slane %v6244, %v6259
    %v6262 = vunpack.c.l.s4 1966171168
    %v6263 = vunpack.c.0.s8 %v6262
    %v6264 = vlaneseq
    %v6265 = vshrl.u32 %v6264, 7
    %v6266 = vsub.s32 %v6263, %v6265
    %v6267 = vrot.slane %v6251, %v6266
    %v6269 = vunpack.c.l.s4 1966171168
    %v6270 = vunpack.c.0.s8 %v6269
    %v6271 = vlaneseq
    %v6272 = vshrl.u32 %v6271, 7
    %v6273 = vsub.s32 %v6270, %v6272
    %v6274 = vrot.slane %v6252, %v6273
    %v6276 = vunpack.c.l.s4 1966171168
    %v6277 = vunpack.c.0.s8 %v6276
    %v6278 = vlaneseq
    %v6279 = vshrl.u32 %v6278, 7
    %v6280 = vsub.s32 %v6277, %v6279
    %v6281 = vrot.slane %v6253, %v6280
    %v6282 = vcombine.high %v6260, %v6260
    %v6283 = vcombine.high %v6267, %v6267
    %v6284 = vcombine.high %v6274, %v6274
    %v6285 = vcombine.high %v6281, %v6281
    %v6286 = vcombine.high %v6138, %v6138
    %v6288 = vunpack.c.l.s4 1966171168
    %v6289 = vunpack.c.0.s8 %v6288
    %v6290 = vlaneseq
    %v6291 = vshrl.u32 %v6290, 7
    %v6292 = vsub.s32 %v6289, %v6291
    %v6293 = vrot.slane %v6138, %v6292
    %v6295 = vunpack.c.l.s4 1966171168
    %v6296 = vunpack.c.0.s8 %v6295
    %v6297 = vlaneseq
    %v6298 = vshrl.u32 %v6297, 7
    %v6299 = vsub.s32 %v6296, %v6298
    %v6300 = vrot.slane %v6286, %v6299
    %v6301 = vcombine.high %v6293, %v6293
    %v6302 = vcombine.high %v6300, %v6300
    %v6304 = vunpack.c.l.s4 1966171168
    %v6305 = vunpack.c.0.s8 %v6304
    %v6306 = vlaneseq
    %v6307 = vshrl.u32 %v6306, 7
    %v6308 = vsub.s32 %v6305, %v6307
    %v6309 = vrot.slane %v6293, %v6308
    %v6311 = vunpack.c.l.s4 1966171168
    %v6312 = vunpack.c.0.s8 %v6311
    %v6313 = vlaneseq
    %v6314 = vshrl.u32 %v6313, 7
    %v6315 = vsub.s32 %v6312, %v6314
    %v6316 = vrot.slane %v6300, %v6315
    %v6318 = vunpack.c.l.s4 1966171168
    %v6319 = vunpack.c.0.s8 %v6318
    %v6320 = vlaneseq
    %v6321 = vshrl.u32 %v6320, 7
    %v6322 = vsub.s32 %v6319, %v6321
    %v6323 = vrot.slane %v6301, %v6322
    %v6325 = vunpack.c.l.s4 1966171168
    %v6326 = vunpack.c.0.s8 %v6325
    %v6327 = vlaneseq
    %v6328 = vshrl.u32 %v6327, 7
    %v6329 = vsub.s32 %v6326, %v6328
    %v6330 = vrot.slane %v6302, %v6329
    %v6331 = vcombine.high %v6309, %v6309
    %v6332 = vcombine.high %v6316, %v6316
    %v6333 = vcombine.high %v6323, %v6323
    %v6334 = vcombine.high %v6330, %v6330
    %6336 = vrot.lane.b32.xlu0 %v5928, 96
    %v6337 = vpop.permute.xlu0 %6336
    %6338 = vrot.lane.b32.xlu0 %v5928, 64
    %v6339 = vpop.permute.xlu0 %6338
    %6340 = vrot.lane.b32.xlu0 %v5928, 32
    %v6341 = vpop.permute.xlu0 %6340
    %v6342 = vcombine.high %v5928, %v5928
    %v6344 = vunpack.c.l.s4 1966171168
    %v6345 = vunpack.c.0.s8 %v6344
    %v6346 = vlaneseq
    %v6347 = vshrl.u32 %v6346, 7
    %v6348 = vsub.s32 %v6345, %v6347
    %v6349 = vrot.slane %v5928, %v6348
    %v6351 = vunpack.c.l.s4 1966171168
    %v6352 = vunpack.c.0.s8 %v6351
    %v6353 = vlaneseq
    %v6354 = vshrl.u32 %v6353, 7
    %v6355 = vsub.s32 %v6352, %v6354
    %v6356 = vrot.slane %v6342, %v6355
    %v6357 = vcombine.high %v6349, %v6349
    %v6358 = vcombine.high %v6356, %v6356
    %v6360 = vunpack.c.l.s4 1966171168
    %v6361 = vunpack.c.0.s8 %v6360
    %v6362 = vlaneseq
    %v6363 = vshrl.u32 %v6362, 7
    %v6364 = vsub.s32 %v6361, %v6363
    %v6365 = vrot.slane %v6349, %v6364
    %v6367 = vunpack.c.l.s4 1966171168
    %v6368 = vunpack.c.0.s8 %v6367
    %v6369 = vlaneseq
    %v6370 = vshrl.u32 %v6369, 7
    %v6371 = vsub.s32 %v6368, %v6370
    %v6372 = vrot.slane %v6356, %v6371
    %v6374 = vunpack.c.l.s4 1966171168
    %v6375 = vunpack.c.0.s8 %v6374
    %v6376 = vlaneseq
    %v6377 = vshrl.u32 %v6376, 7
    %v6378 = vsub.s32 %v6375, %v6377
    %v6379 = vrot.slane %v6357, %v6378
    %v6381 = vunpack.c.l.s4 1966171168
    %v6382 = vunpack.c.0.s8 %v6381
    %v6383 = vlaneseq
    %v6384 = vshrl.u32 %v6383, 7
    %v6385 = vsub.s32 %v6382, %v6384
    %v6386 = vrot.slane %v6358, %v6385
    %v6387 = vcombine.high %v6365, %v6365
    %v6388 = vcombine.high %v6372, %v6372
    %v6389 = vcombine.high %v6379, %v6379
    %v6390 = vcombine.high %v6386, %v6386
    %v6391 = vcombine.high %v6337, %v6337
    %v6393 = vunpack.c.l.s4 1966171168
    %v6394 = vunpack.c.0.s8 %v6393
    %v6395 = vlaneseq
    %v6396 = vshrl.u32 %v6395, 7
    %v6397 = vsub.s32 %v6394, %v6396
    %v6398 = vrot.slane %v6337, %v6397
    %v6400 = vunpack.c.l.s4 1966171168
    %v6401 = vunpack.c.0.s8 %v6400
    %v6402 = vlaneseq
    %v6403 = vshrl.u32 %v6402, 7
    %v6404 = vsub.s32 %v6401, %v6403
    %v6405 = vrot.slane %v6391, %v6404
    %v6406 = vcombine.high %v6398, %v6398
    %v6407 = vcombine.high %v6405, %v6405
    %v6409 = vunpack.c.l.s4 1966171168
    %v6410 = vunpack.c.0.s8 %v6409
    %v6411 = vlaneseq
    %v6412 = vshrl.u32 %v6411, 7
    %v6413 = vsub.s32 %v6410, %v6412
    %v6414 = vrot.slane %v6398, %v6413
    %v6416 = vunpack.c.l.s4 1966171168
    %v6417 = vunpack.c.0.s8 %v6416
    %v6418 = vlaneseq
    %v6419 = vshrl.u32 %v6418, 7
    %v6420 = vsub.s32 %v6417, %v6419
    %v6421 = vrot.slane %v6405, %v6420
    %v6423 = vunpack.c.l.s4 1966171168
    %v6424 = vunpack.c.0.s8 %v6423
    %v6425 = vlaneseq
    %v6426 = vshrl.u32 %v6425, 7
    %v6427 = vsub.s32 %v6424, %v6426
    %v6428 = vrot.slane %v6406, %v6427
    %v6430 = vunpack.c.l.s4 1966171168
    %v6431 = vunpack.c.0.s8 %v6430
    %v6432 = vlaneseq
    %v6433 = vshrl.u32 %v6432, 7
    %v6434 = vsub.s32 %v6431, %v6433
    %v6435 = vrot.slane %v6407, %v6434
    %v6436 = vcombine.high %v6414, %v6414
    %v6437 = vcombine.high %v6421, %v6421
    %v6438 = vcombine.high %v6428, %v6428
    %v6439 = vcombine.high %v6435, %v6435
    %v6440 = vcombine.high %v6339, %v6339
    %v6442 = vunpack.c.l.s4 1966171168
    %v6443 = vunpack.c.0.s8 %v6442
    %v6444 = vlaneseq
    %v6445 = vshrl.u32 %v6444, 7
    %v6446 = vsub.s32 %v6443, %v6445
    %v6447 = vrot.slane %v6339, %v6446
    %v6449 = vunpack.c.l.s4 1966171168
    %v6450 = vunpack.c.0.s8 %v6449
    %v6451 = vlaneseq
    %v6452 = vshrl.u32 %v6451, 7
    %v6453 = vsub.s32 %v6450, %v6452
    %v6454 = vrot.slane %v6440, %v6453
    %v6455 = vcombine.high %v6447, %v6447
    %v6456 = vcombine.high %v6454, %v6454
    %v6458 = vunpack.c.l.s4 1966171168
    %v6459 = vunpack.c.0.s8 %v6458
    %v6460 = vlaneseq
    %v6461 = vshrl.u32 %v6460, 7
    %v6462 = vsub.s32 %v6459, %v6461
    %v6463 = vrot.slane %v6447, %v6462
    %v6465 = vunpack.c.l.s4 1966171168
    %v6466 = vunpack.c.0.s8 %v6465
    %v6467 = vlaneseq
    %v6468 = vshrl.u32 %v6467, 7
    %v6469 = vsub.s32 %v6466, %v6468
    %v6470 = vrot.slane %v6454, %v6469
    %v6472 = vunpack.c.l.s4 1966171168
    %v6473 = vunpack.c.0.s8 %v6472
    %v6474 = vlaneseq
    %v6475 = vshrl.u32 %v6474, 7
    %v6476 = vsub.s32 %v6473, %v6475
    %v6477 = vrot.slane %v6455, %v6476
    %v6479 = vunpack.c.l.s4 1966171168
    %v6480 = vunpack.c.0.s8 %v6479
    %v6481 = vlaneseq
    %v6482 = vshrl.u32 %v6481, 7
    %v6483 = vsub.s32 %v6480, %v6482
    %v6484 = vrot.slane %v6456, %v6483
    %v6485 = vcombine.high %v6463, %v6463
    %v6486 = vcombine.high %v6470, %v6470
    %v6487 = vcombine.high %v6477, %v6477
    %v6488 = vcombine.high %v6484, %v6484
    %v6489 = vcombine.high %v6341, %v6341
    %v6491 = vunpack.c.l.s4 1966171168
    %v6492 = vunpack.c.0.s8 %v6491
    %v6493 = vlaneseq
    %v6494 = vshrl.u32 %v6493, 7
    %v6495 = vsub.s32 %v6492, %v6494
    %v6496 = vrot.slane %v6341, %v6495
    %v6498 = vunpack.c.l.s4 1966171168
    %v6499 = vunpack.c.0.s8 %v6498
    %v6500 = vlaneseq
    %v6501 = vshrl.u32 %v6500, 7
    %v6502 = vsub.s32 %v6499, %v6501
    %v6503 = vrot.slane %v6489, %v6502
    %v6504 = vcombine.high %v6496, %v6496
    %v6505 = vcombine.high %v6503, %v6503
    %v6507 = vunpack.c.l.s4 1966171168
    %v6508 = vunpack.c.0.s8 %v6507
    %v6509 = vlaneseq
    %v6510 = vshrl.u32 %v6509, 7
    %v6511 = vsub.s32 %v6508, %v6510
    %v6512 = vrot.slane %v6496, %v6511
    %v6514 = vunpack.c.l.s4 1966171168
    %v6515 = vunpack.c.0.s8 %v6514
    %v6516 = vlaneseq
    %v6517 = vshrl.u32 %v6516, 7
    %v6518 = vsub.s32 %v6515, %v6517
    %v6519 = vrot.slane %v6503, %v6518
    %v6521 = vunpack.c.l.s4 1966171168
    %v6522 = vunpack.c.0.s8 %v6521
    %v6523 = vlaneseq
    %v6524 = vshrl.u32 %v6523, 7
    %v6525 = vsub.s32 %v6522, %v6524
    %v6526 = vrot.slane %v6504, %v6525
    %v6528 = vunpack.c.l.s4 1966171168
    %v6529 = vunpack.c.0.s8 %v6528
    %v6530 = vlaneseq
    %v6531 = vshrl.u32 %v6530, 7
    %v6532 = vsub.s32 %v6529, %v6531
    %v6533 = vrot.slane %v6505, %v6532
    %v6534 = vcombine.high %v6512, %v6512
    %v6535 = vcombine.high %v6519, %v6519
    %v6536 = vcombine.high %v6526, %v6526
    %v6537 = vcombine.high %v6533, %v6533
    %v6539 = vsel %vm1240, %v5959, 0
    %v6542 = vsel %vm1240, %v6162, 0
    %6544 = vmatprep.subr.bf16.mxu0 0
    %6545 = vmatpush1.bf16.xpose.msra.mxu0 %v6542
    %6546 = vmatprep.subr.bf16.mxu0 0
    %6547 = vmatpush1.bf16.xpose.msra.mxu0 0
    %6548 = vmatprep.subr.bf16.mxu0 0
    %6549 = vmatpush1.bf16.xpose.msra.mxu0 0
    %6550 = vmatprep.subr.bf16.mxu0 0
    %6551 = vmatpush1.bf16.xpose.msra.mxu0 0
    %6552 = vmatprep.subr.bf16.mxu0 0
    %6553 = vmatpush1.bf16.xpose.msra.mxu0 0
    %6554 = vmatprep.subr.bf16.mxu0 0
    %6555 = vmatpush1.bf16.xpose.msra.mxu0 0
    %6556 = vmatprep.subr.bf16.mxu0 0
    %6557 = vmatpush1.bf16.xpose.msra.mxu0 0
    %6558 = vmatprep.subr.bf16.mxu0 0
    %6559 = vmatpush1.bf16.xpose.msra.mxu0 0
    %6560 = vmatprep.subr.bf16.mxu0 0
    %6561 = vmatpush1.bf16.xpose.msra.mxu0 0
    %6562 = vmatprep.subr.bf16.mxu0 0
    %6563 = vmatpush1.bf16.xpose.msra.mxu0 0
    %6564 = vmatprep.subr.bf16.mxu0 0
    %6565 = vmatpush1.bf16.xpose.msra.mxu0 0
    %6566 = vmatprep.subr.bf16.mxu0 0
    %6567 = vmatpush1.bf16.xpose.msra.mxu0 0
    %6568 = vmatprep.subr.bf16.mxu0 0
    %6569 = vmatpush1.bf16.xpose.msra.mxu0 0
    %6570 = vmatprep.subr.bf16.mxu0 0
    %6571 = vmatpush1.bf16.xpose.msra.mxu0 0
    %6572 = vmatprep.subr.bf16.mxu0 0
    %6573 = vmatpush1.bf16.xpose.msra.mxu0 0
    %6574 = vmatprep.subr.bf16.mxu0 0
    %6575 = vmatpush1.bf16.xpose.msra.mxu0 0
    %6576 = vmatprep.mubr.bf16.mxu0 0
    %6577 = vmatmul.mubr.bf16.gmra.mrb[0].mxu0 %v6539
    %v6578 = vpop.f32.mrb[0].mxu0
    %v6579 = vadd.f32 0.0, %v6578
    %v6580 = vpop.f32.mrb[0].mxu0
    %v6581 = vpop.f32.mrb[0].mxu0
    %v6582 = vpop.f32.mrb[0].mxu0
    %6583 = vdwg.mxu0
    %v6585 = vsel %vm1240, %v5973, 0
    %v6588 = vsel %vm1240, %v6176, 0
    %6590 = vmatprep.subr.bf16.mxu0 0
    %6591 = vmatpush1.bf16.xpose.msra.mxu0 %v6588
    %6592 = vmatprep.subr.bf16.mxu0 0
    %6593 = vmatpush1.bf16.xpose.msra.mxu0 0
    %6594 = vmatprep.subr.bf16.mxu0 0
    %6595 = vmatpush1.bf16.xpose.msra.mxu0 0
    %6596 = vmatprep.subr.bf16.mxu0 0
    %6597 = vmatpush1.bf16.xpose.msra.mxu0 0
    %6598 = vmatprep.subr.bf16.mxu0 0
    %6599 = vmatpush1.bf16.xpose.msra.mxu0 0
    %6600 = vmatprep.subr.bf16.mxu0 0
    %6601 = vmatpush1.bf16.xpose.msra.mxu0 0
    %6602 = vmatprep.subr.bf16.mxu0 0
    %6603 = vmatpush1.bf16.xpose.msra.mxu0 0
    %6604 = vmatprep.subr.bf16.mxu0 0
    %6605 = vmatpush1.bf16.xpose.msra.mxu0 0
    %6606 = vmatprep.subr.bf16.mxu0 0
    %6607 = vmatpush1.bf16.xpose.msra.mxu0 0
    %6608 = vmatprep.subr.bf16.mxu0 0
    %6609 = vmatpush1.bf16.xpose.msra.mxu0 0
    %6610 = vmatprep.subr.bf16.mxu0 0
    %6611 = vmatpush1.bf16.xpose.msra.mxu0 0
    %6612 = vmatprep.subr.bf16.mxu0 0
    %6613 = vmatpush1.bf16.xpose.msra.mxu0 0
    %6614 = vmatprep.subr.bf16.mxu0 0
    %6615 = vmatpush1.bf16.xpose.msra.mxu0 0
    %6616 = vmatprep.subr.bf16.mxu0 0
    %6617 = vmatpush1.bf16.xpose.msra.mxu0 0
    %6618 = vmatprep.subr.bf16.mxu0 0
    %6619 = vmatpush1.bf16.xpose.msra.mxu0 0
    %6620 = vmatprep.subr.bf16.mxu0 0
    %6621 = vmatpush1.bf16.xpose.msra.mxu0 0
    %6622 = vmatprep.mubr.bf16.mxu0 0
    %6623 = vmatmul.mubr.bf16.gmra.mrb[0].mxu0 %v6585
    %v6624 = vpop.f32.mrb[0].mxu0
    %v6625 = vadd.f32 0.0, %v6624
    %v6626 = vpop.f32.mrb[0].mxu0
    %v6627 = vpop.f32.mrb[0].mxu0
    %v6628 = vpop.f32.mrb[0].mxu0
    %6629 = vdwg.mxu0
    %v6631 = vsel %vm1240, %v5981, 0
    %v6634 = vsel %vm1240, %v6184, 0
    %6636 = vmatprep.subr.bf16.mxu0 0
    %6637 = vmatpush1.bf16.xpose.msra.mxu0 %v6634
    %6638 = vmatprep.subr.bf16.mxu0 0
    %6639 = vmatpush1.bf16.xpose.msra.mxu0 0
    %6640 = vmatprep.subr.bf16.mxu0 0
    %6641 = vmatpush1.bf16.xpose.msra.mxu0 0
    %6642 = vmatprep.subr.bf16.mxu0 0
    %6643 = vmatpush1.bf16.xpose.msra.mxu0 0
    %6644 = vmatprep.subr.bf16.mxu0 0
    %6645 = vmatpush1.bf16.xpose.msra.mxu0 0
    %6646 = vmatprep.subr.bf16.mxu0 0
    %6647 = vmatpush1.bf16.xpose.msra.mxu0 0
    %6648 = vmatprep.subr.bf16.mxu0 0
    %6649 = vmatpush1.bf16.xpose.msra.mxu0 0
    %6650 = vmatprep.subr.bf16.mxu0 0
    %6651 = vmatpush1.bf16.xpose.msra.mxu0 0
    %6652 = vmatprep.subr.bf16.mxu0 0
    %6653 = vmatpush1.bf16.xpose.msra.mxu0 0
    %6654 = vmatprep.subr.bf16.mxu0 0
    %6655 = vmatpush1.bf16.xpose.msra.mxu0 0
    %6656 = vmatprep.subr.bf16.mxu0 0
    %6657 = vmatpush1.bf16.xpose.msra.mxu0 0
    %6658 = vmatprep.subr.bf16.mxu0 0
    %6659 = vmatpush1.bf16.xpose.msra.mxu0 0
    %6660 = vmatprep.subr.bf16.mxu0 0
    %6661 = vmatpush1.bf16.xpose.msra.mxu0 0
    %6662 = vmatprep.subr.bf16.mxu0 0
    %6663 = vmatpush1.bf16.xpose.msra.mxu0 0
    %6664 = vmatprep.subr.bf16.mxu0 0
    %6665 = vmatpush1.bf16.xpose.msra.mxu0 0
    %6666 = vmatprep.subr.bf16.mxu0 0
    %6667 = vmatpush1.bf16.xpose.msra.mxu0 0
    %6668 = vmatprep.mubr.bf16.mxu0 0
    %6669 = vmatmul.mubr.bf16.gmra.mrb[0].mxu0 %v6631
    %v6670 = vpop.f32.mrb[0].mxu0
    %v6671 = vadd.f32 0.0, %v6670
    %v6672 = vpop.f32.mrb[0].mxu0
    %v6673 = vpop.f32.mrb[0].mxu0
    %v6674 = vpop.f32.mrb[0].mxu0
    %6675 = vdwg.mxu0
    %v6677 = vsel %vm1240, %v5983, 0
    %v6680 = vsel %vm1240, %v6186, 0
    %6682 = vmatprep.subr.bf16.mxu0 0
    %6683 = vmatpush1.bf16.xpose.msra.mxu0 %v6680
    %6684 = vmatprep.subr.bf16.mxu0 0
    %6685 = vmatpush1.bf16.xpose.msra.mxu0 0
    %6686 = vmatprep.subr.bf16.mxu0 0
    %6687 = vmatpush1.bf16.xpose.msra.mxu0 0
    %6688 = vmatprep.subr.bf16.mxu0 0
    %6689 = vmatpush1.bf16.xpose.msra.mxu0 0
    %6690 = vmatprep.subr.bf16.mxu0 0
    %6691 = vmatpush1.bf16.xpose.msra.mxu0 0
    %6692 = vmatprep.subr.bf16.mxu0 0
    %6693 = vmatpush1.bf16.xpose.msra.mxu0 0
    %6694 = vmatprep.subr.bf16.mxu0 0
    %6695 = vmatpush1.bf16.xpose.msra.mxu0 0
    %6696 = vmatprep.subr.bf16.mxu0 0
    %6697 = vmatpush1.bf16.xpose.msra.mxu0 0
    %6698 = vmatprep.subr.bf16.mxu0 0
    %6699 = vmatpush1.bf16.xpose.msra.mxu0 0
    %6700 = vmatprep.subr.bf16.mxu0 0
    %6701 = vmatpush1.bf16.xpose.msra.mxu0 0
    %6702 = vmatprep.subr.bf16.mxu0 0
    %6703 = vmatpush1.bf16.xpose.msra.mxu0 0
    %6704 = vmatprep.subr.bf16.mxu0 0
    %6705 = vmatpush1.bf16.xpose.msra.mxu0 0
    %6706 = vmatprep.subr.bf16.mxu0 0
    %6707 = vmatpush1.bf16.xpose.msra.mxu0 0
    %6708 = vmatprep.subr.bf16.mxu0 0
    %6709 = vmatpush1.bf16.xpose.msra.mxu0 0
    %6710 = vmatprep.subr.bf16.mxu0 0
    %6711 = vmatpush1.bf16.xpose.msra.mxu0 0
    %6712 = vmatprep.subr.bf16.mxu0 0
    %6713 = vmatpush1.bf16.xpose.msra.mxu0 0
    %6714 = vmatprep.mubr.bf16.mxu0 0
    %6715 = vmatmul.mubr.bf16.gmra.mrb[0].mxu0 %v6677
    %v6716 = vpop.f32.mrb[0].mxu0
    %v6717 = vadd.f32 0.0, %v6716
    %v6718 = vpop.f32.mrb[0].mxu0
    %v6719 = vpop.f32.mrb[0].mxu0
    %v6720 = vpop.f32.mrb[0].mxu0
    %6721 = vdwg.mxu0
    %v6723 = vsel %vm1240, %v5966, 0
    %v6726 = vsel %vm1240, %v6169, 0
    %6728 = vmatprep.subr.bf16.mxu0 0
    %6729 = vmatpush1.bf16.xpose.msra.mxu0 %v6726
    %6730 = vmatprep.subr.bf16.mxu0 0
    %6731 = vmatpush1.bf16.xpose.msra.mxu0 0
    %6732 = vmatprep.subr.bf16.mxu0 0
    %6733 = vmatpush1.bf16.xpose.msra.mxu0 0
    %6734 = vmatprep.subr.bf16.mxu0 0
    %6735 = vmatpush1.bf16.xpose.msra.mxu0 0
    %6736 = vmatprep.subr.bf16.mxu0 0
    %6737 = vmatpush1.bf16.xpose.msra.mxu0 0
    %6738 = vmatprep.subr.bf16.mxu0 0
    %6739 = vmatpush1.bf16.xpose.msra.mxu0 0
    %6740 = vmatprep.subr.bf16.mxu0 0
    %6741 = vmatpush1.bf16.xpose.msra.mxu0 0
    %6742 = vmatprep.subr.bf16.mxu0 0
    %6743 = vmatpush1.bf16.xpose.msra.mxu0 0
    %6744 = vmatprep.subr.bf16.mxu0 0
    %6745 = vmatpush1.bf16.xpose.msra.mxu0 0
    %6746 = vmatprep.subr.bf16.mxu0 0
    %6747 = vmatpush1.bf16.xpose.msra.mxu0 0
    %6748 = vmatprep.subr.bf16.mxu0 0
    %6749 = vmatpush1.bf16.xpose.msra.mxu0 0
    %6750 = vmatprep.subr.bf16.mxu0 0
    %6751 = vmatpush1.bf16.xpose.msra.mxu0 0
    %6752 = vmatprep.subr.bf16.mxu0 0
    %6753 = vmatpush1.bf16.xpose.msra.mxu0 0
    %6754 = vmatprep.subr.bf16.mxu0 0
    %6755 = vmatpush1.bf16.xpose.msra.mxu0 0
    %6756 = vmatprep.subr.bf16.mxu0 0
    %6757 = vmatpush1.bf16.xpose.msra.mxu0 0
    %6758 = vmatprep.subr.bf16.mxu0 0
    %6759 = vmatpush1.bf16.xpose.msra.mxu0 0
    %6760 = vmatprep.mubr.bf16.mxu0 0
    %6761 = vmatmul.mubr.bf16.gmra.mrb[0].mxu0 %v6723
    %v6762 = vpop.f32.mrb[0].mxu0
    %v6763 = vadd.f32 0.0, %v6762
    %v6764 = vpop.f32.mrb[0].mxu0
    %v6765 = vpop.f32.mrb[0].mxu0
    %v6766 = vpop.f32.mrb[0].mxu0
    %6767 = vdwg.mxu0
    %v6769 = vsel %vm1240, %v5980, 0
    %v6772 = vsel %vm1240, %v6183, 0
    %6774 = vmatprep.subr.bf16.mxu0 0
    %6775 = vmatpush1.bf16.xpose.msra.mxu0 %v6772
    %6776 = vmatprep.subr.bf16.mxu0 0
    %6777 = vmatpush1.bf16.xpose.msra.mxu0 0
    %6778 = vmatprep.subr.bf16.mxu0 0
    %6779 = vmatpush1.bf16.xpose.msra.mxu0 0
    %6780 = vmatprep.subr.bf16.mxu0 0
    %6781 = vmatpush1.bf16.xpose.msra.mxu0 0
    %6782 = vmatprep.subr.bf16.mxu0 0
    %6783 = vmatpush1.bf16.xpose.msra.mxu0 0
    %6784 = vmatprep.subr.bf16.mxu0 0
    %6785 = vmatpush1.bf16.xpose.msra.mxu0 0
    %6786 = vmatprep.subr.bf16.mxu0 0
    %6787 = vmatpush1.bf16.xpose.msra.mxu0 0
    %6788 = vmatprep.subr.bf16.mxu0 0
    %6789 = vmatpush1.bf16.xpose.msra.mxu0 0
    %6790 = vmatprep.subr.bf16.mxu0 0
    %6791 = vmatpush1.bf16.xpose.msra.mxu0 0
    %6792 = vmatprep.subr.bf16.mxu0 0
    %6793 = vmatpush1.bf16.xpose.msra.mxu0 0
    %6794 = vmatprep.subr.bf16.mxu0 0
    %6795 = vmatpush1.bf16.xpose.msra.mxu0 0
    %6796 = vmatprep.subr.bf16.mxu0 0
    %6797 = vmatpush1.bf16.xpose.msra.mxu0 0
    %6798 = vmatprep.subr.bf16.mxu0 0
    %6799 = vmatpush1.bf16.xpose.msra.mxu0 0
    %6800 = vmatprep.subr.bf16.mxu0 0
    %6801 = vmatpush1.bf16.xpose.msra.mxu0 0
    %6802 = vmatprep.subr.bf16.mxu0 0
    %6803 = vmatpush1.bf16.xpose.msra.mxu0 0
    %6804 = vmatprep.subr.bf16.mxu0 0
    %6805 = vmatpush1.bf16.xpose.msra.mxu0 0
    %6806 = vmatprep.mubr.bf16.mxu0 0
    %6807 = vmatmul.mubr.bf16.gmra.mrb[0].mxu0 %v6769
    %v6808 = vpop.f32.mrb[0].mxu0
    %v6809 = vadd.f32 0.0, %v6808
    %v6810 = vpop.f32.mrb[0].mxu0
    %v6811 = vpop.f32.mrb[0].mxu0
    %v6812 = vpop.f32.mrb[0].mxu0
    %6813 = vdwg.mxu0
    %v6815 = vsel %vm1240, %v5982, 0
    %v6818 = vsel %vm1240, %v6185, 0
    %6820 = vmatprep.subr.bf16.mxu0 0
    %6821 = vmatpush1.bf16.xpose.msra.mxu0 %v6818
    %6822 = vmatprep.subr.bf16.mxu0 0
    %6823 = vmatpush1.bf16.xpose.msra.mxu0 0
    %6824 = vmatprep.subr.bf16.mxu0 0
    %6825 = vmatpush1.bf16.xpose.msra.mxu0 0
    %6826 = vmatprep.subr.bf16.mxu0 0
    %6827 = vmatpush1.bf16.xpose.msra.mxu0 0
    %6828 = vmatprep.subr.bf16.mxu0 0
    %6829 = vmatpush1.bf16.xpose.msra.mxu0 0
    %6830 = vmatprep.subr.bf16.mxu0 0
    %6831 = vmatpush1.bf16.xpose.msra.mxu0 0
    %6832 = vmatprep.subr.bf16.mxu0 0
    %6833 = vmatpush1.bf16.xpose.msra.mxu0 0
    %6834 = vmatprep.subr.bf16.mxu0 0
    %6835 = vmatpush1.bf16.xpose.msra.mxu0 0
    %6836 = vmatprep.subr.bf16.mxu0 0
    %6837 = vmatpush1.bf16.xpose.msra.mxu0 0
    %6838 = vmatprep.subr.bf16.mxu0 0
    %6839 = vmatpush1.bf16.xpose.msra.mxu0 0
    %6840 = vmatprep.subr.bf16.mxu0 0
    %6841 = vmatpush1.bf16.xpose.msra.mxu0 0
    %6842 = vmatprep.subr.bf16.mxu0 0
    %6843 = vmatpush1.bf16.xpose.msra.mxu0 0
    %6844 = vmatprep.subr.bf16.mxu0 0
    %6845 = vmatpush1.bf16.xpose.msra.mxu0 0
    %6846 = vmatprep.subr.bf16.mxu0 0
    %6847 = vmatpush1.bf16.xpose.msra.mxu0 0
    %6848 = vmatprep.subr.bf16.mxu0 0
    %6849 = vmatpush1.bf16.xpose.msra.mxu0 0
    %6850 = vmatprep.subr.bf16.mxu0 0
    %6851 = vmatpush1.bf16.xpose.msra.mxu0 0
    %6852 = vmatprep.mubr.bf16.mxu0 0
    %6853 = vmatmul.mubr.bf16.gmra.mrb[0].mxu0 %v6815
    %v6854 = vpop.f32.mrb[0].mxu0
    %v6855 = vadd.f32 0.0, %v6854
    %v6856 = vpop.f32.mrb[0].mxu0
    %v6857 = vpop.f32.mrb[0].mxu0
    %v6858 = vpop.f32.mrb[0].mxu0
    %6859 = vdwg.mxu0
    %v6861 = vsel %vm1240, %v5984, 0
    %v6864 = vsel %vm1240, %v6187, 0
    %6866 = vmatprep.subr.bf16.mxu0 0
    %6867 = vmatpush1.bf16.xpose.msra.mxu0 %v6864
    %6868 = vmatprep.subr.bf16.mxu0 0
    %6869 = vmatpush1.bf16.xpose.msra.mxu0 0
    %6870 = vmatprep.subr.bf16.mxu0 0
    %6871 = vmatpush1.bf16.xpose.msra.mxu0 0
    %6872 = vmatprep.subr.bf16.mxu0 0
    %6873 = vmatpush1.bf16.xpose.msra.mxu0 0
    %6874 = vmatprep.subr.bf16.mxu0 0
    %6875 = vmatpush1.bf16.xpose.msra.mxu0 0
    %6876 = vmatprep.subr.bf16.mxu0 0
    %6877 = vmatpush1.bf16.xpose.msra.mxu0 0
    %6878 = vmatprep.subr.bf16.mxu0 0
    %6879 = vmatpush1.bf16.xpose.msra.mxu0 0
    %6880 = vmatprep.subr.bf16.mxu0 0
    %6881 = vmatpush1.bf16.xpose.msra.mxu0 0
    %6882 = vmatprep.subr.bf16.mxu0 0
    %6883 = vmatpush1.bf16.xpose.msra.mxu0 0
    %6884 = vmatprep.subr.bf16.mxu0 0
    %6885 = vmatpush1.bf16.xpose.msra.mxu0 0
    %6886 = vmatprep.subr.bf16.mxu0 0
    %6887 = vmatpush1.bf16.xpose.msra.mxu0 0
    %6888 = vmatprep.subr.bf16.mxu0 0
    %6889 = vmatpush1.bf16.xpose.msra.mxu0 0
    %6890 = vmatprep.subr.bf16.mxu0 0
    %6891 = vmatpush1.bf16.xpose.msra.mxu0 0
    %6892 = vmatprep.subr.bf16.mxu0 0
    %6893 = vmatpush1.bf16.xpose.msra.mxu0 0
    %6894 = vmatprep.subr.bf16.mxu0 0
    %6895 = vmatpush1.bf16.xpose.msra.mxu0 0
    %6896 = vmatprep.subr.bf16.mxu0 0
    %6897 = vmatpush1.bf16.xpose.msra.mxu0 0
    %6898 = vmatprep.mubr.bf16.mxu0 0
    %6899 = vmatmul.mubr.bf16.gmra.mrb[0].mxu0 %v6861
    %v6900 = vpop.f32.mrb[0].mxu0
    %v6901 = vadd.f32 0.0, %v6900
    %v6902 = vpop.f32.mrb[0].mxu0
    %v6903 = vpop.f32.mrb[0].mxu0
    %v6904 = vpop.f32.mrb[0].mxu0
    %6905 = vdwg.mxu0
    %v6907 = vsel %vm1240, %v6008, 0
    %v6910 = vsel %vm1240, %v6211, 0
    %6912 = vmatprep.subr.bf16.mxu0 0
    %6913 = vmatpush1.bf16.xpose.msra.mxu0 %v6910
    %6914 = vmatprep.subr.bf16.mxu0 0
    %6915 = vmatpush1.bf16.xpose.msra.mxu0 0
    %6916 = vmatprep.subr.bf16.mxu0 0
    %6917 = vmatpush1.bf16.xpose.msra.mxu0 0
    %6918 = vmatprep.subr.bf16.mxu0 0
    %6919 = vmatpush1.bf16.xpose.msra.mxu0 0
    %6920 = vmatprep.subr.bf16.mxu0 0
    %6921 = vmatpush1.bf16.xpose.msra.mxu0 0
    %6922 = vmatprep.subr.bf16.mxu0 0
    %6923 = vmatpush1.bf16.xpose.msra.mxu0 0
    %6924 = vmatprep.subr.bf16.mxu0 0
    %6925 = vmatpush1.bf16.xpose.msra.mxu0 0
    %6926 = vmatprep.subr.bf16.mxu0 0
    %6927 = vmatpush1.bf16.xpose.msra.mxu0 0
    %6928 = vmatprep.subr.bf16.mxu0 0
    %6929 = vmatpush1.bf16.xpose.msra.mxu0 0
    %6930 = vmatprep.subr.bf16.mxu0 0
    %6931 = vmatpush1.bf16.xpose.msra.mxu0 0
    %6932 = vmatprep.subr.bf16.mxu0 0
    %6933 = vmatpush1.bf16.xpose.msra.mxu0 0
    %6934 = vmatprep.subr.bf16.mxu0 0
    %6935 = vmatpush1.bf16.xpose.msra.mxu0 0
    %6936 = vmatprep.subr.bf16.mxu0 0
    %6937 = vmatpush1.bf16.xpose.msra.mxu0 0
    %6938 = vmatprep.subr.bf16.mxu0 0
    %6939 = vmatpush1.bf16.xpose.msra.mxu0 0
    %6940 = vmatprep.subr.bf16.mxu0 0
    %6941 = vmatpush1.bf16.xpose.msra.mxu0 0
    %6942 = vmatprep.subr.bf16.mxu0 0
    %6943 = vmatpush1.bf16.xpose.msra.mxu0 0
    %6944 = vmatprep.mubr.bf16.mxu0 0
    %6945 = vmatmul.mubr.bf16.gmra.mrb[0].mxu0 %v6907
    %v6946 = vpop.f32.mrb[0].mxu0
    %v6947 = vadd.f32 0.0, %v6946
    %v6948 = vpop.f32.mrb[0].mxu0
    %v6949 = vpop.f32.mrb[0].mxu0
    %v6950 = vpop.f32.mrb[0].mxu0
    %6951 = vdwg.mxu0
    %v6953 = vsel %vm1240, %v6022, 0
    %v6956 = vsel %vm1240, %v6225, 0
    %6958 = vmatprep.subr.bf16.mxu0 0
    %6959 = vmatpush1.bf16.xpose.msra.mxu0 %v6956
    %6960 = vmatprep.subr.bf16.mxu0 0
    %6961 = vmatpush1.bf16.xpose.msra.mxu0 0
    %6962 = vmatprep.subr.bf16.mxu0 0
    %6963 = vmatpush1.bf16.xpose.msra.mxu0 0
    %6964 = vmatprep.subr.bf16.mxu0 0
    %6965 = vmatpush1.bf16.xpose.msra.mxu0 0
    %6966 = vmatprep.subr.bf16.mxu0 0
    %6967 = vmatpush1.bf16.xpose.msra.mxu0 0
    %6968 = vmatprep.subr.bf16.mxu0 0
    %6969 = vmatpush1.bf16.xpose.msra.mxu0 0
    %6970 = vmatprep.subr.bf16.mxu0 0
    %6971 = vmatpush1.bf16.xpose.msra.mxu0 0
    %6972 = vmatprep.subr.bf16.mxu0 0
    %6973 = vmatpush1.bf16.xpose.msra.mxu0 0
    %6974 = vmatprep.subr.bf16.mxu0 0
    %6975 = vmatpush1.bf16.xpose.msra.mxu0 0
    %6976 = vmatprep.subr.bf16.mxu0 0
    %6977 = vmatpush1.bf16.xpose.msra.mxu0 0
    %6978 = vmatprep.subr.bf16.mxu0 0
    %6979 = vmatpush1.bf16.xpose.msra.mxu0 0
    %6980 = vmatprep.subr.bf16.mxu0 0
    %6981 = vmatpush1.bf16.xpose.msra.mxu0 0
    %6982 = vmatprep.subr.bf16.mxu0 0
    %6983 = vmatpush1.bf16.xpose.msra.mxu0 0
    %6984 = vmatprep.subr.bf16.mxu0 0
    %6985 = vmatpush1.bf16.xpose.msra.mxu0 0
    %6986 = vmatprep.subr.bf16.mxu0 0
    %6987 = vmatpush1.bf16.xpose.msra.mxu0 0
    %6988 = vmatprep.subr.bf16.mxu0 0
    %6989 = vmatpush1.bf16.xpose.msra.mxu0 0
    %6990 = vmatprep.mubr.bf16.mxu0 0
    %6991 = vmatmul.mubr.bf16.gmra.mrb[0].mxu0 %v6953
    %v6992 = vpop.f32.mrb[0].mxu0
    %v6993 = vadd.f32 0.0, %v6992
    %v6994 = vpop.f32.mrb[0].mxu0
    %v6995 = vpop.f32.mrb[0].mxu0
    %v6996 = vpop.f32.mrb[0].mxu0
    %6997 = vdwg.mxu0
    %v6999 = vsel %vm1240, %v6030, 0
    %v7002 = vsel %vm1240, %v6233, 0
    %7004 = vmatprep.subr.bf16.mxu0 0
    %7005 = vmatpush1.bf16.xpose.msra.mxu0 %v7002
    %7006 = vmatprep.subr.bf16.mxu0 0
    %7007 = vmatpush1.bf16.xpose.msra.mxu0 0
    %7008 = vmatprep.subr.bf16.mxu0 0
    %7009 = vmatpush1.bf16.xpose.msra.mxu0 0
    %7010 = vmatprep.subr.bf16.mxu0 0
    %7011 = vmatpush1.bf16.xpose.msra.mxu0 0
    %7012 = vmatprep.subr.bf16.mxu0 0
    %7013 = vmatpush1.bf16.xpose.msra.mxu0 0
    %7014 = vmatprep.subr.bf16.mxu0 0
    %7015 = vmatpush1.bf16.xpose.msra.mxu0 0
    %7016 = vmatprep.subr.bf16.mxu0 0
    %7017 = vmatpush1.bf16.xpose.msra.mxu0 0
    %7018 = vmatprep.subr.bf16.mxu0 0
    %7019 = vmatpush1.bf16.xpose.msra.mxu0 0
    %7020 = vmatprep.subr.bf16.mxu0 0
    %7021 = vmatpush1.bf16.xpose.msra.mxu0 0
    %7022 = vmatprep.subr.bf16.mxu0 0
    %7023 = vmatpush1.bf16.xpose.msra.mxu0 0
    %7024 = vmatprep.subr.bf16.mxu0 0
    %7025 = vmatpush1.bf16.xpose.msra.mxu0 0
    %7026 = vmatprep.subr.bf16.mxu0 0
    %7027 = vmatpush1.bf16.xpose.msra.mxu0 0
    %7028 = vmatprep.subr.bf16.mxu0 0
    %7029 = vmatpush1.bf16.xpose.msra.mxu0 0
    %7030 = vmatprep.subr.bf16.mxu0 0
    %7031 = vmatpush1.bf16.xpose.msra.mxu0 0
    %7032 = vmatprep.subr.bf16.mxu0 0
    %7033 = vmatpush1.bf16.xpose.msra.mxu0 0
    %7034 = vmatprep.subr.bf16.mxu0 0
    %7035 = vmatpush1.bf16.xpose.msra.mxu0 0
    %7036 = vmatprep.mubr.bf16.mxu0 0
    %7037 = vmatmul.mubr.bf16.gmra.mrb[0].mxu0 %v6999
    %v7038 = vpop.f32.mrb[0].mxu0
    %v7039 = vadd.f32 0.0, %v7038
    %v7040 = vpop.f32.mrb[0].mxu0
    %v7041 = vpop.f32.mrb[0].mxu0
    %v7042 = vpop.f32.mrb[0].mxu0
    %7043 = vdwg.mxu0
    %v7045 = vsel %vm1240, %v6032, 0
    %v7048 = vsel %vm1240, %v6235, 0
    %7050 = vmatprep.subr.bf16.mxu0 0
    %7051 = vmatpush1.bf16.xpose.msra.mxu0 %v7048
    %7052 = vmatprep.subr.bf16.mxu0 0
    %7053 = vmatpush1.bf16.xpose.msra.mxu0 0
    %7054 = vmatprep.subr.bf16.mxu0 0
    %7055 = vmatpush1.bf16.xpose.msra.mxu0 0
    %7056 = vmatprep.subr.bf16.mxu0 0
    %7057 = vmatpush1.bf16.xpose.msra.mxu0 0
    %7058 = vmatprep.subr.bf16.mxu0 0
    %7059 = vmatpush1.bf16.xpose.msra.mxu0 0
    %7060 = vmatprep.subr.bf16.mxu0 0
    %7061 = vmatpush1.bf16.xpose.msra.mxu0 0
    %7062 = vmatprep.subr.bf16.mxu0 0
    %7063 = vmatpush1.bf16.xpose.msra.mxu0 0
    %7064 = vmatprep.subr.bf16.mxu0 0
    %7065 = vmatpush1.bf16.xpose.msra.mxu0 0
    %7066 = vmatprep.subr.bf16.mxu0 0
    %7067 = vmatpush1.bf16.xpose.msra.mxu0 0
    %7068 = vmatprep.subr.bf16.mxu0 0
    %7069 = vmatpush1.bf16.xpose.msra.mxu0 0
    %7070 = vmatprep.subr.bf16.mxu0 0
    %7071 = vmatpush1.bf16.xpose.msra.mxu0 0
    %7072 = vmatprep.subr.bf16.mxu0 0
    %7073 = vmatpush1.bf16.xpose.msra.mxu0 0
    %7074 = vmatprep.subr.bf16.mxu0 0
    %7075 = vmatpush1.bf16.xpose.msra.mxu0 0
    %7076 = vmatprep.subr.bf16.mxu0 0
    %7077 = vmatpush1.bf16.xpose.msra.mxu0 0
    %7078 = vmatprep.subr.bf16.mxu0 0
    %7079 = vmatpush1.bf16.xpose.msra.mxu0 0
    %7080 = vmatprep.subr.bf16.mxu0 0
    %7081 = vmatpush1.bf16.xpose.msra.mxu0 0
    %7082 = vmatprep.mubr.bf16.mxu0 0
    %7083 = vmatmul.mubr.bf16.gmra.mrb[0].mxu0 %v7045
    %v7084 = vpop.f32.mrb[0].mxu0
    %v7085 = vadd.f32 0.0, %v7084
    %v7086 = vpop.f32.mrb[0].mxu0
    %v7087 = vpop.f32.mrb[0].mxu0
    %v7088 = vpop.f32.mrb[0].mxu0
    %7089 = vdwg.mxu0
    %v7091 = vsel %vm1240, %v6015, 0
    %v7094 = vsel %vm1240, %v6218, 0
    %7096 = vmatprep.subr.bf16.mxu0 0
    %7097 = vmatpush1.bf16.xpose.msra.mxu0 %v7094
    %7098 = vmatprep.subr.bf16.mxu0 0
    %7099 = vmatpush1.bf16.xpose.msra.mxu0 0
    %7100 = vmatprep.subr.bf16.mxu0 0
    %7101 = vmatpush1.bf16.xpose.msra.mxu0 0
    %7102 = vmatprep.subr.bf16.mxu0 0
    %7103 = vmatpush1.bf16.xpose.msra.mxu0 0
    %7104 = vmatprep.subr.bf16.mxu0 0
    %7105 = vmatpush1.bf16.xpose.msra.mxu0 0
    %7106 = vmatprep.subr.bf16.mxu0 0
    %7107 = vmatpush1.bf16.xpose.msra.mxu0 0
    %7108 = vmatprep.subr.bf16.mxu0 0
    %7109 = vmatpush1.bf16.xpose.msra.mxu0 0
    %7110 = vmatprep.subr.bf16.mxu0 0
    %7111 = vmatpush1.bf16.xpose.msra.mxu0 0
    %7112 = vmatprep.subr.bf16.mxu0 0
    %7113 = vmatpush1.bf16.xpose.msra.mxu0 0
    %7114 = vmatprep.subr.bf16.mxu0 0
    %7115 = vmatpush1.bf16.xpose.msra.mxu0 0
    %7116 = vmatprep.subr.bf16.mxu0 0
    %7117 = vmatpush1.bf16.xpose.msra.mxu0 0
    %7118 = vmatprep.subr.bf16.mxu0 0
    %7119 = vmatpush1.bf16.xpose.msra.mxu0 0
    %7120 = vmatprep.subr.bf16.mxu0 0
    %7121 = vmatpush1.bf16.xpose.msra.mxu0 0
    %7122 = vmatprep.subr.bf16.mxu0 0
    %7123 = vmatpush1.bf16.xpose.msra.mxu0 0
    %7124 = vmatprep.subr.bf16.mxu0 0
    %7125 = vmatpush1.bf16.xpose.msra.mxu0 0
    %7126 = vmatprep.subr.bf16.mxu0 0
    %7127 = vmatpush1.bf16.xpose.msra.mxu0 0
    %7128 = vmatprep.mubr.bf16.mxu0 0
    %7129 = vmatmul.mubr.bf16.gmra.mrb[0].mxu0 %v7091
    %v7130 = vpop.f32.mrb[0].mxu0
    %v7131 = vadd.f32 0.0, %v7130
    %v7132 = vpop.f32.mrb[0].mxu0
    %v7133 = vpop.f32.mrb[0].mxu0
    %v7134 = vpop.f32.mrb[0].mxu0
    %7135 = vdwg.mxu0
    %v7137 = vsel %vm1240, %v6029, 0
    %v7140 = vsel %vm1240, %v6232, 0
    %7142 = vmatprep.subr.bf16.mxu0 0
    %7143 = vmatpush1.bf16.xpose.msra.mxu0 %v7140
    %7144 = vmatprep.subr.bf16.mxu0 0
    %7145 = vmatpush1.bf16.xpose.msra.mxu0 0
    %7146 = vmatprep.subr.bf16.mxu0 0
    %7147 = vmatpush1.bf16.xpose.msra.mxu0 0
    %7148 = vmatprep.subr.bf16.mxu0 0
    %7149 = vmatpush1.bf16.xpose.msra.mxu0 0
    %7150 = vmatprep.subr.bf16.mxu0 0
    %7151 = vmatpush1.bf16.xpose.msra.mxu0 0
    %7152 = vmatprep.subr.bf16.mxu0 0
    %7153 = vmatpush1.bf16.xpose.msra.mxu0 0
    %7154 = vmatprep.subr.bf16.mxu0 0
    %7155 = vmatpush1.bf16.xpose.msra.mxu0 0
    %7156 = vmatprep.subr.bf16.mxu0 0
    %7157 = vmatpush1.bf16.xpose.msra.mxu0 0
    %7158 = vmatprep.subr.bf16.mxu0 0
    %7159 = vmatpush1.bf16.xpose.msra.mxu0 0
    %7160 = vmatprep.subr.bf16.mxu0 0
    %7161 = vmatpush1.bf16.xpose.msra.mxu0 0
    %7162 = vmatprep.subr.bf16.mxu0 0
    %7163 = vmatpush1.bf16.xpose.msra.mxu0 0
    %7164 = vmatprep.subr.bf16.mxu0 0
    %7165 = vmatpush1.bf16.xpose.msra.mxu0 0
    %7166 = vmatprep.subr.bf16.mxu0 0
    %7167 = vmatpush1.bf16.xpose.msra.mxu0 0
    %7168 = vmatprep.subr.bf16.mxu0 0
    %7169 = vmatpush1.bf16.xpose.msra.mxu0 0
    %7170 = vmatprep.subr.bf16.mxu0 0
    %7171 = vmatpush1.bf16.xpose.msra.mxu0 0
    %7172 = vmatprep.subr.bf16.mxu0 0
    %7173 = vmatpush1.bf16.xpose.msra.mxu0 0
    %7174 = vmatprep.mubr.bf16.mxu0 0
    %7175 = vmatmul.mubr.bf16.gmra.mrb[0].mxu0 %v7137
    %v7176 = vpop.f32.mrb[0].mxu0
    %v7177 = vadd.f32 0.0, %v7176
    %v7178 = vpop.f32.mrb[0].mxu0
    %v7179 = vpop.f32.mrb[0].mxu0
    %v7180 = vpop.f32.mrb[0].mxu0
    %7181 = vdwg.mxu0
    %v7183 = vsel %vm1240, %v6031, 0
    %v7186 = vsel %vm1240, %v6234, 0
    %7188 = vmatprep.subr.bf16.mxu0 0
    %7189 = vmatpush1.bf16.xpose.msra.mxu0 %v7186
    %7190 = vmatprep.subr.bf16.mxu0 0
    %7191 = vmatpush1.bf16.xpose.msra.mxu0 0
    %7192 = vmatprep.subr.bf16.mxu0 0
    %7193 = vmatpush1.bf16.xpose.msra.mxu0 0
    %7194 = vmatprep.subr.bf16.mxu0 0
    %7195 = vmatpush1.bf16.xpose.msra.mxu0 0
    %7196 = vmatprep.subr.bf16.mxu0 0
    %7197 = vmatpush1.bf16.xpose.msra.mxu0 0
    %7198 = vmatprep.subr.bf16.mxu0 0
    %7199 = vmatpush1.bf16.xpose.msra.mxu0 0
    %7200 = vmatprep.subr.bf16.mxu0 0
    %7201 = vmatpush1.bf16.xpose.msra.mxu0 0
    %7202 = vmatprep.subr.bf16.mxu0 0
    %7203 = vmatpush1.bf16.xpose.msra.mxu0 0
    %7204 = vmatprep.subr.bf16.mxu0 0
    %7205 = vmatpush1.bf16.xpose.msra.mxu0 0
    %7206 = vmatprep.subr.bf16.mxu0 0
    %7207 = vmatpush1.bf16.xpose.msra.mxu0 0
    %7208 = vmatprep.subr.bf16.mxu0 0
    %7209 = vmatpush1.bf16.xpose.msra.mxu0 0
    %7210 = vmatprep.subr.bf16.mxu0 0
    %7211 = vmatpush1.bf16.xpose.msra.mxu0 0
    %7212 = vmatprep.subr.bf16.mxu0 0
    %7213 = vmatpush1.bf16.xpose.msra.mxu0 0
    %7214 = vmatprep.subr.bf16.mxu0 0
    %7215 = vmatpush1.bf16.xpose.msra.mxu0 0
    %7216 = vmatprep.subr.bf16.mxu0 0
    %7217 = vmatpush1.bf16.xpose.msra.mxu0 0
    %7218 = vmatprep.subr.bf16.mxu0 0
    %7219 = vmatpush1.bf16.xpose.msra.mxu0 0
    %7220 = vmatprep.mubr.bf16.mxu0 0
    %7221 = vmatmul.mubr.bf16.gmra.mrb[0].mxu0 %v7183
    %v7222 = vpop.f32.mrb[0].mxu0
    %v7223 = vadd.f32 0.0, %v7222
    %v7224 = vpop.f32.mrb[0].mxu0
    %v7225 = vpop.f32.mrb[0].mxu0
    %v7226 = vpop.f32.mrb[0].mxu0
    %7227 = vdwg.mxu0
    %v7229 = vsel %vm1240, %v6033, 0
    %v7232 = vsel %vm1240, %v6236, 0
    %7234 = vmatprep.subr.bf16.mxu0 0
    %7235 = vmatpush1.bf16.xpose.msra.mxu0 %v7232
    %7236 = vmatprep.subr.bf16.mxu0 0
    %7237 = vmatpush1.bf16.xpose.msra.mxu0 0
    %7238 = vmatprep.subr.bf16.mxu0 0
    %7239 = vmatpush1.bf16.xpose.msra.mxu0 0
    %7240 = vmatprep.subr.bf16.mxu0 0
    %7241 = vmatpush1.bf16.xpose.msra.mxu0 0
    %7242 = vmatprep.subr.bf16.mxu0 0
    %7243 = vmatpush1.bf16.xpose.msra.mxu0 0
    %7244 = vmatprep.subr.bf16.mxu0 0
    %7245 = vmatpush1.bf16.xpose.msra.mxu0 0
    %7246 = vmatprep.subr.bf16.mxu0 0
    %7247 = vmatpush1.bf16.xpose.msra.mxu0 0
    %7248 = vmatprep.subr.bf16.mxu0 0
    %7249 = vmatpush1.bf16.xpose.msra.mxu0 0
    %7250 = vmatprep.subr.bf16.mxu0 0
    %7251 = vmatpush1.bf16.xpose.msra.mxu0 0
    %7252 = vmatprep.subr.bf16.mxu0 0
    %7253 = vmatpush1.bf16.xpose.msra.mxu0 0
    %7254 = vmatprep.subr.bf16.mxu0 0
    %7255 = vmatpush1.bf16.xpose.msra.mxu0 0
    %7256 = vmatprep.subr.bf16.mxu0 0
    %7257 = vmatpush1.bf16.xpose.msra.mxu0 0
    %7258 = vmatprep.subr.bf16.mxu0 0
    %7259 = vmatpush1.bf16.xpose.msra.mxu0 0
    %7260 = vmatprep.subr.bf16.mxu0 0
    %7261 = vmatpush1.bf16.xpose.msra.mxu0 0
    %7262 = vmatprep.subr.bf16.mxu0 0
    %7263 = vmatpush1.bf16.xpose.msra.mxu0 0
    %7264 = vmatprep.subr.bf16.mxu0 0
    %7265 = vmatpush1.bf16.xpose.msra.mxu0 0
    %7266 = vmatprep.mubr.bf16.mxu0 0
    %7267 = vmatmul.mubr.bf16.gmra.mrb[0].mxu0 %v7229
    %v7268 = vpop.f32.mrb[0].mxu0
    %v7269 = vadd.f32 0.0, %v7268
    %v7270 = vpop.f32.mrb[0].mxu0
    %v7271 = vpop.f32.mrb[0].mxu0
    %v7272 = vpop.f32.mrb[0].mxu0
    %7273 = vdwg.mxu0
    %v7275 = vsel %vm1240, %v6057, 0
    %v7278 = vsel %vm1240, %v6260, 0
    %7280 = vmatprep.subr.bf16.mxu0 0
    %7281 = vmatpush1.bf16.xpose.msra.mxu0 %v7278
    %7282 = vmatprep.subr.bf16.mxu0 0
    %7283 = vmatpush1.bf16.xpose.msra.mxu0 0
    %7284 = vmatprep.subr.bf16.mxu0 0
    %7285 = vmatpush1.bf16.xpose.msra.mxu0 0
    %7286 = vmatprep.subr.bf16.mxu0 0
    %7287 = vmatpush1.bf16.xpose.msra.mxu0 0
    %7288 = vmatprep.subr.bf16.mxu0 0
    %7289 = vmatpush1.bf16.xpose.msra.mxu0 0
    %7290 = vmatprep.subr.bf16.mxu0 0
    %7291 = vmatpush1.bf16.xpose.msra.mxu0 0
    %7292 = vmatprep.subr.bf16.mxu0 0
    %7293 = vmatpush1.bf16.xpose.msra.mxu0 0
    %7294 = vmatprep.subr.bf16.mxu0 0
    %7295 = vmatpush1.bf16.xpose.msra.mxu0 0
    %7296 = vmatprep.subr.bf16.mxu0 0
    %7297 = vmatpush1.bf16.xpose.msra.mxu0 0
    %7298 = vmatprep.subr.bf16.mxu0 0
    %7299 = vmatpush1.bf16.xpose.msra.mxu0 0
    %7300 = vmatprep.subr.bf16.mxu0 0
    %7301 = vmatpush1.bf16.xpose.msra.mxu0 0
    %7302 = vmatprep.subr.bf16.mxu0 0
    %7303 = vmatpush1.bf16.xpose.msra.mxu0 0
    %7304 = vmatprep.subr.bf16.mxu0 0
    %7305 = vmatpush1.bf16.xpose.msra.mxu0 0
    %7306 = vmatprep.subr.bf16.mxu0 0
    %7307 = vmatpush1.bf16.xpose.msra.mxu0 0
    %7308 = vmatprep.subr.bf16.mxu0 0
    %7309 = vmatpush1.bf16.xpose.msra.mxu0 0
    %7310 = vmatprep.subr.bf16.mxu0 0
    %7311 = vmatpush1.bf16.xpose.msra.mxu0 0
    %7312 = vmatprep.mubr.bf16.mxu0 0
    %7313 = vmatmul.mubr.bf16.gmra.mrb[0].mxu0 %v7275
    %v7314 = vpop.f32.mrb[0].mxu0
    %v7315 = vadd.f32 0.0, %v7314
    %v7316 = vpop.f32.mrb[0].mxu0
    %v7317 = vpop.f32.mrb[0].mxu0
    %v7318 = vpop.f32.mrb[0].mxu0
    %7319 = vdwg.mxu0
    %v7321 = vsel %vm1240, %v6071, 0
    %v7324 = vsel %vm1240, %v6274, 0
    %7326 = vmatprep.subr.bf16.mxu0 0
    %7327 = vmatpush1.bf16.xpose.msra.mxu0 %v7324
    %7328 = vmatprep.subr.bf16.mxu0 0
    %7329 = vmatpush1.bf16.xpose.msra.mxu0 0
    %7330 = vmatprep.subr.bf16.mxu0 0
    %7331 = vmatpush1.bf16.xpose.msra.mxu0 0
    %7332 = vmatprep.subr.bf16.mxu0 0
    %7333 = vmatpush1.bf16.xpose.msra.mxu0 0
    %7334 = vmatprep.subr.bf16.mxu0 0
    %7335 = vmatpush1.bf16.xpose.msra.mxu0 0
    %7336 = vmatprep.subr.bf16.mxu0 0
    %7337 = vmatpush1.bf16.xpose.msra.mxu0 0
    %7338 = vmatprep.subr.bf16.mxu0 0
    %7339 = vmatpush1.bf16.xpose.msra.mxu0 0
    %7340 = vmatprep.subr.bf16.mxu0 0
    %7341 = vmatpush1.bf16.xpose.msra.mxu0 0
    %7342 = vmatprep.subr.bf16.mxu0 0
    %7343 = vmatpush1.bf16.xpose.msra.mxu0 0
    %7344 = vmatprep.subr.bf16.mxu0 0
    %7345 = vmatpush1.bf16.xpose.msra.mxu0 0
    %7346 = vmatprep.subr.bf16.mxu0 0
    %7347 = vmatpush1.bf16.xpose.msra.mxu0 0
    %7348 = vmatprep.subr.bf16.mxu0 0
    %7349 = vmatpush1.bf16.xpose.msra.mxu0 0
    %7350 = vmatprep.subr.bf16.mxu0 0
    %7351 = vmatpush1.bf16.xpose.msra.mxu0 0
    %7352 = vmatprep.subr.bf16.mxu0 0
    %7353 = vmatpush1.bf16.xpose.msra.mxu0 0
    %7354 = vmatprep.subr.bf16.mxu0 0
    %7355 = vmatpush1.bf16.xpose.msra.mxu0 0
    %7356 = vmatprep.subr.bf16.mxu0 0
    %7357 = vmatpush1.bf16.xpose.msra.mxu0 0
    %7358 = vmatprep.mubr.bf16.mxu0 0
    %7359 = vmatmul.mubr.bf16.gmra.mrb[0].mxu0 %v7321
    %v7360 = vpop.f32.mrb[0].mxu0
    %v7361 = vadd.f32 0.0, %v7360
    %v7362 = vpop.f32.mrb[0].mxu0
    %v7363 = vpop.f32.mrb[0].mxu0
    %v7364 = vpop.f32.mrb[0].mxu0
    %7365 = vdwg.mxu0
    %v7367 = vsel %vm1240, %v6079, 0
    %v7370 = vsel %vm1240, %v6282, 0
    %7372 = vmatprep.subr.bf16.mxu0 0
    %7373 = vmatpush1.bf16.xpose.msra.mxu0 %v7370
    %7374 = vmatprep.subr.bf16.mxu0 0
    %7375 = vmatpush1.bf16.xpose.msra.mxu0 0
    %7376 = vmatprep.subr.bf16.mxu0 0
    %7377 = vmatpush1.bf16.xpose.msra.mxu0 0
    %7378 = vmatprep.subr.bf16.mxu0 0
    %7379 = vmatpush1.bf16.xpose.msra.mxu0 0
    %7380 = vmatprep.subr.bf16.mxu0 0
    %7381 = vmatpush1.bf16.xpose.msra.mxu0 0
    %7382 = vmatprep.subr.bf16.mxu0 0
    %7383 = vmatpush1.bf16.xpose.msra.mxu0 0
    %7384 = vmatprep.subr.bf16.mxu0 0
    %7385 = vmatpush1.bf16.xpose.msra.mxu0 0
    %7386 = vmatprep.subr.bf16.mxu0 0
    %7387 = vmatpush1.bf16.xpose.msra.mxu0 0
    %7388 = vmatprep.subr.bf16.mxu0 0
    %7389 = vmatpush1.bf16.xpose.msra.mxu0 0
    %7390 = vmatprep.subr.bf16.mxu0 0
    %7391 = vmatpush1.bf16.xpose.msra.mxu0 0
    %7392 = vmatprep.subr.bf16.mxu0 0
    %7393 = vmatpush1.bf16.xpose.msra.mxu0 0
    %7394 = vmatprep.subr.bf16.mxu0 0
    %7395 = vmatpush1.bf16.xpose.msra.mxu0 0
    %7396 = vmatprep.subr.bf16.mxu0 0
    %7397 = vmatpush1.bf16.xpose.msra.mxu0 0
    %7398 = vmatprep.subr.bf16.mxu0 0
    %7399 = vmatpush1.bf16.xpose.msra.mxu0 0
    %7400 = vmatprep.subr.bf16.mxu0 0
    %7401 = vmatpush1.bf16.xpose.msra.mxu0 0
    %7402 = vmatprep.subr.bf16.mxu0 0
    %7403 = vmatpush1.bf16.xpose.msra.mxu0 0
    %7404 = vmatprep.mubr.bf16.mxu0 0
    %7405 = vmatmul.mubr.bf16.gmra.mrb[0].mxu0 %v7367
    %v7406 = vpop.f32.mrb[0].mxu0
    %v7407 = vadd.f32 0.0, %v7406
    %v7408 = vpop.f32.mrb[0].mxu0
    %v7409 = vpop.f32.mrb[0].mxu0
    %v7410 = vpop.f32.mrb[0].mxu0
    %7411 = vdwg.mxu0
    %v7413 = vsel %vm1240, %v6081, 0
    %v7416 = vsel %vm1240, %v6284, 0
    %7418 = vmatprep.subr.bf16.mxu0 0
    %7419 = vmatpush1.bf16.xpose.msra.mxu0 %v7416
    %7420 = vmatprep.subr.bf16.mxu0 0
    %7421 = vmatpush1.bf16.xpose.msra.mxu0 0
    %7422 = vmatprep.subr.bf16.mxu0 0
    %7423 = vmatpush1.bf16.xpose.msra.mxu0 0
    %7424 = vmatprep.subr.bf16.mxu0 0
    %7425 = vmatpush1.bf16.xpose.msra.mxu0 0
    %7426 = vmatprep.subr.bf16.mxu0 0
    %7427 = vmatpush1.bf16.xpose.msra.mxu0 0
    %7428 = vmatprep.subr.bf16.mxu0 0
    %7429 = vmatpush1.bf16.xpose.msra.mxu0 0
    %7430 = vmatprep.subr.bf16.mxu0 0
    %7431 = vmatpush1.bf16.xpose.msra.mxu0 0
    %7432 = vmatprep.subr.bf16.mxu0 0
    %7433 = vmatpush1.bf16.xpose.msra.mxu0 0
    %7434 = vmatprep.subr.bf16.mxu0 0
    %7435 = vmatpush1.bf16.xpose.msra.mxu0 0
    %7436 = vmatprep.subr.bf16.mxu0 0
    %7437 = vmatpush1.bf16.xpose.msra.mxu0 0
    %7438 = vmatprep.subr.bf16.mxu0 0
    %7439 = vmatpush1.bf16.xpose.msra.mxu0 0
    %7440 = vmatprep.subr.bf16.mxu0 0
    %7441 = vmatpush1.bf16.xpose.msra.mxu0 0
    %7442 = vmatprep.subr.bf16.mxu0 0
    %7443 = vmatpush1.bf16.xpose.msra.mxu0 0
    %7444 = vmatprep.subr.bf16.mxu0 0
    %7445 = vmatpush1.bf16.xpose.msra.mxu0 0
    %7446 = vmatprep.subr.bf16.mxu0 0
    %7447 = vmatpush1.bf16.xpose.msra.mxu0 0
    %7448 = vmatprep.subr.bf16.mxu0 0
    %7449 = vmatpush1.bf16.xpose.msra.mxu0 0
    %7450 = vmatprep.mubr.bf16.mxu0 0
    %7451 = vmatmul.mubr.bf16.gmra.mrb[0].mxu0 %v7413
    %v7452 = vpop.f32.mrb[0].mxu0
    %v7453 = vadd.f32 0.0, %v7452
    %v7454 = vpop.f32.mrb[0].mxu0
    %v7455 = vpop.f32.mrb[0].mxu0
    %v7456 = vpop.f32.mrb[0].mxu0
    %7457 = vdwg.mxu0
    %v7459 = vsel %vm1240, %v6064, 0
    %v7462 = vsel %vm1240, %v6267, 0
    %7464 = vmatprep.subr.bf16.mxu0 0
    %7465 = vmatpush1.bf16.xpose.msra.mxu0 %v7462
    %7466 = vmatprep.subr.bf16.mxu0 0
    %7467 = vmatpush1.bf16.xpose.msra.mxu0 0
    %7468 = vmatprep.subr.bf16.mxu0 0
    %7469 = vmatpush1.bf16.xpose.msra.mxu0 0
    %7470 = vmatprep.subr.bf16.mxu0 0
    %7471 = vmatpush1.bf16.xpose.msra.mxu0 0
    %7472 = vmatprep.subr.bf16.mxu0 0
    %7473 = vmatpush1.bf16.xpose.msra.mxu0 0
    %7474 = vmatprep.subr.bf16.mxu0 0
    %7475 = vmatpush1.bf16.xpose.msra.mxu0 0
    %7476 = vmatprep.subr.bf16.mxu0 0
    %7477 = vmatpush1.bf16.xpose.msra.mxu0 0
    %7478 = vmatprep.subr.bf16.mxu0 0
    %7479 = vmatpush1.bf16.xpose.msra.mxu0 0
    %7480 = vmatprep.subr.bf16.mxu0 0
    %7481 = vmatpush1.bf16.xpose.msra.mxu0 0
    %7482 = vmatprep.subr.bf16.mxu0 0
    %7483 = vmatpush1.bf16.xpose.msra.mxu0 0
    %7484 = vmatprep.subr.bf16.mxu0 0
    %7485 = vmatpush1.bf16.xpose.msra.mxu0 0
    %7486 = vmatprep.subr.bf16.mxu0 0
    %7487 = vmatpush1.bf16.xpose.msra.mxu0 0
    %7488 = vmatprep.subr.bf16.mxu0 0
    %7489 = vmatpush1.bf16.xpose.msra.mxu0 0
    %7490 = vmatprep.subr.bf16.mxu0 0
    %7491 = vmatpush1.bf16.xpose.msra.mxu0 0
    %7492 = vmatprep.subr.bf16.mxu0 0
    %7493 = vmatpush1.bf16.xpose.msra.mxu0 0
    %7494 = vmatprep.subr.bf16.mxu0 0
    %7495 = vmatpush1.bf16.xpose.msra.mxu0 0
    %7496 = vmatprep.mubr.bf16.mxu0 0
    %7497 = vmatmul.mubr.bf16.gmra.mrb[0].mxu0 %v7459
    %v7498 = vpop.f32.mrb[0].mxu0
    %v7499 = vadd.f32 0.0, %v7498
    %v7500 = vpop.f32.mrb[0].mxu0
    %v7501 = vpop.f32.mrb[0].mxu0
    %v7502 = vpop.f32.mrb[0].mxu0
    %7503 = vdwg.mxu0
    %v7505 = vsel %vm1240, %v6078, 0
    %v7508 = vsel %vm1240, %v6281, 0
    %7510 = vmatprep.subr.bf16.mxu0 0
    %7511 = vmatpush1.bf16.xpose.msra.mxu0 %v7508
    %7512 = vmatprep.subr.bf16.mxu0 0
    %7513 = vmatpush1.bf16.xpose.msra.mxu0 0
    %7514 = vmatprep.subr.bf16.mxu0 0
    %7515 = vmatpush1.bf16.xpose.msra.mxu0 0
    %7516 = vmatprep.subr.bf16.mxu0 0
    %7517 = vmatpush1.bf16.xpose.msra.mxu0 0
    %7518 = vmatprep.subr.bf16.mxu0 0
    %7519 = vmatpush1.bf16.xpose.msra.mxu0 0
    %7520 = vmatprep.subr.bf16.mxu0 0
    %7521 = vmatpush1.bf16.xpose.msra.mxu0 0
    %7522 = vmatprep.subr.bf16.mxu0 0
    %7523 = vmatpush1.bf16.xpose.msra.mxu0 0
    %7524 = vmatprep.subr.bf16.mxu0 0
    %7525 = vmatpush1.bf16.xpose.msra.mxu0 0
    %7526 = vmatprep.subr.bf16.mxu0 0
    %7527 = vmatpush1.bf16.xpose.msra.mxu0 0
    %7528 = vmatprep.subr.bf16.mxu0 0
    %7529 = vmatpush1.bf16.xpose.msra.mxu0 0
    %7530 = vmatprep.subr.bf16.mxu0 0
    %7531 = vmatpush1.bf16.xpose.msra.mxu0 0
    %7532 = vmatprep.subr.bf16.mxu0 0
    %7533 = vmatpush1.bf16.xpose.msra.mxu0 0
    %7534 = vmatprep.subr.bf16.mxu0 0
    %7535 = vmatpush1.bf16.xpose.msra.mxu0 0
    %7536 = vmatprep.subr.bf16.mxu0 0
    %7537 = vmatpush1.bf16.xpose.msra.mxu0 0
    %7538 = vmatprep.subr.bf16.mxu0 0
    %7539 = vmatpush1.bf16.xpose.msra.mxu0 0
    %7540 = vmatprep.subr.bf16.mxu0 0
    %7541 = vmatpush1.bf16.xpose.msra.mxu0 0
    %7542 = vmatprep.mubr.bf16.mxu0 0
    %7543 = vmatmul.mubr.bf16.gmra.mrb[0].mxu0 %v7505
    %v7544 = vpop.f32.mrb[0].mxu0
    %v7545 = vadd.f32 0.0, %v7544
    %v7546 = vpop.f32.mrb[0].mxu0
    %v7547 = vpop.f32.mrb[0].mxu0
    %v7548 = vpop.f32.mrb[0].mxu0
    %7549 = vdwg.mxu0
    %v7551 = vsel %vm1240, %v6080, 0
    %v7554 = vsel %vm1240, %v6283, 0
    %7556 = vmatprep.subr.bf16.mxu0 0
    %7557 = vmatpush1.bf16.xpose.msra.mxu0 %v7554
    %7558 = vmatprep.subr.bf16.mxu0 0
    %7559 = vmatpush1.bf16.xpose.msra.mxu0 0
    %7560 = vmatprep.subr.bf16.mxu0 0
    %7561 = vmatpush1.bf16.xpose.msra.mxu0 0
    %7562 = vmatprep.subr.bf16.mxu0 0
    %7563 = vmatpush1.bf16.xpose.msra.mxu0 0
    %7564 = vmatprep.subr.bf16.mxu0 0
    %7565 = vmatpush1.bf16.xpose.msra.mxu0 0
    %7566 = vmatprep.subr.bf16.mxu0 0
    %7567 = vmatpush1.bf16.xpose.msra.mxu0 0
    %7568 = vmatprep.subr.bf16.mxu0 0
    %7569 = vmatpush1.bf16.xpose.msra.mxu0 0
    %7570 = vmatprep.subr.bf16.mxu0 0
    %7571 = vmatpush1.bf16.xpose.msra.mxu0 0
    %7572 = vmatprep.subr.bf16.mxu0 0
    %7573 = vmatpush1.bf16.xpose.msra.mxu0 0
    %7574 = vmatprep.subr.bf16.mxu0 0
    %7575 = vmatpush1.bf16.xpose.msra.mxu0 0
    %7576 = vmatprep.subr.bf16.mxu0 0
    %7577 = vmatpush1.bf16.xpose.msra.mxu0 0
    %7578 = vmatprep.subr.bf16.mxu0 0
    %7579 = vmatpush1.bf16.xpose.msra.mxu0 0
    %7580 = vmatprep.subr.bf16.mxu0 0
    %7581 = vmatpush1.bf16.xpose.msra.mxu0 0
    %7582 = vmatprep.subr.bf16.mxu0 0
    %7583 = vmatpush1.bf16.xpose.msra.mxu0 0
    %7584 = vmatprep.subr.bf16.mxu0 0
    %7585 = vmatpush1.bf16.xpose.msra.mxu0 0
    %7586 = vmatprep.subr.bf16.mxu0 0
    %7587 = vmatpush1.bf16.xpose.msra.mxu0 0
    %7588 = vmatprep.mubr.bf16.mxu0 0
    %7589 = vmatmul.mubr.bf16.gmra.mrb[0].mxu0 %v7551
    %v7590 = vpop.f32.mrb[0].mxu0
    %v7591 = vadd.f32 0.0, %v7590
    %v7592 = vpop.f32.mrb[0].mxu0
    %v7593 = vpop.f32.mrb[0].mxu0
    %v7594 = vpop.f32.mrb[0].mxu0
    %7595 = vdwg.mxu0
    %v7597 = vsel %vm1240, %v6082, 0
    %v7600 = vsel %vm1240, %v6285, 0
    %7602 = vmatprep.subr.bf16.mxu0 0
    %7603 = vmatpush1.bf16.xpose.msra.mxu0 %v7600
    %7604 = vmatprep.subr.bf16.mxu0 0
    %7605 = vmatpush1.bf16.xpose.msra.mxu0 0
    %7606 = vmatprep.subr.bf16.mxu0 0
    %7607 = vmatpush1.bf16.xpose.msra.mxu0 0
    %7608 = vmatprep.subr.bf16.mxu0 0
    %7609 = vmatpush1.bf16.xpose.msra.mxu0 0
    %7610 = vmatprep.subr.bf16.mxu0 0
    %7611 = vmatpush1.bf16.xpose.msra.mxu0 0
    %7612 = vmatprep.subr.bf16.mxu0 0
    %7613 = vmatpush1.bf16.xpose.msra.mxu0 0
    %7614 = vmatprep.subr.bf16.mxu0 0
    %7615 = vmatpush1.bf16.xpose.msra.mxu0 0
    %7616 = vmatprep.subr.bf16.mxu0 0
    %7617 = vmatpush1.bf16.xpose.msra.mxu0 0
    %7618 = vmatprep.subr.bf16.mxu0 0
    %7619 = vmatpush1.bf16.xpose.msra.mxu0 0
    %7620 = vmatprep.subr.bf16.mxu0 0
    %7621 = vmatpush1.bf16.xpose.msra.mxu0 0
    %7622 = vmatprep.subr.bf16.mxu0 0
    %7623 = vmatpush1.bf16.xpose.msra.mxu0 0
    %7624 = vmatprep.subr.bf16.mxu0 0
    %7625 = vmatpush1.bf16.xpose.msra.mxu0 0
    %7626 = vmatprep.subr.bf16.mxu0 0
    %7627 = vmatpush1.bf16.xpose.msra.mxu0 0
    %7628 = vmatprep.subr.bf16.mxu0 0
    %7629 = vmatpush1.bf16.xpose.msra.mxu0 0
    %7630 = vmatprep.subr.bf16.mxu0 0
    %7631 = vmatpush1.bf16.xpose.msra.mxu0 0
    %7632 = vmatprep.subr.bf16.mxu0 0
    %7633 = vmatpush1.bf16.xpose.msra.mxu0 0
    %7634 = vmatprep.mubr.bf16.mxu0 0
    %7635 = vmatmul.mubr.bf16.gmra.mrb[0].mxu0 %v7597
    %v7636 = vpop.f32.mrb[0].mxu0
    %v7637 = vadd.f32 0.0, %v7636
    %v7638 = vpop.f32.mrb[0].mxu0
    %v7639 = vpop.f32.mrb[0].mxu0
    %v7640 = vpop.f32.mrb[0].mxu0
    %7641 = vdwg.mxu0
    %v7643 = vsel %vm1240, %v6106, 0
    %v7646 = vsel %vm1240, %v6309, 0
    %7648 = vmatprep.subr.bf16.mxu0 0
    %7649 = vmatpush1.bf16.xpose.msra.mxu0 %v7646
    %7650 = vmatprep.subr.bf16.mxu0 0
    %7651 = vmatpush1.bf16.xpose.msra.mxu0 0
    %7652 = vmatprep.subr.bf16.mxu0 0
    %7653 = vmatpush1.bf16.xpose.msra.mxu0 0
    %7654 = vmatprep.subr.bf16.mxu0 0
    %7655 = vmatpush1.bf16.xpose.msra.mxu0 0
    %7656 = vmatprep.subr.bf16.mxu0 0
    %7657 = vmatpush1.bf16.xpose.msra.mxu0 0
    %7658 = vmatprep.subr.bf16.mxu0 0
    %7659 = vmatpush1.bf16.xpose.msra.mxu0 0
    %7660 = vmatprep.subr.bf16.mxu0 0
    %7661 = vmatpush1.bf16.xpose.msra.mxu0 0
    %7662 = vmatprep.subr.bf16.mxu0 0
    %7663 = vmatpush1.bf16.xpose.msra.mxu0 0
    %7664 = vmatprep.subr.bf16.mxu0 0
    %7665 = vmatpush1.bf16.xpose.msra.mxu0 0
    %7666 = vmatprep.subr.bf16.mxu0 0
    %7667 = vmatpush1.bf16.xpose.msra.mxu0 0
    %7668 = vmatprep.subr.bf16.mxu0 0
    %7669 = vmatpush1.bf16.xpose.msra.mxu0 0
    %7670 = vmatprep.subr.bf16.mxu0 0
    %7671 = vmatpush1.bf16.xpose.msra.mxu0 0
    %7672 = vmatprep.subr.bf16.mxu0 0
    %7673 = vmatpush1.bf16.xpose.msra.mxu0 0
    %7674 = vmatprep.subr.bf16.mxu0 0
    %7675 = vmatpush1.bf16.xpose.msra.mxu0 0
    %7676 = vmatprep.subr.bf16.mxu0 0
    %7677 = vmatpush1.bf16.xpose.msra.mxu0 0
    %7678 = vmatprep.subr.bf16.mxu0 0
    %7679 = vmatpush1.bf16.xpose.msra.mxu0 0
    %7680 = vmatprep.mubr.bf16.mxu0 0
    %7681 = vmatmul.mubr.bf16.gmra.mrb[0].mxu0 %v7643
    %v7682 = vpop.f32.mrb[0].mxu0
    %v7683 = vadd.f32 0.0, %v7682
    %v7684 = vpop.f32.mrb[0].mxu0
    %v7685 = vpop.f32.mrb[0].mxu0
    %v7686 = vpop.f32.mrb[0].mxu0
    %7687 = vdwg.mxu0
    %v7689 = vsel %vm1240, %v6120, 0
    %v7692 = vsel %vm1240, %v6323, 0
    %7694 = vmatprep.subr.bf16.mxu0 0
    %7695 = vmatpush1.bf16.xpose.msra.mxu0 %v7692
    %7696 = vmatprep.subr.bf16.mxu0 0
    %7697 = vmatpush1.bf16.xpose.msra.mxu0 0
    %7698 = vmatprep.subr.bf16.mxu0 0
    %7699 = vmatpush1.bf16.xpose.msra.mxu0 0
    %7700 = vmatprep.subr.bf16.mxu0 0
    %7701 = vmatpush1.bf16.xpose.msra.mxu0 0
    %7702 = vmatprep.subr.bf16.mxu0 0
    %7703 = vmatpush1.bf16.xpose.msra.mxu0 0
    %7704 = vmatprep.subr.bf16.mxu0 0
    %7705 = vmatpush1.bf16.xpose.msra.mxu0 0
    %7706 = vmatprep.subr.bf16.mxu0 0
    %7707 = vmatpush1.bf16.xpose.msra.mxu0 0
    %7708 = vmatprep.subr.bf16.mxu0 0
    %7709 = vmatpush1.bf16.xpose.msra.mxu0 0
    %7710 = vmatprep.subr.bf16.mxu0 0
    %7711 = vmatpush1.bf16.xpose.msra.mxu0 0
    %7712 = vmatprep.subr.bf16.mxu0 0
    %7713 = vmatpush1.bf16.xpose.msra.mxu0 0
    %7714 = vmatprep.subr.bf16.mxu0 0
    %7715 = vmatpush1.bf16.xpose.msra.mxu0 0
    %7716 = vmatprep.subr.bf16.mxu0 0
    %7717 = vmatpush1.bf16.xpose.msra.mxu0 0
    %7718 = vmatprep.subr.bf16.mxu0 0
    %7719 = vmatpush1.bf16.xpose.msra.mxu0 0
    %7720 = vmatprep.subr.bf16.mxu0 0
    %7721 = vmatpush1.bf16.xpose.msra.mxu0 0
    %7722 = vmatprep.subr.bf16.mxu0 0
    %7723 = vmatpush1.bf16.xpose.msra.mxu0 0
    %7724 = vmatprep.subr.bf16.mxu0 0
    %7725 = vmatpush1.bf16.xpose.msra.mxu0 0
    %7726 = vmatprep.mubr.bf16.mxu0 0
    %7727 = vmatmul.mubr.bf16.gmra.mrb[0].mxu0 %v7689
    %v7728 = vpop.f32.mrb[0].mxu0
    %v7729 = vadd.f32 0.0, %v7728
    %v7730 = vpop.f32.mrb[0].mxu0
    %v7731 = vpop.f32.mrb[0].mxu0
    %v7732 = vpop.f32.mrb[0].mxu0
    %7733 = vdwg.mxu0
    %v7735 = vsel %vm1240, %v6128, 0
    %v7738 = vsel %vm1240, %v6331, 0
    %7740 = vmatprep.subr.bf16.mxu0 0
    %7741 = vmatpush1.bf16.xpose.msra.mxu0 %v7738
    %7742 = vmatprep.subr.bf16.mxu0 0
    %7743 = vmatpush1.bf16.xpose.msra.mxu0 0
    %7744 = vmatprep.subr.bf16.mxu0 0
    %7745 = vmatpush1.bf16.xpose.msra.mxu0 0
    %7746 = vmatprep.subr.bf16.mxu0 0
    %7747 = vmatpush1.bf16.xpose.msra.mxu0 0
    %7748 = vmatprep.subr.bf16.mxu0 0
    %7749 = vmatpush1.bf16.xpose.msra.mxu0 0
    %7750 = vmatprep.subr.bf16.mxu0 0
    %7751 = vmatpush1.bf16.xpose.msra.mxu0 0
    %7752 = vmatprep.subr.bf16.mxu0 0
    %7753 = vmatpush1.bf16.xpose.msra.mxu0 0
    %7754 = vmatprep.subr.bf16.mxu0 0
    %7755 = vmatpush1.bf16.xpose.msra.mxu0 0
    %7756 = vmatprep.subr.bf16.mxu0 0
    %7757 = vmatpush1.bf16.xpose.msra.mxu0 0
    %7758 = vmatprep.subr.bf16.mxu0 0
    %7759 = vmatpush1.bf16.xpose.msra.mxu0 0
    %7760 = vmatprep.subr.bf16.mxu0 0
    %7761 = vmatpush1.bf16.xpose.msra.mxu0 0
    %7762 = vmatprep.subr.bf16.mxu0 0
    %7763 = vmatpush1.bf16.xpose.msra.mxu0 0
    %7764 = vmatprep.subr.bf16.mxu0 0
    %7765 = vmatpush1.bf16.xpose.msra.mxu0 0
    %7766 = vmatprep.subr.bf16.mxu0 0
    %7767 = vmatpush1.bf16.xpose.msra.mxu0 0
    %7768 = vmatprep.subr.bf16.mxu0 0
    %7769 = vmatpush1.bf16.xpose.msra.mxu0 0
    %7770 = vmatprep.subr.bf16.mxu0 0
    %7771 = vmatpush1.bf16.xpose.msra.mxu0 0
    %7772 = vmatprep.mubr.bf16.mxu0 0
    %7773 = vmatmul.mubr.bf16.gmra.mrb[0].mxu0 %v7735
    %v7774 = vpop.f32.mrb[0].mxu0
    %v7775 = vadd.f32 0.0, %v7774
    %v7776 = vpop.f32.mrb[0].mxu0
    %v7777 = vpop.f32.mrb[0].mxu0
    %v7778 = vpop.f32.mrb[0].mxu0
    %7779 = vdwg.mxu0
    %v7781 = vsel %vm1240, %v6130, 0
    %v7784 = vsel %vm1240, %v6333, 0
    %7786 = vmatprep.subr.bf16.mxu0 0
    %7787 = vmatpush1.bf16.xpose.msra.mxu0 %v7784
    %7788 = vmatprep.subr.bf16.mxu0 0
    %7789 = vmatpush1.bf16.xpose.msra.mxu0 0
    %7790 = vmatprep.subr.bf16.mxu0 0
    %7791 = vmatpush1.bf16.xpose.msra.mxu0 0
    %7792 = vmatprep.subr.bf16.mxu0 0
    %7793 = vmatpush1.bf16.xpose.msra.mxu0 0
    %7794 = vmatprep.subr.bf16.mxu0 0
    %7795 = vmatpush1.bf16.xpose.msra.mxu0 0
    %7796 = vmatprep.subr.bf16.mxu0 0
    %7797 = vmatpush1.bf16.xpose.msra.mxu0 0
    %7798 = vmatprep.subr.bf16.mxu0 0
    %7799 = vmatpush1.bf16.xpose.msra.mxu0 0
    %7800 = vmatprep.subr.bf16.mxu0 0
    %7801 = vmatpush1.bf16.xpose.msra.mxu0 0
    %7802 = vmatprep.subr.bf16.mxu0 0
    %7803 = vmatpush1.bf16.xpose.msra.mxu0 0
    %7804 = vmatprep.subr.bf16.mxu0 0
    %7805 = vmatpush1.bf16.xpose.msra.mxu0 0
    %7806 = vmatprep.subr.bf16.mxu0 0
    %7807 = vmatpush1.bf16.xpose.msra.mxu0 0
    %7808 = vmatprep.subr.bf16.mxu0 0
    %7809 = vmatpush1.bf16.xpose.msra.mxu0 0
    %7810 = vmatprep.subr.bf16.mxu0 0
    %7811 = vmatpush1.bf16.xpose.msra.mxu0 0
    %7812 = vmatprep.subr.bf16.mxu0 0
    %7813 = vmatpush1.bf16.xpose.msra.mxu0 0
    %7814 = vmatprep.subr.bf16.mxu0 0
    %7815 = vmatpush1.bf16.xpose.msra.mxu0 0
    %7816 = vmatprep.subr.bf16.mxu0 0
    %7817 = vmatpush1.bf16.xpose.msra.mxu0 0
    %7818 = vmatprep.mubr.bf16.mxu0 0
    %7819 = vmatmul.mubr.bf16.gmra.mrb[0].mxu0 %v7781
    %v7820 = vpop.f32.mrb[0].mxu0
    %v7821 = vadd.f32 0.0, %v7820
    %v7822 = vpop.f32.mrb[0].mxu0
    %v7823 = vpop.f32.mrb[0].mxu0
    %v7824 = vpop.f32.mrb[0].mxu0
    %7825 = vdwg.mxu0
    %v7827 = vsel %vm1240, %v6113, 0
    %v7830 = vsel %vm1240, %v6316, 0
    %7832 = vmatprep.subr.bf16.mxu0 0
    %7833 = vmatpush1.bf16.xpose.msra.mxu0 %v7830
    %7834 = vmatprep.subr.bf16.mxu0 0
    %7835 = vmatpush1.bf16.xpose.msra.mxu0 0
    %7836 = vmatprep.subr.bf16.mxu0 0
    %7837 = vmatpush1.bf16.xpose.msra.mxu0 0
    %7838 = vmatprep.subr.bf16.mxu0 0
    %7839 = vmatpush1.bf16.xpose.msra.mxu0 0
    %7840 = vmatprep.subr.bf16.mxu0 0
    %7841 = vmatpush1.bf16.xpose.msra.mxu0 0
    %7842 = vmatprep.subr.bf16.mxu0 0
    %7843 = vmatpush1.bf16.xpose.msra.mxu0 0
    %7844 = vmatprep.subr.bf16.mxu0 0
    %7845 = vmatpush1.bf16.xpose.msra.mxu0 0
    %7846 = vmatprep.subr.bf16.mxu0 0
    %7847 = vmatpush1.bf16.xpose.msra.mxu0 0
    %7848 = vmatprep.subr.bf16.mxu0 0
    %7849 = vmatpush1.bf16.xpose.msra.mxu0 0
    %7850 = vmatprep.subr.bf16.mxu0 0
    %7851 = vmatpush1.bf16.xpose.msra.mxu0 0
    %7852 = vmatprep.subr.bf16.mxu0 0
    %7853 = vmatpush1.bf16.xpose.msra.mxu0 0
    %7854 = vmatprep.subr.bf16.mxu0 0
    %7855 = vmatpush1.bf16.xpose.msra.mxu0 0
    %7856 = vmatprep.subr.bf16.mxu0 0
    %7857 = vmatpush1.bf16.xpose.msra.mxu0 0
    %7858 = vmatprep.subr.bf16.mxu0 0
    %7859 = vmatpush1.bf16.xpose.msra.mxu0 0
    %7860 = vmatprep.subr.bf16.mxu0 0
    %7861 = vmatpush1.bf16.xpose.msra.mxu0 0
    %7862 = vmatprep.subr.bf16.mxu0 0
    %7863 = vmatpush1.bf16.xpose.msra.mxu0 0
    %7864 = vmatprep.mubr.bf16.mxu0 0
    %7865 = vmatmul.mubr.bf16.gmra.mrb[0].mxu0 %v7827
    %v7866 = vpop.f32.mrb[0].mxu0
    %v7867 = vadd.f32 0.0, %v7866
    %v7868 = vpop.f32.mrb[0].mxu0
    %v7869 = vpop.f32.mrb[0].mxu0
    %v7870 = vpop.f32.mrb[0].mxu0
    %7871 = vdwg.mxu0
    %v7873 = vsel %vm1240, %v6127, 0
    %v7876 = vsel %vm1240, %v6330, 0
    %7878 = vmatprep.subr.bf16.mxu0 0
    %7879 = vmatpush1.bf16.xpose.msra.mxu0 %v7876
    %7880 = vmatprep.subr.bf16.mxu0 0
    %7881 = vmatpush1.bf16.xpose.msra.mxu0 0
    %7882 = vmatprep.subr.bf16.mxu0 0
    %7883 = vmatpush1.bf16.xpose.msra.mxu0 0
    %7884 = vmatprep.subr.bf16.mxu0 0
    %7885 = vmatpush1.bf16.xpose.msra.mxu0 0
    %7886 = vmatprep.subr.bf16.mxu0 0
    %7887 = vmatpush1.bf16.xpose.msra.mxu0 0
    %7888 = vmatprep.subr.bf16.mxu0 0
    %7889 = vmatpush1.bf16.xpose.msra.mxu0 0
    %7890 = vmatprep.subr.bf16.mxu0 0
    %7891 = vmatpush1.bf16.xpose.msra.mxu0 0
    %7892 = vmatprep.subr.bf16.mxu0 0
    %7893 = vmatpush1.bf16.xpose.msra.mxu0 0
    %7894 = vmatprep.subr.bf16.mxu0 0
    %7895 = vmatpush1.bf16.xpose.msra.mxu0 0
    %7896 = vmatprep.subr.bf16.mxu0 0
    %7897 = vmatpush1.bf16.xpose.msra.mxu0 0
    %7898 = vmatprep.subr.bf16.mxu0 0
    %7899 = vmatpush1.bf16.xpose.msra.mxu0 0
    %7900 = vmatprep.subr.bf16.mxu0 0
    %7901 = vmatpush1.bf16.xpose.msra.mxu0 0
    %7902 = vmatprep.subr.bf16.mxu0 0
    %7903 = vmatpush1.bf16.xpose.msra.mxu0 0
    %7904 = vmatprep.subr.bf16.mxu0 0
    %7905 = vmatpush1.bf16.xpose.msra.mxu0 0
    %7906 = vmatprep.subr.bf16.mxu0 0
    %7907 = vmatpush1.bf16.xpose.msra.mxu0 0
    %7908 = vmatprep.subr.bf16.mxu0 0
    %7909 = vmatpush1.bf16.xpose.msra.mxu0 0
    %7910 = vmatprep.mubr.bf16.mxu0 0
    %7911 = vmatmul.mubr.bf16.gmra.mrb[0].mxu0 %v7873
    %v7912 = vpop.f32.mrb[0].mxu0
    %v7913 = vadd.f32 0.0, %v7912
    %v7914 = vpop.f32.mrb[0].mxu0
    %v7915 = vpop.f32.mrb[0].mxu0
    %v7916 = vpop.f32.mrb[0].mxu0
    %7917 = vdwg.mxu0
    %v7919 = vsel %vm1240, %v6129, 0
    %v7922 = vsel %vm1240, %v6332, 0
    %7924 = vmatprep.subr.bf16.mxu0 0
    %7925 = vmatpush1.bf16.xpose.msra.mxu0 %v7922
    %7926 = vmatprep.subr.bf16.mxu0 0
    %7927 = vmatpush1.bf16.xpose.msra.mxu0 0
    %7928 = vmatprep.subr.bf16.mxu0 0
    %7929 = vmatpush1.bf16.xpose.msra.mxu0 0
    %7930 = vmatprep.subr.bf16.mxu0 0
    %7931 = vmatpush1.bf16.xpose.msra.mxu0 0
    %7932 = vmatprep.subr.bf16.mxu0 0
    %7933 = vmatpush1.bf16.xpose.msra.mxu0 0
    %7934 = vmatprep.subr.bf16.mxu0 0
    %7935 = vmatpush1.bf16.xpose.msra.mxu0 0
    %7936 = vmatprep.subr.bf16.mxu0 0
    %7937 = vmatpush1.bf16.xpose.msra.mxu0 0
    %7938 = vmatprep.subr.bf16.mxu0 0
    %7939 = vmatpush1.bf16.xpose.msra.mxu0 0
    %7940 = vmatprep.subr.bf16.mxu0 0
    %7941 = vmatpush1.bf16.xpose.msra.mxu0 0
    %7942 = vmatprep.subr.bf16.mxu0 0
    %7943 = vmatpush1.bf16.xpose.msra.mxu0 0
    %7944 = vmatprep.subr.bf16.mxu0 0
    %7945 = vmatpush1.bf16.xpose.msra.mxu0 0
    %7946 = vmatprep.subr.bf16.mxu0 0
    %7947 = vmatpush1.bf16.xpose.msra.mxu0 0
    %7948 = vmatprep.subr.bf16.mxu0 0
    %7949 = vmatpush1.bf16.xpose.msra.mxu0 0
    %7950 = vmatprep.subr.bf16.mxu0 0
    %7951 = vmatpush1.bf16.xpose.msra.mxu0 0
    %7952 = vmatprep.subr.bf16.mxu0 0
    %7953 = vmatpush1.bf16.xpose.msra.mxu0 0
    %7954 = vmatprep.subr.bf16.mxu0 0
    %7955 = vmatpush1.bf16.xpose.msra.mxu0 0
    %7956 = vmatprep.mubr.bf16.mxu0 0
    %7957 = vmatmul.mubr.bf16.gmra.mrb[0].mxu0 %v7919
    %v7958 = vpop.f32.mrb[0].mxu0
    %v7959 = vadd.f32 0.0, %v7958
    %v7960 = vpop.f32.mrb[0].mxu0
    %v7961 = vpop.f32.mrb[0].mxu0
    %v7962 = vpop.f32.mrb[0].mxu0
    %7963 = vdwg.mxu0
    %v7965 = vsel %vm1240, %v6131, 0
    %v7968 = vsel %vm1240, %v6334, 0
    %7970 = vmatprep.subr.bf16.mxu0 0
    %7971 = vmatpush1.bf16.xpose.msra.mxu0 %v7968
    %7972 = vmatprep.subr.bf16.mxu0 0
    %7973 = vmatpush1.bf16.xpose.msra.mxu0 0
    %7974 = vmatprep.subr.bf16.mxu0 0
    %7975 = vmatpush1.bf16.xpose.msra.mxu0 0
    %7976 = vmatprep.subr.bf16.mxu0 0
    %7977 = vmatpush1.bf16.xpose.msra.mxu0 0
    %7978 = vmatprep.subr.bf16.mxu0 0
    %7979 = vmatpush1.bf16.xpose.msra.mxu0 0
    %7980 = vmatprep.subr.bf16.mxu0 0
    %7981 = vmatpush1.bf16.xpose.msra.mxu0 0
    %7982 = vmatprep.subr.bf16.mxu0 0
    %7983 = vmatpush1.bf16.xpose.msra.mxu0 0
    %7984 = vmatprep.subr.bf16.mxu0 0
    %7985 = vmatpush1.bf16.xpose.msra.mxu0 0
    %7986 = vmatprep.subr.bf16.mxu0 0
    %7987 = vmatpush1.bf16.xpose.msra.mxu0 0
    %7988 = vmatprep.subr.bf16.mxu0 0
    %7989 = vmatpush1.bf16.xpose.msra.mxu0 0
    %7990 = vmatprep.subr.bf16.mxu0 0
    %7991 = vmatpush1.bf16.xpose.msra.mxu0 0
    %7992 = vmatprep.subr.bf16.mxu0 0
    %7993 = vmatpush1.bf16.xpose.msra.mxu0 0
    %7994 = vmatprep.subr.bf16.mxu0 0
    %7995 = vmatpush1.bf16.xpose.msra.mxu0 0
    %7996 = vmatprep.subr.bf16.mxu0 0
    %7997 = vmatpush1.bf16.xpose.msra.mxu0 0
    %7998 = vmatprep.subr.bf16.mxu0 0
    %7999 = vmatpush1.bf16.xpose.msra.mxu0 0
    %8000 = vmatprep.subr.bf16.mxu0 0
    %8001 = vmatpush1.bf16.xpose.msra.mxu0 0
    %8002 = vmatprep.mubr.bf16.mxu0 0
    %8003 = vmatmul.mubr.bf16.gmra.mrb[0].mxu0 %v7965
    %v8004 = vpop.f32.mrb[0].mxu0
    %v8005 = vadd.f32 0.0, %v8004
    %v8006 = vpop.f32.mrb[0].mxu0
    %v8007 = vpop.f32.mrb[0].mxu0
    %v8008 = vpop.f32.mrb[0].mxu0
    %8009 = vdwg.mxu0
    %v8010 = vmul.f32 %v6579, 0.17677669
    %v8011 = vmul.f32 %v6625, 0.17677669
    %v8012 = vmul.f32 %v6671, 0.17677669
    %v8013 = vmul.f32 %v6717, 0.17677669
    %v8014 = vmul.f32 %v6763, 0.17677669
    %v8015 = vmul.f32 %v6809, 0.17677669
    %v8016 = vmul.f32 %v6855, 0.17677669
    %v8017 = vmul.f32 %v6901, 0.17677669
    %v8018 = vmul.f32 %v6947, 0.17677669
    %v8019 = vmul.f32 %v6993, 0.17677669
    %v8020 = vmul.f32 %v7039, 0.17677669
    %v8021 = vmul.f32 %v7085, 0.17677669
    %v8022 = vmul.f32 %v7131, 0.17677669
    %v8023 = vmul.f32 %v7177, 0.17677669
    %v8024 = vmul.f32 %v7223, 0.17677669
    %v8025 = vmul.f32 %v7269, 0.17677669
    %v8026 = vmul.f32 %v7315, 0.17677669
    %v8027 = vmul.f32 %v7361, 0.17677669
    %v8028 = vmul.f32 %v7407, 0.17677669
    %v8029 = vmul.f32 %v7453, 0.17677669
    %v8030 = vmul.f32 %v7499, 0.17677669
    %v8031 = vmul.f32 %v7545, 0.17677669
    %v8032 = vmul.f32 %v7591, 0.17677669
    %v8033 = vmul.f32 %v7637, 0.17677669
    %v8034 = vmul.f32 %v7683, 0.17677669
    %v8035 = vmul.f32 %v7729, 0.17677669
    %v8036 = vmul.f32 %v7775, 0.17677669
    %v8037 = vmul.f32 %v7821, 0.17677669
    %v8038 = vmul.f32 %v7867, 0.17677669
    %v8039 = vmul.f32 %v7913, 0.17677669
    %v8040 = vmul.f32 %v7959, 0.17677669
    %v8041 = vmul.f32 %v8005, 0.17677669
    %v8042 = vsel %vm2745, %v8010, -inf
    %8043 = vmax.xlane.f32.xlu0 %v8042
    %v8044 = vpop.xlane.xlu0 %8043
    %v8045 = vsel %vm2745, %v8011, -inf
    %8046 = vmax.xlane.f32.xlu0 %v8045
    %v8047 = vpop.xlane.xlu0 %8046
    %v8048 = vsel %vm2745, %v8012, -inf
    %8049 = vmax.xlane.f32.xlu0 %v8048
    %v8050 = vpop.xlane.xlu0 %8049
    %v8051 = vsel %vm2745, %v8013, -inf
    %8052 = vmax.xlane.f32.xlu0 %v8051
    %v8053 = vpop.xlane.xlu0 %8052
    %v8054 = vsel %vm2745, %v8014, -inf
    %8055 = vmax.xlane.f32.xlu0 %v8054
    %v8056 = vpop.xlane.xlu0 %8055
    %v8057 = vsel %vm2745, %v8015, -inf
    %8058 = vmax.xlane.f32.xlu0 %v8057
    %v8059 = vpop.xlane.xlu0 %8058
    %v8060 = vsel %vm2745, %v8016, -inf
    %8061 = vmax.xlane.f32.xlu0 %v8060
    %v8062 = vpop.xlane.xlu0 %8061
    %v8063 = vsel %vm2745, %v8017, -inf
    %8064 = vmax.xlane.f32.xlu0 %v8063
    %v8065 = vpop.xlane.xlu0 %8064
    %v8066 = vsel %vm2745, %v8018, -inf
    %8067 = vmax.xlane.f32.xlu0 %v8066
    %v8068 = vpop.xlane.xlu0 %8067
    %v8069 = vsel %vm2745, %v8019, -inf
    %8070 = vmax.xlane.f32.xlu0 %v8069
    %v8071 = vpop.xlane.xlu0 %8070
    %v8072 = vsel %vm2745, %v8020, -inf
    %8073 = vmax.xlane.f32.xlu0 %v8072
    %v8074 = vpop.xlane.xlu0 %8073
    %v8075 = vsel %vm2745, %v8021, -inf
    %8076 = vmax.xlane.f32.xlu0 %v8075
    %v8077 = vpop.xlane.xlu0 %8076
    %v8078 = vsel %vm2745, %v8022, -inf
    %8079 = vmax.xlane.f32.xlu0 %v8078
    %v8080 = vpop.xlane.xlu0 %8079
    %v8081 = vsel %vm2745, %v8023, -inf
    %8082 = vmax.xlane.f32.xlu0 %v8081
    %v8083 = vpop.xlane.xlu0 %8082
    %v8084 = vsel %vm2745, %v8024, -inf
    %8085 = vmax.xlane.f32.xlu0 %v8084
    %v8086 = vpop.xlane.xlu0 %8085
    %v8087 = vsel %vm2745, %v8025, -inf
    %8088 = vmax.xlane.f32.xlu0 %v8087
    %v8089 = vpop.xlane.xlu0 %8088
    %v8090 = vsel %vm2745, %v8026, -inf
    %8091 = vmax.xlane.f32.xlu0 %v8090
    %v8092 = vpop.xlane.xlu0 %8091
    %v8093 = vsel %vm2745, %v8027, -inf
    %8094 = vmax.xlane.f32.xlu0 %v8093
    %v8095 = vpop.xlane.xlu0 %8094
    %v8096 = vsel %vm2745, %v8028, -inf
    %8097 = vmax.xlane.f32.xlu0 %v8096
    %v8098 = vpop.xlane.xlu0 %8097
    %v8099 = vsel %vm2745, %v8029, -inf
    %8100 = vmax.xlane.f32.xlu0 %v8099
    %v8101 = vpop.xlane.xlu0 %8100
    %v8102 = vsel %vm2745, %v8030, -inf
    %8103 = vmax.xlane.f32.xlu0 %v8102
    %v8104 = vpop.xlane.xlu0 %8103
    %v8105 = vsel %vm2745, %v8031, -inf
    %8106 = vmax.xlane.f32.xlu0 %v8105
    %v8107 = vpop.xlane.xlu0 %8106
    %v8108 = vsel %vm2745, %v8032, -inf
    %8109 = vmax.xlane.f32.xlu0 %v8108
    %v8110 = vpop.xlane.xlu0 %8109
    %v8111 = vsel %vm2745, %v8033, -inf
    %8112 = vmax.xlane.f32.xlu0 %v8111
    %v8113 = vpop.xlane.xlu0 %8112
    %v8114 = vsel %vm2745, %v8034, -inf
    %8115 = vmax.xlane.f32.xlu0 %v8114
    %v8116 = vpop.xlane.xlu0 %8115
    %v8117 = vsel %vm2745, %v8035, -inf
    %8118 = vmax.xlane.f32.xlu0 %v8117
    %v8119 = vpop.xlane.xlu0 %8118
    %v8120 = vsel %vm2745, %v8036, -inf
    %8121 = vmax.xlane.f32.xlu0 %v8120
    %v8122 = vpop.xlane.xlu0 %8121
    %v8123 = vsel %vm2745, %v8037, -inf
    %8124 = vmax.xlane.f32.xlu0 %v8123
    %v8125 = vpop.xlane.xlu0 %8124
    %v8126 = vsel %vm2745, %v8038, -inf
    %8127 = vmax.xlane.f32.xlu0 %v8126
    %v8128 = vpop.xlane.xlu0 %8127
    %v8129 = vsel %vm2745, %v8039, -inf
    %8130 = vmax.xlane.f32.xlu0 %v8129
    %v8131 = vpop.xlane.xlu0 %8130
    %v8132 = vsel %vm2745, %v8040, -inf
    %8133 = vmax.xlane.f32.xlu0 %v8132
    %v8134 = vpop.xlane.xlu0 %8133
    %v8135 = vsel %vm2745, %v8041, -inf
    %8136 = vmax.xlane.f32.xlu0 %v8135
    %v8137 = vpop.xlane.xlu0 %8136
    %v8138 = vsub.f32 %v8010, %v8044
    %v8139 = vsub.f32 %v8011, %v8047
    %v8140 = vsub.f32 %v8012, %v8050
    %v8141 = vsub.f32 %v8013, %v8053
    %v8142 = vsub.f32 %v8014, %v8056
    %v8143 = vsub.f32 %v8015, %v8059
    %v8144 = vsub.f32 %v8016, %v8062
    %v8145 = vsub.f32 %v8017, %v8065
    %v8146 = vsub.f32 %v8018, %v8068
    %v8147 = vsub.f32 %v8019, %v8071
    %v8148 = vsub.f32 %v8020, %v8074
    %v8149 = vsub.f32 %v8021, %v8077
    %v8150 = vsub.f32 %v8022, %v8080
    %v8151 = vsub.f32 %v8023, %v8083
    %v8152 = vsub.f32 %v8024, %v8086
    %v8153 = vsub.f32 %v8025, %v8089
    %v8154 = vsub.f32 %v8026, %v8092
    %v8155 = vsub.f32 %v8027, %v8095
    %v8156 = vsub.f32 %v8028, %v8098
    %v8157 = vsub.f32 %v8029, %v8101
    %v8158 = vsub.f32 %v8030, %v8104
    %v8159 = vsub.f32 %v8031, %v8107
    %v8160 = vsub.f32 %v8032, %v8110
    %v8161 = vsub.f32 %v8033, %v8113
    %v8162 = vsub.f32 %v8034, %v8116
    %v8163 = vsub.f32 %v8035, %v8119
    %v8164 = vsub.f32 %v8036, %v8122
    %v8165 = vsub.f32 %v8037, %v8125
    %v8166 = vsub.f32 %v8038, %v8128
    %v8167 = vsub.f32 %v8039, %v8131
    %v8168 = vsub.f32 %v8040, %v8134
    %v8169 = vsub.f32 %v8041, %v8137
    %v8170 = vmul.f32 %v8138, 1.442695
    %v8171 = vpow.pop %v8170
    %v8172 = vmul.f32 %v8139, 1.442695
    %v8173 = vpow.pop %v8172
    %v8174 = vmul.f32 %v8140, 1.442695
    %v8175 = vpow.pop %v8174
    %v8176 = vmul.f32 %v8141, 1.442695
    %v8177 = vpow.pop %v8176
    %v8178 = vmul.f32 %v8142, 1.442695
    %v8179 = vpow.pop %v8178
    %v8180 = vmul.f32 %v8143, 1.442695
    %v8181 = vpow.pop %v8180
    %v8182 = vmul.f32 %v8144, 1.442695
    %v8183 = vpow.pop %v8182
    %v8184 = vmul.f32 %v8145, 1.442695
    %v8185 = vpow.pop %v8184
    %v8186 = vmul.f32 %v8146, 1.442695
    %v8187 = vpow.pop %v8186
    %v8188 = vmul.f32 %v8147, 1.442695
    %v8189 = vpow.pop %v8188
    %v8190 = vmul.f32 %v8148, 1.442695
    %v8191 = vpow.pop %v8190
    %v8192 = vmul.f32 %v8149, 1.442695
    %v8193 = vpow.pop %v8192
    %v8194 = vmul.f32 %v8150, 1.442695
    %v8195 = vpow.pop %v8194
    %v8196 = vmul.f32 %v8151, 1.442695
    %v8197 = vpow.pop %v8196
    %v8198 = vmul.f32 %v8152, 1.442695
    %v8199 = vpow.pop %v8198
    %v8200 = vmul.f32 %v8153, 1.442695
    %v8201 = vpow.pop %v8200
    %v8202 = vmul.f32 %v8154, 1.442695
    %v8203 = vpow.pop %v8202
    %v8204 = vmul.f32 %v8155, 1.442695
    %v8205 = vpow.pop %v8204
    %v8206 = vmul.f32 %v8156, 1.442695
    %v8207 = vpow.pop %v8206
    %v8208 = vmul.f32 %v8157, 1.442695
    %v8209 = vpow.pop %v8208
    %v8210 = vmul.f32 %v8158, 1.442695
    %v8211 = vpow.pop %v8210
    %v8212 = vmul.f32 %v8159, 1.442695
    %v8213 = vpow.pop %v8212
    %v8214 = vmul.f32 %v8160, 1.442695
    %v8215 = vpow.pop %v8214
    %v8216 = vmul.f32 %v8161, 1.442695
    %v8217 = vpow.pop %v8216
    %v8218 = vmul.f32 %v8162, 1.442695
    %v8219 = vpow.pop %v8218
    %v8220 = vmul.f32 %v8163, 1.442695
    %v8221 = vpow.pop %v8220
    %v8222 = vmul.f32 %v8164, 1.442695
    %v8223 = vpow.pop %v8222
    %v8224 = vmul.f32 %v8165, 1.442695
    %v8225 = vpow.pop %v8224
    %v8226 = vmul.f32 %v8166, 1.442695
    %v8227 = vpow.pop %v8226
    %v8228 = vmul.f32 %v8167, 1.442695
    %v8229 = vpow.pop %v8228
    %v8230 = vmul.f32 %v8168, 1.442695
    %v8231 = vpow.pop %v8230
    %v8232 = vmul.f32 %v8169, 1.442695
    %v8233 = vpow.pop %v8232
    %v8234 = vsel %vm2745, %v8171, 0.0
    %8235 = vadd.xlane.f32.xlu0 %v8234
    %v8236 = vpop.xlane.xlu0 %8235
    %v8237 = vsel %vm2745, %v8173, 0.0
    %8238 = vadd.xlane.f32.xlu0 %v8237
    %v8239 = vpop.xlane.xlu0 %8238
    %v8240 = vsel %vm2745, %v8175, 0.0
    %8241 = vadd.xlane.f32.xlu0 %v8240
    %v8242 = vpop.xlane.xlu0 %8241
    %v8243 = vsel %vm2745, %v8177, 0.0
    %8244 = vadd.xlane.f32.xlu0 %v8243
    %v8245 = vpop.xlane.xlu0 %8244
    %v8246 = vsel %vm2745, %v8179, 0.0
    %8247 = vadd.xlane.f32.xlu0 %v8246
    %v8248 = vpop.xlane.xlu0 %8247
    %v8249 = vsel %vm2745, %v8181, 0.0
    %8250 = vadd.xlane.f32.xlu0 %v8249
    %v8251 = vpop.xlane.xlu0 %8250
    %v8252 = vsel %vm2745, %v8183, 0.0
    %8253 = vadd.xlane.f32.xlu0 %v8252
    %v8254 = vpop.xlane.xlu0 %8253
    %v8255 = vsel %vm2745, %v8185, 0.0
    %8256 = vadd.xlane.f32.xlu0 %v8255
    %v8257 = vpop.xlane.xlu0 %8256
    %v8258 = vsel %vm2745, %v8187, 0.0
    %8259 = vadd.xlane.f32.xlu0 %v8258
    %v8260 = vpop.xlane.xlu0 %8259
    %v8261 = vsel %vm2745, %v8189, 0.0
    %8262 = vadd.xlane.f32.xlu0 %v8261
    %v8263 = vpop.xlane.xlu0 %8262
    %v8264 = vsel %vm2745, %v8191, 0.0
    %8265 = vadd.xlane.f32.xlu0 %v8264
    %v8266 = vpop.xlane.xlu0 %8265
    %v8267 = vsel %vm2745, %v8193, 0.0
    %8268 = vadd.xlane.f32.xlu0 %v8267
    %v8269 = vpop.xlane.xlu0 %8268
    %v8270 = vsel %vm2745, %v8195, 0.0
    %8271 = vadd.xlane.f32.xlu0 %v8270
    %v8272 = vpop.xlane.xlu0 %8271
    %v8273 = vsel %vm2745, %v8197, 0.0
    %8274 = vadd.xlane.f32.xlu0 %v8273
    %v8275 = vpop.xlane.xlu0 %8274
    %v8276 = vsel %vm2745, %v8199, 0.0
    %8277 = vadd.xlane.f32.xlu0 %v8276
    %v8278 = vpop.xlane.xlu0 %8277
    %v8279 = vsel %vm2745, %v8201, 0.0
    %8280 = vadd.xlane.f32.xlu0 %v8279
    %v8281 = vpop.xlane.xlu0 %8280
    %v8282 = vsel %vm2745, %v8203, 0.0
    %8283 = vadd.xlane.f32.xlu0 %v8282
    %v8284 = vpop.xlane.xlu0 %8283
    %v8285 = vsel %vm2745, %v8205, 0.0
    %8286 = vadd.xlane.f32.xlu0 %v8285
    %v8287 = vpop.xlane.xlu0 %8286
    %v8288 = vsel %vm2745, %v8207, 0.0
    %8289 = vadd.xlane.f32.xlu0 %v8288
    %v8290 = vpop.xlane.xlu0 %8289
    %v8291 = vsel %vm2745, %v8209, 0.0
    %8292 = vadd.xlane.f32.xlu0 %v8291
    %v8293 = vpop.xlane.xlu0 %8292
    %v8294 = vsel %vm2745, %v8211, 0.0
    %8295 = vadd.xlane.f32.xlu0 %v8294
    %v8296 = vpop.xlane.xlu0 %8295
    %v8297 = vsel %vm2745, %v8213, 0.0
    %8298 = vadd.xlane.f32.xlu0 %v8297
    %v8299 = vpop.xlane.xlu0 %8298
    %v8300 = vsel %vm2745, %v8215, 0.0
    %8301 = vadd.xlane.f32.xlu0 %v8300
    %v8302 = vpop.xlane.xlu0 %8301
    %v8303 = vsel %vm2745, %v8217, 0.0
    %8304 = vadd.xlane.f32.xlu0 %v8303
    %v8305 = vpop.xlane.xlu0 %8304
    %v8306 = vsel %vm2745, %v8219, 0.0
    %8307 = vadd.xlane.f32.xlu0 %v8306
    %v8308 = vpop.xlane.xlu0 %8307
    %v8309 = vsel %vm2745, %v8221, 0.0
    %8310 = vadd.xlane.f32.xlu0 %v8309
    %v8311 = vpop.xlane.xlu0 %8310
    %v8312 = vsel %vm2745, %v8223, 0.0
    %8313 = vadd.xlane.f32.xlu0 %v8312
    %v8314 = vpop.xlane.xlu0 %8313
    %v8315 = vsel %vm2745, %v8225, 0.0
    %8316 = vadd.xlane.f32.xlu0 %v8315
    %v8317 = vpop.xlane.xlu0 %8316
    %v8318 = vsel %vm2745, %v8227, 0.0
    %8319 = vadd.xlane.f32.xlu0 %v8318
    %v8320 = vpop.xlane.xlu0 %8319
    %v8321 = vsel %vm2745, %v8229, 0.0
    %8322 = vadd.xlane.f32.xlu0 %v8321
    %v8323 = vpop.xlane.xlu0 %8322
    %v8324 = vsel %vm2745, %v8231, 0.0
    %8325 = vadd.xlane.f32.xlu0 %v8324
    %v8326 = vpop.xlane.xlu0 %8325
    %v8327 = vsel %vm2745, %v8233, 0.0
    %8328 = vadd.xlane.f32.xlu0 %v8327
    %v8329 = vpop.xlane.xlu0 %8328
    %v8330 = vrcp.pop %v8236
    %v8331 = vmul.f32 %v8171, %v8330
    %v8332 = vrcp.pop %v8239
    %v8333 = vmul.f32 %v8173, %v8332
    %v8334 = vrcp.pop %v8242
    %v8335 = vmul.f32 %v8175, %v8334
    %v8336 = vrcp.pop %v8245
    %v8337 = vmul.f32 %v8177, %v8336
    %v8338 = vrcp.pop %v8248
    %v8339 = vmul.f32 %v8179, %v8338
    %v8340 = vrcp.pop %v8251
    %v8341 = vmul.f32 %v8181, %v8340
    %v8342 = vrcp.pop %v8254
    %v8343 = vmul.f32 %v8183, %v8342
    %v8344 = vrcp.pop %v8257
    %v8345 = vmul.f32 %v8185, %v8344
    %v8346 = vrcp.pop %v8260
    %v8347 = vmul.f32 %v8187, %v8346
    %v8348 = vrcp.pop %v8263
    %v8349 = vmul.f32 %v8189, %v8348
    %v8350 = vrcp.pop %v8266
    %v8351 = vmul.f32 %v8191, %v8350
    %v8352 = vrcp.pop %v8269
    %v8353 = vmul.f32 %v8193, %v8352
    %v8354 = vrcp.pop %v8272
    %v8355 = vmul.f32 %v8195, %v8354
    %v8356 = vrcp.pop %v8275
    %v8357 = vmul.f32 %v8197, %v8356
    %v8358 = vrcp.pop %v8278
    %v8359 = vmul.f32 %v8199, %v8358
    %v8360 = vrcp.pop %v8281
    %v8361 = vmul.f32 %v8201, %v8360
    %v8362 = vrcp.pop %v8284
    %v8363 = vmul.f32 %v8203, %v8362
    %v8364 = vrcp.pop %v8287
    %v8365 = vmul.f32 %v8205, %v8364
    %v8366 = vrcp.pop %v8290
    %v8367 = vmul.f32 %v8207, %v8366
    %v8368 = vrcp.pop %v8293
    %v8369 = vmul.f32 %v8209, %v8368
    %v8370 = vrcp.pop %v8296
    %v8371 = vmul.f32 %v8211, %v8370
    %v8372 = vrcp.pop %v8299
    %v8373 = vmul.f32 %v8213, %v8372
    %v8374 = vrcp.pop %v8302
    %v8375 = vmul.f32 %v8215, %v8374
    %v8376 = vrcp.pop %v8305
    %v8377 = vmul.f32 %v8217, %v8376
    %v8378 = vrcp.pop %v8308
    %v8379 = vmul.f32 %v8219, %v8378
    %v8380 = vrcp.pop %v8311
    %v8381 = vmul.f32 %v8221, %v8380
    %v8382 = vrcp.pop %v8314
    %v8383 = vmul.f32 %v8223, %v8382
    %v8384 = vrcp.pop %v8317
    %v8385 = vmul.f32 %v8225, %v8384
    %v8386 = vrcp.pop %v8320
    %v8387 = vmul.f32 %v8227, %v8386
    %v8388 = vrcp.pop %v8323
    %v8389 = vmul.f32 %v8229, %v8388
    %v8390 = vrcp.pop %v8326
    %v8391 = vmul.f32 %v8231, %v8390
    %v8392 = vrcp.pop %v8329
    %v8393 = vmul.f32 %v8233, %v8392
    %v8394 = vpack.c.bf16 %v8331, %v8331
    %v8395 = vpack.c.bf16 %v8333, %v8333
    %v8396 = vpack.c.bf16 %v8335, %v8335
    %v8397 = vpack.c.bf16 %v8337, %v8337
    %v8398 = vpack.c.bf16 %v8339, %v8339
    %v8399 = vpack.c.bf16 %v8341, %v8341
    %v8400 = vpack.c.bf16 %v8343, %v8343
    %v8401 = vpack.c.bf16 %v8345, %v8345
    %v8402 = vpack.c.bf16 %v8347, %v8347
    %v8403 = vpack.c.bf16 %v8349, %v8349
    %v8404 = vpack.c.bf16 %v8351, %v8351
    %v8405 = vpack.c.bf16 %v8353, %v8353
    %v8406 = vpack.c.bf16 %v8355, %v8355
    %v8407 = vpack.c.bf16 %v8357, %v8357
    %v8408 = vpack.c.bf16 %v8359, %v8359
    %v8409 = vpack.c.bf16 %v8361, %v8361
    %v8410 = vpack.c.bf16 %v8363, %v8363
    %v8411 = vpack.c.bf16 %v8365, %v8365
    %v8412 = vpack.c.bf16 %v8367, %v8367
    %v8413 = vpack.c.bf16 %v8369, %v8369
    %v8414 = vpack.c.bf16 %v8371, %v8371
    %v8415 = vpack.c.bf16 %v8373, %v8373
    %v8416 = vpack.c.bf16 %v8375, %v8375
    %v8417 = vpack.c.bf16 %v8377, %v8377
    %v8418 = vpack.c.bf16 %v8379, %v8379
    %v8419 = vpack.c.bf16 %v8381, %v8381
    %v8420 = vpack.c.bf16 %v8383, %v8383
    %v8421 = vpack.c.bf16 %v8385, %v8385
    %v8422 = vpack.c.bf16 %v8387, %v8387
    %v8423 = vpack.c.bf16 %v8389, %v8389
    %v8424 = vpack.c.bf16 %v8391, %v8391
    %v8425 = vpack.c.bf16 %v8393, %v8393
    %v8427 = vsel %vm3130, %v8394, 0
    %v8430 = vsel %vm3134, %v6365, 0
    %8432 = vmatprep.subr.bf16.mxu0 0
    %8433 = vmatpush1.bf16.msra.mxu0 %v8430
    %8434 = vmatprep.subr.bf16.mxu0 0
    %8435 = vmatpush1.bf16.msra.mxu0 0
    %8436 = vmatprep.subr.bf16.mxu0 0
    %8437 = vmatpush1.bf16.msra.mxu0 0
    %8438 = vmatprep.subr.bf16.mxu0 0
    %8439 = vmatpush1.bf16.msra.mxu0 0
    %8440 = vmatprep.subr.bf16.mxu0 0
    %8441 = vmatpush1.bf16.msra.mxu0 0
    %8442 = vmatprep.subr.bf16.mxu0 0
    %8443 = vmatpush1.bf16.msra.mxu0 0
    %8444 = vmatprep.subr.bf16.mxu0 0
    %8445 = vmatpush1.bf16.msra.mxu0 0
    %8446 = vmatprep.subr.bf16.mxu0 0
    %8447 = vmatpush1.bf16.msra.mxu0 0
    %8448 = vmatprep.subr.bf16.mxu0 0
    %8449 = vmatpush1.bf16.msra.mxu0 0
    %8450 = vmatprep.subr.bf16.mxu0 0
    %8451 = vmatpush1.bf16.msra.mxu0 0
    %8452 = vmatprep.subr.bf16.mxu0 0
    %8453 = vmatpush1.bf16.msra.mxu0 0
    %8454 = vmatprep.subr.bf16.mxu0 0
    %8455 = vmatpush1.bf16.msra.mxu0 0
    %8456 = vmatprep.subr.bf16.mxu0 0
    %8457 = vmatpush1.bf16.msra.mxu0 0
    %8458 = vmatprep.subr.bf16.mxu0 0
    %8459 = vmatpush1.bf16.msra.mxu0 0
    %8460 = vmatprep.subr.bf16.mxu0 0
    %8461 = vmatpush1.bf16.msra.mxu0 0
    %8462 = vmatprep.subr.bf16.mxu0 0
    %8463 = vmatpush1.bf16.msra.mxu0 0
    %8464 = vmatprep.mubr.bf16.mxu0 0
    %8465 = vmatmul.mubr.bf16.gmra.mrb[0].mxu0 %v8427
    %v8466 = vpop.f32.mrb[0].mxu0
    %v8467 = vadd.f32 0.0, %v8466
    %v8468 = vpop.f32.mrb[0].mxu0
    %v8469 = vpop.f32.mrb[0].mxu0
    %v8470 = vpop.f32.mrb[0].mxu0
    %8471 = vdwg.mxu0
    %v8473 = vsel %vm3130, %v8395, 0
    %v8476 = vsel %vm3134, %v6379, 0
    %8478 = vmatprep.subr.bf16.mxu0 0
    %8479 = vmatpush1.bf16.msra.mxu0 %v8476
    %8480 = vmatprep.subr.bf16.mxu0 0
    %8481 = vmatpush1.bf16.msra.mxu0 0
    %8482 = vmatprep.subr.bf16.mxu0 0
    %8483 = vmatpush1.bf16.msra.mxu0 0
    %8484 = vmatprep.subr.bf16.mxu0 0
    %8485 = vmatpush1.bf16.msra.mxu0 0
    %8486 = vmatprep.subr.bf16.mxu0 0
    %8487 = vmatpush1.bf16.msra.mxu0 0
    %8488 = vmatprep.subr.bf16.mxu0 0
    %8489 = vmatpush1.bf16.msra.mxu0 0
    %8490 = vmatprep.subr.bf16.mxu0 0
    %8491 = vmatpush1.bf16.msra.mxu0 0
    %8492 = vmatprep.subr.bf16.mxu0 0
    %8493 = vmatpush1.bf16.msra.mxu0 0
    %8494 = vmatprep.subr.bf16.mxu0 0
    %8495 = vmatpush1.bf16.msra.mxu0 0
    %8496 = vmatprep.subr.bf16.mxu0 0
    %8497 = vmatpush1.bf16.msra.mxu0 0
    %8498 = vmatprep.subr.bf16.mxu0 0
    %8499 = vmatpush1.bf16.msra.mxu0 0
    %8500 = vmatprep.subr.bf16.mxu0 0
    %8501 = vmatpush1.bf16.msra.mxu0 0
    %8502 = vmatprep.subr.bf16.mxu0 0
    %8503 = vmatpush1.bf16.msra.mxu0 0
    %8504 = vmatprep.subr.bf16.mxu0 0
    %8505 = vmatpush1.bf16.msra.mxu0 0
    %8506 = vmatprep.subr.bf16.mxu0 0
    %8507 = vmatpush1.bf16.msra.mxu0 0
    %8508 = vmatprep.subr.bf16.mxu0 0
    %8509 = vmatpush1.bf16.msra.mxu0 0
    %8510 = vmatprep.mubr.bf16.mxu0 0
    %8511 = vmatmul.mubr.bf16.gmra.mrb[0].mxu0 %v8473
    %v8512 = vpop.f32.mrb[0].mxu0
    %v8513 = vadd.f32 0.0, %v8512
    %v8514 = vpop.f32.mrb[0].mxu0
    %v8515 = vpop.f32.mrb[0].mxu0
    %v8516 = vpop.f32.mrb[0].mxu0
    %8517 = vdwg.mxu0
    %v8519 = vsel %vm3130, %v8396, 0
    %v8522 = vsel %vm3134, %v6387, 0
    %8524 = vmatprep.subr.bf16.mxu0 0
    %8525 = vmatpush1.bf16.msra.mxu0 %v8522
    %8526 = vmatprep.subr.bf16.mxu0 0
    %8527 = vmatpush1.bf16.msra.mxu0 0
    %8528 = vmatprep.subr.bf16.mxu0 0
    %8529 = vmatpush1.bf16.msra.mxu0 0
    %8530 = vmatprep.subr.bf16.mxu0 0
    %8531 = vmatpush1.bf16.msra.mxu0 0
    %8532 = vmatprep.subr.bf16.mxu0 0
    %8533 = vmatpush1.bf16.msra.mxu0 0
    %8534 = vmatprep.subr.bf16.mxu0 0
    %8535 = vmatpush1.bf16.msra.mxu0 0
    %8536 = vmatprep.subr.bf16.mxu0 0
    %8537 = vmatpush1.bf16.msra.mxu0 0
    %8538 = vmatprep.subr.bf16.mxu0 0
    %8539 = vmatpush1.bf16.msra.mxu0 0
    %8540 = vmatprep.subr.bf16.mxu0 0
    %8541 = vmatpush1.bf16.msra.mxu0 0
    %8542 = vmatprep.subr.bf16.mxu0 0
    %8543 = vmatpush1.bf16.msra.mxu0 0
    %8544 = vmatprep.subr.bf16.mxu0 0
    %8545 = vmatpush1.bf16.msra.mxu0 0
    %8546 = vmatprep.subr.bf16.mxu0 0
    %8547 = vmatpush1.bf16.msra.mxu0 0
    %8548 = vmatprep.subr.bf16.mxu0 0
    %8549 = vmatpush1.bf16.msra.mxu0 0
    %8550 = vmatprep.subr.bf16.mxu0 0
    %8551 = vmatpush1.bf16.msra.mxu0 0
    %8552 = vmatprep.subr.bf16.mxu0 0
    %8553 = vmatpush1.bf16.msra.mxu0 0
    %8554 = vmatprep.subr.bf16.mxu0 0
    %8555 = vmatpush1.bf16.msra.mxu0 0
    %8556 = vmatprep.mubr.bf16.mxu0 0
    %8557 = vmatmul.mubr.bf16.gmra.mrb[0].mxu0 %v8519
    %v8558 = vpop.f32.mrb[0].mxu0
    %v8559 = vadd.f32 0.0, %v8558
    %v8560 = vpop.f32.mrb[0].mxu0
    %v8561 = vpop.f32.mrb[0].mxu0
    %v8562 = vpop.f32.mrb[0].mxu0
    %8563 = vdwg.mxu0
    %v8565 = vsel %vm3130, %v8397, 0
    %v8568 = vsel %vm3134, %v6389, 0
    %8570 = vmatprep.subr.bf16.mxu0 0
    %8571 = vmatpush1.bf16.msra.mxu0 %v8568
    %8572 = vmatprep.subr.bf16.mxu0 0
    %8573 = vmatpush1.bf16.msra.mxu0 0
    %8574 = vmatprep.subr.bf16.mxu0 0
    %8575 = vmatpush1.bf16.msra.mxu0 0
    %8576 = vmatprep.subr.bf16.mxu0 0
    %8577 = vmatpush1.bf16.msra.mxu0 0
    %8578 = vmatprep.subr.bf16.mxu0 0
    %8579 = vmatpush1.bf16.msra.mxu0 0
    %8580 = vmatprep.subr.bf16.mxu0 0
    %8581 = vmatpush1.bf16.msra.mxu0 0
    %8582 = vmatprep.subr.bf16.mxu0 0
    %8583 = vmatpush1.bf16.msra.mxu0 0
    %8584 = vmatprep.subr.bf16.mxu0 0
    %8585 = vmatpush1.bf16.msra.mxu0 0
    %8586 = vmatprep.subr.bf16.mxu0 0
    %8587 = vmatpush1.bf16.msra.mxu0 0
    %8588 = vmatprep.subr.bf16.mxu0 0
    %8589 = vmatpush1.bf16.msra.mxu0 0
    %8590 = vmatprep.subr.bf16.mxu0 0
    %8591 = vmatpush1.bf16.msra.mxu0 0
    %8592 = vmatprep.subr.bf16.mxu0 0
    %8593 = vmatpush1.bf16.msra.mxu0 0
    %8594 = vmatprep.subr.bf16.mxu0 0
    %8595 = vmatpush1.bf16.msra.mxu0 0
    %8596 = vmatprep.subr.bf16.mxu0 0
    %8597 = vmatpush1.bf16.msra.mxu0 0
    %8598 = vmatprep.subr.bf16.mxu0 0
    %8599 = vmatpush1.bf16.msra.mxu0 0
    %8600 = vmatprep.subr.bf16.mxu0 0
    %8601 = vmatpush1.bf16.msra.mxu0 0
    %8602 = vmatprep.mubr.bf16.mxu0 0
    %8603 = vmatmul.mubr.bf16.gmra.mrb[0].mxu0 %v8565
    %v8604 = vpop.f32.mrb[0].mxu0
    %v8605 = vadd.f32 0.0, %v8604
    %v8606 = vpop.f32.mrb[0].mxu0
    %v8607 = vpop.f32.mrb[0].mxu0
    %v8608 = vpop.f32.mrb[0].mxu0
    %8609 = vdwg.mxu0
    %v8611 = vsel %vm3130, %v8398, 0
    %v8614 = vsel %vm3134, %v6372, 0
    %8616 = vmatprep.subr.bf16.mxu0 0
    %8617 = vmatpush1.bf16.msra.mxu0 %v8614
    %8618 = vmatprep.subr.bf16.mxu0 0
    %8619 = vmatpush1.bf16.msra.mxu0 0
    %8620 = vmatprep.subr.bf16.mxu0 0
    %8621 = vmatpush1.bf16.msra.mxu0 0
    %8622 = vmatprep.subr.bf16.mxu0 0
    %8623 = vmatpush1.bf16.msra.mxu0 0
    %8624 = vmatprep.subr.bf16.mxu0 0
    %8625 = vmatpush1.bf16.msra.mxu0 0
    %8626 = vmatprep.subr.bf16.mxu0 0
    %8627 = vmatpush1.bf16.msra.mxu0 0
    %8628 = vmatprep.subr.bf16.mxu0 0
    %8629 = vmatpush1.bf16.msra.mxu0 0
    %8630 = vmatprep.subr.bf16.mxu0 0
    %8631 = vmatpush1.bf16.msra.mxu0 0
    %8632 = vmatprep.subr.bf16.mxu0 0
    %8633 = vmatpush1.bf16.msra.mxu0 0
    %8634 = vmatprep.subr.bf16.mxu0 0
    %8635 = vmatpush1.bf16.msra.mxu0 0
    %8636 = vmatprep.subr.bf16.mxu0 0
    %8637 = vmatpush1.bf16.msra.mxu0 0
    %8638 = vmatprep.subr.bf16.mxu0 0
    %8639 = vmatpush1.bf16.msra.mxu0 0
    %8640 = vmatprep.subr.bf16.mxu0 0
    %8641 = vmatpush1.bf16.msra.mxu0 0
    %8642 = vmatprep.subr.bf16.mxu0 0
    %8643 = vmatpush1.bf16.msra.mxu0 0
    %8644 = vmatprep.subr.bf16.mxu0 0
    %8645 = vmatpush1.bf16.msra.mxu0 0
    %8646 = vmatprep.subr.bf16.mxu0 0
    %8647 = vmatpush1.bf16.msra.mxu0 0
    %8648 = vmatprep.mubr.bf16.mxu0 0
    %8649 = vmatmul.mubr.bf16.gmra.mrb[0].mxu0 %v8611
    %v8650 = vpop.f32.mrb[0].mxu0
    %v8651 = vadd.f32 0.0, %v8650
    %v8652 = vpop.f32.mrb[0].mxu0
    %v8653 = vpop.f32.mrb[0].mxu0
    %v8654 = vpop.f32.mrb[0].mxu0
    %8655 = vdwg.mxu0
    %v8657 = vsel %vm3130, %v8399, 0
    %v8660 = vsel %vm3134, %v6386, 0
    %8662 = vmatprep.subr.bf16.mxu0 0
    %8663 = vmatpush1.bf16.msra.mxu0 %v8660
    %8664 = vmatprep.subr.bf16.mxu0 0
    %8665 = vmatpush1.bf16.msra.mxu0 0
    %8666 = vmatprep.subr.bf16.mxu0 0
    %8667 = vmatpush1.bf16.msra.mxu0 0
    %8668 = vmatprep.subr.bf16.mxu0 0
    %8669 = vmatpush1.bf16.msra.mxu0 0
    %8670 = vmatprep.subr.bf16.mxu0 0
    %8671 = vmatpush1.bf16.msra.mxu0 0
    %8672 = vmatprep.subr.bf16.mxu0 0
    %8673 = vmatpush1.bf16.msra.mxu0 0
    %8674 = vmatprep.subr.bf16.mxu0 0
    %8675 = vmatpush1.bf16.msra.mxu0 0
    %8676 = vmatprep.subr.bf16.mxu0 0
    %8677 = vmatpush1.bf16.msra.mxu0 0
    %8678 = vmatprep.subr.bf16.mxu0 0
    %8679 = vmatpush1.bf16.msra.mxu0 0
    %8680 = vmatprep.subr.bf16.mxu0 0
    %8681 = vmatpush1.bf16.msra.mxu0 0
    %8682 = vmatprep.subr.bf16.mxu0 0
    %8683 = vmatpush1.bf16.msra.mxu0 0
    %8684 = vmatprep.subr.bf16.mxu0 0
    %8685 = vmatpush1.bf16.msra.mxu0 0
    %8686 = vmatprep.subr.bf16.mxu0 0
    %8687 = vmatpush1.bf16.msra.mxu0 0
    %8688 = vmatprep.subr.bf16.mxu0 0
    %8689 = vmatpush1.bf16.msra.mxu0 0
    %8690 = vmatprep.subr.bf16.mxu0 0
    %8691 = vmatpush1.bf16.msra.mxu0 0
    %8692 = vmatprep.subr.bf16.mxu0 0
    %8693 = vmatpush1.bf16.msra.mxu0 0
    %8694 = vmatprep.mubr.bf16.mxu0 0
    %8695 = vmatmul.mubr.bf16.gmra.mrb[0].mxu0 %v8657
    %v8696 = vpop.f32.mrb[0].mxu0
    %v8697 = vadd.f32 0.0, %v8696
    %v8698 = vpop.f32.mrb[0].mxu0
    %v8699 = vpop.f32.mrb[0].mxu0
    %v8700 = vpop.f32.mrb[0].mxu0
    %8701 = vdwg.mxu0
    %v8703 = vsel %vm3130, %v8400, 0
    %v8706 = vsel %vm3134, %v6388, 0
    %8708 = vmatprep.subr.bf16.mxu0 0
    %8709 = vmatpush1.bf16.msra.mxu0 %v8706
    %8710 = vmatprep.subr.bf16.mxu0 0
    %8711 = vmatpush1.bf16.msra.mxu0 0
    %8712 = vmatprep.subr.bf16.mxu0 0
    %8713 = vmatpush1.bf16.msra.mxu0 0
    %8714 = vmatprep.subr.bf16.mxu0 0
    %8715 = vmatpush1.bf16.msra.mxu0 0
    %8716 = vmatprep.subr.bf16.mxu0 0
    %8717 = vmatpush1.bf16.msra.mxu0 0
    %8718 = vmatprep.subr.bf16.mxu0 0
    %8719 = vmatpush1.bf16.msra.mxu0 0
    %8720 = vmatprep.subr.bf16.mxu0 0
    %8721 = vmatpush1.bf16.msra.mxu0 0
    %8722 = vmatprep.subr.bf16.mxu0 0
    %8723 = vmatpush1.bf16.msra.mxu0 0
    %8724 = vmatprep.subr.bf16.mxu0 0
    %8725 = vmatpush1.bf16.msra.mxu0 0
    %8726 = vmatprep.subr.bf16.mxu0 0
    %8727 = vmatpush1.bf16.msra.mxu0 0
    %8728 = vmatprep.subr.bf16.mxu0 0
    %8729 = vmatpush1.bf16.msra.mxu0 0
    %8730 = vmatprep.subr.bf16.mxu0 0
    %8731 = vmatpush1.bf16.msra.mxu0 0
    %8732 = vmatprep.subr.bf16.mxu0 0
    %8733 = vmatpush1.bf16.msra.mxu0 0
    %8734 = vmatprep.subr.bf16.mxu0 0
    %8735 = vmatpush1.bf16.msra.mxu0 0
    %8736 = vmatprep.subr.bf16.mxu0 0
    %8737 = vmatpush1.bf16.msra.mxu0 0
    %8738 = vmatprep.subr.bf16.mxu0 0
    %8739 = vmatpush1.bf16.msra.mxu0 0
    %8740 = vmatprep.mubr.bf16.mxu0 0
    %8741 = vmatmul.mubr.bf16.gmra.mrb[0].mxu0 %v8703
    %v8742 = vpop.f32.mrb[0].mxu0
    %v8743 = vadd.f32 0.0, %v8742
    %v8744 = vpop.f32.mrb[0].mxu0
    %v8745 = vpop.f32.mrb[0].mxu0
    %v8746 = vpop.f32.mrb[0].mxu0
    %8747 = vdwg.mxu0
    %v8749 = vsel %vm3130, %v8401, 0
    %v8752 = vsel %vm3134, %v6390, 0
    %8754 = vmatprep.subr.bf16.mxu0 0
    %8755 = vmatpush1.bf16.msra.mxu0 %v8752
    %8756 = vmatprep.subr.bf16.mxu0 0
    %8757 = vmatpush1.bf16.msra.mxu0 0
    %8758 = vmatprep.subr.bf16.mxu0 0
    %8759 = vmatpush1.bf16.msra.mxu0 0
    %8760 = vmatprep.subr.bf16.mxu0 0
    %8761 = vmatpush1.bf16.msra.mxu0 0
    %8762 = vmatprep.subr.bf16.mxu0 0
    %8763 = vmatpush1.bf16.msra.mxu0 0
    %8764 = vmatprep.subr.bf16.mxu0 0
    %8765 = vmatpush1.bf16.msra.mxu0 0
    %8766 = vmatprep.subr.bf16.mxu0 0
    %8767 = vmatpush1.bf16.msra.mxu0 0
    %8768 = vmatprep.subr.bf16.mxu0 0
    %8769 = vmatpush1.bf16.msra.mxu0 0
    %8770 = vmatprep.subr.bf16.mxu0 0
    %8771 = vmatpush1.bf16.msra.mxu0 0
    %8772 = vmatprep.subr.bf16.mxu0 0
    %8773 = vmatpush1.bf16.msra.mxu0 0
    %8774 = vmatprep.subr.bf16.mxu0 0
    %8775 = vmatpush1.bf16.msra.mxu0 0
    %8776 = vmatprep.subr.bf16.mxu0 0
    %8777 = vmatpush1.bf16.msra.mxu0 0
    %8778 = vmatprep.subr.bf16.mxu0 0
    %8779 = vmatpush1.bf16.msra.mxu0 0
    %8780 = vmatprep.subr.bf16.mxu0 0
    %8781 = vmatpush1.bf16.msra.mxu0 0
    %8782 = vmatprep.subr.bf16.mxu0 0
    %8783 = vmatpush1.bf16.msra.mxu0 0
    %8784 = vmatprep.subr.bf16.mxu0 0
    %8785 = vmatpush1.bf16.msra.mxu0 0
    %8786 = vmatprep.mubr.bf16.mxu0 0
    %8787 = vmatmul.mubr.bf16.gmra.mrb[0].mxu0 %v8749
    %v8788 = vpop.f32.mrb[0].mxu0
    %v8789 = vadd.f32 0.0, %v8788
    %v8790 = vpop.f32.mrb[0].mxu0
    %v8791 = vpop.f32.mrb[0].mxu0
    %v8792 = vpop.f32.mrb[0].mxu0
    %8793 = vdwg.mxu0
    %v8795 = vsel %vm3130, %v8402, 0
    %v8798 = vsel %vm3134, %v6414, 0
    %8800 = vmatprep.subr.bf16.mxu0 0
    %8801 = vmatpush1.bf16.msra.mxu0 %v8798
    %8802 = vmatprep.subr.bf16.mxu0 0
    %8803 = vmatpush1.bf16.msra.mxu0 0
    %8804 = vmatprep.subr.bf16.mxu0 0
    %8805 = vmatpush1.bf16.msra.mxu0 0
    %8806 = vmatprep.subr.bf16.mxu0 0
    %8807 = vmatpush1.bf16.msra.mxu0 0
    %8808 = vmatprep.subr.bf16.mxu0 0
    %8809 = vmatpush1.bf16.msra.mxu0 0
    %8810 = vmatprep.subr.bf16.mxu0 0
    %8811 = vmatpush1.bf16.msra.mxu0 0
    %8812 = vmatprep.subr.bf16.mxu0 0
    %8813 = vmatpush1.bf16.msra.mxu0 0
    %8814 = vmatprep.subr.bf16.mxu0 0
    %8815 = vmatpush1.bf16.msra.mxu0 0
    %8816 = vmatprep.subr.bf16.mxu0 0
    %8817 = vmatpush1.bf16.msra.mxu0 0
    %8818 = vmatprep.subr.bf16.mxu0 0
    %8819 = vmatpush1.bf16.msra.mxu0 0
    %8820 = vmatprep.subr.bf16.mxu0 0
    %8821 = vmatpush1.bf16.msra.mxu0 0
    %8822 = vmatprep.subr.bf16.mxu0 0
    %8823 = vmatpush1.bf16.msra.mxu0 0
    %8824 = vmatprep.subr.bf16.mxu0 0
    %8825 = vmatpush1.bf16.msra.mxu0 0
    %8826 = vmatprep.subr.bf16.mxu0 0
    %8827 = vmatpush1.bf16.msra.mxu0 0
    %8828 = vmatprep.subr.bf16.mxu0 0
    %8829 = vmatpush1.bf16.msra.mxu0 0
    %8830 = vmatprep.subr.bf16.mxu0 0
    %8831 = vmatpush1.bf16.msra.mxu0 0
    %8832 = vmatprep.mubr.bf16.mxu0 0
    %8833 = vmatmul.mubr.bf16.gmra.mrb[0].mxu0 %v8795
    %v8834 = vpop.f32.mrb[0].mxu0
    %v8835 = vadd.f32 0.0, %v8834
    %v8836 = vpop.f32.mrb[0].mxu0
    %v8837 = vpop.f32.mrb[0].mxu0
    %v8838 = vpop.f32.mrb[0].mxu0
    %8839 = vdwg.mxu0
    %v8841 = vsel %vm3130, %v8403, 0
    %v8844 = vsel %vm3134, %v6428, 0
    %8846 = vmatprep.subr.bf16.mxu0 0
    %8847 = vmatpush1.bf16.msra.mxu0 %v8844
    %8848 = vmatprep.subr.bf16.mxu0 0
    %8849 = vmatpush1.bf16.msra.mxu0 0
    %8850 = vmatprep.subr.bf16.mxu0 0
    %8851 = vmatpush1.bf16.msra.mxu0 0
    %8852 = vmatprep.subr.bf16.mxu0 0
    %8853 = vmatpush1.bf16.msra.mxu0 0
    %8854 = vmatprep.subr.bf16.mxu0 0
    %8855 = vmatpush1.bf16.msra.mxu0 0
    %8856 = vmatprep.subr.bf16.mxu0 0
    %8857 = vmatpush1.bf16.msra.mxu0 0
    %8858 = vmatprep.subr.bf16.mxu0 0
    %8859 = vmatpush1.bf16.msra.mxu0 0
    %8860 = vmatprep.subr.bf16.mxu0 0
    %8861 = vmatpush1.bf16.msra.mxu0 0
    %8862 = vmatprep.subr.bf16.mxu0 0
    %8863 = vmatpush1.bf16.msra.mxu0 0
    %8864 = vmatprep.subr.bf16.mxu0 0
    %8865 = vmatpush1.bf16.msra.mxu0 0
    %8866 = vmatprep.subr.bf16.mxu0 0
    %8867 = vmatpush1.bf16.msra.mxu0 0
    %8868 = vmatprep.subr.bf16.mxu0 0
    %8869 = vmatpush1.bf16.msra.mxu0 0
    %8870 = vmatprep.subr.bf16.mxu0 0
    %8871 = vmatpush1.bf16.msra.mxu0 0
    %8872 = vmatprep.subr.bf16.mxu0 0
    %8873 = vmatpush1.bf16.msra.mxu0 0
    %8874 = vmatprep.subr.bf16.mxu0 0
    %8875 = vmatpush1.bf16.msra.mxu0 0
    %8876 = vmatprep.subr.bf16.mxu0 0
    %8877 = vmatpush1.bf16.msra.mxu0 0
    %8878 = vmatprep.mubr.bf16.mxu0 0
    %8879 = vmatmul.mubr.bf16.gmra.mrb[0].mxu0 %v8841
    %v8880 = vpop.f32.mrb[0].mxu0
    %v8881 = vadd.f32 0.0, %v8880
    %v8882 = vpop.f32.mrb[0].mxu0
    %v8883 = vpop.f32.mrb[0].mxu0
    %v8884 = vpop.f32.mrb[0].mxu0
    %8885 = vdwg.mxu0
    %v8887 = vsel %vm3130, %v8404, 0
    %v8890 = vsel %vm3134, %v6436, 0
    %8892 = vmatprep.subr.bf16.mxu0 0
    %8893 = vmatpush1.bf16.msra.mxu0 %v8890
    %8894 = vmatprep.subr.bf16.mxu0 0
    %8895 = vmatpush1.bf16.msra.mxu0 0
    %8896 = vmatprep.subr.bf16.mxu0 0
    %8897 = vmatpush1.bf16.msra.mxu0 0
    %8898 = vmatprep.subr.bf16.mxu0 0
    %8899 = vmatpush1.bf16.msra.mxu0 0
    %8900 = vmatprep.subr.bf16.mxu0 0
    %8901 = vmatpush1.bf16.msra.mxu0 0
    %8902 = vmatprep.subr.bf16.mxu0 0
    %8903 = vmatpush1.bf16.msra.mxu0 0
    %8904 = vmatprep.subr.bf16.mxu0 0
    %8905 = vmatpush1.bf16.msra.mxu0 0
    %8906 = vmatprep.subr.bf16.mxu0 0
    %8907 = vmatpush1.bf16.msra.mxu0 0
    %8908 = vmatprep.subr.bf16.mxu0 0
    %8909 = vmatpush1.bf16.msra.mxu0 0
    %8910 = vmatprep.subr.bf16.mxu0 0
    %8911 = vmatpush1.bf16.msra.mxu0 0
    %8912 = vmatprep.subr.bf16.mxu0 0
    %8913 = vmatpush1.bf16.msra.mxu0 0
    %8914 = vmatprep.subr.bf16.mxu0 0
    %8915 = vmatpush1.bf16.msra.mxu0 0
    %8916 = vmatprep.subr.bf16.mxu0 0
    %8917 = vmatpush1.bf16.msra.mxu0 0
    %8918 = vmatprep.subr.bf16.mxu0 0
    %8919 = vmatpush1.bf16.msra.mxu0 0
    %8920 = vmatprep.subr.bf16.mxu0 0
    %8921 = vmatpush1.bf16.msra.mxu0 0
    %8922 = vmatprep.subr.bf16.mxu0 0
    %8923 = vmatpush1.bf16.msra.mxu0 0
    %8924 = vmatprep.mubr.bf16.mxu0 0
    %8925 = vmatmul.mubr.bf16.gmra.mrb[0].mxu0 %v8887
    %v8926 = vpop.f32.mrb[0].mxu0
    %v8927 = vadd.f32 0.0, %v8926
    %v8928 = vpop.f32.mrb[0].mxu0
    %v8929 = vpop.f32.mrb[0].mxu0
    %v8930 = vpop.f32.mrb[0].mxu0
    %8931 = vdwg.mxu0
    %v8933 = vsel %vm3130, %v8405, 0
    %v8936 = vsel %vm3134, %v6438, 0
    %8938 = vmatprep.subr.bf16.mxu0 0
    %8939 = vmatpush1.bf16.msra.mxu0 %v8936
    %8940 = vmatprep.subr.bf16.mxu0 0
    %8941 = vmatpush1.bf16.msra.mxu0 0
    %8942 = vmatprep.subr.bf16.mxu0 0
    %8943 = vmatpush1.bf16.msra.mxu0 0
    %8944 = vmatprep.subr.bf16.mxu0 0
    %8945 = vmatpush1.bf16.msra.mxu0 0
    %8946 = vmatprep.subr.bf16.mxu0 0
    %8947 = vmatpush1.bf16.msra.mxu0 0
    %8948 = vmatprep.subr.bf16.mxu0 0
    %8949 = vmatpush1.bf16.msra.mxu0 0
    %8950 = vmatprep.subr.bf16.mxu0 0
    %8951 = vmatpush1.bf16.msra.mxu0 0
    %8952 = vmatprep.subr.bf16.mxu0 0
    %8953 = vmatpush1.bf16.msra.mxu0 0
    %8954 = vmatprep.subr.bf16.mxu0 0
    %8955 = vmatpush1.bf16.msra.mxu0 0
    %8956 = vmatprep.subr.bf16.mxu0 0
    %8957 = vmatpush1.bf16.msra.mxu0 0
    %8958 = vmatprep.subr.bf16.mxu0 0
    %8959 = vmatpush1.bf16.msra.mxu0 0
    %8960 = vmatprep.subr.bf16.mxu0 0
    %8961 = vmatpush1.bf16.msra.mxu0 0
    %8962 = vmatprep.subr.bf16.mxu0 0
    %8963 = vmatpush1.bf16.msra.mxu0 0
    %8964 = vmatprep.subr.bf16.mxu0 0
    %8965 = vmatpush1.bf16.msra.mxu0 0
    %8966 = vmatprep.subr.bf16.mxu0 0
    %8967 = vmatpush1.bf16.msra.mxu0 0
    %8968 = vmatprep.subr.bf16.mxu0 0
    %8969 = vmatpush1.bf16.msra.mxu0 0
    %8970 = vmatprep.mubr.bf16.mxu0 0
    %8971 = vmatmul.mubr.bf16.gmra.mrb[0].mxu0 %v8933
    %v8972 = vpop.f32.mrb[0].mxu0
    %v8973 = vadd.f32 0.0, %v8972
    %v8974 = vpop.f32.mrb[0].mxu0
    %v8975 = vpop.f32.mrb[0].mxu0
    %v8976 = vpop.f32.mrb[0].mxu0
    %8977 = vdwg.mxu0
    %v8979 = vsel %vm3130, %v8406, 0
    %v8982 = vsel %vm3134, %v6421, 0
    %8984 = vmatprep.subr.bf16.mxu0 0
    %8985 = vmatpush1.bf16.msra.mxu0 %v8982
    %8986 = vmatprep.subr.bf16.mxu0 0
    %8987 = vmatpush1.bf16.msra.mxu0 0
    %8988 = vmatprep.subr.bf16.mxu0 0
    %8989 = vmatpush1.bf16.msra.mxu0 0
    %8990 = vmatprep.subr.bf16.mxu0 0
    %8991 = vmatpush1.bf16.msra.mxu0 0
    %8992 = vmatprep.subr.bf16.mxu0 0
    %8993 = vmatpush1.bf16.msra.mxu0 0
    %8994 = vmatprep.subr.bf16.mxu0 0
    %8995 = vmatpush1.bf16.msra.mxu0 0
    %8996 = vmatprep.subr.bf16.mxu0 0
    %8997 = vmatpush1.bf16.msra.mxu0 0
    %8998 = vmatprep.subr.bf16.mxu0 0
    %8999 = vmatpush1.bf16.msra.mxu0 0
    %9000 = vmatprep.subr.bf16.mxu0 0
    %9001 = vmatpush1.bf16.msra.mxu0 0
    %9002 = vmatprep.subr.bf16.mxu0 0
    %9003 = vmatpush1.bf16.msra.mxu0 0
    %9004 = vmatprep.subr.bf16.mxu0 0
    %9005 = vmatpush1.bf16.msra.mxu0 0
    %9006 = vmatprep.subr.bf16.mxu0 0
    %9007 = vmatpush1.bf16.msra.mxu0 0
    %9008 = vmatprep.subr.bf16.mxu0 0
    %9009 = vmatpush1.bf16.msra.mxu0 0
    %9010 = vmatprep.subr.bf16.mxu0 0
    %9011 = vmatpush1.bf16.msra.mxu0 0
    %9012 = vmatprep.subr.bf16.mxu0 0
    %9013 = vmatpush1.bf16.msra.mxu0 0
    %9014 = vmatprep.subr.bf16.mxu0 0
    %9015 = vmatpush1.bf16.msra.mxu0 0
    %9016 = vmatprep.mubr.bf16.mxu0 0
    %9017 = vmatmul.mubr.bf16.gmra.mrb[0].mxu0 %v8979
    %v9018 = vpop.f32.mrb[0].mxu0
    %v9019 = vadd.f32 0.0, %v9018
    %v9020 = vpop.f32.mrb[0].mxu0
    %v9021 = vpop.f32.mrb[0].mxu0
    %v9022 = vpop.f32.mrb[0].mxu0
    %9023 = vdwg.mxu0
    %v9025 = vsel %vm3130, %v8407, 0
    %v9028 = vsel %vm3134, %v6435, 0
    %9030 = vmatprep.subr.bf16.mxu0 0
    %9031 = vmatpush1.bf16.msra.mxu0 %v9028
    %9032 = vmatprep.subr.bf16.mxu0 0
    %9033 = vmatpush1.bf16.msra.mxu0 0
    %9034 = vmatprep.subr.bf16.mxu0 0
    %9035 = vmatpush1.bf16.msra.mxu0 0
    %9036 = vmatprep.subr.bf16.mxu0 0
    %9037 = vmatpush1.bf16.msra.mxu0 0
    %9038 = vmatprep.subr.bf16.mxu0 0
    %9039 = vmatpush1.bf16.msra.mxu0 0
    %9040 = vmatprep.subr.bf16.mxu0 0
    %9041 = vmatpush1.bf16.msra.mxu0 0
    %9042 = vmatprep.subr.bf16.mxu0 0
    %9043 = vmatpush1.bf16.msra.mxu0 0
    %9044 = vmatprep.subr.bf16.mxu0 0
    %9045 = vmatpush1.bf16.msra.mxu0 0
    %9046 = vmatprep.subr.bf16.mxu0 0
    %9047 = vmatpush1.bf16.msra.mxu0 0
    %9048 = vmatprep.subr.bf16.mxu0 0
    %9049 = vmatpush1.bf16.msra.mxu0 0
    %9050 = vmatprep.subr.bf16.mxu0 0
    %9051 = vmatpush1.bf16.msra.mxu0 0
    %9052 = vmatprep.subr.bf16.mxu0 0
    %9053 = vmatpush1.bf16.msra.mxu0 0
    %9054 = vmatprep.subr.bf16.mxu0 0
    %9055 = vmatpush1.bf16.msra.mxu0 0
    %9056 = vmatprep.subr.bf16.mxu0 0
    %9057 = vmatpush1.bf16.msra.mxu0 0
    %9058 = vmatprep.subr.bf16.mxu0 0
    %9059 = vmatpush1.bf16.msra.mxu0 0
    %9060 = vmatprep.subr.bf16.mxu0 0
    %9061 = vmatpush1.bf16.msra.mxu0 0
    %9062 = vmatprep.mubr.bf16.mxu0 0
    %9063 = vmatmul.mubr.bf16.gmra.mrb[0].mxu0 %v9025
    %v9064 = vpop.f32.mrb[0].mxu0
    %v9065 = vadd.f32 0.0, %v9064
    %v9066 = vpop.f32.mrb[0].mxu0
    %v9067 = vpop.f32.mrb[0].mxu0
    %v9068 = vpop.f32.mrb[0].mxu0
    %9069 = vdwg.mxu0
    %v9071 = vsel %vm3130, %v8408, 0
    %v9074 = vsel %vm3134, %v6437, 0
    %9076 = vmatprep.subr.bf16.mxu0 0
    %9077 = vmatpush1.bf16.msra.mxu0 %v9074
    %9078 = vmatprep.subr.bf16.mxu0 0
    %9079 = vmatpush1.bf16.msra.mxu0 0
    %9080 = vmatprep.subr.bf16.mxu0 0
    %9081 = vmatpush1.bf16.msra.mxu0 0
    %9082 = vmatprep.subr.bf16.mxu0 0
    %9083 = vmatpush1.bf16.msra.mxu0 0
    %9084 = vmatprep.subr.bf16.mxu0 0
    %9085 = vmatpush1.bf16.msra.mxu0 0
    %9086 = vmatprep.subr.bf16.mxu0 0
    %9087 = vmatpush1.bf16.msra.mxu0 0
    %9088 = vmatprep.subr.bf16.mxu0 0
    %9089 = vmatpush1.bf16.msra.mxu0 0
    %9090 = vmatprep.subr.bf16.mxu0 0
    %9091 = vmatpush1.bf16.msra.mxu0 0
    %9092 = vmatprep.subr.bf16.mxu0 0
    %9093 = vmatpush1.bf16.msra.mxu0 0
    %9094 = vmatprep.subr.bf16.mxu0 0
    %9095 = vmatpush1.bf16.msra.mxu0 0
    %9096 = vmatprep.subr.bf16.mxu0 0
    %9097 = vmatpush1.bf16.msra.mxu0 0
    %9098 = vmatprep.subr.bf16.mxu0 0
    %9099 = vmatpush1.bf16.msra.mxu0 0
    %9100 = vmatprep.subr.bf16.mxu0 0
    %9101 = vmatpush1.bf16.msra.mxu0 0
    %9102 = vmatprep.subr.bf16.mxu0 0
    %9103 = vmatpush1.bf16.msra.mxu0 0
    %9104 = vmatprep.subr.bf16.mxu0 0
    %9105 = vmatpush1.bf16.msra.mxu0 0
    %9106 = vmatprep.subr.bf16.mxu0 0
    %9107 = vmatpush1.bf16.msra.mxu0 0
    %9108 = vmatprep.mubr.bf16.mxu0 0
    %9109 = vmatmul.mubr.bf16.gmra.mrb[0].mxu0 %v9071
    %v9110 = vpop.f32.mrb[0].mxu0
    %v9111 = vadd.f32 0.0, %v9110
    %v9112 = vpop.f32.mrb[0].mxu0
    %v9113 = vpop.f32.mrb[0].mxu0
    %v9114 = vpop.f32.mrb[0].mxu0
    %9115 = vdwg.mxu0
    %v9117 = vsel %vm3130, %v8409, 0
    %v9120 = vsel %vm3134, %v6439, 0
    %9122 = vmatprep.subr.bf16.mxu0 0
    %9123 = vmatpush1.bf16.msra.mxu0 %v9120
    %9124 = vmatprep.subr.bf16.mxu0 0
    %9125 = vmatpush1.bf16.msra.mxu0 0
    %9126 = vmatprep.subr.bf16.mxu0 0
    %9127 = vmatpush1.bf16.msra.mxu0 0
    %9128 = vmatprep.subr.bf16.mxu0 0
    %9129 = vmatpush1.bf16.msra.mxu0 0
    %9130 = vmatprep.subr.bf16.mxu0 0
    %9131 = vmatpush1.bf16.msra.mxu0 0
    %9132 = vmatprep.subr.bf16.mxu0 0
    %9133 = vmatpush1.bf16.msra.mxu0 0
    %9134 = vmatprep.subr.bf16.mxu0 0
    %9135 = vmatpush1.bf16.msra.mxu0 0
    %9136 = vmatprep.subr.bf16.mxu0 0
    %9137 = vmatpush1.bf16.msra.mxu0 0
    %9138 = vmatprep.subr.bf16.mxu0 0
    %9139 = vmatpush1.bf16.msra.mxu0 0
    %9140 = vmatprep.subr.bf16.mxu0 0
    %9141 = vmatpush1.bf16.msra.mxu0 0
    %9142 = vmatprep.subr.bf16.mxu0 0
    %9143 = vmatpush1.bf16.msra.mxu0 0
    %9144 = vmatprep.subr.bf16.mxu0 0
    %9145 = vmatpush1.bf16.msra.mxu0 0
    %9146 = vmatprep.subr.bf16.mxu0 0
    %9147 = vmatpush1.bf16.msra.mxu0 0
    %9148 = vmatprep.subr.bf16.mxu0 0
    %9149 = vmatpush1.bf16.msra.mxu0 0
    %9150 = vmatprep.subr.bf16.mxu0 0
    %9151 = vmatpush1.bf16.msra.mxu0 0
    %9152 = vmatprep.subr.bf16.mxu0 0
    %9153 = vmatpush1.bf16.msra.mxu0 0
    %9154 = vmatprep.mubr.bf16.mxu0 0
    %9155 = vmatmul.mubr.bf16.gmra.mrb[0].mxu0 %v9117
    %v9156 = vpop.f32.mrb[0].mxu0
    %v9157 = vadd.f32 0.0, %v9156
    %v9158 = vpop.f32.mrb[0].mxu0
    %v9159 = vpop.f32.mrb[0].mxu0
    %v9160 = vpop.f32.mrb[0].mxu0
    %9161 = vdwg.mxu0
    %v9163 = vsel %vm3130, %v8410, 0
    %v9166 = vsel %vm3134, %v6463, 0
    %9168 = vmatprep.subr.bf16.mxu0 0
    %9169 = vmatpush1.bf16.msra.mxu0 %v9166
    %9170 = vmatprep.subr.bf16.mxu0 0
    %9171 = vmatpush1.bf16.msra.mxu0 0
    %9172 = vmatprep.subr.bf16.mxu0 0
    %9173 = vmatpush1.bf16.msra.mxu0 0
    %9174 = vmatprep.subr.bf16.mxu0 0
    %9175 = vmatpush1.bf16.msra.mxu0 0
    %9176 = vmatprep.subr.bf16.mxu0 0
    %9177 = vmatpush1.bf16.msra.mxu0 0
    %9178 = vmatprep.subr.bf16.mxu0 0
    %9179 = vmatpush1.bf16.msra.mxu0 0
    %9180 = vmatprep.subr.bf16.mxu0 0
    %9181 = vmatpush1.bf16.msra.mxu0 0
    %9182 = vmatprep.subr.bf16.mxu0 0
    %9183 = vmatpush1.bf16.msra.mxu0 0
    %9184 = vmatprep.subr.bf16.mxu0 0
    %9185 = vmatpush1.bf16.msra.mxu0 0
    %9186 = vmatprep.subr.bf16.mxu0 0
    %9187 = vmatpush1.bf16.msra.mxu0 0
    %9188 = vmatprep.subr.bf16.mxu0 0
    %9189 = vmatpush1.bf16.msra.mxu0 0
    %9190 = vmatprep.subr.bf16.mxu0 0
    %9191 = vmatpush1.bf16.msra.mxu0 0
    %9192 = vmatprep.subr.bf16.mxu0 0
    %9193 = vmatpush1.bf16.msra.mxu0 0
    %9194 = vmatprep.subr.bf16.mxu0 0
    %9195 = vmatpush1.bf16.msra.mxu0 0
    %9196 = vmatprep.subr.bf16.mxu0 0
    %9197 = vmatpush1.bf16.msra.mxu0 0
    %9198 = vmatprep.subr.bf16.mxu0 0
    %9199 = vmatpush1.bf16.msra.mxu0 0
    %9200 = vmatprep.mubr.bf16.mxu0 0
    %9201 = vmatmul.mubr.bf16.gmra.mrb[0].mxu0 %v9163
    %v9202 = vpop.f32.mrb[0].mxu0
    %v9203 = vadd.f32 0.0, %v9202
    %v9204 = vpop.f32.mrb[0].mxu0
    %v9205 = vpop.f32.mrb[0].mxu0
    %v9206 = vpop.f32.mrb[0].mxu0
    %9207 = vdwg.mxu0
    %v9209 = vsel %vm3130, %v8411, 0
    %v9212 = vsel %vm3134, %v6477, 0
    %9214 = vmatprep.subr.bf16.mxu0 0
    %9215 = vmatpush1.bf16.msra.mxu0 %v9212
    %9216 = vmatprep.subr.bf16.mxu0 0
    %9217 = vmatpush1.bf16.msra.mxu0 0
    %9218 = vmatprep.subr.bf16.mxu0 0
    %9219 = vmatpush1.bf16.msra.mxu0 0
    %9220 = vmatprep.subr.bf16.mxu0 0
    %9221 = vmatpush1.bf16.msra.mxu0 0
    %9222 = vmatprep.subr.bf16.mxu0 0
    %9223 = vmatpush1.bf16.msra.mxu0 0
    %9224 = vmatprep.subr.bf16.mxu0 0
    %9225 = vmatpush1.bf16.msra.mxu0 0
    %9226 = vmatprep.subr.bf16.mxu0 0
    %9227 = vmatpush1.bf16.msra.mxu0 0
    %9228 = vmatprep.subr.bf16.mxu0 0
    %9229 = vmatpush1.bf16.msra.mxu0 0
    %9230 = vmatprep.subr.bf16.mxu0 0
    %9231 = vmatpush1.bf16.msra.mxu0 0
    %9232 = vmatprep.subr.bf16.mxu0 0
    %9233 = vmatpush1.bf16.msra.mxu0 0
    %9234 = vmatprep.subr.bf16.mxu0 0
    %9235 = vmatpush1.bf16.msra.mxu0 0
    %9236 = vmatprep.subr.bf16.mxu0 0
    %9237 = vmatpush1.bf16.msra.mxu0 0
    %9238 = vmatprep.subr.bf16.mxu0 0
    %9239 = vmatpush1.bf16.msra.mxu0 0
    %9240 = vmatprep.subr.bf16.mxu0 0
    %9241 = vmatpush1.bf16.msra.mxu0 0
    %9242 = vmatprep.subr.bf16.mxu0 0
    %9243 = vmatpush1.bf16.msra.mxu0 0
    %9244 = vmatprep.subr.bf16.mxu0 0
    %9245 = vmatpush1.bf16.msra.mxu0 0
    %9246 = vmatprep.mubr.bf16.mxu0 0
    %9247 = vmatmul.mubr.bf16.gmra.mrb[0].mxu0 %v9209
    %v9248 = vpop.f32.mrb[0].mxu0
    %v9249 = vadd.f32 0.0, %v9248
    %v9250 = vpop.f32.mrb[0].mxu0
    %v9251 = vpop.f32.mrb[0].mxu0
    %v9252 = vpop.f32.mrb[0].mxu0
    %9253 = vdwg.mxu0
    %v9255 = vsel %vm3130, %v8412, 0
    %v9258 = vsel %vm3134, %v6485, 0
    %9260 = vmatprep.subr.bf16.mxu0 0
    %9261 = vmatpush1.bf16.msra.mxu0 %v9258
    %9262 = vmatprep.subr.bf16.mxu0 0
    %9263 = vmatpush1.bf16.msra.mxu0 0
    %9264 = vmatprep.subr.bf16.mxu0 0
    %9265 = vmatpush1.bf16.msra.mxu0 0
    %9266 = vmatprep.subr.bf16.mxu0 0
    %9267 = vmatpush1.bf16.msra.mxu0 0
    %9268 = vmatprep.subr.bf16.mxu0 0
    %9269 = vmatpush1.bf16.msra.mxu0 0
    %9270 = vmatprep.subr.bf16.mxu0 0
    %9271 = vmatpush1.bf16.msra.mxu0 0
    %9272 = vmatprep.subr.bf16.mxu0 0
    %9273 = vmatpush1.bf16.msra.mxu0 0
    %9274 = vmatprep.subr.bf16.mxu0 0
    %9275 = vmatpush1.bf16.msra.mxu0 0
    %9276 = vmatprep.subr.bf16.mxu0 0
    %9277 = vmatpush1.bf16.msra.mxu0 0
    %9278 = vmatprep.subr.bf16.mxu0 0
    %9279 = vmatpush1.bf16.msra.mxu0 0
    %9280 = vmatprep.subr.bf16.mxu0 0
    %9281 = vmatpush1.bf16.msra.mxu0 0
    %9282 = vmatprep.subr.bf16.mxu0 0
    %9283 = vmatpush1.bf16.msra.mxu0 0
    %9284 = vmatprep.subr.bf16.mxu0 0
    %9285 = vmatpush1.bf16.msra.mxu0 0
    %9286 = vmatprep.subr.bf16.mxu0 0
    %9287 = vmatpush1.bf16.msra.mxu0 0
    %9288 = vmatprep.subr.bf16.mxu0 0
    %9289 = vmatpush1.bf16.msra.mxu0 0
    %9290 = vmatprep.subr.bf16.mxu0 0
    %9291 = vmatpush1.bf16.msra.mxu0 0
    %9292 = vmatprep.mubr.bf16.mxu0 0
    %9293 = vmatmul.mubr.bf16.gmra.mrb[0].mxu0 %v9255
    %v9294 = vpop.f32.mrb[0].mxu0
    %v9295 = vadd.f32 0.0, %v9294
    %v9296 = vpop.f32.mrb[0].mxu0
    %v9297 = vpop.f32.mrb[0].mxu0
    %v9298 = vpop.f32.mrb[0].mxu0
    %9299 = vdwg.mxu0
    %v9301 = vsel %vm3130, %v8413, 0
    %v9304 = vsel %vm3134, %v6487, 0
    %9306 = vmatprep.subr.bf16.mxu0 0
    %9307 = vmatpush1.bf16.msra.mxu0 %v9304
    %9308 = vmatprep.subr.bf16.mxu0 0
    %9309 = vmatpush1.bf16.msra.mxu0 0
    %9310 = vmatprep.subr.bf16.mxu0 0
    %9311 = vmatpush1.bf16.msra.mxu0 0
    %9312 = vmatprep.subr.bf16.mxu0 0
    %9313 = vmatpush1.bf16.msra.mxu0 0
    %9314 = vmatprep.subr.bf16.mxu0 0
    %9315 = vmatpush1.bf16.msra.mxu0 0
    %9316 = vmatprep.subr.bf16.mxu0 0
    %9317 = vmatpush1.bf16.msra.mxu0 0
    %9318 = vmatprep.subr.bf16.mxu0 0
    %9319 = vmatpush1.bf16.msra.mxu0 0
    %9320 = vmatprep.subr.bf16.mxu0 0
    %9321 = vmatpush1.bf16.msra.mxu0 0
    %9322 = vmatprep.subr.bf16.mxu0 0
    %9323 = vmatpush1.bf16.msra.mxu0 0
    %9324 = vmatprep.subr.bf16.mxu0 0
    %9325 = vmatpush1.bf16.msra.mxu0 0
    %9326 = vmatprep.subr.bf16.mxu0 0
    %9327 = vmatpush1.bf16.msra.mxu0 0
    %9328 = vmatprep.subr.bf16.mxu0 0
    %9329 = vmatpush1.bf16.msra.mxu0 0
    %9330 = vmatprep.subr.bf16.mxu0 0
    %9331 = vmatpush1.bf16.msra.mxu0 0
    %9332 = vmatprep.subr.bf16.mxu0 0
    %9333 = vmatpush1.bf16.msra.mxu0 0
    %9334 = vmatprep.subr.bf16.mxu0 0
    %9335 = vmatpush1.bf16.msra.mxu0 0
    %9336 = vmatprep.subr.bf16.mxu0 0
    %9337 = vmatpush1.bf16.msra.mxu0 0
    %9338 = vmatprep.mubr.bf16.mxu0 0
    %9339 = vmatmul.mubr.bf16.gmra.mrb[0].mxu0 %v9301
    %v9340 = vpop.f32.mrb[0].mxu0
    %v9341 = vadd.f32 0.0, %v9340
    %v9342 = vpop.f32.mrb[0].mxu0
    %v9343 = vpop.f32.mrb[0].mxu0
    %v9344 = vpop.f32.mrb[0].mxu0
    %9345 = vdwg.mxu0
    %v9347 = vsel %vm3130, %v8414, 0
    %v9350 = vsel %vm3134, %v6470, 0
    %9352 = vmatprep.subr.bf16.mxu0 0
    %9353 = vmatpush1.bf16.msra.mxu0 %v9350
    %9354 = vmatprep.subr.bf16.mxu0 0
    %9355 = vmatpush1.bf16.msra.mxu0 0
    %9356 = vmatprep.subr.bf16.mxu0 0
    %9357 = vmatpush1.bf16.msra.mxu0 0
    %9358 = vmatprep.subr.bf16.mxu0 0
    %9359 = vmatpush1.bf16.msra.mxu0 0
    %9360 = vmatprep.subr.bf16.mxu0 0
    %9361 = vmatpush1.bf16.msra.mxu0 0
    %9362 = vmatprep.subr.bf16.mxu0 0
    %9363 = vmatpush1.bf16.msra.mxu0 0
    %9364 = vmatprep.subr.bf16.mxu0 0
    %9365 = vmatpush1.bf16.msra.mxu0 0
    %9366 = vmatprep.subr.bf16.mxu0 0
    %9367 = vmatpush1.bf16.msra.mxu0 0
    %9368 = vmatprep.subr.bf16.mxu0 0
    %9369 = vmatpush1.bf16.msra.mxu0 0
    %9370 = vmatprep.subr.bf16.mxu0 0
    %9371 = vmatpush1.bf16.msra.mxu0 0
    %9372 = vmatprep.subr.bf16.mxu0 0
    %9373 = vmatpush1.bf16.msra.mxu0 0
    %9374 = vmatprep.subr.bf16.mxu0 0
    %9375 = vmatpush1.bf16.msra.mxu0 0
    %9376 = vmatprep.subr.bf16.mxu0 0
    %9377 = vmatpush1.bf16.msra.mxu0 0
    %9378 = vmatprep.subr.bf16.mxu0 0
    %9379 = vmatpush1.bf16.msra.mxu0 0
    %9380 = vmatprep.subr.bf16.mxu0 0
    %9381 = vmatpush1.bf16.msra.mxu0 0
    %9382 = vmatprep.subr.bf16.mxu0 0
    %9383 = vmatpush1.bf16.msra.mxu0 0
    %9384 = vmatprep.mubr.bf16.mxu0 0
    %9385 = vmatmul.mubr.bf16.gmra.mrb[0].mxu0 %v9347
    %v9386 = vpop.f32.mrb[0].mxu0
    %v9387 = vadd.f32 0.0, %v9386
    %v9388 = vpop.f32.mrb[0].mxu0
    %v9389 = vpop.f32.mrb[0].mxu0
    %v9390 = vpop.f32.mrb[0].mxu0
    %9391 = vdwg.mxu0
    %v9393 = vsel %vm3130, %v8415, 0
    %v9396 = vsel %vm3134, %v6484, 0
    %9398 = vmatprep.subr.bf16.mxu0 0
    %9399 = vmatpush1.bf16.msra.mxu0 %v9396
    %9400 = vmatprep.subr.bf16.mxu0 0
    %9401 = vmatpush1.bf16.msra.mxu0 0
    %9402 = vmatprep.subr.bf16.mxu0 0
    %9403 = vmatpush1.bf16.msra.mxu0 0
    %9404 = vmatprep.subr.bf16.mxu0 0
    %9405 = vmatpush1.bf16.msra.mxu0 0
    %9406 = vmatprep.subr.bf16.mxu0 0
    %9407 = vmatpush1.bf16.msra.mxu0 0
    %9408 = vmatprep.subr.bf16.mxu0 0
    %9409 = vmatpush1.bf16.msra.mxu0 0
    %9410 = vmatprep.subr.bf16.mxu0 0
    %9411 = vmatpush1.bf16.msra.mxu0 0
    %9412 = vmatprep.subr.bf16.mxu0 0
    %9413 = vmatpush1.bf16.msra.mxu0 0
    %9414 = vmatprep.subr.bf16.mxu0 0
    %9415 = vmatpush1.bf16.msra.mxu0 0
    %9416 = vmatprep.subr.bf16.mxu0 0
    %9417 = vmatpush1.bf16.msra.mxu0 0
    %9418 = vmatprep.subr.bf16.mxu0 0
    %9419 = vmatpush1.bf16.msra.mxu0 0
    %9420 = vmatprep.subr.bf16.mxu0 0
    %9421 = vmatpush1.bf16.msra.mxu0 0
    %9422 = vmatprep.subr.bf16.mxu0 0
    %9423 = vmatpush1.bf16.msra.mxu0 0
    %9424 = vmatprep.subr.bf16.mxu0 0
    %9425 = vmatpush1.bf16.msra.mxu0 0
    %9426 = vmatprep.subr.bf16.mxu0 0
    %9427 = vmatpush1.bf16.msra.mxu0 0
    %9428 = vmatprep.subr.bf16.mxu0 0
    %9429 = vmatpush1.bf16.msra.mxu0 0
    %9430 = vmatprep.mubr.bf16.mxu0 0
    %9431 = vmatmul.mubr.bf16.gmra.mrb[0].mxu0 %v9393
    %v9432 = vpop.f32.mrb[0].mxu0
    %v9433 = vadd.f32 0.0, %v9432
    %v9434 = vpop.f32.mrb[0].mxu0
    %v9435 = vpop.f32.mrb[0].mxu0
    %v9436 = vpop.f32.mrb[0].mxu0
    %9437 = vdwg.mxu0
    %v9439 = vsel %vm3130, %v8416, 0
    %v9442 = vsel %vm3134, %v6486, 0
    %9444 = vmatprep.subr.bf16.mxu0 0
    %9445 = vmatpush1.bf16.msra.mxu0 %v9442
    %9446 = vmatprep.subr.bf16.mxu0 0
    %9447 = vmatpush1.bf16.msra.mxu0 0
    %9448 = vmatprep.subr.bf16.mxu0 0
    %9449 = vmatpush1.bf16.msra.mxu0 0
    %9450 = vmatprep.subr.bf16.mxu0 0
    %9451 = vmatpush1.bf16.msra.mxu0 0
    %9452 = vmatprep.subr.bf16.mxu0 0
    %9453 = vmatpush1.bf16.msra.mxu0 0
    %9454 = vmatprep.subr.bf16.mxu0 0
    %9455 = vmatpush1.bf16.msra.mxu0 0
    %9456 = vmatprep.subr.bf16.mxu0 0
    %9457 = vmatpush1.bf16.msra.mxu0 0
    %9458 = vmatprep.subr.bf16.mxu0 0
    %9459 = vmatpush1.bf16.msra.mxu0 0
    %9460 = vmatprep.subr.bf16.mxu0 0
    %9461 = vmatpush1.bf16.msra.mxu0 0
    %9462 = vmatprep.subr.bf16.mxu0 0
    %9463 = vmatpush1.bf16.msra.mxu0 0
    %9464 = vmatprep.subr.bf16.mxu0 0
    %9465 = vmatpush1.bf16.msra.mxu0 0
    %9466 = vmatprep.subr.bf16.mxu0 0
    %9467 = vmatpush1.bf16.msra.mxu0 0
    %9468 = vmatprep.subr.bf16.mxu0 0
    %9469 = vmatpush1.bf16.msra.mxu0 0
    %9470 = vmatprep.subr.bf16.mxu0 0
    %9471 = vmatpush1.bf16.msra.mxu0 0
    %9472 = vmatprep.subr.bf16.mxu0 0
    %9473 = vmatpush1.bf16.msra.mxu0 0
    %9474 = vmatprep.subr.bf16.mxu0 0
    %9475 = vmatpush1.bf16.msra.mxu0 0
    %9476 = vmatprep.mubr.bf16.mxu0 0
    %9477 = vmatmul.mubr.bf16.gmra.mrb[0].mxu0 %v9439
    %v9478 = vpop.f32.mrb[0].mxu0
    %v9479 = vadd.f32 0.0, %v9478
    %v9480 = vpop.f32.mrb[0].mxu0
    %v9481 = vpop.f32.mrb[0].mxu0
    %v9482 = vpop.f32.mrb[0].mxu0
    %9483 = vdwg.mxu0
    %v9485 = vsel %vm3130, %v8417, 0
    %v9488 = vsel %vm3134, %v6488, 0
    %9490 = vmatprep.subr.bf16.mxu0 0
    %9491 = vmatpush1.bf16.msra.mxu0 %v9488
    %9492 = vmatprep.subr.bf16.mxu0 0
    %9493 = vmatpush1.bf16.msra.mxu0 0
    %9494 = vmatprep.subr.bf16.mxu0 0
    %9495 = vmatpush1.bf16.msra.mxu0 0
    %9496 = vmatprep.subr.bf16.mxu0 0
    %9497 = vmatpush1.bf16.msra.mxu0 0
    %9498 = vmatprep.subr.bf16.mxu0 0
    %9499 = vmatpush1.bf16.msra.mxu0 0
    %9500 = vmatprep.subr.bf16.mxu0 0
    %9501 = vmatpush1.bf16.msra.mxu0 0
    %9502 = vmatprep.subr.bf16.mxu0 0
    %9503 = vmatpush1.bf16.msra.mxu0 0
    %9504 = vmatprep.subr.bf16.mxu0 0
    %9505 = vmatpush1.bf16.msra.mxu0 0
    %9506 = vmatprep.subr.bf16.mxu0 0
    %9507 = vmatpush1.bf16.msra.mxu0 0
    %9508 = vmatprep.subr.bf16.mxu0 0
    %9509 = vmatpush1.bf16.msra.mxu0 0
    %9510 = vmatprep.subr.bf16.mxu0 0
    %9511 = vmatpush1.bf16.msra.mxu0 0
    %9512 = vmatprep.subr.bf16.mxu0 0
    %9513 = vmatpush1.bf16.msra.mxu0 0
    %9514 = vmatprep.subr.bf16.mxu0 0
    %9515 = vmatpush1.bf16.msra.mxu0 0
    %9516 = vmatprep.subr.bf16.mxu0 0
    %9517 = vmatpush1.bf16.msra.mxu0 0
    %9518 = vmatprep.subr.bf16.mxu0 0
    %9519 = vmatpush1.bf16.msra.mxu0 0
    %9520 = vmatprep.subr.bf16.mxu0 0
    %9521 = vmatpush1.bf16.msra.mxu0 0
    %9522 = vmatprep.mubr.bf16.mxu0 0
    %9523 = vmatmul.mubr.bf16.gmra.mrb[0].mxu0 %v9485
    %v9524 = vpop.f32.mrb[0].mxu0
    %v9525 = vadd.f32 0.0, %v9524
    %v9526 = vpop.f32.mrb[0].mxu0
    %v9527 = vpop.f32.mrb[0].mxu0
    %v9528 = vpop.f32.mrb[0].mxu0
    %9529 = vdwg.mxu0
    %v9531 = vsel %vm3130, %v8418, 0
    %v9534 = vsel %vm3134, %v6512, 0
    %9536 = vmatprep.subr.bf16.mxu0 0
    %9537 = vmatpush1.bf16.msra.mxu0 %v9534
    %9538 = vmatprep.subr.bf16.mxu0 0
    %9539 = vmatpush1.bf16.msra.mxu0 0
    %9540 = vmatprep.subr.bf16.mxu0 0
    %9541 = vmatpush1.bf16.msra.mxu0 0
    %9542 = vmatprep.subr.bf16.mxu0 0
    %9543 = vmatpush1.bf16.msra.mxu0 0
    %9544 = vmatprep.subr.bf16.mxu0 0
    %9545 = vmatpush1.bf16.msra.mxu0 0
    %9546 = vmatprep.subr.bf16.mxu0 0
    %9547 = vmatpush1.bf16.msra.mxu0 0
    %9548 = vmatprep.subr.bf16.mxu0 0
    %9549 = vmatpush1.bf16.msra.mxu0 0
    %9550 = vmatprep.subr.bf16.mxu0 0
    %9551 = vmatpush1.bf16.msra.mxu0 0
    %9552 = vmatprep.subr.bf16.mxu0 0
    %9553 = vmatpush1.bf16.msra.mxu0 0
    %9554 = vmatprep.subr.bf16.mxu0 0
    %9555 = vmatpush1.bf16.msra.mxu0 0
    %9556 = vmatprep.subr.bf16.mxu0 0
    %9557 = vmatpush1.bf16.msra.mxu0 0
    %9558 = vmatprep.subr.bf16.mxu0 0
    %9559 = vmatpush1.bf16.msra.mxu0 0
    %9560 = vmatprep.subr.bf16.mxu0 0
    %9561 = vmatpush1.bf16.msra.mxu0 0
    %9562 = vmatprep.subr.bf16.mxu0 0
    %9563 = vmatpush1.bf16.msra.mxu0 0
    %9564 = vmatprep.subr.bf16.mxu0 0
    %9565 = vmatpush1.bf16.msra.mxu0 0
    %9566 = vmatprep.subr.bf16.mxu0 0
    %9567 = vmatpush1.bf16.msra.mxu0 0
    %9568 = vmatprep.mubr.bf16.mxu0 0
    %9569 = vmatmul.mubr.bf16.gmra.mrb[0].mxu0 %v9531
    %v9570 = vpop.f32.mrb[0].mxu0
    %v9571 = vadd.f32 0.0, %v9570
    %v9572 = vpop.f32.mrb[0].mxu0
    %v9573 = vpop.f32.mrb[0].mxu0
    %v9574 = vpop.f32.mrb[0].mxu0
    %9575 = vdwg.mxu0
    %v9577 = vsel %vm3130, %v8419, 0
    %v9580 = vsel %vm3134, %v6526, 0
    %9582 = vmatprep.subr.bf16.mxu0 0
    %9583 = vmatpush1.bf16.msra.mxu0 %v9580
    %9584 = vmatprep.subr.bf16.mxu0 0
    %9585 = vmatpush1.bf16.msra.mxu0 0
    %9586 = vmatprep.subr.bf16.mxu0 0
    %9587 = vmatpush1.bf16.msra.mxu0 0
    %9588 = vmatprep.subr.bf16.mxu0 0
    %9589 = vmatpush1.bf16.msra.mxu0 0
    %9590 = vmatprep.subr.bf16.mxu0 0
    %9591 = vmatpush1.bf16.msra.mxu0 0
    %9592 = vmatprep.subr.bf16.mxu0 0
    %9593 = vmatpush1.bf16.msra.mxu0 0
    %9594 = vmatprep.subr.bf16.mxu0 0
    %9595 = vmatpush1.bf16.msra.mxu0 0
    %9596 = vmatprep.subr.bf16.mxu0 0
    %9597 = vmatpush1.bf16.msra.mxu0 0
    %9598 = vmatprep.subr.bf16.mxu0 0
    %9599 = vmatpush1.bf16.msra.mxu0 0
    %9600 = vmatprep.subr.bf16.mxu0 0
    %9601 = vmatpush1.bf16.msra.mxu0 0
    %9602 = vmatprep.subr.bf16.mxu0 0
    %9603 = vmatpush1.bf16.msra.mxu0 0
    %9604 = vmatprep.subr.bf16.mxu0 0
    %9605 = vmatpush1.bf16.msra.mxu0 0
    %9606 = vmatprep.subr.bf16.mxu0 0
    %9607 = vmatpush1.bf16.msra.mxu0 0
    %9608 = vmatprep.subr.bf16.mxu0 0
    %9609 = vmatpush1.bf16.msra.mxu0 0
    %9610 = vmatprep.subr.bf16.mxu0 0
    %9611 = vmatpush1.bf16.msra.mxu0 0
    %9612 = vmatprep.subr.bf16.mxu0 0
    %9613 = vmatpush1.bf16.msra.mxu0 0
    %9614 = vmatprep.mubr.bf16.mxu0 0
    %9615 = vmatmul.mubr.bf16.gmra.mrb[0].mxu0 %v9577
    %v9616 = vpop.f32.mrb[0].mxu0
    %v9617 = vadd.f32 0.0, %v9616
    %v9618 = vpop.f32.mrb[0].mxu0
    %v9619 = vpop.f32.mrb[0].mxu0
    %v9620 = vpop.f32.mrb[0].mxu0
    %9621 = vdwg.mxu0
    %v9623 = vsel %vm3130, %v8420, 0
    %v9626 = vsel %vm3134, %v6534, 0
    %9628 = vmatprep.subr.bf16.mxu0 0
    %9629 = vmatpush1.bf16.msra.mxu0 %v9626
    %9630 = vmatprep.subr.bf16.mxu0 0
    %9631 = vmatpush1.bf16.msra.mxu0 0
    %9632 = vmatprep.subr.bf16.mxu0 0
    %9633 = vmatpush1.bf16.msra.mxu0 0
    %9634 = vmatprep.subr.bf16.mxu0 0
    %9635 = vmatpush1.bf16.msra.mxu0 0
    %9636 = vmatprep.subr.bf16.mxu0 0
    %9637 = vmatpush1.bf16.msra.mxu0 0
    %9638 = vmatprep.subr.bf16.mxu0 0
    %9639 = vmatpush1.bf16.msra.mxu0 0
    %9640 = vmatprep.subr.bf16.mxu0 0
    %9641 = vmatpush1.bf16.msra.mxu0 0
    %9642 = vmatprep.subr.bf16.mxu0 0
    %9643 = vmatpush1.bf16.msra.mxu0 0
    %9644 = vmatprep.subr.bf16.mxu0 0
    %9645 = vmatpush1.bf16.msra.mxu0 0
    %9646 = vmatprep.subr.bf16.mxu0 0
    %9647 = vmatpush1.bf16.msra.mxu0 0
    %9648 = vmatprep.subr.bf16.mxu0 0
    %9649 = vmatpush1.bf16.msra.mxu0 0
    %9650 = vmatprep.subr.bf16.mxu0 0
    %9651 = vmatpush1.bf16.msra.mxu0 0
    %9652 = vmatprep.subr.bf16.mxu0 0
    %9653 = vmatpush1.bf16.msra.mxu0 0
    %9654 = vmatprep.subr.bf16.mxu0 0
    %9655 = vmatpush1.bf16.msra.mxu0 0
    %9656 = vmatprep.subr.bf16.mxu0 0
    %9657 = vmatpush1.bf16.msra.mxu0 0
    %9658 = vmatprep.subr.bf16.mxu0 0
    %9659 = vmatpush1.bf16.msra.mxu0 0
    %9660 = vmatprep.mubr.bf16.mxu0 0
    %9661 = vmatmul.mubr.bf16.gmra.mrb[0].mxu0 %v9623
    %v9662 = vpop.f32.mrb[0].mxu0
    %v9663 = vadd.f32 0.0, %v9662
    %v9664 = vpop.f32.mrb[0].mxu0
    %v9665 = vpop.f32.mrb[0].mxu0
    %v9666 = vpop.f32.mrb[0].mxu0
    %9667 = vdwg.mxu0
    %v9669 = vsel %vm3130, %v8421, 0
    %v9672 = vsel %vm3134, %v6536, 0
    %9674 = vmatprep.subr.bf16.mxu0 0
    %9675 = vmatpush1.bf16.msra.mxu0 %v9672
    %9676 = vmatprep.subr.bf16.mxu0 0
    %9677 = vmatpush1.bf16.msra.mxu0 0
    %9678 = vmatprep.subr.bf16.mxu0 0
    %9679 = vmatpush1.bf16.msra.mxu0 0
    %9680 = vmatprep.subr.bf16.mxu0 0
    %9681 = vmatpush1.bf16.msra.mxu0 0
    %9682 = vmatprep.subr.bf16.mxu0 0
    %9683 = vmatpush1.bf16.msra.mxu0 0
    %9684 = vmatprep.subr.bf16.mxu0 0
    %9685 = vmatpush1.bf16.msra.mxu0 0
    %9686 = vmatprep.subr.bf16.mxu0 0
    %9687 = vmatpush1.bf16.msra.mxu0 0
    %9688 = vmatprep.subr.bf16.mxu0 0
    %9689 = vmatpush1.bf16.msra.mxu0 0
    %9690 = vmatprep.subr.bf16.mxu0 0
    %9691 = vmatpush1.bf16.msra.mxu0 0
    %9692 = vmatprep.subr.bf16.mxu0 0
    %9693 = vmatpush1.bf16.msra.mxu0 0
    %9694 = vmatprep.subr.bf16.mxu0 0
    %9695 = vmatpush1.bf16.msra.mxu0 0
    %9696 = vmatprep.subr.bf16.mxu0 0
    %9697 = vmatpush1.bf16.msra.mxu0 0
    %9698 = vmatprep.subr.bf16.mxu0 0
    %9699 = vmatpush1.bf16.msra.mxu0 0
    %9700 = vmatprep.subr.bf16.mxu0 0
    %9701 = vmatpush1.bf16.msra.mxu0 0
    %9702 = vmatprep.subr.bf16.mxu0 0
    %9703 = vmatpush1.bf16.msra.mxu0 0
    %9704 = vmatprep.subr.bf16.mxu0 0
    %9705 = vmatpush1.bf16.msra.mxu0 0
    %9706 = vmatprep.mubr.bf16.mxu0 0
    %9707 = vmatmul.mubr.bf16.gmra.mrb[0].mxu0 %v9669
    %v9708 = vpop.f32.mrb[0].mxu0
    %v9709 = vadd.f32 0.0, %v9708
    %v9710 = vpop.f32.mrb[0].mxu0
    %v9711 = vpop.f32.mrb[0].mxu0
    %v9712 = vpop.f32.mrb[0].mxu0
    %9713 = vdwg.mxu0
    %v9715 = vsel %vm3130, %v8422, 0
    %v9718 = vsel %vm3134, %v6519, 0
    %9720 = vmatprep.subr.bf16.mxu0 0
    %9721 = vmatpush1.bf16.msra.mxu0 %v9718
    %9722 = vmatprep.subr.bf16.mxu0 0
    %9723 = vmatpush1.bf16.msra.mxu0 0
    %9724 = vmatprep.subr.bf16.mxu0 0
    %9725 = vmatpush1.bf16.msra.mxu0 0
    %9726 = vmatprep.subr.bf16.mxu0 0
    %9727 = vmatpush1.bf16.msra.mxu0 0
    %9728 = vmatprep.subr.bf16.mxu0 0
    %9729 = vmatpush1.bf16.msra.mxu0 0
    %9730 = vmatprep.subr.bf16.mxu0 0
    %9731 = vmatpush1.bf16.msra.mxu0 0
    %9732 = vmatprep.subr.bf16.mxu0 0
    %9733 = vmatpush1.bf16.msra.mxu0 0
    %9734 = vmatprep.subr.bf16.mxu0 0
    %9735 = vmatpush1.bf16.msra.mxu0 0
    %9736 = vmatprep.subr.bf16.mxu0 0
    %9737 = vmatpush1.bf16.msra.mxu0 0
    %9738 = vmatprep.subr.bf16.mxu0 0
    %9739 = vmatpush1.bf16.msra.mxu0 0
    %9740 = vmatprep.subr.bf16.mxu0 0
    %9741 = vmatpush1.bf16.msra.mxu0 0
    %9742 = vmatprep.subr.bf16.mxu0 0
    %9743 = vmatpush1.bf16.msra.mxu0 0
    %9744 = vmatprep.subr.bf16.mxu0 0
    %9745 = vmatpush1.bf16.msra.mxu0 0
    %9746 = vmatprep.subr.bf16.mxu0 0
    %9747 = vmatpush1.bf16.msra.mxu0 0
    %9748 = vmatprep.subr.bf16.mxu0 0
    %9749 = vmatpush1.bf16.msra.mxu0 0
    %9750 = vmatprep.subr.bf16.mxu0 0
    %9751 = vmatpush1.bf16.msra.mxu0 0
    %9752 = vmatprep.mubr.bf16.mxu0 0
    %9753 = vmatmul.mubr.bf16.gmra.mrb[0].mxu0 %v9715
    %v9754 = vpop.f32.mrb[0].mxu0
    %v9755 = vadd.f32 0.0, %v9754
    %v9756 = vpop.f32.mrb[0].mxu0
    %v9757 = vpop.f32.mrb[0].mxu0
    %v9758 = vpop.f32.mrb[0].mxu0
    %9759 = vdwg.mxu0
    %v9761 = vsel %vm3130, %v8423, 0
    %v9764 = vsel %vm3134, %v6533, 0
    %9766 = vmatprep.subr.bf16.mxu0 0
    %9767 = vmatpush1.bf16.msra.mxu0 %v9764
    %9768 = vmatprep.subr.bf16.mxu0 0
    %9769 = vmatpush1.bf16.msra.mxu0 0
    %9770 = vmatprep.subr.bf16.mxu0 0
    %9771 = vmatpush1.bf16.msra.mxu0 0
    %9772 = vmatprep.subr.bf16.mxu0 0
    %9773 = vmatpush1.bf16.msra.mxu0 0
    %9774 = vmatprep.subr.bf16.mxu0 0
    %9775 = vmatpush1.bf16.msra.mxu0 0
    %9776 = vmatprep.subr.bf16.mxu0 0
    %9777 = vmatpush1.bf16.msra.mxu0 0
    %9778 = vmatprep.subr.bf16.mxu0 0
    %9779 = vmatpush1.bf16.msra.mxu0 0
    %9780 = vmatprep.subr.bf16.mxu0 0
    %9781 = vmatpush1.bf16.msra.mxu0 0
    %9782 = vmatprep.subr.bf16.mxu0 0
    %9783 = vmatpush1.bf16.msra.mxu0 0
    %9784 = vmatprep.subr.bf16.mxu0 0
    %9785 = vmatpush1.bf16.msra.mxu0 0
    %9786 = vmatprep.subr.bf16.mxu0 0
    %9787 = vmatpush1.bf16.msra.mxu0 0
    %9788 = vmatprep.subr.bf16.mxu0 0
    %9789 = vmatpush1.bf16.msra.mxu0 0
    %9790 = vmatprep.subr.bf16.mxu0 0
    %9791 = vmatpush1.bf16.msra.mxu0 0
    %9792 = vmatprep.subr.bf16.mxu0 0
    %9793 = vmatpush1.bf16.msra.mxu0 0
    %9794 = vmatprep.subr.bf16.mxu0 0
    %9795 = vmatpush1.bf16.msra.mxu0 0
    %9796 = vmatprep.subr.bf16.mxu0 0
    %9797 = vmatpush1.bf16.msra.mxu0 0
    %9798 = vmatprep.mubr.bf16.mxu0 0
    %9799 = vmatmul.mubr.bf16.gmra.mrb[0].mxu0 %v9761
    %v9800 = vpop.f32.mrb[0].mxu0
    %v9801 = vadd.f32 0.0, %v9800
    %v9802 = vpop.f32.mrb[0].mxu0
    %v9803 = vpop.f32.mrb[0].mxu0
    %v9804 = vpop.f32.mrb[0].mxu0
    %9805 = vdwg.mxu0
    %v9807 = vsel %vm3130, %v8424, 0
    %v9810 = vsel %vm3134, %v6535, 0
    %9812 = vmatprep.subr.bf16.mxu0 0
    %9813 = vmatpush1.bf16.msra.mxu0 %v9810
    %9814 = vmatprep.subr.bf16.mxu0 0
    %9815 = vmatpush1.bf16.msra.mxu0 0
    %9816 = vmatprep.subr.bf16.mxu0 0
    %9817 = vmatpush1.bf16.msra.mxu0 0
    %9818 = vmatprep.subr.bf16.mxu0 0
    %9819 = vmatpush1.bf16.msra.mxu0 0
    %9820 = vmatprep.subr.bf16.mxu0 0
    %9821 = vmatpush1.bf16.msra.mxu0 0
    %9822 = vmatprep.subr.bf16.mxu0 0
    %9823 = vmatpush1.bf16.msra.mxu0 0
    %9824 = vmatprep.subr.bf16.mxu0 0
    %9825 = vmatpush1.bf16.msra.mxu0 0
    %9826 = vmatprep.subr.bf16.mxu0 0
    %9827 = vmatpush1.bf16.msra.mxu0 0
    %9828 = vmatprep.subr.bf16.mxu0 0
    %9829 = vmatpush1.bf16.msra.mxu0 0
    %9830 = vmatprep.subr.bf16.mxu0 0
    %9831 = vmatpush1.bf16.msra.mxu0 0
    %9832 = vmatprep.subr.bf16.mxu0 0
    %9833 = vmatpush1.bf16.msra.mxu0 0
    %9834 = vmatprep.subr.bf16.mxu0 0
    %9835 = vmatpush1.bf16.msra.mxu0 0
    %9836 = vmatprep.subr.bf16.mxu0 0
    %9837 = vmatpush1.bf16.msra.mxu0 0
    %9838 = vmatprep.subr.bf16.mxu0 0
    %9839 = vmatpush1.bf16.msra.mxu0 0
    %9840 = vmatprep.subr.bf16.mxu0 0
    %9841 = vmatpush1.bf16.msra.mxu0 0
    %9842 = vmatprep.subr.bf16.mxu0 0
    %9843 = vmatpush1.bf16.msra.mxu0 0
    %9844 = vmatprep.mubr.bf16.mxu0 0
    %9845 = vmatmul.mubr.bf16.gmra.mrb[0].mxu0 %v9807
    %v9846 = vpop.f32.mrb[0].mxu0
    %v9847 = vadd.f32 0.0, %v9846
    %v9848 = vpop.f32.mrb[0].mxu0
    %v9849 = vpop.f32.mrb[0].mxu0
    %v9850 = vpop.f32.mrb[0].mxu0
    %9851 = vdwg.mxu0
    %v9853 = vsel %vm3130, %v8425, 0
    %v9856 = vsel %vm3134, %v6537, 0
    %9858 = vmatprep.subr.bf16.mxu0 0
    %9859 = vmatpush1.bf16.msra.mxu0 %v9856
    %9860 = vmatprep.subr.bf16.mxu0 0
    %9861 = vmatpush1.bf16.msra.mxu0 0
    %9862 = vmatprep.subr.bf16.mxu0 0
    %9863 = vmatpush1.bf16.msra.mxu0 0
    %9864 = vmatprep.subr.bf16.mxu0 0
    %9865 = vmatpush1.bf16.msra.mxu0 0
    %9866 = vmatprep.subr.bf16.mxu0 0
    %9867 = vmatpush1.bf16.msra.mxu0 0
    %9868 = vmatprep.subr.bf16.mxu0 0
    %9869 = vmatpush1.bf16.msra.mxu0 0
    %9870 = vmatprep.subr.bf16.mxu0 0
    %9871 = vmatpush1.bf16.msra.mxu0 0
    %9872 = vmatprep.subr.bf16.mxu0 0
    %9873 = vmatpush1.bf16.msra.mxu0 0
    %9874 = vmatprep.subr.bf16.mxu0 0
    %9875 = vmatpush1.bf16.msra.mxu0 0
    %9876 = vmatprep.subr.bf16.mxu0 0
    %9877 = vmatpush1.bf16.msra.mxu0 0
    %9878 = vmatprep.subr.bf16.mxu0 0
    %9879 = vmatpush1.bf16.msra.mxu0 0
    %9880 = vmatprep.subr.bf16.mxu0 0
    %9881 = vmatpush1.bf16.msra.mxu0 0
    %9882 = vmatprep.subr.bf16.mxu0 0
    %9883 = vmatpush1.bf16.msra.mxu0 0
    %9884 = vmatprep.subr.bf16.mxu0 0
    %9885 = vmatpush1.bf16.msra.mxu0 0
    %9886 = vmatprep.subr.bf16.mxu0 0
    %9887 = vmatpush1.bf16.msra.mxu0 0
    %9888 = vmatprep.subr.bf16.mxu0 0
    %9889 = vmatpush1.bf16.msra.mxu0 0
    %9890 = vmatprep.mubr.bf16.mxu0 0
    %9891 = vmatmul.mubr.bf16.gmra.mrb[0].mxu0 %v9853
    %v9892 = vpop.f32.mrb[0].mxu0
    %v9893 = vadd.f32 0.0, %v9892
    %v9894 = vpop.f32.mrb[0].mxu0
    %v9895 = vpop.f32.mrb[0].mxu0
    %v9896 = vpop.f32.mrb[0].mxu0
    %9897 = vdwg.mxu0
    %v9906 = vcombine.low %v8467, %v8513
    %v9907 = vcombine.low %v8559, %v8605
    %v9909 = vunpack.c.l.s4 1983009808
    %v9910 = vunpack.c.0.s8 %v9909
    %v9911 = vlaneseq
    %v9912 = vshrl.u32 %v9911, 7
    %v9913 = vsub.s32 %v9910, %v9912
    %v9914 = vrot.slane %v9906, %v9913
    %v9916 = vunpack.c.l.s4 1983009808
    %v9917 = vunpack.c.0.s8 %v9916
    %v9918 = vlaneseq
    %v9919 = vshrl.u32 %v9918, 7
    %v9920 = vsub.s32 %v9917, %v9919
    %v9921 = vrot.slane %v9907, %v9920
    %v9922 = vcombine.low %v9914, %v9921
    %v9923 = vcombine.low %v8651, %v8697
    %v9924 = vcombine.low %v8743, %v8789
    %v9926 = vunpack.c.l.s4 1983009808
    %v9927 = vunpack.c.0.s8 %v9926
    %v9928 = vlaneseq
    %v9929 = vshrl.u32 %v9928, 7
    %v9930 = vsub.s32 %v9927, %v9929
    %v9931 = vrot.slane %v9923, %v9930
    %v9933 = vunpack.c.l.s4 1983009808
    %v9934 = vunpack.c.0.s8 %v9933
    %v9935 = vlaneseq
    %v9936 = vshrl.u32 %v9935, 7
    %v9937 = vsub.s32 %v9934, %v9936
    %v9938 = vrot.slane %v9924, %v9937
    %v9939 = vcombine.low %v9931, %v9938
    %v9942 = vpack.c.bf16 %v9939, %v9922
    %9943 = vst.msk [vmem:[#allocation3] sm:$0xff] %vm1240, %v9942
    %v9952 = vcombine.low %v8835, %v8881
    %v9953 = vcombine.low %v8927, %v8973
    %v9955 = vunpack.c.l.s4 1983009808
    %v9956 = vunpack.c.0.s8 %v9955
    %v9957 = vlaneseq
    %v9958 = vshrl.u32 %v9957, 7
    %v9959 = vsub.s32 %v9956, %v9958
    %v9960 = vrot.slane %v9952, %v9959
    %v9962 = vunpack.c.l.s4 1983009808
    %v9963 = vunpack.c.0.s8 %v9962
    %v9964 = vlaneseq
    %v9965 = vshrl.u32 %v9964, 7
    %v9966 = vsub.s32 %v9963, %v9965
    %v9967 = vrot.slane %v9953, %v9966
    %v9968 = vcombine.low %v9960, %v9967
    %v9969 = vcombine.low %v9019, %v9065
    %v9970 = vcombine.low %v9111, %v9157
    %v9972 = vunpack.c.l.s4 1983009808
    %v9973 = vunpack.c.0.s8 %v9972
    %v9974 = vlaneseq
    %v9975 = vshrl.u32 %v9974, 7
    %v9976 = vsub.s32 %v9973, %v9975
    %v9977 = vrot.slane %v9969, %v9976
    %v9979 = vunpack.c.l.s4 1983009808
    %v9980 = vunpack.c.0.s8 %v9979
    %v9981 = vlaneseq
    %v9982 = vshrl.u32 %v9981, 7
    %v9983 = vsub.s32 %v9980, %v9982
    %v9984 = vrot.slane %v9970, %v9983
    %v9985 = vcombine.low %v9977, %v9984
    %v9988 = vpack.c.bf16 %v9985, %v9968
    %9990 = vrot.lane.b32.xlu0 %v9988, 32
    %v9991 = vpop.permute.xlu0 %9990
    %9993 = vst.msk [vmem:[#allocation3] sm:$0xff] %vm4699, %v9991
    %v10002 = vcombine.low %v9203, %v9249
    %v10003 = vcombine.low %v9295, %v9341
    %v10005 = vunpack.c.l.s4 1983009808
    %v10006 = vunpack.c.0.s8 %v10005
    %v10007 = vlaneseq
    %v10008 = vshrl.u32 %v10007, 7
    %v10009 = vsub.s32 %v10006, %v10008
    %v10010 = vrot.slane %v10002, %v10009
    %v10012 = vunpack.c.l.s4 1983009808
    %v10013 = vunpack.c.0.s8 %v10012
    %v10014 = vlaneseq
    %v10015 = vshrl.u32 %v10014, 7
    %v10016 = vsub.s32 %v10013, %v10015
    %v10017 = vrot.slane %v10003, %v10016
    %v10018 = vcombine.low %v10010, %v10017
    %v10019 = vcombine.low %v9387, %v9433
    %v10020 = vcombine.low %v9479, %v9525
    %v10022 = vunpack.c.l.s4 1983009808
    %v10023 = vunpack.c.0.s8 %v10022
    %v10024 = vlaneseq
    %v10025 = vshrl.u32 %v10024, 7
    %v10026 = vsub.s32 %v10023, %v10025
    %v10027 = vrot.slane %v10019, %v10026
    %v10029 = vunpack.c.l.s4 1983009808
    %v10030 = vunpack.c.0.s8 %v10029
    %v10031 = vlaneseq
    %v10032 = vshrl.u32 %v10031, 7
    %v10033 = vsub.s32 %v10030, %v10032
    %v10034 = vrot.slane %v10020, %v10033
    %v10035 = vcombine.low %v10027, %v10034
    %v10038 = vpack.c.bf16 %v10035, %v10018
    %10040 = vrot.lane.b32.xlu0 %v10038, 64
    %v10041 = vpop.permute.xlu0 %10040
    %10043 = vst.msk [vmem:[#allocation3] sm:$0xff] %vm4750, %v10041
    %v10052 = vcombine.low %v9571, %v9617
    %v10053 = vcombine.low %v9663, %v9709
    %v10055 = vunpack.c.l.s4 1983009808
    %v10056 = vunpack.c.0.s8 %v10055
    %v10057 = vlaneseq
    %v10058 = vshrl.u32 %v10057, 7
    %v10059 = vsub.s32 %v10056, %v10058
    %v10060 = vrot.slane %v10052, %v10059
    %v10062 = vunpack.c.l.s4 1983009808
    %v10063 = vunpack.c.0.s8 %v10062
    %v10064 = vlaneseq
    %v10065 = vshrl.u32 %v10064, 7
    %v10066 = vsub.s32 %v10063, %v10065
    %v10067 = vrot.slane %v10053, %v10066
    %v10068 = vcombine.low %v10060, %v10067
    %v10069 = vcombine.low %v9755, %v9801
    %v10070 = vcombine.low %v9847, %v9893
    %v10072 = vunpack.c.l.s4 1983009808
    %v10073 = vunpack.c.0.s8 %v10072
    %v10074 = vlaneseq
    %v10075 = vshrl.u32 %v10074, 7
    %v10076 = vsub.s32 %v10073, %v10075
    %v10077 = vrot.slane %v10069, %v10076
    %v10079 = vunpack.c.l.s4 1983009808
    %v10080 = vunpack.c.0.s8 %v10079
    %v10081 = vlaneseq
    %v10082 = vshrl.u32 %v10081, 7
    %v10083 = vsub.s32 %v10080, %v10082
    %v10084 = vrot.slane %v10070, %v10083
    %v10085 = vcombine.low %v10077, %v10084
    %v10088 = vpack.c.bf16 %v10085, %v10068
    %10090 = vrot.lane.b32.xlu0 %v10088, 96
    %v10091 = vpop.permute.xlu0 %10090
    %10093 = vst.msk [vmem:[#allocation3] sm:$0xff] %vm4801, %v10091
    %v10094 = vld [vmem:[#allocation3] sm:$0xff]
    %s10095 = scalar_lea.vmem [#allocation10], 1
    %v10096 = vld [vmem:[%s10095] sm:$0x1]
    %v10098 = vlaneseq
    %v10099 = vshrl.u32 %v10098, 7
    %v10100 = vsub.s32 0, %v10099
    %v10101 = vrot.slane %v10096, %v10100
    %v10119 = vunpack.c.l.b16 %v5582
    %v10120 = vunpack.c.l.b16 %v5583
    %v10121 = vunpack.c.l.b16 %v5584
    %v10122 = vunpack.c.l.b16 %v5585
    %v10123 = vunpack.c.l.b16 %v5586
    %v10124 = vunpack.c.l.b16 %v5587
    %v10125 = vunpack.c.l.b16 %v5588
    %v10126 = vunpack.c.l.b16 %v5589
    %v10127 = vunpack.c.l.b16 %v5590
    %v10128 = vunpack.c.l.b16 %v5591
    %v10129 = vunpack.c.l.b16 %v5592
    %v10130 = vunpack.c.l.b16 %v5593
    %v10131 = vunpack.c.l.b16 %v5594
    %v10132 = vunpack.c.l.b16 %v5595
    %v10133 = vunpack.c.l.b16 %v5596
    %v10134 = vunpack.c.l.b16 %v5597
    %v10135 = vpack.c.b16 %v10120, %v10119
    %v10136 = vpack.c.b16 %v10122, %v10121
    %v10137 = vpack.c.b16 %v10124, %v10123
    %v10138 = vpack.c.b16 %v10126, %v10125
    %v10139 = vpack.c.b16 %v10128, %v10127
    %v10140 = vpack.c.b16 %v10130, %v10129
    %v10141 = vpack.c.b16 %v10132, %v10131
    %v10142 = vpack.c.b16 %v10134, %v10133
    %10151 = vmatprep.subr.bf16.mxu0 0
    %10152 = vmatpush1.bf16.msra.mxu0 %v10135
    %10153 = vmatprep.subr.bf16.mxu0 0
    %10154 = vmatpush1.bf16.msra.mxu0 %v10136
    %10155 = vmatprep.subr.bf16.mxu0 0
    %10156 = vmatpush1.bf16.msra.mxu0 %v10137
    %10157 = vmatprep.subr.bf16.mxu0 0
    %10158 = vmatpush1.bf16.msra.mxu0 %v10138
    %10159 = vmatprep.subr.bf16.mxu0 0
    %10160 = vmatpush1.bf16.msra.mxu0 %v10139
    %10161 = vmatprep.subr.bf16.mxu0 0
    %10162 = vmatpush1.bf16.msra.mxu0 %v10140
    %10163 = vmatprep.subr.bf16.mxu0 0
    %10164 = vmatpush1.bf16.msra.mxu0 %v10141
    %10165 = vmatprep.subr.bf16.mxu0 0
    %10166 = vmatpush1.bf16.msra.mxu0 %v10142
    %10167 = vmatprep.subr.bf16.mxu0 0
    %10168 = vmatpush1.bf16.msra.mxu0 0
    %10169 = vmatprep.subr.bf16.mxu0 0
    %10170 = vmatpush1.bf16.msra.mxu0 0
    %10171 = vmatprep.subr.bf16.mxu0 0
    %10172 = vmatpush1.bf16.msra.mxu0 0
    %10173 = vmatprep.subr.bf16.mxu0 0
    %10174 = vmatpush1.bf16.msra.mxu0 0
    %10175 = vmatprep.subr.bf16.mxu0 0
    %10176 = vmatpush1.bf16.msra.mxu0 0
    %10177 = vmatprep.subr.bf16.mxu0 0
    %10178 = vmatpush1.bf16.msra.mxu0 0
    %10179 = vmatprep.subr.bf16.mxu0 0
    %10180 = vmatpush1.bf16.msra.mxu0 0
    %10181 = vmatprep.subr.bf16.mxu0 0
    %10182 = vmatpush1.bf16.msra.mxu0 0
    %10183 = vmatprep.mubr.bf16.mxu0 0
    %10184 = vmatmul.mubr.bf16.gmra.mrb[0].mxu0 %v10094
    %v10185 = vpop.f32.mrb[0].mxu0
    %v10186 = vadd.f32 %v10101, %v10185
    %v10187 = vpop.f32.mrb[0].mxu0
    %v10188 = vpop.f32.mrb[0].mxu0
    %v10189 = vadd.f32 %v10101, %v10188
    %v10190 = vpop.f32.mrb[0].mxu0
    %10191 = vdwg.mxu0
    %v10192 = vadd.f32 %v5545, %v10186
    %v10193 = vadd.f32 %v5546, %v10189
    %s10194 = scalar_lea.vmem [#allocation18], 1
    %v10195 = vld [vmem:[%s10194] sm:$0x1]
    %s10196 = scalar_lea.vmem [#allocation19], 1
    %v10197 = vld [vmem:[%s10196] sm:$0x1]
    %10198 = vadd.xlane.f32.xlu0 %v10192
    %v10199 = vpop.xlane.xlu0 %10198
    %10200 = vadd.xlane.f32.xlu0 %v10193
    %v10201 = vpop.xlane.xlu0 %10200
    %v10202 = vmul.f32 %v10199, %v4908
    %v10203 = vmul.f32 %v10201, %v4908
    %v10204 = vsub.f32 %v10192, %v10202
    %v10205 = vsub.f32 %v10193, %v10203
    %v10206 = vmul.f32 %v10204, %v10204
    %v10207 = vmul.f32 %v10205, %v10205
    %10208 = vadd.xlane.f32.xlu0 %v10206
    %v10209 = vpop.xlane.xlu0 %10208
    %10210 = vadd.xlane.f32.xlu0 %v10207
    %v10211 = vpop.xlane.xlu0 %10210
    %v10212 = vmul.f32 %v10209, %v4908
    %v10213 = vmul.f32 %v10211, %v4908
    %v10214 = vadd.f32 %v10212, 1e-05
    %v10215 = vadd.f32 %v10213, 1e-05
    %v10216 = vrsqrt.pop %v10214
    %v10217 = vrsqrt.pop %v10215
    %v10218 = vmul.f32 %v10204, %v10216
    %v10219 = vmul.f32 %v10205, %v10217
    %v10221 = vlaneseq
    %v10222 = vshrl.u32 %v10221, 7
    %v10223 = vsub.s32 0, %v10222
    %v10224 = vrot.slane %v10195, %v10223
    %v10226 = vmul.f32 %v10218, %v10224
    %v10227 = vmul.f32 %v10219, %v10224
    %v10229 = vlaneseq
    %v10230 = vshrl.u32 %v10229, 7
    %v10231 = vsub.s32 0, %v10230
    %v10232 = vrot.slane %v10197, %v10231
    %v10234 = vadd.f32 %v10226, %v10232
    %v10235 = vadd.f32 %v10227, %v10232
    %v10236 = vpack.c.bf16 %v10235, %v10234
    %s10237 = scalar_lea.vmem [#allocation13], 4
    %v10238 = vld [vmem:[%s10237] sm:$0xf]
    %v10240 = vlaneseq
    %v10241 = vshrl.u32 %v10240, 7
    %v10242 = vsub.s32 0, %v10241
    %v10243 = vrot.slane %v10238, %v10242
    %v10244 = vlaneseq
    %v10245 = vshrl.u32 %v10244, 7
    %v10246 = vsub.s32 1, %v10245
    %v10247 = vrot.slane %v10238, %v10246
    %v10248 = vlaneseq
    %v10249 = vshrl.u32 %v10248, 7
    %v10250 = vsub.s32 2, %v10249
    %v10251 = vrot.slane %v10238, %v10250
    %v10252 = vlaneseq
    %v10253 = vshrl.u32 %v10252, 7
    %v10254 = vsub.s32 3, %v10253
    %v10255 = vrot.slane %v10238, %v10254
    %v10292 = vunpack.c.l.b16 %v5599
    %v10293 = vunpack.c.h.b16 %v5599
    %v10294 = vunpack.c.l.b16 %v5600
    %v10295 = vunpack.c.h.b16 %v5600
    %v10296 = vunpack.c.l.b16 %v5601
    %v10297 = vunpack.c.h.b16 %v5601
    %v10298 = vunpack.c.l.b16 %v5602
    %v10299 = vunpack.c.h.b16 %v5602
    %v10300 = vunpack.c.l.b16 %v5603
    %v10301 = vunpack.c.h.b16 %v5603
    %v10302 = vunpack.c.l.b16 %v5604
    %v10303 = vunpack.c.h.b16 %v5604
    %v10304 = vunpack.c.l.b16 %v5605
    %v10305 = vunpack.c.h.b16 %v5605
    %v10306 = vunpack.c.l.b16 %v5606
    %v10307 = vunpack.c.h.b16 %v5606
    %v10308 = vunpack.c.l.b16 %v5607
    %v10309 = vunpack.c.h.b16 %v5607
    %v10310 = vunpack.c.l.b16 %v5608
    %v10311 = vunpack.c.h.b16 %v5608
    %v10312 = vunpack.c.l.b16 %v5609
    %v10313 = vunpack.c.h.b16 %v5609
    %v10314 = vunpack.c.l.b16 %v5610
    %v10315 = vunpack.c.h.b16 %v5610
    %v10316 = vunpack.c.l.b16 %v5611
    %v10317 = vunpack.c.h.b16 %v5611
    %v10318 = vunpack.c.l.b16 %v5612
    %v10319 = vunpack.c.h.b16 %v5612
    %v10320 = vunpack.c.l.b16 %v5613
    %v10321 = vunpack.c.h.b16 %v5613
    %v10322 = vunpack.c.l.b16 %v5614
    %v10323 = vunpack.c.h.b16 %v5614
    %v10324 = vunpack.c.l.b16 %v5615
    %v10325 = vunpack.c.h.b16 %v5615
    %v10326 = vunpack.c.l.b16 %v5616
    %v10327 = vunpack.c.h.b16 %v5616
    %v10328 = vunpack.c.l.b16 %v5617
    %v10329 = vunpack.c.h.b16 %v5617
    %v10330 = vunpack.c.l.b16 %v5618
    %v10331 = vunpack.c.h.b16 %v5618
    %v10332 = vunpack.c.l.b16 %v5619
    %v10333 = vunpack.c.h.b16 %v5619
    %v10334 = vunpack.c.l.b16 %v5620
    %v10335 = vunpack.c.h.b16 %v5620
    %v10336 = vunpack.c.l.b16 %v5621
    %v10337 = vunpack.c.h.b16 %v5621
    %v10338 = vunpack.c.l.b16 %v5622
    %v10339 = vunpack.c.h.b16 %v5622
    %v10340 = vunpack.c.l.b16 %v5623
    %v10341 = vunpack.c.h.b16 %v5623
    %v10342 = vunpack.c.l.b16 %v5624
    %v10343 = vunpack.c.h.b16 %v5624
    %v10344 = vunpack.c.l.b16 %v5625
    %v10345 = vunpack.c.h.b16 %v5625
    %v10346 = vunpack.c.l.b16 %v5626
    %v10347 = vunpack.c.h.b16 %v5626
    %v10348 = vunpack.c.l.b16 %v5627
    %v10349 = vunpack.c.h.b16 %v5627
    %v10350 = vunpack.c.l.b16 %v5628
    %v10351 = vunpack.c.h.b16 %v5628
    %v10352 = vunpack.c.l.b16 %v5629
    %v10353 = vunpack.c.h.b16 %v5629
    %v10354 = vunpack.c.l.b16 %v5630
    %v10355 = vunpack.c.h.b16 %v5630
    %v10356 = vpack.c.b16 %v10296, %v10292
    %v10357 = vpack.c.b16 %v10297, %v10293
    %v10358 = vpack.c.b16 %v10298, %v10294
    %v10359 = vpack.c.b16 %v10299, %v10295
    %v10360 = vpack.c.b16 %v10304, %v10300
    %v10361 = vpack.c.b16 %v10305, %v10301
    %v10362 = vpack.c.b16 %v10306, %v10302
    %v10363 = vpack.c.b16 %v10307, %v10303
    %v10364 = vpack.c.b16 %v10312, %v10308
    %v10365 = vpack.c.b16 %v10313, %v10309
    %v10366 = vpack.c.b16 %v10314, %v10310
    %v10367 = vpack.c.b16 %v10315, %v10311
    %v10368 = vpack.c.b16 %v10320, %v10316
    %v10369 = vpack.c.b16 %v10321, %v10317
    %v10370 = vpack.c.b16 %v10322, %v10318
    %v10371 = vpack.c.b16 %v10323, %v10319
    %v10372 = vpack.c.b16 %v10328, %v10324
    %v10373 = vpack.c.b16 %v10329, %v10325
    %v10374 = vpack.c.b16 %v10330, %v10326
    %v10375 = vpack.c.b16 %v10331, %v10327
    %v10376 = vpack.c.b16 %v10336, %v10332
    %v10377 = vpack.c.b16 %v10337, %v10333
    %v10378 = vpack.c.b16 %v10338, %v10334
    %v10379 = vpack.c.b16 %v10339, %v10335
    %v10380 = vpack.c.b16 %v10344, %v10340
    %v10381 = vpack.c.b16 %v10345, %v10341
    %v10382 = vpack.c.b16 %v10346, %v10342
    %v10383 = vpack.c.b16 %v10347, %v10343
    %v10384 = vpack.c.b16 %v10352, %v10348
    %v10385 = vpack.c.b16 %v10353, %v10349
    %v10386 = vpack.c.b16 %v10354, %v10350
    %v10387 = vpack.c.b16 %v10355, %v10351
    %10420 = vmatprep.subr.bf16.mxu0 %v10357
    %10421 = vmatpush1.bf16.msra.mxu0 %v10356
    %10422 = vmatprep.subr.bf16.mxu0 %v10361
    %10423 = vmatpush1.bf16.msra.mxu0 %v10360
    %10424 = vmatprep.subr.bf16.mxu0 %v10365
    %10425 = vmatpush1.bf16.msra.mxu0 %v10364
    %10426 = vmatprep.subr.bf16.mxu0 %v10369
    %10427 = vmatpush1.bf16.msra.mxu0 %v10368
    %10428 = vmatprep.subr.bf16.mxu0 %v10373
    %10429 = vmatpush1.bf16.msra.mxu0 %v10372
    %10430 = vmatprep.subr.bf16.mxu0 %v10377
    %10431 = vmatpush1.bf16.msra.mxu0 %v10376
    %10432 = vmatprep.subr.bf16.mxu0 %v10381
    %10433 = vmatpush1.bf16.msra.mxu0 %v10380
    %10434 = vmatprep.subr.bf16.mxu0 %v10385
    %10435 = vmatpush1.bf16.msra.mxu0 %v10384
    %10436 = vmatprep.subr.bf16.mxu0 0
    %10437 = vmatpush1.bf16.msra.mxu0 0
    %10438 = vmatprep.subr.bf16.mxu0 0
    %10439 = vmatpush1.bf16.msra.mxu0 0
    %10440 = vmatprep.subr.bf16.mxu0 0
    %10441 = vmatpush1.bf16.msra.mxu0 0
    %10442 = vmatprep.subr.bf16.mxu0 0
    %10443 = vmatpush1.bf16.msra.mxu0 0
    %10444 = vmatprep.subr.bf16.mxu0 0
    %10445 = vmatpush1.bf16.msra.mxu0 0
    %10446 = vmatprep.subr.bf16.mxu0 0
    %10447 = vmatpush1.bf16.msra.mxu0 0
    %10448 = vmatprep.subr.bf16.mxu0 0
    %10449 = vmatpush1.bf16.msra.mxu0 0
    %10450 = vmatprep.subr.bf16.mxu0 0
    %10451 = vmatpush1.bf16.msra.mxu0 0
    %10452 = vmatprep.mubr.bf16.mxu0 0
    %10453 = vmatmul.mubr.bf16.gmra.mrb[0].mxu0 %v10236
    %v10454 = vpop.f32.mrb[0].mxu0
    %v10455 = vadd.f32 %v10243, %v10454
    %v10456 = vpop.f32.mrb[0].mxu0
    %v10457 = vadd.f32 %v10247, %v10456
    %v10458 = vpop.f32.mrb[0].mxu0
    %v10459 = vadd.f32 %v10243, %v10458
    %v10460 = vpop.f32.mrb[0].mxu0
    %v10461 = vadd.f32 %v10247, %v10460
    %10462 = vdwg.mxu0
    %10463 = vmatprep.subr.bf16.mxu0 %v10359
    %10464 = vmatpush1.bf16.msra.mxu0 %v10358
    %10465 = vmatprep.subr.bf16.mxu0 %v10363
    %10466 = vmatpush1.bf16.msra.mxu0 %v10362
    %10467 = vmatprep.subr.bf16.mxu0 %v10367
    %10468 = vmatpush1.bf16.msra.mxu0 %v10366
    %10469 = vmatprep.subr.bf16.mxu0 %v10371
    %10470 = vmatpush1.bf16.msra.mxu0 %v10370
    %10471 = vmatprep.subr.bf16.mxu0 %v10375
    %10472 = vmatpush1.bf16.msra.mxu0 %v10374
    %10473 = vmatprep.subr.bf16.mxu0 %v10379
    %10474 = vmatpush1.bf16.msra.mxu0 %v10378
    %10475 = vmatprep.subr.bf16.mxu0 %v10383
    %10476 = vmatpush1.bf16.msra.mxu0 %v10382
    %10477 = vmatprep.subr.bf16.mxu0 %v10387
    %10478 = vmatpush1.bf16.msra.mxu0 %v10386
    %10479 = vmatprep.subr.bf16.mxu0 0
    %10480 = vmatpush1.bf16.msra.mxu0 0
    %10481 = vmatprep.subr.bf16.mxu0 0
    %10482 = vmatpush1.bf16.msra.mxu0 0
    %10483 = vmatprep.subr.bf16.mxu0 0
    %10484 = vmatpush1.bf16.msra.mxu0 0
    %10485 = vmatprep.subr.bf16.mxu0 0
    %10486 = vmatpush1.bf16.msra.mxu0 0
    %10487 = vmatprep.subr.bf16.mxu0 0
    %10488 = vmatpush1.bf16.msra.mxu0 0
    %10489 = vmatprep.subr.bf16.mxu0 0
    %10490 = vmatpush1.bf16.msra.mxu0 0
    %10491 = vmatprep.subr.bf16.mxu0 0
    %10492 = vmatpush1.bf16.msra.mxu0 0
    %10493 = vmatprep.subr.bf16.mxu0 0
    %10494 = vmatpush1.bf16.msra.mxu0 0
    %10495 = vmatprep.mubr.bf16.mxu0 0
    %10496 = vmatmul.mubr.bf16.gmra.mrb[0].mxu0 %v10236
    %v10497 = vpop.f32.mrb[0].mxu0
    %v10498 = vadd.f32 %v10251, %v10497
    %v10499 = vpop.f32.mrb[0].mxu0
    %v10500 = vadd.f32 %v10255, %v10499
    %v10501 = vpop.f32.mrb[0].mxu0
    %v10502 = vadd.f32 %v10251, %v10501
    %v10503 = vpop.f32.mrb[0].mxu0
    %v10504 = vadd.f32 %v10255, %v10503
    %10505 = vdwg.mxu0
    %v10506 = vmax.f32 %v10455, 0.0
    %v10507 = vmax.f32 %v10457, 0.0
    %v10508 = vmax.f32 %v10498, 0.0
    %v10509 = vmax.f32 %v10500, 0.0
    %v10510 = vmax.f32 %v10459, 0.0
    %v10511 = vmax.f32 %v10461, 0.0
    %v10512 = vmax.f32 %v10502, 0.0
    %v10513 = vmax.f32 %v10504, 0.0
    %v10514 = vpack.c.bf16 %v10510, %v10506
    %v10515 = vpack.c.bf16 %v10511, %v10507
    %v10516 = vpack.c.bf16 %v10512, %v10508
    %v10517 = vpack.c.bf16 %v10513, %v10509
    %s10518 = scalar_lea.vmem [#allocation16], 1
    %v10519 = vld [vmem:[%s10518] sm:$0x1]
    %v10521 = vlaneseq
    %v10522 = vshrl.u32 %v10521, 7
    %v10523 = vsub.s32 0, %v10522
    %v10524 = vrot.slane %v10519, %v10523
    %v10590 = vunpack.c.l.b16 %v5632
    %v10591 = vunpack.c.l.b16 %v5633
    %v10592 = vunpack.c.l.b16 %v5634
    %v10593 = vunpack.c.l.b16 %v5635
    %v10594 = vunpack.c.l.b16 %v5636
    %v10595 = vunpack.c.l.b16 %v5637
    %v10596 = vunpack.c.l.b16 %v5638
    %v10597 = vunpack.c.l.b16 %v5639
    %v10598 = vunpack.c.l.b16 %v5640
    %v10599 = vunpack.c.l.b16 %v5641
    %v10600 = vunpack.c.l.b16 %v5642
    %v10601 = vunpack.c.l.b16 %v5643
    %v10602 = vunpack.c.l.b16 %v5644
    %v10603 = vunpack.c.l.b16 %v5645
    %v10604 = vunpack.c.l.b16 %v5646
    %v10605 = vunpack.c.l.b16 %v5647
    %v10606 = vunpack.c.l.b16 %v5648
    %v10607 = vunpack.c.l.b16 %v5649
    %v10608 = vunpack.c.l.b16 %v5650
    %v10609 = vunpack.c.l.b16 %v5651
    %v10610 = vunpack.c.l.b16 %v5652
    %v10611 = vunpack.c.l.b16 %v5653
    %v10612 = vunpack.c.l.b16 %v5654
    %v10613 = vunpack.c.l.b16 %v5655
    %v10614 = vunpack.c.l.b16 %v5656
    %v10615 = vunpack.c.l.b16 %v5657
    %v10616 = vunpack.c.l.b16 %v5658
    %v10617 = vunpack.c.l.b16 %v5659
    %v10618 = vunpack.c.l.b16 %v5660
    %v10619 = vunpack.c.l.b16 %v5661
    %v10620 = vunpack.c.l.b16 %v5662
    %v10621 = vunpack.c.l.b16 %v5663
    %v10622 = vunpack.c.l.b16 %v5664
    %v10623 = vunpack.c.l.b16 %v5665
    %v10624 = vunpack.c.l.b16 %v5666
    %v10625 = vunpack.c.l.b16 %v5667
    %v10626 = vunpack.c.l.b16 %v5668
    %v10627 = vunpack.c.l.b16 %v5669
    %v10628 = vunpack.c.l.b16 %v5670
    %v10629 = vunpack.c.l.b16 %v5671
    %v10630 = vunpack.c.l.b16 %v5672
    %v10631 = vunpack.c.l.b16 %v5673
    %v10632 = vunpack.c.l.b16 %v5674
    %v10633 = vunpack.c.l.b16 %v5675
    %v10634 = vunpack.c.l.b16 %v5676
    %v10635 = vunpack.c.l.b16 %v5677
    %v10636 = vunpack.c.l.b16 %v5678
    %v10637 = vunpack.c.l.b16 %v5679
    %v10638 = vunpack.c.l.b16 %v5680
    %v10639 = vunpack.c.l.b16 %v5681
    %v10640 = vunpack.c.l.b16 %v5682
    %v10641 = vunpack.c.l.b16 %v5683
    %v10642 = vunpack.c.l.b16 %v5684
    %v10643 = vunpack.c.l.b16 %v5685
    %v10644 = vunpack.c.l.b16 %v5686
    %v10645 = vunpack.c.l.b16 %v5687
    %v10646 = vunpack.c.l.b16 %v5688
    %v10647 = vunpack.c.l.b16 %v5689
    %v10648 = vunpack.c.l.b16 %v5690
    %v10649 = vunpack.c.l.b16 %v5691
    %v10650 = vunpack.c.l.b16 %v5692
    %v10651 = vunpack.c.l.b16 %v5693
    %v10652 = vunpack.c.l.b16 %v5694
    %v10653 = vunpack.c.l.b16 %v5695
    %v10654 = vpack.c.b16 %v10591, %v10590
    %v10655 = vpack.c.b16 %v10593, %v10592
    %v10656 = vpack.c.b16 %v10595, %v10594
    %v10657 = vpack.c.b16 %v10597, %v10596
    %v10658 = vpack.c.b16 %v10599, %v10598
    %v10659 = vpack.c.b16 %v10601, %v10600
    %v10660 = vpack.c.b16 %v10603, %v10602
    %v10661 = vpack.c.b16 %v10605, %v10604
    %v10662 = vpack.c.b16 %v10607, %v10606
    %v10663 = vpack.c.b16 %v10609, %v10608
    %v10664 = vpack.c.b16 %v10611, %v10610
    %v10665 = vpack.c.b16 %v10613, %v10612
    %v10666 = vpack.c.b16 %v10615, %v10614
    %v10667 = vpack.c.b16 %v10617, %v10616
    %v10668 = vpack.c.b16 %v10619, %v10618
    %v10669 = vpack.c.b16 %v10621, %v10620
    %v10670 = vpack.c.b16 %v10623, %v10622
    %v10671 = vpack.c.b16 %v10625, %v10624
    %v10672 = vpack.c.b16 %v10627, %v10626
    %v10673 = vpack.c.b16 %v10629, %v10628
    %v10674 = vpack.c.b16 %v10631, %v10630
    %v10675 = vpack.c.b16 %v10633, %v10632
    %v10676 = vpack.c.b16 %v10635, %v10634
    %v10677 = vpack.c.b16 %v10637, %v10636
    %v10678 = vpack.c.b16 %v10639, %v10638
    %v10679 = vpack.c.b16 %v10641, %v10640
    %v10680 = vpack.c.b16 %v10643, %v10642
    %v10681 = vpack.c.b16 %v10645, %v10644
    %v10682 = vpack.c.b16 %v10647, %v10646
    %v10683 = vpack.c.b16 %v10649, %v10648
    %v10684 = vpack.c.b16 %v10651, %v10650
    %v10685 = vpack.c.b16 %v10653, %v10652
    %10718 = vmatprep.subr.bf16.mxu0 0
    %10719 = vmatpush1.bf16.msra.mxu0 %v10654
    %10720 = vmatprep.subr.bf16.mxu0 0
    %10721 = vmatpush1.bf16.msra.mxu0 %v10655
    %10722 = vmatprep.subr.bf16.mxu0 0
    %10723 = vmatpush1.bf16.msra.mxu0 %v10656
    %10724 = vmatprep.subr.bf16.mxu0 0
    %10725 = vmatpush1.bf16.msra.mxu0 %v10657
    %10726 = vmatprep.subr.bf16.mxu0 0
    %10727 = vmatpush1.bf16.msra.mxu0 %v10658
    %10728 = vmatprep.subr.bf16.mxu0 0
    %10729 = vmatpush1.bf16.msra.mxu0 %v10659
    %10730 = vmatprep.subr.bf16.mxu0 0
    %10731 = vmatpush1.bf16.msra.mxu0 %v10660
    %10732 = vmatprep.subr.bf16.mxu0 0
    %10733 = vmatpush1.bf16.msra.mxu0 %v10661
    %10734 = vmatprep.subr.bf16.mxu0 0
    %10735 = vmatpush1.bf16.msra.mxu0 %v10662
    %10736 = vmatprep.subr.bf16.mxu0 0
    %10737 = vmatpush1.bf16.msra.mxu0 %v10663
    %10738 = vmatprep.subr.bf16.mxu0 0
    %10739 = vmatpush1.bf16.msra.mxu0 %v10664
    %10740 = vmatprep.subr.bf16.mxu0 0
    %10741 = vmatpush1.bf16.msra.mxu0 %v10665
    %10742 = vmatprep.subr.bf16.mxu0 0
    %10743 = vmatpush1.bf16.msra.mxu0 %v10666
    %10744 = vmatprep.subr.bf16.mxu0 0
    %10745 = vmatpush1.bf16.msra.mxu0 %v10667
    %10746 = vmatprep.subr.bf16.mxu0 0
    %10747 = vmatpush1.bf16.msra.mxu0 %v10668
    %10748 = vmatprep.subr.bf16.mxu0 0
    %10749 = vmatpush1.bf16.msra.mxu0 %v10669
    %10750 = vmatprep.mubr.bf16.mxu0 %v10515
    %10751 = vmatmul.mubr.bf16.gmra.mrb[0].mxu0 %v10514
    %v10752 = vpop.f32.mrb[0].mxu0
    %v10753 = vadd.f32 %v10524, %v10752
    %v10754 = vpop.f32.mrb[0].mxu0
    %v10755 = vpop.f32.mrb[0].mxu0
    %v10756 = vadd.f32 %v10524, %v10755
    %v10757 = vpop.f32.mrb[0].mxu0
    %10758 = vdwg.mxu0
    %10759 = vmatprep.subr.bf16.mxu0 0
    %10760 = vmatpush1.bf16.msra.mxu0 %v10670
    %10761 = vmatprep.subr.bf16.mxu0 0
    %10762 = vmatpush1.bf16.msra.mxu0 %v10671
    %10763 = vmatprep.subr.bf16.mxu0 0
    %10764 = vmatpush1.bf16.msra.mxu0 %v10672
    %10765 = vmatprep.subr.bf16.mxu0 0
    %10766 = vmatpush1.bf16.msra.mxu0 %v10673
    %10767 = vmatprep.subr.bf16.mxu0 0
    %10768 = vmatpush1.bf16.msra.mxu0 %v10674
    %10769 = vmatprep.subr.bf16.mxu0 0
    %10770 = vmatpush1.bf16.msra.mxu0 %v10675
    %10771 = vmatprep.subr.bf16.mxu0 0
    %10772 = vmatpush1.bf16.msra.mxu0 %v10676
    %10773 = vmatprep.subr.bf16.mxu0 0
    %10774 = vmatpush1.bf16.msra.mxu0 %v10677
    %10775 = vmatprep.subr.bf16.mxu0 0
    %10776 = vmatpush1.bf16.msra.mxu0 %v10678
    %10777 = vmatprep.subr.bf16.mxu0 0
    %10778 = vmatpush1.bf16.msra.mxu0 %v10679
    %10779 = vmatprep.subr.bf16.mxu0 0
    %10780 = vmatpush1.bf16.msra.mxu0 %v10680
    %10781 = vmatprep.subr.bf16.mxu0 0
    %10782 = vmatpush1.bf16.msra.mxu0 %v10681
    %10783 = vmatprep.subr.bf16.mxu0 0
    %10784 = vmatpush1.bf16.msra.mxu0 %v10682
    %10785 = vmatprep.subr.bf16.mxu0 0
    %10786 = vmatpush1.bf16.msra.mxu0 %v10683
    %10787 = vmatprep.subr.bf16.mxu0 0
    %10788 = vmatpush1.bf16.msra.mxu0 %v10684
    %10789 = vmatprep.subr.bf16.mxu0 0
    %10790 = vmatpush1.bf16.msra.mxu0 %v10685
    %10791 = vmatprep.mubr.bf16.mxu0 %v10517
    %10792 = vmatmul.mubr.bf16.gmra.mrb[0].mxu0 %v10516
    %v10793 = vpop.f32.mrb[0].mxu0
    %v10794 = vadd.f32 %v10753, %v10793
    %v10795 = vpop.f32.mrb[0].mxu0
    %v10796 = vpop.f32.mrb[0].mxu0
    %v10797 = vadd.f32 %v10756, %v10796
    %v10798 = vpop.f32.mrb[0].mxu0
    %10799 = vdwg.mxu0
    %v10800 = vadd.f32 %v10234, %v10794
    %v10801 = vadd.f32 %v10235, %v10797
    %s10802 = scalar_lea.vmem [#allocation21], 1
    %v10803 = vld [vmem:[%s10802] sm:$0x1]
    %s10804 = scalar_lea.vmem [#allocation22], 1
    %v10805 = vld [vmem:[%s10804] sm:$0x1]
    %10806 = vadd.xlane.f32.xlu0 %v10800
    %v10807 = vpop.xlane.xlu0 %10806
    %10808 = vadd.xlane.f32.xlu0 %v10801
    %v10809 = vpop.xlane.xlu0 %10808
    %v10810 = vmul.f32 %v10807, %v4908
    %v10811 = vmul.f32 %v10809, %v4908
    %v10812 = vsub.f32 %v10800, %v10810
    %v10813 = vsub.f32 %v10801, %v10811
    %v10814 = vmul.f32 %v10812, %v10812
    %v10815 = vmul.f32 %v10813, %v10813
    %10816 = vadd.xlane.f32.xlu0 %v10814
    %v10817 = vpop.xlane.xlu0 %10816
    %10818 = vadd.xlane.f32.xlu0 %v10815
    %v10819 = vpop.xlane.xlu0 %10818
    %v10820 = vmul.f32 %v10817, %v4908
    %v10821 = vmul.f32 %v10819, %v4908
    %v10822 = vadd.f32 %v10820, 1e-05
    %v10823 = vadd.f32 %v10821, 1e-05
    %v10824 = vrsqrt.pop %v10822
    %v10825 = vrsqrt.pop %v10823
    %v10826 = vmul.f32 %v10812, %v10824
    %v10827 = vmul.f32 %v10813, %v10825
    %v10829 = vlaneseq
    %v10830 = vshrl.u32 %v10829, 7
    %v10831 = vsub.s32 0, %v10830
    %v10832 = vrot.slane %v10803, %v10831
    %v10834 = vmul.f32 %v10826, %v10832
    %v10835 = vmul.f32 %v10827, %v10832
    %v10837 = vlaneseq
    %v10838 = vshrl.u32 %v10837, 7
    %v10839 = vsub.s32 0, %v10838
    %v10840 = vrot.slane %v10805, %v10839
    %v10842 = vadd.f32 %v10834, %v10840
    %v10843 = vadd.f32 %v10835, %v10840
    %v10844 = vld [vmem:[#allocation2] sm:$0x3]
    %v10847 = vcombine.high %v10842, %v10842
    %v10849 = vunpack.c.l.s4 1983009808
    %v10850 = vunpack.c.0.s8 %v10849
    %v10851 = vlaneseq
    %v10852 = vshrl.u32 %v10851, 7
    %v10853 = vsub.s32 %v10850, %v10852
    %v10854 = vrot.slane %v10842, %v10853
    %v10856 = vunpack.c.l.s4 1983009808
    %v10857 = vunpack.c.0.s8 %v10856
    %v10858 = vlaneseq
    %v10859 = vshrl.u32 %v10858, 7
    %v10860 = vsub.s32 %v10857, %v10859
    %v10861 = vrot.slane %v10847, %v10860
    %v10862 = vcombine.high %v10854, %v10854
    %v10863 = vcombine.high %v10861, %v10861
    %v10864 = vcombine.high %v10843, %v10843
    %v10866 = vunpack.c.l.s4 1983009808
    %v10867 = vunpack.c.0.s8 %v10866
    %v10868 = vlaneseq
    %v10869 = vshrl.u32 %v10868, 7
    %v10870 = vsub.s32 %v10867, %v10869
    %v10871 = vrot.slane %v10843, %v10870
    %v10873 = vunpack.c.l.s4 1983009808
    %v10874 = vunpack.c.0.s8 %v10873
    %v10875 = vlaneseq
    %v10876 = vshrl.u32 %v10875, 7
    %v10877 = vsub.s32 %v10874, %v10876
    %v10878 = vrot.slane %v10864, %v10877
    %v10879 = vcombine.high %v10871, %v10871
    %v10880 = vcombine.high %v10878, %v10878
    %vm10889 = vcmask 1041408
    %v10890 = vsel %vm10889, %v10854, 0.0
    %v10891 = vsel %vm10889, %v10862, 0.0
    %v10892 = vadd.f32 %v10890, %v10891
    %v10893 = vsel %vm10889, %v10861, 0.0
    %v10894 = vadd.f32 %v10892, %v10893
    %v10895 = vsel %vm10889, %v10863, 0.0
    %v10896 = vadd.f32 %v10894, %v10895
    %v10897 = vsel %vm10889, %v10871, 0.0
    %v10898 = vadd.f32 %v10896, %v10897
    %v10899 = vsel %vm10889, %v10879, 0.0
    %v10900 = vadd.f32 %v10898, %v10899
    %v10901 = vsel %vm10889, %v10878, 0.0
    %v10902 = vadd.f32 %v10900, %v10901
    %v10903 = vsel %vm10889, %v10880, 0.0
    %v10904 = vadd.f32 %v10902, %v10903
    %v10905 = vadd.f32 %v10844, %v10904
    %10906 = vst [vmem:[#allocation2] sm:$0x3] %v10905
    // Predicated region
    $region122: #{transformer_classifier_forward.1} parent=1 // pred_check
      %p10907 = pneg %p240
    $region123: #{transformer_classifier_forward.1} parent=1 // pred_check_branch
      %10909 = sbr.rel (%p10907) target = $region125
    $region124: #{transformer_classifier_forward.1} parent=1 // pred_region
      %v10910 = vld [vmem:[#allocation2] sm:$0x3]
      %v10911 = vmul.f32 %v10910, 0.125
      %v10912 = vpack.c.bf16 %v10911, %v10911
      %v10913 = vld [vmem:[#allocation24] sm:$0xf]
      %v10914 = vld [vmem:[#allocation24 + $0x4] sm:$0xf]
      %v10915 = vld [vmem:[#allocation24 + $0x8] sm:$0xf]
      %v10916 = vld [vmem:[#allocation24 + $0xc] sm:$0xf]
      %v10917 = vld [vmem:[#allocation24 + $0x10] sm:$0xf]
      %v10918 = vld [vmem:[#allocation24 + $0x14] sm:$0xf]
      %v10919 = vld [vmem:[#allocation24 + $0x18] sm:$0xf]
      %v10920 = vld [vmem:[#allocation24 + $0x1c] sm:$0xf]
      %v10921 = vld [vmem:[#allocation24 + $0x20] sm:$0xf]
      %v10922 = vld [vmem:[#allocation24 + $0x24] sm:$0xf]
      %v10923 = vld [vmem:[#allocation24 + $0x28] sm:$0xf]
      %v10924 = vld [vmem:[#allocation24 + $0x2c] sm:$0xf]
      %v10925 = vld [vmem:[#allocation24 + $0x30] sm:$0xf]
      %v10926 = vld [vmem:[#allocation24 + $0x34] sm:$0xf]
      %v10927 = vld [vmem:[#allocation24 + $0x38] sm:$0xf]
      %v10928 = vld [vmem:[#allocation24 + $0x3c] sm:$0xf]
      %v10929 = vld [vmem:[#allocation25] sm:$0x1]
      %v10931 = vlaneseq
      %v10932 = vshrl.u32 %v10931, 7
      %v10933 = vsub.s32 0, %v10932
      %v10934 = vrot.slane %v10929, %v10933
      %v10952 = vunpack.c.l.b16 %v10913
      %v10953 = vunpack.c.l.b16 %v10914
      %v10954 = vunpack.c.l.b16 %v10915
      %v10955 = vunpack.c.l.b16 %v10916
      %v10956 = vunpack.c.l.b16 %v10917
      %v10957 = vunpack.c.l.b16 %v10918
      %v10958 = vunpack.c.l.b16 %v10919
      %v10959 = vunpack.c.l.b16 %v10920
      %v10960 = vunpack.c.l.b16 %v10921
      %v10961 = vunpack.c.l.b16 %v10922
      %v10962 = vunpack.c.l.b16 %v10923
      %v10963 = vunpack.c.l.b16 %v10924
      %v10964 = vunpack.c.l.b16 %v10925
      %v10965 = vunpack.c.l.b16 %v10926
      %v10966 = vunpack.c.l.b16 %v10927
      %v10967 = vunpack.c.l.b16 %v10928
      %v10968 = vpack.c.b16 %v10953, %v10952
      %v10969 = vpack.c.b16 %v10955, %v10954
      %v10970 = vpack.c.b16 %v10957, %v10956
      %v10971 = vpack.c.b16 %v10959, %v10958
      %v10972 = vpack.c.b16 %v10961, %v10960
      %v10973 = vpack.c.b16 %v10963, %v10962
      %v10974 = vpack.c.b16 %v10965, %v10964
      %v10975 = vpack.c.b16 %v10967, %v10966
      %10984 = vmatprep.subr.bf16.mxu0 0
      %10985 = vmatpush1.bf16.msra.mxu0 %v10968
      %10986 = vmatprep.subr.bf16.mxu0 0
      %10987 = vmatpush1.bf16.msra.mxu0 %v10969
      %10988 = vmatprep.subr.bf16.mxu0 0
      %10989 = vmatpush1.bf16.msra.mxu0 %v10970
      %10990 = vmatprep.subr.bf16.mxu0 0
      %10991 = vmatpush1.bf16.msra.mxu0 %v10971
      %10992 = vmatprep.subr.bf16.mxu0 0
      %10993 = vmatpush1.bf16.msra.mxu0 %v10972
      %10994 = vmatprep.subr.bf16.mxu0 0
      %10995 = vmatpush1.bf16.msra.mxu0 %v10973
      %10996 = vmatprep.subr.bf16.mxu0 0
      %10997 = vmatpush1.bf16.msra.mxu0 %v10974
      %10998 = vmatprep.subr.bf16.mxu0 0
      %10999 = vmatpush1.bf16.msra.mxu0 %v10975
      %11000 = vmatprep.subr.bf16.mxu0 0
      %11001 = vmatpush1.bf16.msra.mxu0 0
      %11002 = vmatprep.subr.bf16.mxu0 0
      %11003 = vmatpush1.bf16.msra.mxu0 0
      %11004 = vmatprep.subr.bf16.mxu0 0
      %11005 = vmatpush1.bf16.msra.mxu0 0
      %11006 = vmatprep.subr.bf16.mxu0 0
      %11007 = vmatpush1.bf16.msra.mxu0 0
      %11008 = vmatprep.subr.bf16.mxu0 0
      %11009 = vmatpush1.bf16.msra.mxu0 0
      %11010 = vmatprep.subr.bf16.mxu0 0
      %11011 = vmatpush1.bf16.msra.mxu0 0
      %11012 = vmatprep.subr.bf16.mxu0 0
      %11013 = vmatpush1.bf16.msra.mxu0 0
      %11014 = vmatprep.subr.bf16.mxu0 0
      %11015 = vmatpush1.bf16.msra.mxu0 0
      %11016 = vmatprep.mubr.bf16.mxu0 0
      %11017 = vmatmul.mubr.bf16.gmra.mrb[0].mxu0 %v10912
      %v11018 = vpop.f32.mrb[0].mxu0
      %v11019 = vadd.f32 %v10934, %v11018
      %v11020 = vpop.f32.mrb[0].mxu0
      %v11021 = vpop.f32.mrb[0].mxu0
      %v11022 = vpop.f32.mrb[0].mxu0
      %11023 = vdwg.mxu0
      %11024 = vst [vmem:[#allocation27] sm:$0x3] %v11019
    $region125: #{transformer_classifier_forward.1} parent=1 // pred_fallthru
      _
    // Predicated region
    $region126: #{transformer_classifier_forward.1} parent=1 // pred_check
      _
    $region127: #{transformer_classifier_forward.1} parent=1 // pred_check_branch
      %11026 = sbr.rel (0) target = $region129
    $region128: #{transformer_classifier_forward.1} parent=1 // pred_region
      %s11028 = ssub.s32 32, 32
      %11029 = vsyncadd [#allocation6], %s11028
      %s11031 = sshll.u32 [#allocation27], 4
      %s11032 = int_to_ptr.vmem [resolvable:$true] %s11031
      %11034 = dma.vmem_to_hbm [thread:$0]  %s11032, 32, %s15, [#allocation6]
    $region129: #{transformer_classifier_forward.1} parent=1 // pred_fallthru
      _
    // Predicated region
    $region130: #{transformer_classifier_forward.1} parent=1 // pred_check
      _
    $region131: #{transformer_classifier_forward.1} parent=1 // pred_check_branch
      %11036 = sbr.rel (0) target = $region133
    $region132: #{transformer_classifier_forward.1} parent=1 // pred_region
      %11037 = dma.done [#allocation6], 32
    $region133: #{transformer_classifier_forward.1} parent=1 // pred_fallthru
      _
    %11038 = vsyncpa [#allocation5], 1
    %11039 = vsyncpa [#allocation8], 1
    %11040 = vsyncpa [#allocation11], 1
    %11041 = vsyncpa [#allocation14], 1
    %11042 = vsyncpa [#allocation17], 1
    %11043 = vsyncpa [#allocation20], 1
    %11044 = vsyncpa [#allocation23], 1
    %11045 = vsyncpa [#allocation26], 1
    %11046 = vsyncpa [#allocation6], 1

</llo_original>
